<compile_context>
chip_gen: v7x
topology: tpu7x:2x2x1
jax: 0.10.0
libtpu: 0.0.40
codegen_flags: <defaults>
</compile_context>

<pallas_src>
import functools
import math

import jax
import jax.numpy as jnp
from jax import lax
from jax.experimental import pallas as pl
from jax.experimental.pallas import tpu as pltpu


def encoder_layer_kernel(x_ref,
                         wqkv_ref, bqkv_ref,
                         wo3_ref, bo_ref,
                         g1_ref, be1_ref,
                         w1_ref, bf1_ref,
                         w2_ref, bf2_ref,
                         g2_ref, be2_ref,
                         out_ref, attnw_ref,
                         *, num_heads, head_dim):
    x = x_ref[0]                                   # [S, D] f32
    S, D = x.shape
    H, hd = num_heads, head_dim
    scale = 1.0 / math.sqrt(hd)

    # ---- fused QKV projection: one bf16 MXU matmul, f32 accumulate ----
    qkv = jnp.dot(x.astype(jnp.bfloat16), wqkv_ref[...],
                  preferred_element_type=jnp.float32) + bqkv_ref[...]
    qkv_bf = qkv.astype(jnp.bfloat16)              # single whole-tensor cast

    # ---- head split: [S, 3D] -> 3x [H, S, hd] (static slices + leading-axis stack) ----
    q3 = jnp.stack([qkv_bf[:, h * hd:(h + 1) * hd] for h in range(H)], axis=0)
    k3 = jnp.stack([qkv_bf[:, D + h * hd:D + (h + 1) * hd] for h in range(H)], axis=0)
    v3 = jnp.stack([qkv_bf[:, 2 * D + h * hd:2 * D + (h + 1) * hd] for h in range(H)], axis=0)

    # ---- causal mask as an additive bias, built once (finite -> no NaN risk) ----
    row = lax.broadcasted_iota(jnp.int32, (S, S), 0)
    col = lax.broadcasted_iota(jnp.int32, (S, S), 1)
    mask_bias = jnp.where(row >= col, 0.0, -1e30).astype(jnp.float32)

    # ---- head-batched attention: no k.T, no per-head loop ----
    s = jnp.einsum("hqd,hkd->hqk", q3, k3,
                   preferred_element_type=jnp.float32)       # [H, S, S] f32
    s = s * scale + mask_bias[None, :, :]
    m = jnp.max(s, axis=-1, keepdims=True)
    e = jnp.exp(s - m)
    w = e * pl.reciprocal(jnp.sum(e, axis=-1, keepdims=True), approx=True)
    attnw_ref[0] = w                               # one contiguous [H, S, S] store

    ctx = jnp.einsum("hqk,hkd->hqd", w.astype(jnp.bfloat16), v3,
                     preferred_element_type=jnp.float32)     # [H, S, hd] f32

    # ---- output projection: head-batched matmul with Wo[H, hd, D], then sum over H ----
    proj = jnp.einsum("hsd,hdo->hso", ctx.astype(jnp.bfloat16), wo3_ref[...],
                      preferred_element_type=jnp.float32)    # [H, S, D] f32
    attn_out = jnp.sum(proj, axis=0) + bo_ref[...]           # [S, D]

    # ---- residual + LayerNorm1 (f32 VPU math; v5e has no bf16 VPU/EUP) ----
    src = x + attn_out
    mu = jnp.mean(src, axis=-1, keepdims=True)
    var = jnp.mean((src - mu) ** 2, axis=-1, keepdims=True)
    src = (src - mu) * lax.rsqrt(var + 1e-5) * g1_ref[...] + be1_ref[...]

    # ---- feed-forward: Linear -> ReLU -> Linear (bf16 MXU, f32 accumulate) ----
    h1 = jnp.dot(src.astype(jnp.bfloat16), w1_ref[...],
                 preferred_element_type=jnp.float32) + bf1_ref[...]
    h1 = jnp.maximum(h1, 0.0)
    ff = jnp.dot(h1.astype(jnp.bfloat16), w2_ref[...],
                 preferred_element_type=jnp.float32) + bf2_ref[...]

    # ---- residual + LayerNorm2 ----
    src2 = src + ff
    mu2 = jnp.mean(src2, axis=-1, keepdims=True)
    var2 = jnp.mean((src2 - mu2) ** 2, axis=-1, keepdims=True)
    out_ref[0] = (src2 - mu2) * lax.rsqrt(var2 + 1e-5) * g2_ref[...] + be2_ref[...]


def transformer_encoder_layer(x, params, num_heads, *, single_buffer_weights=True):
    B, S, D = x.shape
    F = params["w1"].shape[1]
    assert D % num_heads == 0
    head_dim = D // num_heads

    # Fuse Q/K/V into one [D, 3D] weight / [1, 3D] bias; pre-cast matmul weights to
    # bf16 (halves weight DMA + VMEM; f32 accumulation inside the kernel).  Wo is
    # reshaped to [H, hd, D] so the kernel does a head-batched output projection.
    w_qkv = jnp.concatenate([params["wq"], params["wk"], params["wv"]],
                            axis=1).astype(jnp.bfloat16)
    b_qkv = jnp.concatenate([params["bq"], params["bk"], params["bv"]], axis=1)
    wo3 = params["wo"].reshape(num_heads, head_dim, D).astype(jnp.bfloat16)
    w1 = params["w1"].astype(jnp.bfloat16)
    w2 = params["w2"].astype(jnp.bfloat16)

    kernel = functools.partial(encoder_layer_kernel,
                               num_heads=num_heads, head_dim=head_dim)

    def wspec(shape):
        # Grid-invariant weight/bias block: same block every grid step.
        def idx(b, _rank=len(shape)):
            return (0,) * _rank
        if single_buffer_weights:
            # Single-buffer: Pallas never re-fetches these, so one VMEM copy is
            # enough -- critical on v7x's 64 MiB VMEM.
            return pl.BlockSpec(shape, idx, pipeline_mode=pl.Buffered(1))
        return pl.BlockSpec(shape, idx)

    in_specs = [
        pl.BlockSpec((1, S, D), lambda b: (b, 0, 0)),   # x (per-batch tile)
        wspec((D, 3 * D)), wspec((1, 3 * D)),           # fused Wqkv, bqkv
        wspec((num_heads, head_dim, D)), wspec((1, D)), # Wo (head-batched), bo
        wspec((1, D)), wspec((1, D)),                   # norm1 gamma, beta
        wspec((D, F)), wspec((1, F)),                   # W1, b1
        wspec((F, D)), wspec((1, D)),                   # W2, b2
        wspec((1, D)), wspec((1, D)),                   # norm2 gamma, beta
    ]
    out_specs = (
        pl.BlockSpec((1, S, D), lambda b: (b, 0, 0)),
        pl.BlockSpec((1, num_heads, S, S), lambda b: (b, 0, 0, 0)),
    )
    out_shape = (
        jax.ShapeDtypeStruct((B, S, D), jnp.float32),
        jax.ShapeDtypeStruct((B, num_heads, S, S), jnp.float32),
    )

    # Scoped-VMEM budget: weights (x1 or x2 buffers), biases + pipelined I/O blocks
    # (x2), plus in-kernel temporaries (qkv, head tensors, [H,S,S] scores, FFN
    # hidden) and headroom; capped at 40 MiB so it also fits v7x's 64 MiB VMEM.
    weight_bytes = (D * 3 * D + D * D + D * F + F * D) * 2            # bf16 weights
    bias_bytes = (3 * D + 6 * D + F) * 4                              # f32 biases/gains
    block_bytes = (2 * S * D + num_heads * S * S) * 4                 # x, out, attnw blocks
    tmp_bytes = (S * 3 * D * 6                                        # qkv f32 + bf16
                 + 3 * num_heads * S * head_dim * 2                   # q3, k3, v3
                 + 3 * num_heads * S * S * 4                          # scores / exp / weights
                 + num_heads * S * head_dim * 4 + num_heads * S * D * 4  # ctx, proj
                 + 2 * S * F * 4 + 4 * S * D * 4)                     # FFN hidden + misc
    wbuf = 1 if single_buffer_weights else 2
    vmem_bytes = int(min(max(wbuf * weight_bytes + 2 * (bias_bytes + block_bytes)
                             + tmp_bytes + (4 << 20), 16 << 20), 40 << 20))

    return pl.pallas_call(
        kernel,
        grid=(B,),
        in_specs=in_specs,
        out_specs=out_specs,
        out_shape=out_shape,
        compiler_params=pltpu.CompilerParams(
            dimension_semantics=("parallel",),
            vmem_limit_bytes=vmem_bytes),
    )(x, w_qkv, b_qkv, wo3, params["bo"],
      params["g1"], params["be1"],
      w1, params["bf1"], w2, params["bf2"],
      params["g2"], params["be2"])


def reference_layer(x, params, num_heads):
    """Pure-JAX f32 reference (same semantics as the PyTorch module, eval mode)."""
    B, S, D = x.shape
    hd = D // num_heads

    def split_heads(t):
        return t.reshape(B, S, num_heads, hd).transpose(0, 2, 1, 3)

    q = split_heads(x @ params["wq"] + params["bq"])
    k = split_heads(x @ params["wk"] + params["bk"])
    v = split_heads(x @ params["wv"] + params["bv"])

    s = jnp.einsum("bhqd,bhkd->bhqk", q, k) / math.sqrt(hd)
    causal = jnp.tril(jnp.ones((S, S), dtype=bool))
    s = jnp.where(causal[None, None], s, -1e30)
    w = jax.nn.softmax(s, axis=-1)
    ctx = jnp.einsum("bhqk,bhkd->bhqd", w, v)
    ctx = ctx.transpose(0, 2, 1, 3).reshape(B, S, D)
    attn_out = ctx @ params["wo"] + params["bo"]

    def layer_norm(t, g, b):
        mu = jnp.mean(t, axis=-1, keepdims=True)
        var = jnp.mean((t - mu) ** 2, axis=-1, keepdims=True)
        return (t - mu) * lax.rsqrt(var + 1e-5) * g + b

    src = layer_norm(x + attn_out, params["g1"], params["be1"])
    h1 = jnp.maximum(src @ params["w1"] + params["bf1"], 0.0)
    ff = h1 @ params["w2"] + params["bf2"]
    out = layer_norm(src + ff, params["g2"], params["be2"])
    return out, w


if __name__ == "__main__":
    # Small but lane-dense shapes: last dims of every stored output are 128-wide
    # (unmasked vst) and the matmul M dim is 128.
    B, S, D, H, F = 2, 128, 128, 4, 256   # batch, seq, d_model, heads, dim_feedforward

    key = jax.random.PRNGKey(0)
    keys = jax.random.split(key, 12)

    def init(k, shape, scale=0.1):
        return (jax.random.normal(k, shape) * scale).astype(jnp.float32)

    params = {
        "wq": init(keys[0], (D, D)), "bq": init(keys[1], (1, D)),
        "wk": init(keys[2], (D, D)), "bk": init(keys[3], (1, D)),
        "wv": init(keys[4], (D, D)), "bv": init(keys[5], (1, D)),
        "wo": init(keys[6], (D, D)), "bo": init(keys[7], (1, D)),
        "g1": jnp.ones((1, D), jnp.float32), "be1": jnp.zeros((1, D), jnp.float32),
        "w1": init(keys[8], (D, F)), "bf1": init(keys[9], (1, F)),
        "w2": init(keys[10], (F, D)), "bf2": init(keys[11], (1, D)),
        "g2": jnp.ones((1, D), jnp.float32), "be2": jnp.zeros((1, D), jnp.float32),
    }

    x = jax.random.normal(jax.random.PRNGKey(1), (B, S, D), dtype=jnp.float32)

    def run(single_buffer):
        o, w = transformer_encoder_layer(x, params, H,
                                         single_buffer_weights=single_buffer)
        jax.block_until_ready((o, w))
        return o, w

    try:
        out, attn_w = run(True)        # preferred: single-buffered weight blocks
    except Exception:
        out, attn_w = run(False)       # fallback: default double buffering

    ref_out, ref_w = reference_layer(x, params, H)
    err_out = float(jnp.max(jnp.abs(out - ref_out)))
    err_w = float(jnp.max(jnp.abs(attn_w - ref_w)))

    assert out.shape == (B, S, D)
    assert attn_w.shape == (B, H, S, S)
    assert bool(jnp.isfinite(out).all())
    assert bool(jnp.isfinite(attn_w).all())
    # Loose tolerances: bf16 matmul inputs + approx softmax reciprocal vs f32 reference.
    assert err_out < 0.2, f"output mismatch vs reference: {err_out}"
    assert err_w < 0.05, f"attention-weight mismatch vs reference: {err_w}"
    print("KERNEL_OK")
</pallas_src>

<mosaic_0001>
module attributes {stable_mosaic.version = 11 : i64} {
  func.func @encoder_layer_kernel(%arg0: i32, %arg1: memref<1x128x128xf32, #tpu.memory_space<vmem>>, %arg2: memref<128x384xbf16, #tpu.memory_space<vmem>>, %arg3: memref<1x384xf32, #tpu.memory_space<vmem>>, %arg4: memref<4x32x128xbf16, #tpu.memory_space<vmem>>, %arg5: memref<1x128xf32, #tpu.memory_space<vmem>>, %arg6: memref<1x128xf32, #tpu.memory_space<vmem>>, %arg7: memref<1x128xf32, #tpu.memory_space<vmem>>, %arg8: memref<128x256xbf16, #tpu.memory_space<vmem>>, %arg9: memref<1x256xf32, #tpu.memory_space<vmem>>, %arg10: memref<256x128xbf16, #tpu.memory_space<vmem>>, %arg11: memref<1x128xf32, #tpu.memory_space<vmem>>, %arg12: memref<1x128xf32, #tpu.memory_space<vmem>>, %arg13: memref<1x128xf32, #tpu.memory_space<vmem>>, %arg14: memref<1x128x128xf32, #tpu.memory_space<vmem>>, %arg15: memref<1x4x128x128xf32, #tpu.memory_space<vmem>>) attributes {dimension_semantics = [#tpu.dimension_semantics<parallel>], iteration_bounds = array<i64: 2>, scalar_prefetch = 0 : i64, scratch_operands = 0 : i64, tpu.core_type = #tpu.core_type<tc>, window_params = [{transform_indices = @transform_0, window_bounds = array<i64: 1, 128, 128>}, {pipeline_mode = #tpu.pipeline_mode<synchronous>, transform_indices = @transform_1, window_bounds = array<i64: 128, 384>}, {pipeline_mode = #tpu.pipeline_mode<synchronous>, transform_indices = @transform_2, window_bounds = array<i64: 1, 384>}, {pipeline_mode = #tpu.pipeline_mode<synchronous>, transform_indices = @transform_3, window_bounds = array<i64: 4, 32, 128>}, {pipeline_mode = #tpu.pipeline_mode<synchronous>, transform_indices = @transform_4, window_bounds = array<i64: 1, 128>}, {pipeline_mode = #tpu.pipeline_mode<synchronous>, transform_indices = @transform_5, window_bounds = array<i64: 1, 128>}, {pipeline_mode = #tpu.pipeline_mode<synchronous>, transform_indices = @transform_6, window_bounds = array<i64: 1, 128>}, {pipeline_mode = #tpu.pipeline_mode<synchronous>, transform_indices = @transform_7, window_bounds = array<i64: 128, 256>}, {pipeline_mode = #tpu.pipeline_mode<synchronous>, transform_indices = @transform_8, window_bounds = array<i64: 1, 256>}, {pipeline_mode = #tpu.pipeline_mode<synchronous>, transform_indices = @transform_9, window_bounds = array<i64: 256, 128>}, {pipeline_mode = #tpu.pipeline_mode<synchronous>, transform_indices = @transform_10, window_bounds = array<i64: 1, 128>}, {pipeline_mode = #tpu.pipeline_mode<synchronous>, transform_indices = @transform_11, window_bounds = array<i64: 1, 128>}, {pipeline_mode = #tpu.pipeline_mode<synchronous>, transform_indices = @transform_12, window_bounds = array<i64: 1, 128>}, {transform_indices = @transform_13, window_bounds = array<i64: 1, 128, 128>}, {transform_indices = @transform_14, window_bounds = array<i64: 1, 4, 128, 128>}]} {
    %c0 = arith.constant 0 : index
    %c0_0 = arith.constant 0 : index
    %c0_1 = arith.constant 0 : index
    %0 = vector.load %arg1[%c0, %c0_0, %c0_1] : memref<1x128x128xf32, #tpu.memory_space<vmem>>, vector<1x128x128xf32>
    %1 = vector.shape_cast %0 : vector<1x128x128xf32> to vector<128x128xf32>
    %2 = arith.truncf %1 : vector<128x128xf32> to vector<128x128xbf16>
    %c0_2 = arith.constant 0 : index
    %c0_3 = arith.constant 0 : index
    %3 = vector.load %arg2[%c0_2, %c0_3] : memref<128x384xbf16, #tpu.memory_space<vmem>>, vector<128x384xbf16>
    %cst = arith.constant dense<0.000000e+00> : vector<128x384xf32>
    %4 = tpu.matmul %2, %3, %cst {dimension_numbers = #tpu.dot_dimension_numbers<[1], [0], [0], [1], [0, 0, 1, 1], [], []>} : vector<128x128xbf16>, vector<128x384xbf16>, vector<128x384xf32> -> vector<128x384xf32>
    %c0_4 = arith.constant 0 : index
    %c0_5 = arith.constant 0 : index
    %5 = vector.load %arg3[%c0_4, %c0_5] : memref<1x384xf32, #tpu.memory_space<vmem>>, vector<1x384xf32>
    %6 = vector.broadcast %5 : vector<1x384xf32> to vector<128x384xf32>
    %7 = arith.addf %4, %6 : vector<128x384xf32>
    %8 = arith.truncf %7 : vector<128x384xf32> to vector<128x384xbf16>
    %9 = vector.extract_strided_slice %8 {offsets = [0, 0], sizes = [128, 32], strides = [1, 1]} : vector<128x384xbf16> to vector<128x32xbf16>
    %10 = vector.extract_strided_slice %8 {offsets = [0, 32], sizes = [128, 32], strides = [1, 1]} : vector<128x384xbf16> to vector<128x32xbf16>
    %11 = vector.extract_strided_slice %8 {offsets = [0, 64], sizes = [128, 32], strides = [1, 1]} : vector<128x384xbf16> to vector<128x32xbf16>
    %12 = vector.extract_strided_slice %8 {offsets = [0, 96], sizes = [128, 32], strides = [1, 1]} : vector<128x384xbf16> to vector<128x32xbf16>
    %13 = vector.shape_cast %9 : vector<128x32xbf16> to vector<1x128x32xbf16>
    %14 = vector.shape_cast %10 : vector<128x32xbf16> to vector<1x128x32xbf16>
    %15 = vector.shape_cast %11 : vector<128x32xbf16> to vector<1x128x32xbf16>
    %16 = vector.shape_cast %12 : vector<128x32xbf16> to vector<1x128x32xbf16>
    %17 = tpu.concatenate %13, %14, %15, %16 in 0 : vector<1x128x32xbf16>, vector<1x128x32xbf16>, vector<1x128x32xbf16>, vector<1x128x32xbf16> -> vector<4x128x32xbf16>
    %18 = vector.extract_strided_slice %8 {offsets = [0, 128], sizes = [128, 32], strides = [1, 1]} : vector<128x384xbf16> to vector<128x32xbf16>
    %19 = vector.extract_strided_slice %8 {offsets = [0, 160], sizes = [128, 32], strides = [1, 1]} : vector<128x384xbf16> to vector<128x32xbf16>
    %20 = vector.extract_strided_slice %8 {offsets = [0, 192], sizes = [128, 32], strides = [1, 1]} : vector<128x384xbf16> to vector<128x32xbf16>
    %21 = vector.extract_strided_slice %8 {offsets = [0, 224], sizes = [128, 32], strides = [1, 1]} : vector<128x384xbf16> to vector<128x32xbf16>
    %22 = vector.shape_cast %18 : vector<128x32xbf16> to vector<1x128x32xbf16>
    %23 = vector.shape_cast %19 : vector<128x32xbf16> to vector<1x128x32xbf16>
    %24 = vector.shape_cast %20 : vector<128x32xbf16> to vector<1x128x32xbf16>
    %25 = vector.shape_cast %21 : vector<128x32xbf16> to vector<1x128x32xbf16>
    %26 = tpu.concatenate %22, %23, %24, %25 in 0 : vector<1x128x32xbf16>, vector<1x128x32xbf16>, vector<1x128x32xbf16>, vector<1x128x32xbf16> -> vector<4x128x32xbf16>
    %27 = vector.extract_strided_slice %8 {offsets = [0, 256], sizes = [128, 32], strides = [1, 1]} : vector<128x384xbf16> to vector<128x32xbf16>
    %28 = vector.extract_strided_slice %8 {offsets = [0, 288], sizes = [128, 32], strides = [1, 1]} : vector<128x384xbf16> to vector<128x32xbf16>
    %29 = vector.extract_strided_slice %8 {offsets = [0, 320], sizes = [128, 32], strides = [1, 1]} : vector<128x384xbf16> to vector<128x32xbf16>
    %30 = vector.extract_strided_slice %8 {offsets = [0, 352], sizes = [128, 32], strides = [1, 1]} : vector<128x384xbf16> to vector<128x32xbf16>
    %31 = vector.shape_cast %27 : vector<128x32xbf16> to vector<1x128x32xbf16>
    %32 = vector.shape_cast %28 : vector<128x32xbf16> to vector<1x128x32xbf16>
    %33 = vector.shape_cast %29 : vector<128x32xbf16> to vector<1x128x32xbf16>
    %34 = vector.shape_cast %30 : vector<128x32xbf16> to vector<1x128x32xbf16>
    %35 = tpu.concatenate %31, %32, %33, %34 in 0 : vector<1x128x32xbf16>, vector<1x128x32xbf16>, vector<1x128x32xbf16>, vector<1x128x32xbf16> -> vector<4x128x32xbf16>
    %36 = tpu.iota {dimensions = array<i32: 0>} : vector<128x128xi32>
    %37 = tpu.iota {dimensions = array<i32: 1>} : vector<128x128xi32>
    %38 = arith.cmpi sge, %36, %37 : vector<128x128xi32>
    %cst_6 = arith.constant 0.000000e+00 : f32
    %cst_7 = arith.constant -1.000000e+30 : f32
    %39 = vector.broadcast %cst_6 : f32 to vector<128x128xf32>
    %40 = vector.broadcast %cst_7 : f32 to vector<128x128xf32>
    %41 = arith.select %38, %39, %40 : vector<128x128xi1>, vector<128x128xf32>
    "tpu.trace_start"() <{level = 10 : i32, message = "hqd,hkd->hqk"}> : () -> ()
    %cst_8 = arith.constant dense<0.000000e+00> : vector<4x128x128xf32>
    %42 = tpu.matmul %17, %26, %cst_8 {dimension_numbers = #tpu.dot_dimension_numbers<[2], [2], [1], [1], [0, 0, 0, 1, 1, 1], [0], [0]>} : vector<4x128x32xbf16>, vector<4x128x32xbf16>, vector<4x128x128xf32> -> vector<4x128x128xf32>
    "tpu.trace_stop"() : () -> ()
    %cst_9 = arith.constant 0.176776692 : f32
    %43 = vector.broadcast %cst_9 : f32 to vector<4x128x128xf32>
    %44 = arith.mulf %42, %43 : vector<4x128x128xf32>
    %45 = vector.shape_cast %41 : vector<128x128xf32> to vector<1x128x128xf32>
    %46 = vector.broadcast %45 : vector<1x128x128xf32> to vector<4x128x128xf32>
    %47 = arith.addf %44, %46 : vector<4x128x128xf32>
    %cst_10 = arith.constant dense<0xFF800000> : vector<4x128xf32>
    %48 = vector.multi_reduction <maximumf>, %47, %cst_10 [2] : vector<4x128x128xf32> to vector<4x128xf32>
    %49 = vector.shape_cast %48 : vector<4x128xf32> to vector<4x128x1xf32>
    %50 = vector.broadcast %49 : vector<4x128x1xf32> to vector<4x128x128xf32>
    %51 = arith.subf %47, %50 : vector<4x128x128xf32>
    %52 = math.exp %51 : vector<4x128x128xf32>
    %cst_11 = arith.constant dense<0.000000e+00> : vector<4x128xf32>
    %53 = vector.multi_reduction <add>, %52, %cst_11 [2] : vector<4x128x128xf32> to vector<4x128xf32>
    %54 = vector.shape_cast %53 : vector<4x128xf32> to vector<4x128x1xf32>
    %55 = tpu.reciprocal %54 {approx = true} : vector<4x128x1xf32> -> vector<4x128x1xf32>
    %56 = vector.broadcast %55 : vector<4x128x1xf32> to vector<4x128x128xf32>
    %57 = arith.mulf %52, %56 : vector<4x128x128xf32>
    %c0_12 = arith.constant 0 : index
    %c0_13 = arith.constant 0 : index
    %c0_14 = arith.constant 0 : index
    %c0_15 = arith.constant 0 : index
    %58 = vector.load %arg15[%c0_12, %c0_13, %c0_14, %c0_15] : memref<1x4x128x128xf32, #tpu.memory_space<vmem>>, vector<1x4x128x128xf32>
    %59 = vector.shape_cast %58 : vector<1x4x128x128xf32> to vector<4x128x128xf32>
    %60 = vector.shape_cast %57 : vector<4x128x128xf32> to vector<1x4x128x128xf32>
    tpu.vector_store %arg15[%c0_12, %c0_13, %c0_14, %c0_15], %60 {strides = array<i32>} : memref<1x4x128x128xf32, #tpu.memory_space<vmem>>, vector<1x4x128x128xf32>,
    %61 = arith.truncf %57 : vector<4x128x128xf32> to vector<4x128x128xbf16>
    "tpu.trace_start"() <{level = 10 : i32, message = "hqk,hkd->hqd"}> : () -> ()
    %cst_16 = arith.constant dense<0.000000e+00> : vector<4x128x32xf32>
    %62 = tpu.matmul %61, %35, %cst_16 {dimension_numbers = #tpu.dot_dimension_numbers<[2], [1], [1], [2], [0, 0, 0, 1, 1, 2], [0], [0]>} : vector<4x128x128xbf16>, vector<4x128x32xbf16>, vector<4x128x32xf32> -> vector<4x128x32xf32>
    "tpu.trace_stop"() : () -> ()
    %63 = arith.truncf %62 : vector<4x128x32xf32> to vector<4x128x32xbf16>
    %c0_17 = arith.constant 0 : index
    %c0_18 = arith.constant 0 : index
    %c0_19 = arith.constant 0 : index
    %64 = vector.load %arg4[%c0_17, %c0_18, %c0_19] : memref<4x32x128xbf16, #tpu.memory_space<vmem>>, vector<4x32x128xbf16>
    "tpu.trace_start"() <{level = 10 : i32, message = "hsd,hdo->hso"}> : () -> ()
    %cst_20 = arith.constant dense<0.000000e+00> : vector<4x128x128xf32>
    %65 = tpu.matmul %63, %64, %cst_20 {dimension_numbers = #tpu.dot_dimension_numbers<[2], [1], [1], [2], [0, 0, 0, 1, 1, 2], [0], [0]>} : vector<4x128x32xbf16>, vector<4x32x128xbf16>, vector<4x128x128xf32> -> vector<4x128x128xf32>
    "tpu.trace_stop"() : () -> ()
    %cst_21 = arith.constant dense<0.000000e+00> : vector<128x128xf32>
    %66 = vector.multi_reduction <add>, %65, %cst_21 [0] : vector<4x128x128xf32> to vector<128x128xf32>
    %c0_22 = arith.constant 0 : index
    %c0_23 = arith.constant 0 : index
    %67 = vector.load %arg5[%c0_22, %c0_23] : memref<1x128xf32, #tpu.memory_space<vmem>>, vector<1x128xf32>
    %68 = vector.broadcast %67 : vector<1x128xf32> to vector<128x128xf32>
    %69 = arith.addf %66, %68 : vector<128x128xf32>
    %70 = arith.addf %1, %69 : vector<128x128xf32>
    %cst_24 = arith.constant dense<0.000000e+00> : vector<128xf32>
    %71 = vector.multi_reduction <add>, %70, %cst_24 [1] : vector<128x128xf32> to vector<128xf32>
    %72 = vector.shape_cast %71 : vector<128xf32> to vector<128x1xf32>
    %cst_25 = arith.constant 1.280000e+02 : f32
    %73 = vector.broadcast %cst_25 : f32 to vector<128x1xf32>
    %74 = arith.divf %72, %73 : vector<128x1xf32>
    %75 = vector.broadcast %74 : vector<128x1xf32> to vector<128x128xf32>
    %76 = arith.subf %70, %75 : vector<128x128xf32>
    %77 = arith.mulf %76, %76 : vector<128x128xf32>
    %cst_26 = arith.constant dense<0.000000e+00> : vector<128xf32>
    %78 = vector.multi_reduction <add>, %77, %cst_26 [1] : vector<128x128xf32> to vector<128xf32>
    %79 = vector.shape_cast %78 : vector<128xf32> to vector<128x1xf32>
    %cst_27 = arith.constant 1.280000e+02 : f32
    %80 = vector.broadcast %cst_27 : f32 to vector<128x1xf32>
    %81 = arith.divf %79, %80 : vector<128x1xf32>
    %82 = vector.broadcast %74 : vector<128x1xf32> to vector<128x128xf32>
    %83 = arith.subf %70, %82 : vector<128x128xf32>
    %cst_28 = arith.constant 9.99999974E-6 : f32
    %84 = vector.broadcast %cst_28 : f32 to vector<128x1xf32>
    %85 = arith.addf %81, %84 : vector<128x1xf32>
    %86 = math.rsqrt %85 : vector<128x1xf32>
    %87 = vector.broadcast %86 : vector<128x1xf32> to vector<128x128xf32>
    %88 = arith.mulf %83, %87 : vector<128x128xf32>
    %c0_29 = arith.constant 0 : index
    %c0_30 = arith.constant 0 : index
    %89 = vector.load %arg6[%c0_29, %c0_30] : memref<1x128xf32, #tpu.memory_space<vmem>>, vector<1x128xf32>
    %90 = vector.broadcast %89 : vector<1x128xf32> to vector<128x128xf32>
    %91 = arith.mulf %88, %90 : vector<128x128xf32>
    %c0_31 = arith.constant 0 : index
    %c0_32 = arith.constant 0 : index
    %92 = vector.load %arg7[%c0_31, %c0_32] : memref<1x128xf32, #tpu.memory_space<vmem>>, vector<1x128xf32>
    %93 = vector.broadcast %92 : vector<1x128xf32> to vector<128x128xf32>
    %94 = arith.addf %91, %93 : vector<128x128xf32>
    %95 = arith.truncf %94 : vector<128x128xf32> to vector<128x128xbf16>
    %c0_33 = arith.constant 0 : index
    %c0_34 = arith.constant 0 : index
    %96 = vector.load %arg8[%c0_33, %c0_34] : memref<128x256xbf16, #tpu.memory_space<vmem>>, vector<128x256xbf16>
    %cst_35 = arith.constant dense<0.000000e+00> : vector<128x256xf32>
    %97 = tpu.matmul %95, %96, %cst_35 {dimension_numbers = #tpu.dot_dimension_numbers<[1], [0], [0], [1], [0, 0, 1, 1], [], []>} : vector<128x128xbf16>, vector<128x256xbf16>, vector<128x256xf32> -> vector<128x256xf32>
    %c0_36 = arith.constant 0 : index
    %c0_37 = arith.constant 0 : index
    %98 = vector.load %arg9[%c0_36, %c0_37] : memref<1x256xf32, #tpu.memory_space<vmem>>, vector<1x256xf32>
    %99 = vector.broadcast %98 : vector<1x256xf32> to vector<128x256xf32>
    %100 = arith.addf %97, %99 : vector<128x256xf32>
    %cst_38 = arith.constant 0.000000e+00 : f32
    %101 = vector.broadcast %cst_38 : f32 to vector<128x256xf32>
    %102 = arith.maximumf %100, %101 : vector<128x256xf32>
    %103 = arith.truncf %102 : vector<128x256xf32> to vector<128x256xbf16>
    %c0_39 = arith.constant 0 : index
    %c0_40 = arith.constant 0 : index
    %104 = vector.load %arg10[%c0_39, %c0_40] : memref<256x128xbf16, #tpu.memory_space<vmem>>, vector<256x128xbf16>
    %cst_41 = arith.constant dense<0.000000e+00> : vector<128x128xf32>
    %105 = tpu.matmul %103, %104, %cst_41 {dimension_numbers = #tpu.dot_dimension_numbers<[1], [0], [0], [1], [0, 0, 1, 1], [], []>} : vector<128x256xbf16>, vector<256x128xbf16>, vector<128x128xf32> -> vector<128x128xf32>
    %c0_42 = arith.constant 0 : index
    %c0_43 = arith.constant 0 : index
    %106 = vector.load %arg11[%c0_42, %c0_43] : memref<1x128xf32, #tpu.memory_space<vmem>>, vector<1x128xf32>
    %107 = vector.broadcast %106 : vector<1x128xf32> to vector<128x128xf32>
    %108 = arith.addf %105, %107 : vector<128x128xf32>
    %109 = arith.addf %94, %108 : vector<128x128xf32>
    %cst_44 = arith.constant dense<0.000000e+00> : vector<128xf32>
    %110 = vector.multi_reduction <add>, %109, %cst_44 [1] : vector<128x128xf32> to vector<128xf32>
    %111 = vector.shape_cast %110 : vector<128xf32> to vector<128x1xf32>
    %cst_45 = arith.constant 1.280000e+02 : f32
    %112 = vector.broadcast %cst_45 : f32 to vector<128x1xf32>
    %113 = arith.divf %111, %112 : vector<128x1xf32>
    %114 = vector.broadcast %113 : vector<128x1xf32> to vector<128x128xf32>
    %115 = arith.subf %109, %114 : vector<128x128xf32>
    %116 = arith.mulf %115, %115 : vector<128x128xf32>
    %cst_46 = arith.constant dense<0.000000e+00> : vector<128xf32>
    %117 = vector.multi_reduction <add>, %116, %cst_46 [1] : vector<128x128xf32> to vector<128xf32>
    %118 = vector.shape_cast %117 : vector<128xf32> to vector<128x1xf32>
    %cst_47 = arith.constant 1.280000e+02 : f32
    %119 = vector.broadcast %cst_47 : f32 to vector<128x1xf32>
    %120 = arith.divf %118, %119 : vector<128x1xf32>
    %121 = vector.broadcast %113 : vector<128x1xf32> to vector<128x128xf32>
    %122 = arith.subf %109, %121 : vector<128x128xf32>
    %cst_48 = arith.constant 9.99999974E-6 : f32
    %123 = vector.broadcast %cst_48 : f32 to vector<128x1xf32>
    %124 = arith.addf %120, %123 : vector<128x1xf32>
    %125 = math.rsqrt %124 : vector<128x1xf32>
    %126 = vector.broadcast %125 : vector<128x1xf32> to vector<128x128xf32>
    %127 = arith.mulf %122, %126 : vector<128x128xf32>
    %c0_49 = arith.constant 0 : index
    %c0_50 = arith.constant 0 : index
    %128 = vector.load %arg12[%c0_49, %c0_50] : memref<1x128xf32, #tpu.memory_space<vmem>>, vector<1x128xf32>
    %129 = vector.broadcast %128 : vector<1x128xf32> to vector<128x128xf32>
    %130 = arith.mulf %127, %129 : vector<128x128xf32>
    %c0_51 = arith.constant 0 : index
    %c0_52 = arith.constant 0 : index
    %131 = vector.load %arg13[%c0_51, %c0_52] : memref<1x128xf32, #tpu.memory_space<vmem>>, vector<1x128xf32>
    %132 = vector.broadcast %131 : vector<1x128xf32> to vector<128x128xf32>
    %133 = arith.addf %130, %132 : vector<128x128xf32>
    %c0_53 = arith.constant 0 : index
    %c0_54 = arith.constant 0 : index
    %c0_55 = arith.constant 0 : index
    %134 = vector.load %arg14[%c0_53, %c0_54, %c0_55] : memref<1x128x128xf32, #tpu.memory_space<vmem>>, vector<1x128x128xf32>
    %135 = vector.shape_cast %134 : vector<1x128x128xf32> to vector<128x128xf32>
    %136 = vector.shape_cast %133 : vector<128x128xf32> to vector<1x128x128xf32>
    tpu.vector_store %arg14[%c0_53, %c0_54, %c0_55], %136 {strides = array<i32>} : memref<1x128x128xf32, #tpu.memory_space<vmem>>, vector<1x128x128xf32>,
    return
  }
  func.func @transform_0(%arg0: i32) -> (i32, i32, i32) {
    %c0_i32 = arith.constant 0 : i32
    %c0_i32_0 = arith.constant 0 : i32
    %c0_i32_1 = arith.constant 0 : i32
    return %arg0, %c0_i32, %c0_i32_0 : i32, i32, i32
  }
  func.func @transform_1(%arg0: i32) -> (i32, i32) {
    %c0_i32 = arith.constant 0 : i32
    %c0_i32_0 = arith.constant 0 : i32
    %c0_i32_1 = arith.constant 0 : i32
    return %c0_i32, %c0_i32_0 : i32, i32
  }
  func.func @transform_2(%arg0: i32) -> (i32, i32) {
    %c0_i32 = arith.constant 0 : i32
    %c0_i32_0 = arith.constant 0 : i32
    %c0_i32_1 = arith.constant 0 : i32
    return %c0_i32, %c0_i32_0 : i32, i32
  }
  func.func @transform_3(%arg0: i32) -> (i32, i32, i32) {
    %c0_i32 = arith.constant 0 : i32
    %c0_i32_0 = arith.constant 0 : i32
    %c0_i32_1 = arith.constant 0 : i32
    %c0_i32_2 = arith.constant 0 : i32
    return %c0_i32, %c0_i32_0, %c0_i32_1 : i32, i32, i32
  }
  func.func @transform_4(%arg0: i32) -> (i32, i32) {
    %c0_i32 = arith.constant 0 : i32
    %c0_i32_0 = arith.constant 0 : i32
    %c0_i32_1 = arith.constant 0 : i32
    return %c0_i32, %c0_i32_0 : i32, i32
  }
  func.func @transform_5(%arg0: i32) -> (i32, i32) {
    %c0_i32 = arith.constant 0 : i32
    %c0_i32_0 = arith.constant 0 : i32
    %c0_i32_1 = arith.constant 0 : i32
    return %c0_i32, %c0_i32_0 : i32, i32
  }
  func.func @transform_6(%arg0: i32) -> (i32, i32) {
    %c0_i32 = arith.constant 0 : i32
    %c0_i32_0 = arith.constant 0 : i32
    %c0_i32_1 = arith.constant 0 : i32
    return %c0_i32, %c0_i32_0 : i32, i32
  }
  func.func @transform_7(%arg0: i32) -> (i32, i32) {
    %c0_i32 = arith.constant 0 : i32
    %c0_i32_0 = arith.constant 0 : i32
    %c0_i32_1 = arith.constant 0 : i32
    return %c0_i32, %c0_i32_0 : i32, i32
  }
  func.func @transform_8(%arg0: i32) -> (i32, i32) {
    %c0_i32 = arith.constant 0 : i32
    %c0_i32_0 = arith.constant 0 : i32
    %c0_i32_1 = arith.constant 0 : i32
    return %c0_i32, %c0_i32_0 : i32, i32
  }
  func.func @transform_9(%arg0: i32) -> (i32, i32) {
    %c0_i32 = arith.constant 0 : i32
    %c0_i32_0 = arith.constant 0 : i32
    %c0_i32_1 = arith.constant 0 : i32
    return %c0_i32, %c0_i32_0 : i32, i32
  }
  func.func @transform_10(%arg0: i32) -> (i32, i32) {
    %c0_i32 = arith.constant 0 : i32
    %c0_i32_0 = arith.constant 0 : i32
    %c0_i32_1 = arith.constant 0 : i32
    return %c0_i32, %c0_i32_0 : i32, i32
  }
  func.func @transform_11(%arg0: i32) -> (i32, i32) {
    %c0_i32 = arith.constant 0 : i32
    %c0_i32_0 = arith.constant 0 : i32
    %c0_i32_1 = arith.constant 0 : i32
    return %c0_i32, %c0_i32_0 : i32, i32
  }
  func.func @transform_12(%arg0: i32) -> (i32, i32) {
    %c0_i32 = arith.constant 0 : i32
    %c0_i32_0 = arith.constant 0 : i32
    %c0_i32_1 = arith.constant 0 : i32
    return %c0_i32, %c0_i32_0 : i32, i32
  }
  func.func @transform_13(%arg0: i32) -> (i32, i32, i32) {
    %c0_i32 = arith.constant 0 : i32
    %c0_i32_0 = arith.constant 0 : i32
    %c0_i32_1 = arith.constant 0 : i32
    return %arg0, %c0_i32, %c0_i32_0 : i32, i32, i32
  }
  func.func @transform_14(%arg0: i32) -> (i32, i32, i32, i32) {
    %c0_i32 = arith.constant 0 : i32
    %c0_i32_0 = arith.constant 0 : i32
    %c0_i32_1 = arith.constant 0 : i32
    %c0_i32_2 = arith.constant 0 : i32
    return %arg0, %c0_i32, %c0_i32_0, %c0_i32_1 : i32, i32, i32, i32
  }
}

module attributes {stable_mosaic.version = 11 : i64} {
  func.func @encoder_layer_kernel(%arg0: i32, %arg1: memref<1x128x128xf32, #tpu.memory_space<vmem>>, %arg2: memref<128x384xbf16, #tpu.memory_space<vmem>>, %arg3: memref<1x384xf32, #tpu.memory_space<vmem>>, %arg4: memref<4x32x128xbf16, #tpu.memory_space<vmem>>, %arg5: memref<1x128xf32, #tpu.memory_space<vmem>>, %arg6: memref<1x128xf32, #tpu.memory_space<vmem>>, %arg7: memref<1x128xf32, #tpu.memory_space<vmem>>, %arg8: memref<128x256xbf16, #tpu.memory_space<vmem>>, %arg9: memref<1x256xf32, #tpu.memory_space<vmem>>, %arg10: memref<256x128xbf16, #tpu.memory_space<vmem>>, %arg11: memref<1x128xf32, #tpu.memory_space<vmem>>, %arg12: memref<1x128xf32, #tpu.memory_space<vmem>>, %arg13: memref<1x128xf32, #tpu.memory_space<vmem>>, %arg14: memref<1x128x128xf32, #tpu.memory_space<vmem>>, %arg15: memref<1x4x128x128xf32, #tpu.memory_space<vmem>>) attributes {dimension_semantics = [#tpu.dimension_semantics<parallel>], iteration_bounds = array<i64: 2>, scalar_prefetch = 0 : i64, scratch_operands = 0 : i64, tpu.core_type = #tpu.core_type<tc>, window_params = [{transform_indices = @transform_0, window_bounds = array<i64: 1, 128, 128>}, {pipeline_mode = #tpu.pipeline_mode<synchronous>, transform_indices = @transform_1, window_bounds = array<i64: 128, 384>}, {pipeline_mode = #tpu.pipeline_mode<synchronous>, transform_indices = @transform_2, window_bounds = array<i64: 1, 384>}, {pipeline_mode = #tpu.pipeline_mode<synchronous>, transform_indices = @transform_3, window_bounds = array<i64: 4, 32, 128>}, {pipeline_mode = #tpu.pipeline_mode<synchronous>, transform_indices = @transform_4, window_bounds = array<i64: 1, 128>}, {pipeline_mode = #tpu.pipeline_mode<synchronous>, transform_indices = @transform_5, window_bounds = array<i64: 1, 128>}, {pipeline_mode = #tpu.pipeline_mode<synchronous>, transform_indices = @transform_6, window_bounds = array<i64: 1, 128>}, {pipeline_mode = #tpu.pipeline_mode<synchronous>, transform_indices = @transform_7, window_bounds = array<i64: 128, 256>}, {pipeline_mode = #tpu.pipeline_mode<synchronous>, transform_indices = @transform_8, window_bounds = array<i64: 1, 256>}, {pipeline_mode = #tpu.pipeline_mode<synchronous>, transform_indices = @transform_9, window_bounds = array<i64: 256, 128>}, {pipeline_mode = #tpu.pipeline_mode<synchronous>, transform_indices = @transform_10, window_bounds = array<i64: 1, 128>}, {pipeline_mode = #tpu.pipeline_mode<synchronous>, transform_indices = @transform_11, window_bounds = array<i64: 1, 128>}, {pipeline_mode = #tpu.pipeline_mode<synchronous>, transform_indices = @transform_12, window_bounds = array<i64: 1, 128>}, {transform_indices = @transform_13, window_bounds = array<i64: 1, 128, 128>}, {transform_indices = @transform_14, window_bounds = array<i64: 1, 4, 128, 128>}]} {
    %c0 = arith.constant 0 : index
    %c0_0 = arith.constant 0 : index
    %c0_1 = arith.constant 0 : index
    %0 = vector.load %arg1[%c0, %c0_0, %c0_1] : memref<1x128x128xf32, #tpu.memory_space<vmem>>, vector<1x128x128xf32>
    %1 = vector.shape_cast %0 : vector<1x128x128xf32> to vector<128x128xf32>
    %2 = arith.truncf %1 : vector<128x128xf32> to vector<128x128xbf16>
    %c0_2 = arith.constant 0 : index
    %c0_3 = arith.constant 0 : index
    %3 = vector.load %arg2[%c0_2, %c0_3] : memref<128x384xbf16, #tpu.memory_space<vmem>>, vector<128x384xbf16>
    %cst = arith.constant dense<0.000000e+00> : vector<128x384xf32>
    %4 = tpu.matmul %2, %3, %cst {dimension_numbers = #tpu.dot_dimension_numbers<[1], [0], [0], [1], [0, 0, 1, 1], [], []>} : vector<128x128xbf16>, vector<128x384xbf16>, vector<128x384xf32> -> vector<128x384xf32>
    %c0_4 = arith.constant 0 : index
    %c0_5 = arith.constant 0 : index
    %5 = vector.load %arg3[%c0_4, %c0_5] : memref<1x384xf32, #tpu.memory_space<vmem>>, vector<1x384xf32>
    %6 = vector.broadcast %5 : vector<1x384xf32> to vector<128x384xf32>
    %7 = arith.addf %4, %6 : vector<128x384xf32>
    %8 = arith.truncf %7 : vector<128x384xf32> to vector<128x384xbf16>
    %9 = vector.extract_strided_slice %8 {offsets = [0, 0], sizes = [128, 32], strides = [1, 1]} : vector<128x384xbf16> to vector<128x32xbf16>
    %10 = vector.extract_strided_slice %8 {offsets = [0, 32], sizes = [128, 32], strides = [1, 1]} : vector<128x384xbf16> to vector<128x32xbf16>
    %11 = vector.extract_strided_slice %8 {offsets = [0, 64], sizes = [128, 32], strides = [1, 1]} : vector<128x384xbf16> to vector<128x32xbf16>
    %12 = vector.extract_strided_slice %8 {offsets = [0, 96], sizes = [128, 32], strides = [1, 1]} : vector<128x384xbf16> to vector<128x32xbf16>
    %13 = vector.shape_cast %9 : vector<128x32xbf16> to vector<1x128x32xbf16>
    %14 = vector.shape_cast %10 : vector<128x32xbf16> to vector<1x128x32xbf16>
    %15 = vector.shape_cast %11 : vector<128x32xbf16> to vector<1x128x32xbf16>
    %16 = vector.shape_cast %12 : vector<128x32xbf16> to vector<1x128x32xbf16>
    %17 = tpu.concatenate %13, %14, %15, %16 in 0 : vector<1x128x32xbf16>, vector<1x128x32xbf16>, vector<1x128x32xbf16>, vector<1x128x32xbf16> -> vector<4x128x32xbf16>
    %18 = vector.extract_strided_slice %8 {offsets = [0, 128], sizes = [128, 32], strides = [1, 1]} : vector<128x384xbf16> to vector<128x32xbf16>
    %19 = vector.extract_strided_slice %8 {offsets = [0, 160], sizes = [128, 32], strides = [1, 1]} : vector<128x384xbf16> to vector<128x32xbf16>
    %20 = vector.extract_strided_slice %8 {offsets = [0, 192], sizes = [128, 32], strides = [1, 1]} : vector<128x384xbf16> to vector<128x32xbf16>
    %21 = vector.extract_strided_slice %8 {offsets = [0, 224], sizes = [128, 32], strides = [1, 1]} : vector<128x384xbf16> to vector<128x32xbf16>
    %22 = vector.shape_cast %18 : vector<128x32xbf16> to vector<1x128x32xbf16>
    %23 = vector.shape_cast %19 : vector<128x32xbf16> to vector<1x128x32xbf16>
    %24 = vector.shape_cast %20 : vector<128x32xbf16> to vector<1x128x32xbf16>
    %25 = vector.shape_cast %21 : vector<128x32xbf16> to vector<1x128x32xbf16>
    %26 = tpu.concatenate %22, %23, %24, %25 in 0 : vector<1x128x32xbf16>, vector<1x128x32xbf16>, vector<1x128x32xbf16>, vector<1x128x32xbf16> -> vector<4x128x32xbf16>
    %27 = vector.extract_strided_slice %8 {offsets = [0, 256], sizes = [128, 32], strides = [1, 1]} : vector<128x384xbf16> to vector<128x32xbf16>
    %28 = vector.extract_strided_slice %8 {offsets = [0, 288], sizes = [128, 32], strides = [1, 1]} : vector<128x384xbf16> to vector<128x32xbf16>
    %29 = vector.extract_strided_slice %8 {offsets = [0, 320], sizes = [128, 32], strides = [1, 1]} : vector<128x384xbf16> to vector<128x32xbf16>
    %30 = vector.extract_strided_slice %8 {offsets = [0, 352], sizes = [128, 32], strides = [1, 1]} : vector<128x384xbf16> to vector<128x32xbf16>
    %31 = vector.shape_cast %27 : vector<128x32xbf16> to vector<1x128x32xbf16>
    %32 = vector.shape_cast %28 : vector<128x32xbf16> to vector<1x128x32xbf16>
    %33 = vector.shape_cast %29 : vector<128x32xbf16> to vector<1x128x32xbf16>
    %34 = vector.shape_cast %30 : vector<128x32xbf16> to vector<1x128x32xbf16>
    %35 = tpu.concatenate %31, %32, %33, %34 in 0 : vector<1x128x32xbf16>, vector<1x128x32xbf16>, vector<1x128x32xbf16>, vector<1x128x32xbf16> -> vector<4x128x32xbf16>
    %36 = tpu.iota {dimensions = array<i32: 0>} : vector<128x128xi32>
    %37 = tpu.iota {dimensions = array<i32: 1>} : vector<128x128xi32>
    %38 = arith.cmpi sge, %36, %37 : vector<128x128xi32>
    %cst_6 = arith.constant 0.000000e+00 : f32
    %cst_7 = arith.constant -1.000000e+30 : f32
    %39 = vector.broadcast %cst_6 : f32 to vector<128x128xf32>
    %40 = vector.broadcast %cst_7 : f32 to vector<128x128xf32>
    %41 = arith.select %38, %39, %40 : vector<128x128xi1>, vector<128x128xf32>
    "tpu.trace_start"() <{level = 10 : i32, message = "hqd,hkd->hqk"}> : () -> ()
    %cst_8 = arith.constant dense<0.000000e+00> : vector<4x128x128xf32>
    %42 = tpu.matmul %17, %26, %cst_8 {dimension_numbers = #tpu.dot_dimension_numbers<[2], [2], [1], [1], [0, 0, 0, 1, 1, 1], [0], [0]>} : vector<4x128x32xbf16>, vector<4x128x32xbf16>, vector<4x128x128xf32> -> vector<4x128x128xf32>
    "tpu.trace_stop"() : () -> ()
    %cst_9 = arith.constant 0.176776692 : f32
    %43 = vector.broadcast %cst_9 : f32 to vector<4x128x128xf32>
    %44 = arith.mulf %42, %43 : vector<4x128x128xf32>
    %45 = vector.shape_cast %41 : vector<128x128xf32> to vector<1x128x128xf32>
    %46 = vector.broadcast %45 : vector<1x128x128xf32> to vector<4x128x128xf32>
    %47 = arith.addf %44, %46 : vector<4x128x128xf32>
    %cst_10 = arith.constant dense<0xFF800000> : vector<4x128xf32>
    %48 = vector.multi_reduction <maximumf>, %47, %cst_10 [2] : vector<4x128x128xf32> to vector<4x128xf32>
    %49 = vector.shape_cast %48 : vector<4x128xf32> to vector<4x128x1xf32>
    %50 = vector.broadcast %49 : vector<4x128x1xf32> to vector<4x128x128xf32>
    %51 = arith.subf %47, %50 : vector<4x128x128xf32>
    %52 = math.exp %51 : vector<4x128x128xf32>
    %cst_11 = arith.constant dense<0.000000e+00> : vector<4x128xf32>
    %53 = vector.multi_reduction <add>, %52, %cst_11 [2] : vector<4x128x128xf32> to vector<4x128xf32>
    %54 = vector.shape_cast %53 : vector<4x128xf32> to vector<4x128x1xf32>
    %55 = tpu.reciprocal %54 {approx = true} : vector<4x128x1xf32> -> vector<4x128x1xf32>
    %56 = vector.broadcast %55 : vector<4x128x1xf32> to vector<4x128x128xf32>
    %57 = arith.mulf %52, %56 : vector<4x128x128xf32>
    %c0_12 = arith.constant 0 : index
    %c0_13 = arith.constant 0 : index
    %c0_14 = arith.constant 0 : index
    %c0_15 = arith.constant 0 : index
    %58 = vector.load %arg15[%c0_12, %c0_13, %c0_14, %c0_15] : memref<1x4x128x128xf32, #tpu.memory_space<vmem>>, vector<1x4x128x128xf32>
    %59 = vector.shape_cast %58 : vector<1x4x128x128xf32> to vector<4x128x128xf32>
    %60 = vector.shape_cast %57 : vector<4x128x128xf32> to vector<1x4x128x128xf32>
    tpu.vector_store %arg15[%c0_12, %c0_13, %c0_14, %c0_15], %60 {strides = array<i32>} : memref<1x4x128x128xf32, #tpu.memory_space<vmem>>, vector<1x4x128x128xf32>,
    %61 = arith.truncf %57 : vector<4x128x128xf32> to vector<4x128x128xbf16>
    "tpu.trace_start"() <{level = 10 : i32, message = "hqk,hkd->hqd"}> : () -> ()
    %cst_16 = arith.constant dense<0.000000e+00> : vector<4x128x32xf32>
    %62 = tpu.matmul %61, %35, %cst_16 {dimension_numbers = #tpu.dot_dimension_numbers<[2], [1], [1], [2], [0, 0, 0, 1, 1, 2], [0], [0]>} : vector<4x128x128xbf16>, vector<4x128x32xbf16>, vector<4x128x32xf32> -> vector<4x128x32xf32>
    "tpu.trace_stop"() : () -> ()
    %63 = arith.truncf %62 : vector<4x128x32xf32> to vector<4x128x32xbf16>
    %c0_17 = arith.constant 0 : index
    %c0_18 = arith.constant 0 : index
    %c0_19 = arith.constant 0 : index
    %64 = vector.load %arg4[%c0_17, %c0_18, %c0_19] : memref<4x32x128xbf16, #tpu.memory_space<vmem>>, vector<4x32x128xbf16>
    "tpu.trace_start"() <{level = 10 : i32, message = "hsd,hdo->hso"}> : () -> ()
    %cst_20 = arith.constant dense<0.000000e+00> : vector<4x128x128xf32>
    %65 = tpu.matmul %63, %64, %cst_20 {dimension_numbers = #tpu.dot_dimension_numbers<[2], [1], [1], [2], [0, 0, 0, 1, 1, 2], [0], [0]>} : vector<4x128x32xbf16>, vector<4x32x128xbf16>, vector<4x128x128xf32> -> vector<4x128x128xf32>
    "tpu.trace_stop"() : () -> ()
    %cst_21 = arith.constant dense<0.000000e+00> : vector<128x128xf32>
    %66 = vector.multi_reduction <add>, %65, %cst_21 [0] : vector<4x128x128xf32> to vector<128x128xf32>
    %c0_22 = arith.constant 0 : index
    %c0_23 = arith.constant 0 : index
    %67 = vector.load %arg5[%c0_22, %c0_23] : memref<1x128xf32, #tpu.memory_space<vmem>>, vector<1x128xf32>
    %68 = vector.broadcast %67 : vector<1x128xf32> to vector<128x128xf32>
    %69 = arith.addf %66, %68 : vector<128x128xf32>
    %70 = arith.addf %1, %69 : vector<128x128xf32>
    %cst_24 = arith.constant dense<0.000000e+00> : vector<128xf32>
    %71 = vector.multi_reduction <add>, %70, %cst_24 [1] : vector<128x128xf32> to vector<128xf32>
    %72 = vector.shape_cast %71 : vector<128xf32> to vector<128x1xf32>
    %cst_25 = arith.constant 1.280000e+02 : f32
    %73 = vector.broadcast %cst_25 : f32 to vector<128x1xf32>
    %74 = arith.divf %72, %73 : vector<128x1xf32>
    %75 = vector.broadcast %74 : vector<128x1xf32> to vector<128x128xf32>
    %76 = arith.subf %70, %75 : vector<128x128xf32>
    %77 = arith.mulf %76, %76 : vector<128x128xf32>
    %cst_26 = arith.constant dense<0.000000e+00> : vector<128xf32>
    %78 = vector.multi_reduction <add>, %77, %cst_26 [1] : vector<128x128xf32> to vector<128xf32>
    %79 = vector.shape_cast %78 : vector<128xf32> to vector<128x1xf32>
    %cst_27 = arith.constant 1.280000e+02 : f32
    %80 = vector.broadcast %cst_27 : f32 to vector<128x1xf32>
    %81 = arith.divf %79, %80 : vector<128x1xf32>
    %82 = vector.broadcast %74 : vector<128x1xf32> to vector<128x128xf32>
    %83 = arith.subf %70, %82 : vector<128x128xf32>
    %cst_28 = arith.constant 9.99999974E-6 : f32
    %84 = vector.broadcast %cst_28 : f32 to vector<128x1xf32>
    %85 = arith.addf %81, %84 : vector<128x1xf32>
    %86 = math.rsqrt %85 : vector<128x1xf32>
    %87 = vector.broadcast %86 : vector<128x1xf32> to vector<128x128xf32>
    %88 = arith.mulf %83, %87 : vector<128x128xf32>
    %c0_29 = arith.constant 0 : index
    %c0_30 = arith.constant 0 : index
    %89 = vector.load %arg6[%c0_29, %c0_30] : memref<1x128xf32, #tpu.memory_space<vmem>>, vector<1x128xf32>
    %90 = vector.broadcast %89 : vector<1x128xf32> to vector<128x128xf32>
    %91 = arith.mulf %88, %90 : vector<128x128xf32>
    %c0_31 = arith.constant 0 : index
    %c0_32 = arith.constant 0 : index
    %92 = vector.load %arg7[%c0_31, %c0_32] : memref<1x128xf32, #tpu.memory_space<vmem>>, vector<1x128xf32>
    %93 = vector.broadcast %92 : vector<1x128xf32> to vector<128x128xf32>
    %94 = arith.addf %91, %93 : vector<128x128xf32>
    %95 = arith.truncf %94 : vector<128x128xf32> to vector<128x128xbf16>
    %c0_33 = arith.constant 0 : index
    %c0_34 = arith.constant 0 : index
    %96 = vector.load %arg8[%c0_33, %c0_34] : memref<128x256xbf16, #tpu.memory_space<vmem>>, vector<128x256xbf16>
    %cst_35 = arith.constant dense<0.000000e+00> : vector<128x256xf32>
    %97 = tpu.matmul %95, %96, %cst_35 {dimension_numbers = #tpu.dot_dimension_numbers<[1], [0], [0], [1], [0, 0, 1, 1], [], []>} : vector<128x128xbf16>, vector<128x256xbf16>, vector<128x256xf32> -> vector<128x256xf32>
    %c0_36 = arith.constant 0 : index
    %c0_37 = arith.constant 0 : index
    %98 = vector.load %arg9[%c0_36, %c0_37] : memref<1x256xf32, #tpu.memory_space<vmem>>, vector<1x256xf32>
    %99 = vector.broadcast %98 : vector<1x256xf32> to vector<128x256xf32>
    %100 = arith.addf %97, %99 : vector<128x256xf32>
    %cst_38 = arith.constant 0.000000e+00 : f32
    %101 = vector.broadcast %cst_38 : f32 to vector<128x256xf32>
    %102 = arith.maximumf %100, %101 : vector<128x256xf32>
    %103 = arith.truncf %102 : vector<128x256xf32> to vector<128x256xbf16>
    %c0_39 = arith.constant 0 : index
    %c0_40 = arith.constant 0 : index
    %104 = vector.load %arg10[%c0_39, %c0_40] : memref<256x128xbf16, #tpu.memory_space<vmem>>, vector<256x128xbf16>
    %cst_41 = arith.constant dense<0.000000e+00> : vector<128x128xf32>
    %105 = tpu.matmul %103, %104, %cst_41 {dimension_numbers = #tpu.dot_dimension_numbers<[1], [0], [0], [1], [0, 0, 1, 1], [], []>} : vector<128x256xbf16>, vector<256x128xbf16>, vector<128x128xf32> -> vector<128x128xf32>
    %c0_42 = arith.constant 0 : index
    %c0_43 = arith.constant 0 : index
    %106 = vector.load %arg11[%c0_42, %c0_43] : memref<1x128xf32, #tpu.memory_space<vmem>>, vector<1x128xf32>
    %107 = vector.broadcast %106 : vector<1x128xf32> to vector<128x128xf32>
    %108 = arith.addf %105, %107 : vector<128x128xf32>
    %109 = arith.addf %94, %108 : vector<128x128xf32>
    %cst_44 = arith.constant dense<0.000000e+00> : vector<128xf32>
    %110 = vector.multi_reduction <add>, %109, %cst_44 [1] : vector<128x128xf32> to vector<128xf32>
    %111 = vector.shape_cast %110 : vector<128xf32> to vector<128x1xf32>
    %cst_45 = arith.constant 1.280000e+02 : f32
    %112 = vector.broadcast %cst_45 : f32 to vector<128x1xf32>
    %113 = arith.divf %111, %112 : vector<128x1xf32>
    %114 = vector.broadcast %113 : vector<128x1xf32> to vector<128x128xf32>
    %115 = arith.subf %109, %114 : vector<128x128xf32>
    %116 = arith.mulf %115, %115 : vector<128x128xf32>
    %cst_46 = arith.constant dense<0.000000e+00> : vector<128xf32>
    %117 = vector.multi_reduction <add>, %116, %cst_46 [1] : vector<128x128xf32> to vector<128xf32>
    %118 = vector.shape_cast %117 : vector<128xf32> to vector<128x1xf32>
    %cst_47 = arith.constant 1.280000e+02 : f32
    %119 = vector.broadcast %cst_47 : f32 to vector<128x1xf32>
    %120 = arith.divf %118, %119 : vector<128x1xf32>
    %121 = vector.broadcast %113 : vector<128x1xf32> to vector<128x128xf32>
    %122 = arith.subf %109, %121 : vector<128x128xf32>
    %cst_48 = arith.constant 9.99999974E-6 : f32
    %123 = vector.broadcast %cst_48 : f32 to vector<128x1xf32>
    %124 = arith.addf %120, %123 : vector<128x1xf32>
    %125 = math.rsqrt %124 : vector<128x1xf32>
    %126 = vector.broadcast %125 : vector<128x1xf32> to vector<128x128xf32>
    %127 = arith.mulf %122, %126 : vector<128x128xf32>
    %c0_49 = arith.constant 0 : index
    %c0_50 = arith.constant 0 : index
    %128 = vector.load %arg12[%c0_49, %c0_50] : memref<1x128xf32, #tpu.memory_space<vmem>>, vector<1x128xf32>
    %129 = vector.broadcast %128 : vector<1x128xf32> to vector<128x128xf32>
    %130 = arith.mulf %127, %129 : vector<128x128xf32>
    %c0_51 = arith.constant 0 : index
    %c0_52 = arith.constant 0 : index
    %131 = vector.load %arg13[%c0_51, %c0_52] : memref<1x128xf32, #tpu.memory_space<vmem>>, vector<1x128xf32>
    %132 = vector.broadcast %131 : vector<1x128xf32> to vector<128x128xf32>
    %133 = arith.addf %130, %132 : vector<128x128xf32>
    %c0_53 = arith.constant 0 : index
    %c0_54 = arith.constant 0 : index
    %c0_55 = arith.constant 0 : index
    %134 = vector.load %arg14[%c0_53, %c0_54, %c0_55] : memref<1x128x128xf32, #tpu.memory_space<vmem>>, vector<1x128x128xf32>
    %135 = vector.shape_cast %134 : vector<1x128x128xf32> to vector<128x128xf32>
    %136 = vector.shape_cast %133 : vector<128x128xf32> to vector<1x128x128xf32>
    tpu.vector_store %arg14[%c0_53, %c0_54, %c0_55], %136 {strides = array<i32>} : memref<1x128x128xf32, #tpu.memory_space<vmem>>, vector<1x128x128xf32>,
    return
  }
  func.func @transform_0(%arg0: i32) -> (i32, i32, i32) {
    %c0_i32 = arith.constant 0 : i32
    %c0_i32_0 = arith.constant 0 : i32
    %c0_i32_1 = arith.constant 0 : i32
    return %arg0, %c0_i32, %c0_i32_0 : i32, i32, i32
  }
  func.func @transform_1(%arg0: i32) -> (i32, i32) {
    %c0_i32 = arith.constant 0 : i32
    %c0_i32_0 = arith.constant 0 : i32
    %c0_i32_1 = arith.constant 0 : i32
    return %c0_i32, %c0_i32_0 : i32, i32
  }
  func.func @transform_2(%arg0: i32) -> (i32, i32) {
    %c0_i32 = arith.constant 0 : i32
    %c0_i32_0 = arith.constant 0 : i32
    %c0_i32_1 = arith.constant 0 : i32
    return %c0_i32, %c0_i32_0 : i32, i32
  }
  func.func @transform_3(%arg0: i32) -> (i32, i32, i32) {
    %c0_i32 = arith.constant 0 : i32
    %c0_i32_0 = arith.constant 0 : i32
    %c0_i32_1 = arith.constant 0 : i32
    %c0_i32_2 = arith.constant 0 : i32
    return %c0_i32, %c0_i32_0, %c0_i32_1 : i32, i32, i32
  }
  func.func @transform_4(%arg0: i32) -> (i32, i32) {
    %c0_i32 = arith.constant 0 : i32
    %c0_i32_0 = arith.constant 0 : i32
    %c0_i32_1 = arith.constant 0 : i32
    return %c0_i32, %c0_i32_0 : i32, i32
  }
  func.func @transform_5(%arg0: i32) -> (i32, i32) {
    %c0_i32 = arith.constant 0 : i32
    %c0_i32_0 = arith.constant 0 : i32
    %c0_i32_1 = arith.constant 0 : i32
    return %c0_i32, %c0_i32_0 : i32, i32
  }
  func.func @transform_6(%arg0: i32) -> (i32, i32) {
    %c0_i32 = arith.constant 0 : i32
    %c0_i32_0 = arith.constant 0 : i32
    %c0_i32_1 = arith.constant 0 : i32
    return %c0_i32, %c0_i32_0 : i32, i32
  }
  func.func @transform_7(%arg0: i32) -> (i32, i32) {
    %c0_i32 = arith.constant 0 : i32
    %c0_i32_0 = arith.constant 0 : i32
    %c0_i32_1 = arith.constant 0 : i32
    return %c0_i32, %c0_i32_0 : i32, i32
  }
  func.func @transform_8(%arg0: i32) -> (i32, i32) {
    %c0_i32 = arith.constant 0 : i32
    %c0_i32_0 = arith.constant 0 : i32
    %c0_i32_1 = arith.constant 0 : i32
    return %c0_i32, %c0_i32_0 : i32, i32
  }
  func.func @transform_9(%arg0: i32) -> (i32, i32) {
    %c0_i32 = arith.constant 0 : i32
    %c0_i32_0 = arith.constant 0 : i32
    %c0_i32_1 = arith.constant 0 : i32
    return %c0_i32, %c0_i32_0 : i32, i32
  }
  func.func @transform_10(%arg0: i32) -> (i32, i32) {
    %c0_i32 = arith.constant 0 : i32
    %c0_i32_0 = arith.constant 0 : i32
    %c0_i32_1 = arith.constant 0 : i32
    return %c0_i32, %c0_i32_0 : i32, i32
  }
  func.func @transform_11(%arg0: i32) -> (i32, i32) {
    %c0_i32 = arith.constant 0 : i32
    %c0_i32_0 = arith.constant 0 : i32
    %c0_i32_1 = arith.constant 0 : i32
    return %c0_i32, %c0_i32_0 : i32, i32
  }
  func.func @transform_12(%arg0: i32) -> (i32, i32) {
    %c0_i32 = arith.constant 0 : i32
    %c0_i32_0 = arith.constant 0 : i32
    %c0_i32_1 = arith.constant 0 : i32
    return %c0_i32, %c0_i32_0 : i32, i32
  }
  func.func @transform_13(%arg0: i32) -> (i32, i32, i32) {
    %c0_i32 = arith.constant 0 : i32
    %c0_i32_0 = arith.constant 0 : i32
    %c0_i32_1 = arith.constant 0 : i32
    return %arg0, %c0_i32, %c0_i32_0 : i32, i32, i32
  }
  func.func @transform_14(%arg0: i32) -> (i32, i32, i32, i32) {
    %c0_i32 = arith.constant 0 : i32
    %c0_i32_0 = arith.constant 0 : i32
    %c0_i32_1 = arith.constant 0 : i32
    %c0_i32_2 = arith.constant 0 : i32
    return %arg0, %c0_i32, %c0_i32_0, %c0_i32_1 : i32, i32, i32, i32
  }
}

</mosaic_0001>

<llo_original>
// kernel: tpu_custom_call.1
$region0: #{tpu_custom_call.1}
  #allocation0 [shape = 'u32[]', space=smem, size = 0x4, offset = 0x4, fixed_abs, tag = 'smem constant byte address 0x4 - core index']
  #allocation1 [shape = 'u32[144,128]{1,0:T(1,128)}', space=vmem, size = 0x12000, scoped, tag = 'internal scratch']
  %s0 = inlined_call_operand.hbm [shape: f32[2,128,128], index: 0, kind: input, shape index: {}]
  %s1 = inlined_call_operand.hbm [shape: bf16[128,384], index: 1, kind: input, shape index: {}]
  %s2 = inlined_call_operand.vmem [shape: f32[1,384], index: 2, kind: input, shape index: {}]
  %s3 = inlined_call_operand.hbm [shape: bf16[4,32,128], index: 3, kind: input, shape index: {}]
  %s4 = inlined_call_operand.vmem [shape: f32[1,128], index: 4, kind: input, shape index: {}]
  %s5 = inlined_call_operand.vmem [shape: f32[1,128], index: 5, kind: input, shape index: {}]
  %s6 = inlined_call_operand.vmem [shape: f32[1,128], index: 6, kind: input, shape index: {}]
  %s7 = inlined_call_operand.hbm [shape: bf16[128,256], index: 7, kind: input, shape index: {}]
  %s8 = inlined_call_operand.vmem [shape: f32[1,256], index: 8, kind: input, shape index: {}]
  %s9 = inlined_call_operand.hbm [shape: bf16[256,128], index: 9, kind: input, shape index: {}]
  %s10 = inlined_call_operand.vmem [shape: f32[1,128], index: 10, kind: input, shape index: {}]
  %s11 = inlined_call_operand.vmem [shape: f32[1,128], index: 11, kind: input, shape index: {}]
  %s12 = inlined_call_operand.vmem [shape: f32[1,128], index: 12, kind: input, shape index: {}]
  %s13 = inlined_call_operand.hbm [shape: f32[2,128,128], index: 13, kind: output, shape index: {0}]
  %s14 = inlined_call_operand.hbm [shape: f32[2,4,128,128], index: 14, kind: output, shape index: {1}]
  %15 = xla_tuple %s13, %s14
  %s16 = sld [smem:[#allocation0]]
  $region113: #{tpu_custom_call.1} parent=0
    _
  %s18 = ssub.s32 1, %s16
  %s19 = scalar_select 0, %s18, %s16
  $region1: #{tpu_custom_call.1} parent=0
    #allocation2 [shape = 'u8[131072]{0}', space=vmem, size = 0x20000, scoped, tag = 'input window, operand 0']
    #allocation3 [shape = 's32[2]{0}', space=sflag, size = 0x8, scoped, tag = 'scoped memory for tpu_custom_call.1']
    #allocation4 [shape = 's32[2]{0}', space=sflag, size = 0x8, scoped, tag = 'scoped memory for tpu_custom_call.1']
    #allocation5 [shape = 'u8[98304]{0}', space=vmem, size = 0x18000, scoped, tag = 'input window, operand 1, single buffered']
    #allocation6 [shape = 's32[1]{0}', space=sflag, size = 0x4, scoped, tag = 'scoped memory for tpu_custom_call.1']
    #allocation7 [shape = 'u8[32768]{0}', space=vmem, size = 0x8000, scoped, tag = 'input window, operand 3, single buffered']
    #allocation8 [shape = 'u8[65536]{0}', space=vmem, size = 0x10000, scoped, tag = 'input window, operand 7, single buffered']
    #allocation9 [shape = 's32[1]{0}', space=sflag, size = 0x4, scoped, tag = 'scoped memory for tpu_custom_call.1']
    #allocation10 [shape = 'u8[65536]{0}', space=vmem, size = 0x10000, scoped, tag = 'input window, operand 9, single buffered']
    #allocation11 [shape = 'u8[131072]{0}', space=vmem, size = 0x20000, scoped, tag = 'output window, operand 0']
    #allocation12 [shape = 'u8[524288]{0}', space=vmem, size = 0x80000, scoped, tag = 'output window, operand 1']
    #allocation13 [shape = 's32[2]{0}', space=sflag, size = 0x8, scoped, tag = 'scoped memory for tpu_custom_call.1']
    %20 = vsyncpa [#allocation3], 0
    %s21 = scalar_lea.sflag [#allocation3], 1
    %22 = vsyncpa %s21, 0
    %23 = vsyncpa [#allocation6], 0
    %24 = vsyncpa [#allocation9], 0
    %25 = vsyncpa [#allocation4], 0
    %s26 = scalar_lea.sflag [#allocation4], 1
    %27 = vsyncpa %s26, 0
    %28 = vsyncpa [#allocation13], 0
    %s29 = scalar_lea.sflag [#allocation13], 1
    %30 = vsyncpa %s29, 0
    loop: start=0, step=1, limit=4
    $region2: #{tpu_custom_call.1} parent=1 // loop_pre_header
      _
    $region3: #{tpu_custom_call.1} parent=1 // loop_header
      %s32 = sphi 0, %s36
      %p33 = scmp.ge.s32.totalorder %s32, 4
      %s42 = sphi 0, %s44
      %s45 = sphi 0, %s42
      %s46 = sphi 0, %s45
      %s62 = sphi 0, %s46
      %s66 = sphi 0, %s66
      %s68 = sphi 0, %s66
      %s69 = sphi 0, %s68
      %s83 = sphi 0, %s69
      %s87 = sphi 0, %s87
      %s89 = sphi 0, %s87
      %s90 = sphi 0, %s89
      %s104 = sphi 0, %s90
      %s108 = sphi 0, %s108
      %s110 = sphi 0, %s108
      %s111 = sphi 0, %s110
      %s125 = sphi 0, %s111
      %s129 = sphi 0, %s129
      %s131 = sphi 0, %s129
      %s132 = sphi 0, %s131
      %s146 = sphi 0, %s132
      %s150 = sphi 0, %s150
      %s152 = sphi 0, %s150
      %s153 = sphi 0, %s152
      %s167 = sphi 0, %s153
      %s171 = sphi 0, %s171
      %s173 = sphi 0, %s171
      %s174 = sphi 0, %s173
      %s188 = sphi 0, %s174
      %s192 = sphi 0, %s192
      %s194 = sphi 0, %s192
      %s195 = sphi 0, %s194
      %s209 = sphi 0, %s195
      %s213 = sphi 0, %s213
      %s215 = sphi 0, %s213
      %s216 = sphi 0, %s215
      %s230 = sphi 0, %s216
      %s234 = sphi 0, %s234
      %s236 = sphi 0, %s234
      %s237 = sphi 0, %s236
      %s251 = sphi 0, %s237
      %s255 = sphi 0, %s255
      %s257 = sphi 0, %s255
      %s258 = sphi 0, %s257
      %s272 = sphi 0, %s258
      %s276 = sphi 0, %s276
      %s278 = sphi 0, %s276
      %s279 = sphi 0, %s278
      %s293 = sphi 0, %s279
      %s297 = sphi 0, %s297
      %s299 = sphi 0, %s297
      %s300 = sphi 0, %s299
      %s314 = sphi 0, %s300
      %s320 = sphi 0, %s322
      %s323 = sphi 0, %s320
      %s324 = sphi 0, %s323
      %s340 = sphi 0, %s324
      %s346 = sphi 0, %s348
      %s349 = sphi 0, %s346
      %s350 = sphi 0, %s349
      %s366 = sphi 0, %s350
    $region4: #{tpu_custom_call.1} parent=1 // loop_header_branch
      %35 = sbr.rel (%p33) target = $region8
    $region5: #{tpu_custom_call.1} parent=1 // loop_body
      %s37 = ssub.s32 %s32, 1
      %s38 = ssub.s32 %s32, 2
      %s39 = sadd.s32 %s32, 1
      %s40 = ssub.s32 %s32, %s39
      %p41 = scmp.eq.s32.totalorder %s40, 0
      %s43 = sadd.s32 %s42, 1
      %s44 = scalar_select %p41, %s42, %s43
      %p47 = pneg %p41
      %p48 = scmp.eq.s32.totalorder %s32, 1
      %p49 = por %p47, %p48
      %p50 = scmp.ne.s32.totalorder %s42, %s45
      %p51 = scmp.eq.s32.totalorder %s32, 0
      %p52 = por %p50, %p51
      %p53 = scmp.ne.s32.totalorder %s42, %s45
      %p54 = scmp.eq.s32.totalorder %s37, 1
      %p55 = por %p53, %p54
      %p56 = scmp.ne.s32.totalorder %s45, %s46
      %p57 = scmp.eq.s32.totalorder %s37, 0
      %p58 = por %p56, %p57
      %p59 = scmp.ne.s32.totalorder %s45, %s46
      %p60 = scmp.eq.s32.totalorder %s38, 1
      %p61 = por %p59, %p60
      %p63 = scmp.ne.s32.totalorder %s46, %s62
      %p64 = scmp.eq.s32.totalorder %s38, 0
      %p65 = por %p63, %p64
      %s67 = sadd.s32 %s66, 1
      %p70 = scmp.eq.s32.totalorder %s32, 1
      %p71 = scmp.ne.s32.totalorder %s66, %s68
      %p72 = scmp.eq.s32.totalorder %s32, 0
      %p73 = por %p71, %p72
      %p74 = scmp.ne.s32.totalorder %s66, %s68
      %p75 = scmp.eq.s32.totalorder %s37, 1
      %p76 = por %p74, %p75
      %p77 = scmp.ne.s32.totalorder %s68, %s69
      %p78 = scmp.eq.s32.totalorder %s37, 0
      %p79 = por %p77, %p78
      %p80 = scmp.ne.s32.totalorder %s68, %s69
      %p81 = scmp.eq.s32.totalorder %s38, 1
      %p82 = por %p80, %p81
      %p84 = scmp.ne.s32.totalorder %s69, %s83
      %p85 = scmp.eq.s32.totalorder %s38, 0
      %p86 = por %p84, %p85
      %s88 = sadd.s32 %s87, 1
      %p91 = scmp.eq.s32.totalorder %s32, 1
      %p92 = scmp.ne.s32.totalorder %s87, %s89
      %p93 = scmp.eq.s32.totalorder %s32, 0
      %p94 = por %p92, %p93
      %p95 = scmp.ne.s32.totalorder %s87, %s89
      %p96 = scmp.eq.s32.totalorder %s37, 1
      %p97 = por %p95, %p96
      %p98 = scmp.ne.s32.totalorder %s89, %s90
      %p99 = scmp.eq.s32.totalorder %s37, 0
      %p100 = por %p98, %p99
      %p101 = scmp.ne.s32.totalorder %s89, %s90
      %p102 = scmp.eq.s32.totalorder %s38, 1
      %p103 = por %p101, %p102
      %p105 = scmp.ne.s32.totalorder %s90, %s104
      %p106 = scmp.eq.s32.totalorder %s38, 0
      %p107 = por %p105, %p106
      %s109 = sadd.s32 %s108, 1
      %p112 = scmp.eq.s32.totalorder %s32, 1
      %p113 = scmp.ne.s32.totalorder %s108, %s110
      %p114 = scmp.eq.s32.totalorder %s32, 0
      %p115 = por %p113, %p114
      %p116 = scmp.ne.s32.totalorder %s108, %s110
      %p117 = scmp.eq.s32.totalorder %s37, 1
      %p118 = por %p116, %p117
      %p119 = scmp.ne.s32.totalorder %s110, %s111
      %p120 = scmp.eq.s32.totalorder %s37, 0
      %p121 = por %p119, %p120
      %p122 = scmp.ne.s32.totalorder %s110, %s111
      %p123 = scmp.eq.s32.totalorder %s38, 1
      %p124 = por %p122, %p123
      %p126 = scmp.ne.s32.totalorder %s111, %s125
      %p127 = scmp.eq.s32.totalorder %s38, 0
      %p128 = por %p126, %p127
      %s130 = sadd.s32 %s129, 1
      %p133 = scmp.eq.s32.totalorder %s32, 1
      %p134 = scmp.ne.s32.totalorder %s129, %s131
      %p135 = scmp.eq.s32.totalorder %s32, 0
      %p136 = por %p134, %p135
      %p137 = scmp.ne.s32.totalorder %s129, %s131
      %p138 = scmp.eq.s32.totalorder %s37, 1
      %p139 = por %p137, %p138
      %p140 = scmp.ne.s32.totalorder %s131, %s132
      %p141 = scmp.eq.s32.totalorder %s37, 0
      %p142 = por %p140, %p141
      %p143 = scmp.ne.s32.totalorder %s131, %s132
      %p144 = scmp.eq.s32.totalorder %s38, 1
      %p145 = por %p143, %p144
      %p147 = scmp.ne.s32.totalorder %s132, %s146
      %p148 = scmp.eq.s32.totalorder %s38, 0
      %p149 = por %p147, %p148
      %s151 = sadd.s32 %s150, 1
      %p154 = scmp.eq.s32.totalorder %s32, 1
      %p155 = scmp.ne.s32.totalorder %s150, %s152
      %p156 = scmp.eq.s32.totalorder %s32, 0
      %p157 = por %p155, %p156
      %p158 = scmp.ne.s32.totalorder %s150, %s152
      %p159 = scmp.eq.s32.totalorder %s37, 1
      %p160 = por %p158, %p159
      %p161 = scmp.ne.s32.totalorder %s152, %s153
      %p162 = scmp.eq.s32.totalorder %s37, 0
      %p163 = por %p161, %p162
      %p164 = scmp.ne.s32.totalorder %s152, %s153
      %p165 = scmp.eq.s32.totalorder %s38, 1
      %p166 = por %p164, %p165
      %p168 = scmp.ne.s32.totalorder %s153, %s167
      %p169 = scmp.eq.s32.totalorder %s38, 0
      %p170 = por %p168, %p169
      %s172 = sadd.s32 %s171, 1
      %p175 = scmp.eq.s32.totalorder %s32, 1
      %p176 = scmp.ne.s32.totalorder %s171, %s173
      %p177 = scmp.eq.s32.totalorder %s32, 0
      %p178 = por %p176, %p177
      %p179 = scmp.ne.s32.totalorder %s171, %s173
      %p180 = scmp.eq.s32.totalorder %s37, 1
      %p181 = por %p179, %p180
      %p182 = scmp.ne.s32.totalorder %s173, %s174
      %p183 = scmp.eq.s32.totalorder %s37, 0
      %p184 = por %p182, %p183
      %p185 = scmp.ne.s32.totalorder %s173, %s174
      %p186 = scmp.eq.s32.totalorder %s38, 1
      %p187 = por %p185, %p186
      %p189 = scmp.ne.s32.totalorder %s174, %s188
      %p190 = scmp.eq.s32.totalorder %s38, 0
      %p191 = por %p189, %p190
      %s193 = sadd.s32 %s192, 1
      %p196 = scmp.eq.s32.totalorder %s32, 1
      %p197 = scmp.ne.s32.totalorder %s192, %s194
      %p198 = scmp.eq.s32.totalorder %s32, 0
      %p199 = por %p197, %p198
      %p200 = scmp.ne.s32.totalorder %s192, %s194
      %p201 = scmp.eq.s32.totalorder %s37, 1
      %p202 = por %p200, %p201
      %p203 = scmp.ne.s32.totalorder %s194, %s195
      %p204 = scmp.eq.s32.totalorder %s37, 0
      %p205 = por %p203, %p204
      %p206 = scmp.ne.s32.totalorder %s194, %s195
      %p207 = scmp.eq.s32.totalorder %s38, 1
      %p208 = por %p206, %p207
      %p210 = scmp.ne.s32.totalorder %s195, %s209
      %p211 = scmp.eq.s32.totalorder %s38, 0
      %p212 = por %p210, %p211
      %s214 = sadd.s32 %s213, 1
      %p217 = scmp.eq.s32.totalorder %s32, 1
      %p218 = scmp.ne.s32.totalorder %s213, %s215
      %p219 = scmp.eq.s32.totalorder %s32, 0
      %p220 = por %p218, %p219
      %p221 = scmp.ne.s32.totalorder %s213, %s215
      %p222 = scmp.eq.s32.totalorder %s37, 1
      %p223 = por %p221, %p222
      %p224 = scmp.ne.s32.totalorder %s215, %s216
      %p225 = scmp.eq.s32.totalorder %s37, 0
      %p226 = por %p224, %p225
      %p227 = scmp.ne.s32.totalorder %s215, %s216
      %p228 = scmp.eq.s32.totalorder %s38, 1
      %p229 = por %p227, %p228
      %p231 = scmp.ne.s32.totalorder %s216, %s230
      %p232 = scmp.eq.s32.totalorder %s38, 0
      %p233 = por %p231, %p232
      %s235 = sadd.s32 %s234, 1
      %p238 = scmp.eq.s32.totalorder %s32, 1
      %p239 = scmp.ne.s32.totalorder %s234, %s236
      %p240 = scmp.eq.s32.totalorder %s32, 0
      %p241 = por %p239, %p240
      %p242 = scmp.ne.s32.totalorder %s234, %s236
      %p243 = scmp.eq.s32.totalorder %s37, 1
      %p244 = por %p242, %p243
      %p245 = scmp.ne.s32.totalorder %s236, %s237
      %p246 = scmp.eq.s32.totalorder %s37, 0
      %p247 = por %p245, %p246
      %p248 = scmp.ne.s32.totalorder %s236, %s237
      %p249 = scmp.eq.s32.totalorder %s38, 1
      %p250 = por %p248, %p249
      %p252 = scmp.ne.s32.totalorder %s237, %s251
      %p253 = scmp.eq.s32.totalorder %s38, 0
      %p254 = por %p252, %p253
      %s256 = sadd.s32 %s255, 1
      %p259 = scmp.eq.s32.totalorder %s32, 1
      %p260 = scmp.ne.s32.totalorder %s255, %s257
      %p261 = scmp.eq.s32.totalorder %s32, 0
      %p262 = por %p260, %p261
      %p263 = scmp.ne.s32.totalorder %s255, %s257
      %p264 = scmp.eq.s32.totalorder %s37, 1
      %p265 = por %p263, %p264
      %p266 = scmp.ne.s32.totalorder %s257, %s258
      %p267 = scmp.eq.s32.totalorder %s37, 0
      %p268 = por %p266, %p267
      %p269 = scmp.ne.s32.totalorder %s257, %s258
      %p270 = scmp.eq.s32.totalorder %s38, 1
      %p271 = por %p269, %p270
      %p273 = scmp.ne.s32.totalorder %s258, %s272
      %p274 = scmp.eq.s32.totalorder %s38, 0
      %p275 = por %p273, %p274
      %s277 = sadd.s32 %s276, 1
      %p280 = scmp.eq.s32.totalorder %s32, 1
      %p281 = scmp.ne.s32.totalorder %s276, %s278
      %p282 = scmp.eq.s32.totalorder %s32, 0
      %p283 = por %p281, %p282
      %p284 = scmp.ne.s32.totalorder %s276, %s278
      %p285 = scmp.eq.s32.totalorder %s37, 1
      %p286 = por %p284, %p285
      %p287 = scmp.ne.s32.totalorder %s278, %s279
      %p288 = scmp.eq.s32.totalorder %s37, 0
      %p289 = por %p287, %p288
      %p290 = scmp.ne.s32.totalorder %s278, %s279
      %p291 = scmp.eq.s32.totalorder %s38, 1
      %p292 = por %p290, %p291
      %p294 = scmp.ne.s32.totalorder %s279, %s293
      %p295 = scmp.eq.s32.totalorder %s38, 0
      %p296 = por %p294, %p295
      %s298 = sadd.s32 %s297, 1
      %p301 = scmp.eq.s32.totalorder %s32, 1
      %p302 = scmp.ne.s32.totalorder %s297, %s299
      %p303 = scmp.eq.s32.totalorder %s32, 0
      %p304 = por %p302, %p303
      %p305 = scmp.ne.s32.totalorder %s297, %s299
      %p306 = scmp.eq.s32.totalorder %s37, 1
      %p307 = por %p305, %p306
      %p308 = scmp.ne.s32.totalorder %s299, %s300
      %p309 = scmp.eq.s32.totalorder %s37, 0
      %p310 = por %p308, %p309
      %p311 = scmp.ne.s32.totalorder %s299, %s300
      %p312 = scmp.eq.s32.totalorder %s38, 1
      %p313 = por %p311, %p312
      %p315 = scmp.ne.s32.totalorder %s300, %s314
      %p316 = scmp.eq.s32.totalorder %s38, 0
      %p317 = por %p315, %p316
      %s318 = ssub.s32 %s32, %s39
      %p319 = scmp.eq.s32.totalorder %s318, 0
      %s321 = sadd.s32 %s320, 1
      %s322 = scalar_select %p319, %s320, %s321
      %p325 = pneg %p319
      %p326 = scmp.eq.s32.totalorder %s32, 1
      %p327 = por %p325, %p326
      %p328 = scmp.ne.s32.totalorder %s320, %s323
      %p329 = scmp.eq.s32.totalorder %s32, 0
      %p330 = por %p328, %p329
      %p331 = scmp.ne.s32.totalorder %s320, %s323
      %p332 = scmp.eq.s32.totalorder %s37, 1
      %p333 = por %p331, %p332
      %p334 = scmp.ne.s32.totalorder %s323, %s324
      %p335 = scmp.eq.s32.totalorder %s37, 0
      %p336 = por %p334, %p335
      %p337 = scmp.ne.s32.totalorder %s323, %s324
      %p338 = scmp.eq.s32.totalorder %s38, 1
      %p339 = por %p337, %p338
      %p341 = scmp.ne.s32.totalorder %s324, %s340
      %p342 = scmp.eq.s32.totalorder %s38, 0
      %p343 = por %p341, %p342
      %s344 = ssub.s32 %s32, %s39
      %p345 = scmp.eq.s32.totalorder %s344, 0
      %s347 = sadd.s32 %s346, 1
      %s348 = scalar_select %p345, %s346, %s347
      %p351 = pneg %p345
      %p352 = scmp.eq.s32.totalorder %s32, 1
      %p353 = por %p351, %p352
      %p354 = scmp.ne.s32.totalorder %s346, %s349
      %p355 = scmp.eq.s32.totalorder %s32, 0
      %p356 = por %p354, %p355
      %p357 = scmp.ne.s32.totalorder %s346, %s349
      %p358 = scmp.eq.s32.totalorder %s37, 1
      %p359 = por %p357, %p358
      %p360 = scmp.ne.s32.totalorder %s349, %s350
      %p361 = scmp.eq.s32.totalorder %s37, 0
      %p362 = por %p360, %p361
      %p363 = scmp.ne.s32.totalorder %s349, %s350
      %p364 = scmp.eq.s32.totalorder %s38, 1
      %p365 = por %p363, %p364
      %p367 = scmp.ne.s32.totalorder %s350, %s366
      %p368 = scmp.eq.s32.totalorder %s38, 0
      %p369 = por %p367, %p368
      %p370 = scmp.le.s32.totalorder 1, %s32
      %p371 = scmp.lt.s32.totalorder %s32, 3
      %p372 = pnand %p370, %p371
      %p373 = pneg %p372
      // Predicated region
      $region9: #{tpu_custom_call.1} parent=5 // pred_check
        _
      $region10: #{tpu_custom_call.1} parent=5 // pred_check_branch
        %375 = sbr.rel (%p372) target = $region12
      $region11: #{tpu_custom_call.1} parent=5 // pred_region
        %s376 = ssub.s32 %s32, 1
        // Predicated region
        $region13: #{tpu_custom_call.1} parent=11 // pred_check
          %p377 = pneg %p79
        $region14: #{tpu_custom_call.1} parent=11 // pred_check_branch
          %379 = sbr.rel (%p377) target = $region16
        $region15: #{tpu_custom_call.1} parent=11 // pred_region
          %s381 = ssub.s32 3072, 3072
          %382 = vsyncadd [#allocation6], %s381
          %s383 = sshll.u32 [#allocation5], 4
          %s384 = int_to_ptr.vmem [resolvable:$true] %s383
          %389 = dma.hbm_to_vmem [thread:$0]  %s1, 3072, %s384, [#allocation6], 192, 192, 12
        $region16: #{tpu_custom_call.1} parent=11 // pred_fallthru
          _
        // Predicated region
        $region17: #{tpu_custom_call.1} parent=11 // pred_check
          %p390 = pneg %p100
        $region18: #{tpu_custom_call.1} parent=11 // pred_check_branch
          %392 = sbr.rel (%p390) target = $region20
        $region19: #{tpu_custom_call.1} parent=11 // pred_region
          _
        $region20: #{tpu_custom_call.1} parent=11 // pred_fallthru
          _
        // Predicated region
        $region21: #{tpu_custom_call.1} parent=11 // pred_check
          %p393 = pneg %p121
        $region22: #{tpu_custom_call.1} parent=11 // pred_check_branch
          %395 = sbr.rel (%p393) target = $region24
        $region23: #{tpu_custom_call.1} parent=11 // pred_region
          %s397 = ssub.s32 1024, 1024
          %398 = vsyncadd [#allocation6], %s397
          %s399 = sshll.u32 [#allocation7], 4
          %s400 = int_to_ptr.vmem [resolvable:$true] %s399
          %405 = dma.hbm_to_vmem [thread:$0]  %s3, 1024, %s400, [#allocation6], 64, 64, 4
        $region24: #{tpu_custom_call.1} parent=11 // pred_fallthru
          _
        // Predicated region
        $region25: #{tpu_custom_call.1} parent=11 // pred_check
          %p406 = pneg %p142
        $region26: #{tpu_custom_call.1} parent=11 // pred_check_branch
          %408 = sbr.rel (%p406) target = $region28
        $region27: #{tpu_custom_call.1} parent=11 // pred_region
          _
        $region28: #{tpu_custom_call.1} parent=11 // pred_fallthru
          _
        // Predicated region
        $region29: #{tpu_custom_call.1} parent=11 // pred_check
          %p409 = pneg %p163
        $region30: #{tpu_custom_call.1} parent=11 // pred_check_branch
          %411 = sbr.rel (%p409) target = $region32
        $region31: #{tpu_custom_call.1} parent=11 // pred_region
          _
        $region32: #{tpu_custom_call.1} parent=11 // pred_fallthru
          _
        // Predicated region
        $region33: #{tpu_custom_call.1} parent=11 // pred_check
          %p412 = pneg %p184
        $region34: #{tpu_custom_call.1} parent=11 // pred_check_branch
          %414 = sbr.rel (%p412) target = $region36
        $region35: #{tpu_custom_call.1} parent=11 // pred_region
          _
        $region36: #{tpu_custom_call.1} parent=11 // pred_fallthru
          _
        // Predicated region
        $region37: #{tpu_custom_call.1} parent=11 // pred_check
          %p415 = pneg %p205
        $region38: #{tpu_custom_call.1} parent=11 // pred_check_branch
          %417 = sbr.rel (%p415) target = $region40
        $region39: #{tpu_custom_call.1} parent=11 // pred_region
          %s419 = ssub.s32 2048, 2048
          %420 = vsyncadd [#allocation9], %s419
          %s421 = sshll.u32 [#allocation8], 4
          %s422 = int_to_ptr.vmem [resolvable:$true] %s421
          %427 = dma.hbm_to_vmem [thread:$0]  %s7, 2048, %s422, [#allocation9], 128, 128, 8
        $region40: #{tpu_custom_call.1} parent=11 // pred_fallthru
          _
        // Predicated region
        $region41: #{tpu_custom_call.1} parent=11 // pred_check
          %p428 = pneg %p226
        $region42: #{tpu_custom_call.1} parent=11 // pred_check_branch
          %430 = sbr.rel (%p428) target = $region44
        $region43: #{tpu_custom_call.1} parent=11 // pred_region
          _
        $region44: #{tpu_custom_call.1} parent=11 // pred_fallthru
          _
        // Predicated region
        $region45: #{tpu_custom_call.1} parent=11 // pred_check
          %p431 = pneg %p247
        $region46: #{tpu_custom_call.1} parent=11 // pred_check_branch
          %433 = sbr.rel (%p431) target = $region48
        $region47: #{tpu_custom_call.1} parent=11 // pred_region
          %s435 = ssub.s32 2048, 2048
          %436 = vsyncadd [#allocation9], %s435
          %s437 = sshll.u32 [#allocation10], 4
          %s438 = int_to_ptr.vmem [resolvable:$true] %s437
          %443 = dma.hbm_to_vmem [thread:$0]  %s9, 2048, %s438, [#allocation9], 64, 64, 4
        $region48: #{tpu_custom_call.1} parent=11 // pred_fallthru
          _
        // Predicated region
        $region49: #{tpu_custom_call.1} parent=11 // pred_check
          %p444 = pneg %p268
        $region50: #{tpu_custom_call.1} parent=11 // pred_check_branch
          %446 = sbr.rel (%p444) target = $region52
        $region51: #{tpu_custom_call.1} parent=11 // pred_region
          _
        $region52: #{tpu_custom_call.1} parent=11 // pred_fallthru
          _
        // Predicated region
        $region53: #{tpu_custom_call.1} parent=11 // pred_check
          %p447 = pneg %p289
        $region54: #{tpu_custom_call.1} parent=11 // pred_check_branch
          %449 = sbr.rel (%p447) target = $region56
        $region55: #{tpu_custom_call.1} parent=11 // pred_region
          _
        $region56: #{tpu_custom_call.1} parent=11 // pred_fallthru
          _
        // Predicated region
        $region57: #{tpu_custom_call.1} parent=11 // pred_check
          %p450 = pneg %p310
        $region58: #{tpu_custom_call.1} parent=11 // pred_check_branch
          %452 = sbr.rel (%p450) target = $region60
        $region59: #{tpu_custom_call.1} parent=11 // pred_region
          _
        $region60: #{tpu_custom_call.1} parent=11 // pred_fallthru
          _
      $region12: #{tpu_custom_call.1} parent=5 // pred_fallthru
        _
      %p453 = scmp.lt.s32.totalorder %s32, 2
      // Predicated region
      $region61: #{tpu_custom_call.1} parent=5 // pred_check
        %p454 = pneg %p453
      $region62: #{tpu_custom_call.1} parent=5 // pred_check_branch
        %456 = sbr.rel (%p454) target = $region64
      $region63: #{tpu_custom_call.1} parent=5 // pred_region
        // Predicated region
        $region65: #{tpu_custom_call.1} parent=63 // pred_check
          %p457 = pneg %p52
        $region66: #{tpu_custom_call.1} parent=63 // pred_check_branch
          %459 = sbr.rel (%p457) target = $region68
        $region67: #{tpu_custom_call.1} parent=63 // pred_region
          %s460 = sand.u32 %s42, 1
          %s461 = scalar_lea.sflag [#allocation3], %s460
          %s462 = sand.u32 %s42, 1
          %s463 = smul.addr %s462, 128
          %s464 = scalar_lea.vmem [#allocation2], %s463
          %s466 = ssub.s32 2048, 2048
          %467 = vsyncadd %s461, %s466
          %s468 = smul.addr %s32, 16
          %s469 = smul.addr %s468, 128
          %s470 = scalar_lea.hbm %s0, %s469
          %s471 = sshll.u32 %s464, 4
          %s472 = int_to_ptr.vmem [resolvable:$true] %s471
          %477 = dma.hbm_to_vmem [thread:$0]  %s470, 2048, %s472, %s461, 128, 128, 8
        $region68: #{tpu_custom_call.1} parent=63 // pred_fallthru
          _
      $region64: #{tpu_custom_call.1} parent=5 // pred_fallthru
        _
      %p478 = scmp.le.s32.totalorder 1, %s32
      %p479 = scmp.lt.s32.totalorder %s32, 3
      %p480 = pnand %p478, %p479
      %p481 = pneg %p480
      // Predicated region
      $region69: #{tpu_custom_call.1} parent=5 // pred_check
        _
      $region70: #{tpu_custom_call.1} parent=5 // pred_check_branch
        %483 = sbr.rel (%p480) target = $region72
      $region71: #{tpu_custom_call.1} parent=5 // pred_region
        %s484 = ssub.s32 %s32, 1
        %s485 = sand.u32 %s45, 1
        %s486 = scalar_lea.sflag [#allocation3], %s485
        %s487 = sand.u32 %s45, 1
        %s488 = smul.addr %s487, 128
        %s489 = scalar_lea.vmem [#allocation2], %s488
        // Predicated region
        $region73: #{tpu_custom_call.1} parent=71 // pred_check
          %p490 = pneg %p58
        $region74: #{tpu_custom_call.1} parent=71 // pred_check_branch
          %492 = sbr.rel (%p490) target = $region76
        $region75: #{tpu_custom_call.1} parent=71 // pred_region
          %493 = dma.done %s486, 2048
        $region76: #{tpu_custom_call.1} parent=71 // pred_fallthru
          _
        // Predicated region
        $region77: #{tpu_custom_call.1} parent=71 // pred_check
          %p494 = pneg %p79
        $region78: #{tpu_custom_call.1} parent=71 // pred_check_branch
          %496 = sbr.rel (%p494) target = $region80
        $region79: #{tpu_custom_call.1} parent=71 // pred_region
          %497 = dma.done [#allocation6], 3072
        $region80: #{tpu_custom_call.1} parent=71 // pred_fallthru
          _
        // Predicated region
        $region81: #{tpu_custom_call.1} parent=71 // pred_check
          %p498 = pneg %p121
        $region82: #{tpu_custom_call.1} parent=71 // pred_check_branch
          %500 = sbr.rel (%p498) target = $region84
        $region83: #{tpu_custom_call.1} parent=71 // pred_region
          %501 = dma.done [#allocation6], 1024
        $region84: #{tpu_custom_call.1} parent=71 // pred_fallthru
          _
        // Predicated region
        $region85: #{tpu_custom_call.1} parent=71 // pred_check
          %p502 = pneg %p205
        $region86: #{tpu_custom_call.1} parent=71 // pred_check_branch
          %504 = sbr.rel (%p502) target = $region88
        $region87: #{tpu_custom_call.1} parent=71 // pred_region
          %505 = dma.done [#allocation9], 2048
        $region88: #{tpu_custom_call.1} parent=71 // pred_fallthru
          _
        // Predicated region
        $region89: #{tpu_custom_call.1} parent=71 // pred_check
          %p506 = pneg %p247
        $region90: #{tpu_custom_call.1} parent=71 // pred_check_branch
          %508 = sbr.rel (%p506) target = $region92
        $region91: #{tpu_custom_call.1} parent=71 // pred_region
          %509 = dma.done [#allocation9], 2048
        $region92: #{tpu_custom_call.1} parent=71 // pred_fallthru
          _
        %s510 = sand.u32 %s45, 1
        %s511 = scalar_lea.sflag [#allocation3], %s510
        %s512 = sand.u32 %s45, 1
        %s513 = smul.addr %s512, 128
        %s514 = scalar_lea.vmem [#allocation2], %s513
        %p515 = pneg %p58
        %p516 = pneg %p55
        %p517 = pneg %p79
        %p518 = pneg %p76
        %p519 = pneg %p100
        %p520 = pneg %p97
        %p521 = pneg %p121
        %p522 = pneg %p118
        %p523 = pneg %p142
        %p524 = pneg %p139
        %p525 = pneg %p163
        %p526 = pneg %p160
        %p527 = pneg %p184
        %p528 = pneg %p181
        %p529 = pneg %p205
        %p530 = pneg %p202
        %p531 = pneg %p226
        %p532 = pneg %p223
        %p533 = pneg %p247
        %p534 = pneg %p244
        %p535 = pneg %p268
        %p536 = pneg %p265
        %p537 = pneg %p289
        %p538 = pneg %p286
        %p539 = pneg %p310
        %p540 = pneg %p307
        %p541 = pneg %p336
        %p542 = pneg %p333
        %s543 = sand.u32 %s323, 1
        %s544 = scalar_lea.sflag [#allocation4], %s543
        %s545 = sand.u32 %s323, 1
        %s546 = smul.addr %s545, 128
        %s547 = scalar_lea.vmem [#allocation11], %s546
        %p548 = pneg %p362
        %p549 = pneg %p359
        %s550 = sand.u32 %s349, 1
        %s551 = scalar_lea.sflag [#allocation13], %s550
        %s552 = sand.u32 %s349, 1
        %s553 = smul.addr %s552, 512
        %s554 = scalar_lea.vmem [#allocation12], %s553
        %v556 = vld [vmem:[%s489] sm:$0xff]
        %v557 = vld [vmem:[%s489 + $0x8] sm:$0xff]
        %v558 = vld [vmem:[%s489 + $0x10] sm:$0xff]
        %v559 = vld [vmem:[%s489 + $0x18] sm:$0xff]
        %v560 = vld [vmem:[%s489 + $0x20] sm:$0xff]
        %v561 = vld [vmem:[%s489 + $0x28] sm:$0xff]
        %v562 = vld [vmem:[%s489 + $0x30] sm:$0xff]
        %v563 = vld [vmem:[%s489 + $0x38] sm:$0xff]
        %v564 = vld [vmem:[%s489 + $0x40] sm:$0xff]
        %v565 = vld [vmem:[%s489 + $0x48] sm:$0xff]
        %v566 = vld [vmem:[%s489 + $0x50] sm:$0xff]
        %v567 = vld [vmem:[%s489 + $0x58] sm:$0xff]
        %v568 = vld [vmem:[%s489 + $0x60] sm:$0xff]
        %v569 = vld [vmem:[%s489 + $0x68] sm:$0xff]
        %v570 = vld [vmem:[%s489 + $0x70] sm:$0xff]
        %v571 = vld [vmem:[%s489 + $0x78] sm:$0xff]
        %v572 = vpack.c.bf16 %v557, %v556
        %v573 = vpack.c.bf16 %v559, %v558
        %v574 = vpack.c.bf16 %v561, %v560
        %v575 = vpack.c.bf16 %v563, %v562
        %v576 = vpack.c.bf16 %v565, %v564
        %v577 = vpack.c.bf16 %v567, %v566
        %v578 = vpack.c.bf16 %v569, %v568
        %v579 = vpack.c.bf16 %v571, %v570
        %v580 = vld [vmem:[#allocation5] sm:$0xff]
        %v581 = vld [vmem:[#allocation5 + $0x8] sm:$0xf]
        %v582 = vld [vmem:[#allocation5 + $0xc] sm:$0xff]
        %v583 = vld [vmem:[#allocation5 + $0x14] sm:$0xf]
        %v584 = vld [vmem:[#allocation5 + $0x18] sm:$0xff]
        %v585 = vld [vmem:[#allocation5 + $0x20] sm:$0xf]
        %v586 = vld [vmem:[#allocation5 + $0x24] sm:$0xff]
        %v587 = vld [vmem:[#allocation5 + $0x2c] sm:$0xf]
        %v588 = vld [vmem:[#allocation5 + $0x30] sm:$0xff]
        %v589 = vld [vmem:[#allocation5 + $0x38] sm:$0xf]
        %v590 = vld [vmem:[#allocation5 + $0x3c] sm:$0xff]
        %v591 = vld [vmem:[#allocation5 + $0x44] sm:$0xf]
        %v592 = vld [vmem:[#allocation5 + $0x48] sm:$0xff]
        %v593 = vld [vmem:[#allocation5 + $0x50] sm:$0xf]
        %v594 = vld [vmem:[#allocation5 + $0x54] sm:$0xff]
        %v595 = vld [vmem:[#allocation5 + $0x5c] sm:$0xf]
        %v596 = vld [vmem:[#allocation5 + $0x60] sm:$0xff]
        %v597 = vld [vmem:[#allocation5 + $0x68] sm:$0xf]
        %v598 = vld [vmem:[#allocation5 + $0x6c] sm:$0xff]
        %v599 = vld [vmem:[#allocation5 + $0x74] sm:$0xf]
        %v600 = vld [vmem:[#allocation5 + $0x78] sm:$0xff]
        %v601 = vld [vmem:[#allocation5 + $0x80] sm:$0xf]
        %v602 = vld [vmem:[#allocation5 + $0x84] sm:$0xff]
        %v603 = vld [vmem:[#allocation5 + $0x8c] sm:$0xf]
        %v604 = vld [vmem:[#allocation5 + $0x90] sm:$0xff]
        %v605 = vld [vmem:[#allocation5 + $0x98] sm:$0xf]
        %v606 = vld [vmem:[#allocation5 + $0x9c] sm:$0xff]
        %v607 = vld [vmem:[#allocation5 + $0xa4] sm:$0xf]
        %v608 = vld [vmem:[#allocation5 + $0xa8] sm:$0xff]
        %v609 = vld [vmem:[#allocation5 + $0xb0] sm:$0xf]
        %v610 = vld [vmem:[#allocation5 + $0xb4] sm:$0xff]
        %v611 = vld [vmem:[#allocation5 + $0xbc] sm:$0xf]
        %v612 = vld [vmem:[%s2] sm:$0x7]
        %v614 = vlaneseq
        %v615 = vshrl.u32 %v614, 7
        %v616 = vsub.s32 0, %v615
        %v617 = vrot.slane %v612, %v616
        %v618 = vlaneseq
        %v619 = vshrl.u32 %v618, 7
        %v620 = vsub.s32 1, %v619
        %v621 = vrot.slane %v612, %v620
        %v622 = vlaneseq
        %v623 = vshrl.u32 %v622, 7
        %v624 = vsub.s32 2, %v623
        %v625 = vrot.slane %v612, %v624
        %v661 = vunpack.c.l.b16 %v580
        %v662 = vunpack.c.h.b16 %v580
        %v663 = vunpack.c.l.b16 %v581
        %v664 = vunpack.c.l.b16 %v582
        %v665 = vunpack.c.h.b16 %v582
        %v666 = vunpack.c.l.b16 %v583
        %v667 = vunpack.c.l.b16 %v584
        %v668 = vunpack.c.h.b16 %v584
        %v669 = vunpack.c.l.b16 %v585
        %v670 = vunpack.c.l.b16 %v586
        %v671 = vunpack.c.h.b16 %v586
        %v672 = vunpack.c.l.b16 %v587
        %v673 = vunpack.c.l.b16 %v588
        %v674 = vunpack.c.h.b16 %v588
        %v675 = vunpack.c.l.b16 %v589
        %v676 = vunpack.c.l.b16 %v590
        %v677 = vunpack.c.h.b16 %v590
        %v678 = vunpack.c.l.b16 %v591
        %v679 = vunpack.c.l.b16 %v592
        %v680 = vunpack.c.h.b16 %v592
        %v681 = vunpack.c.l.b16 %v593
        %v682 = vunpack.c.l.b16 %v594
        %v683 = vunpack.c.h.b16 %v594
        %v684 = vunpack.c.l.b16 %v595
        %v685 = vunpack.c.l.b16 %v596
        %v686 = vunpack.c.h.b16 %v596
        %v687 = vunpack.c.l.b16 %v597
        %v688 = vunpack.c.l.b16 %v598
        %v689 = vunpack.c.h.b16 %v598
        %v690 = vunpack.c.l.b16 %v599
        %v691 = vunpack.c.l.b16 %v600
        %v692 = vunpack.c.h.b16 %v600
        %v693 = vunpack.c.l.b16 %v601
        %v694 = vunpack.c.l.b16 %v602
        %v695 = vunpack.c.h.b16 %v602
        %v696 = vunpack.c.l.b16 %v603
        %v697 = vunpack.c.l.b16 %v604
        %v698 = vunpack.c.h.b16 %v604
        %v699 = vunpack.c.l.b16 %v605
        %v700 = vunpack.c.l.b16 %v606
        %v701 = vunpack.c.h.b16 %v606
        %v702 = vunpack.c.l.b16 %v607
        %v703 = vunpack.c.l.b16 %v608
        %v704 = vunpack.c.h.b16 %v608
        %v705 = vunpack.c.l.b16 %v609
        %v706 = vunpack.c.l.b16 %v610
        %v707 = vunpack.c.h.b16 %v610
        %v708 = vunpack.c.l.b16 %v611
        %v709 = vpack.c.b16 %v664, %v661
        %v710 = vpack.c.b16 %v665, %v662
        %v711 = vpack.c.b16 %v666, %v663
        %v712 = vpack.c.b16 %v670, %v667
        %v713 = vpack.c.b16 %v671, %v668
        %v714 = vpack.c.b16 %v672, %v669
        %v715 = vpack.c.b16 %v676, %v673
        %v716 = vpack.c.b16 %v677, %v674
        %v717 = vpack.c.b16 %v678, %v675
        %v718 = vpack.c.b16 %v682, %v679
        %v719 = vpack.c.b16 %v683, %v680
        %v720 = vpack.c.b16 %v684, %v681
        %v721 = vpack.c.b16 %v688, %v685
        %v722 = vpack.c.b16 %v689, %v686
        %v723 = vpack.c.b16 %v690, %v687
        %v724 = vpack.c.b16 %v694, %v691
        %v725 = vpack.c.b16 %v695, %v692
        %v726 = vpack.c.b16 %v696, %v693
        %v727 = vpack.c.b16 %v700, %v697
        %v728 = vpack.c.b16 %v701, %v698
        %v729 = vpack.c.b16 %v702, %v699
        %v730 = vpack.c.b16 %v706, %v703
        %v731 = vpack.c.b16 %v707, %v704
        %v732 = vpack.c.b16 %v708, %v705
        %757 = vmatprep.subr.bf16.mxu0 %v710
        %758 = vmatpush1.bf16.msra.mxu0 %v709
        %759 = vmatprep.subr.bf16.mxu0 %v713
        %760 = vmatpush1.bf16.msra.mxu0 %v712
        %761 = vmatprep.subr.bf16.mxu0 %v716
        %762 = vmatpush1.bf16.msra.mxu0 %v715
        %763 = vmatprep.subr.bf16.mxu0 %v719
        %764 = vmatpush1.bf16.msra.mxu0 %v718
        %765 = vmatprep.subr.bf16.mxu0 %v722
        %766 = vmatpush1.bf16.msra.mxu0 %v721
        %767 = vmatprep.subr.bf16.mxu0 %v725
        %768 = vmatpush1.bf16.msra.mxu0 %v724
        %769 = vmatprep.subr.bf16.mxu0 %v728
        %770 = vmatpush1.bf16.msra.mxu0 %v727
        %771 = vmatprep.subr.bf16.mxu0 %v731
        %772 = vmatpush1.bf16.msra.mxu0 %v730
        %773 = vmatprep.subr.bf16.mxu0 0
        %774 = vmatpush1.bf16.msra.mxu0 0
        %775 = vmatprep.subr.bf16.mxu0 0
        %776 = vmatpush1.bf16.msra.mxu0 0
        %777 = vmatprep.subr.bf16.mxu0 0
        %778 = vmatpush1.bf16.msra.mxu0 0
        %779 = vmatprep.subr.bf16.mxu0 0
        %780 = vmatpush1.bf16.msra.mxu0 0
        %781 = vmatprep.subr.bf16.mxu0 0
        %782 = vmatpush1.bf16.msra.mxu0 0
        %783 = vmatprep.subr.bf16.mxu0 0
        %784 = vmatpush1.bf16.msra.mxu0 0
        %785 = vmatprep.subr.bf16.mxu0 0
        %786 = vmatpush1.bf16.msra.mxu0 0
        %787 = vmatprep.subr.bf16.mxu0 0
        %788 = vmatpush1.bf16.msra.mxu0 0
        %789 = vmatprep.mubr.bf16.mxu0 0
        %790 = vmatmul.mubr.bf16.gmra.mrb[0].mxu0 %v572
        %v791 = vpop.f32.mrb[0].mxu0
        %v792 = vadd.f32 %v617, %v791
        %v793 = vpop.f32.mrb[0].mxu0
        %v794 = vadd.f32 %v621, %v793
        %v795 = vpop.f32.mrb[0].mxu0
        %v796 = vadd.f32 %v617, %v795
        %v797 = vpop.f32.mrb[0].mxu0
        %v798 = vadd.f32 %v621, %v797
        %799 = vmatprep.mubr.bf16.mxu0 0
        %800 = vmatmul.mubr.bf16.gmra.mrb[0].mxu0 %v573
        %v801 = vpop.f32.mrb[0].mxu0
        %v802 = vadd.f32 %v617, %v801
        %v803 = vpop.f32.mrb[0].mxu0
        %v804 = vadd.f32 %v621, %v803
        %v805 = vpop.f32.mrb[0].mxu0
        %v806 = vadd.f32 %v617, %v805
        %v807 = vpop.f32.mrb[0].mxu0
        %v808 = vadd.f32 %v621, %v807
        %809 = vmatprep.mubr.bf16.mxu0 0
        %810 = vmatmul.mubr.bf16.gmra.mrb[0].mxu0 %v574
        %v811 = vpop.f32.mrb[0].mxu0
        %v812 = vadd.f32 %v617, %v811
        %v813 = vpop.f32.mrb[0].mxu0
        %v814 = vadd.f32 %v621, %v813
        %v815 = vpop.f32.mrb[0].mxu0
        %v816 = vadd.f32 %v617, %v815
        %v817 = vpop.f32.mrb[0].mxu0
        %v818 = vadd.f32 %v621, %v817
        %819 = vmatprep.mubr.bf16.mxu0 0
        %820 = vmatmul.mubr.bf16.gmra.mrb[0].mxu0 %v575
        %v821 = vpop.f32.mrb[0].mxu0
        %v822 = vadd.f32 %v617, %v821
        %v823 = vpop.f32.mrb[0].mxu0
        %v824 = vadd.f32 %v621, %v823
        %v825 = vpop.f32.mrb[0].mxu0
        %v826 = vadd.f32 %v617, %v825
        %v827 = vpop.f32.mrb[0].mxu0
        %v828 = vadd.f32 %v621, %v827
        %829 = vmatprep.mubr.bf16.mxu0 0
        %830 = vmatmul.mubr.bf16.gmra.mrb[0].mxu0 %v576
        %v831 = vpop.f32.mrb[0].mxu0
        %v832 = vadd.f32 %v617, %v831
        %v833 = vpop.f32.mrb[0].mxu0
        %v834 = vadd.f32 %v621, %v833
        %v835 = vpop.f32.mrb[0].mxu0
        %v836 = vadd.f32 %v617, %v835
        %v837 = vpop.f32.mrb[0].mxu0
        %v838 = vadd.f32 %v621, %v837
        %839 = vmatprep.mubr.bf16.mxu0 0
        %840 = vmatmul.mubr.bf16.gmra.mrb[0].mxu0 %v577
        %v841 = vpop.f32.mrb[0].mxu0
        %v842 = vadd.f32 %v617, %v841
        %v843 = vpop.f32.mrb[0].mxu0
        %v844 = vadd.f32 %v621, %v843
        %v845 = vpop.f32.mrb[0].mxu0
        %v846 = vadd.f32 %v617, %v845
        %v847 = vpop.f32.mrb[0].mxu0
        %v848 = vadd.f32 %v621, %v847
        %849 = vmatprep.mubr.bf16.mxu0 0
        %850 = vmatmul.mubr.bf16.gmra.mrb[0].mxu0 %v578
        %v851 = vpop.f32.mrb[0].mxu0
        %v852 = vadd.f32 %v617, %v851
        %v853 = vpop.f32.mrb[0].mxu0
        %v854 = vadd.f32 %v621, %v853
        %v855 = vpop.f32.mrb[0].mxu0
        %v856 = vadd.f32 %v617, %v855
        %v857 = vpop.f32.mrb[0].mxu0
        %v858 = vadd.f32 %v621, %v857
        %859 = vmatprep.mubr.bf16.mxu0 0
        %860 = vmatmul.mubr.bf16.gmra.mrb[0].mxu0 %v579
        %v861 = vpop.f32.mrb[0].mxu0
        %v862 = vadd.f32 %v617, %v861
        %v863 = vpop.f32.mrb[0].mxu0
        %v864 = vadd.f32 %v621, %v863
        %v865 = vpop.f32.mrb[0].mxu0
        %v866 = vadd.f32 %v617, %v865
        %v867 = vpop.f32.mrb[0].mxu0
        %v868 = vadd.f32 %v621, %v867
        %869 = vdwg.mxu0
        %870 = vmatprep.subr.bf16.mxu0 0
        %871 = vmatpush1.bf16.msra.mxu0 %v711
        %872 = vmatprep.subr.bf16.mxu0 0
        %873 = vmatpush1.bf16.msra.mxu0 %v714
        %874 = vmatprep.subr.bf16.mxu0 0
        %875 = vmatpush1.bf16.msra.mxu0 %v717
        %876 = vmatprep.subr.bf16.mxu0 0
        %877 = vmatpush1.bf16.msra.mxu0 %v720
        %878 = vmatprep.subr.bf16.mxu0 0
        %879 = vmatpush1.bf16.msra.mxu0 %v723
        %880 = vmatprep.subr.bf16.mxu0 0
        %881 = vmatpush1.bf16.msra.mxu0 %v726
        %882 = vmatprep.subr.bf16.mxu0 0
        %883 = vmatpush1.bf16.msra.mxu0 %v729
        %884 = vmatprep.subr.bf16.mxu0 0
        %885 = vmatpush1.bf16.msra.mxu0 %v732
        %886 = vmatprep.subr.bf16.mxu0 0
        %887 = vmatpush1.bf16.msra.mxu0 0
        %888 = vmatprep.subr.bf16.mxu0 0
        %889 = vmatpush1.bf16.msra.mxu0 0
        %890 = vmatprep.subr.bf16.mxu0 0
        %891 = vmatpush1.bf16.msra.mxu0 0
        %892 = vmatprep.subr.bf16.mxu0 0
        %893 = vmatpush1.bf16.msra.mxu0 0
        %894 = vmatprep.subr.bf16.mxu0 0
        %895 = vmatpush1.bf16.msra.mxu0 0
        %896 = vmatprep.subr.bf16.mxu0 0
        %897 = vmatpush1.bf16.msra.mxu0 0
        %898 = vmatprep.subr.bf16.mxu0 0
        %899 = vmatpush1.bf16.msra.mxu0 0
        %900 = vmatprep.subr.bf16.mxu0 0
        %901 = vmatpush1.bf16.msra.mxu0 0
        %902 = vmatprep.mubr.bf16.mxu0 0
        %903 = vmatmul.mubr.bf16.gmra.mrb[0].mxu0 %v572
        %v904 = vpop.f32.mrb[0].mxu0
        %v905 = vadd.f32 %v625, %v904
        %v906 = vpop.f32.mrb[0].mxu0
        %v907 = vpop.f32.mrb[0].mxu0
        %v908 = vadd.f32 %v625, %v907
        %v909 = vpop.f32.mrb[0].mxu0
        %910 = vmatprep.mubr.bf16.mxu0 0
        %911 = vmatmul.mubr.bf16.gmra.mrb[0].mxu0 %v573
        %v912 = vpop.f32.mrb[0].mxu0
        %v913 = vadd.f32 %v625, %v912
        %v914 = vpop.f32.mrb[0].mxu0
        %v915 = vpop.f32.mrb[0].mxu0
        %v916 = vadd.f32 %v625, %v915
        %v917 = vpop.f32.mrb[0].mxu0
        %918 = vmatprep.mubr.bf16.mxu0 0
        %919 = vmatmul.mubr.bf16.gmra.mrb[0].mxu0 %v574
        %v920 = vpop.f32.mrb[0].mxu0
        %v921 = vadd.f32 %v625, %v920
        %v922 = vpop.f32.mrb[0].mxu0
        %v923 = vpop.f32.mrb[0].mxu0
        %v924 = vadd.f32 %v625, %v923
        %v925 = vpop.f32.mrb[0].mxu0
        %926 = vmatprep.mubr.bf16.mxu0 0
        %927 = vmatmul.mubr.bf16.gmra.mrb[0].mxu0 %v575
        %v928 = vpop.f32.mrb[0].mxu0
        %v929 = vadd.f32 %v625, %v928
        %v930 = vpop.f32.mrb[0].mxu0
        %v931 = vpop.f32.mrb[0].mxu0
        %v932 = vadd.f32 %v625, %v931
        %v933 = vpop.f32.mrb[0].mxu0
        %934 = vmatprep.mubr.bf16.mxu0 0
        %935 = vmatmul.mubr.bf16.gmra.mrb[0].mxu0 %v576
        %v936 = vpop.f32.mrb[0].mxu0
        %v937 = vadd.f32 %v625, %v936
        %v938 = vpop.f32.mrb[0].mxu0
        %v939 = vpop.f32.mrb[0].mxu0
        %v940 = vadd.f32 %v625, %v939
        %v941 = vpop.f32.mrb[0].mxu0
        %942 = vmatprep.mubr.bf16.mxu0 0
        %943 = vmatmul.mubr.bf16.gmra.mrb[0].mxu0 %v577
        %v944 = vpop.f32.mrb[0].mxu0
        %v945 = vadd.f32 %v625, %v944
        %v946 = vpop.f32.mrb[0].mxu0
        %v947 = vpop.f32.mrb[0].mxu0
        %v948 = vadd.f32 %v625, %v947
        %v949 = vpop.f32.mrb[0].mxu0
        %950 = vmatprep.mubr.bf16.mxu0 0
        %951 = vmatmul.mubr.bf16.gmra.mrb[0].mxu0 %v578
        %v952 = vpop.f32.mrb[0].mxu0
        %v953 = vadd.f32 %v625, %v952
        %v954 = vpop.f32.mrb[0].mxu0
        %v955 = vpop.f32.mrb[0].mxu0
        %v956 = vadd.f32 %v625, %v955
        %v957 = vpop.f32.mrb[0].mxu0
        %958 = vmatprep.mubr.bf16.mxu0 0
        %959 = vmatmul.mubr.bf16.gmra.mrb[0].mxu0 %v579
        %v960 = vpop.f32.mrb[0].mxu0
        %v961 = vadd.f32 %v625, %v960
        %v962 = vpop.f32.mrb[0].mxu0
        %v963 = vpop.f32.mrb[0].mxu0
        %v964 = vadd.f32 %v625, %v963
        %v965 = vpop.f32.mrb[0].mxu0
        %966 = vdwg.mxu0
        %v967 = vpack.c.bf16 %v796, %v792
        %v968 = vpack.c.bf16 %v798, %v794
        %v969 = vpack.c.bf16 %v908, %v905
        %v970 = vpack.c.bf16 %v806, %v802
        %v971 = vpack.c.bf16 %v808, %v804
        %v972 = vpack.c.bf16 %v916, %v913
        %v973 = vpack.c.bf16 %v816, %v812
        %v974 = vpack.c.bf16 %v818, %v814
        %v975 = vpack.c.bf16 %v924, %v921
        %v976 = vpack.c.bf16 %v826, %v822
        %v977 = vpack.c.bf16 %v828, %v824
        %v978 = vpack.c.bf16 %v932, %v929
        %v979 = vpack.c.bf16 %v836, %v832
        %v980 = vpack.c.bf16 %v838, %v834
        %v981 = vpack.c.bf16 %v940, %v937
        %v982 = vpack.c.bf16 %v846, %v842
        %v983 = vpack.c.bf16 %v848, %v844
        %v984 = vpack.c.bf16 %v948, %v945
        %v985 = vpack.c.bf16 %v856, %v852
        %v986 = vpack.c.bf16 %v858, %v854
        %v987 = vpack.c.bf16 %v956, %v953
        %v988 = vpack.c.bf16 %v866, %v862
        %v989 = vpack.c.bf16 %v868, %v864
        %v990 = vpack.c.bf16 %v964, %v961
        %999 = vrot.lane.b32.xlu0 %v967, 96
        %v1000 = vpop.permute.xlu0 %999
        %1001 = vrot.lane.b32.xlu0 %v970, 96
        %v1002 = vpop.permute.xlu0 %1001
        %1003 = vrot.lane.b32.xlu0 %v973, 96
        %v1004 = vpop.permute.xlu0 %1003
        %1005 = vrot.lane.b32.xlu0 %v976, 96
        %v1006 = vpop.permute.xlu0 %1005
        %1007 = vrot.lane.b32.xlu0 %v979, 96
        %v1008 = vpop.permute.xlu0 %1007
        %1009 = vrot.lane.b32.xlu0 %v982, 96
        %v1010 = vpop.permute.xlu0 %1009
        %1011 = vrot.lane.b32.xlu0 %v985, 96
        %v1012 = vpop.permute.xlu0 %1011
        %1013 = vrot.lane.b32.xlu0 %v988, 96
        %v1014 = vpop.permute.xlu0 %1013
        %1015 = vrot.lane.b32.xlu0 %v967, 64
        %v1016 = vpop.permute.xlu0 %1015
        %1017 = vrot.lane.b32.xlu0 %v970, 64
        %v1018 = vpop.permute.xlu0 %1017
        %1019 = vrot.lane.b32.xlu0 %v973, 64
        %v1020 = vpop.permute.xlu0 %1019
        %1021 = vrot.lane.b32.xlu0 %v976, 64
        %v1022 = vpop.permute.xlu0 %1021
        %1023 = vrot.lane.b32.xlu0 %v979, 64
        %v1024 = vpop.permute.xlu0 %1023
        %1025 = vrot.lane.b32.xlu0 %v982, 64
        %v1026 = vpop.permute.xlu0 %1025
        %1027 = vrot.lane.b32.xlu0 %v985, 64
        %v1028 = vpop.permute.xlu0 %1027
        %1029 = vrot.lane.b32.xlu0 %v988, 64
        %v1030 = vpop.permute.xlu0 %1029
        %1031 = vrot.lane.b32.xlu0 %v967, 32
        %v1032 = vpop.permute.xlu0 %1031
        %1033 = vrot.lane.b32.xlu0 %v970, 32
        %v1034 = vpop.permute.xlu0 %1033
        %1035 = vrot.lane.b32.xlu0 %v973, 32
        %v1036 = vpop.permute.xlu0 %1035
        %1037 = vrot.lane.b32.xlu0 %v976, 32
        %v1038 = vpop.permute.xlu0 %1037
        %1039 = vrot.lane.b32.xlu0 %v979, 32
        %v1040 = vpop.permute.xlu0 %1039
        %1041 = vrot.lane.b32.xlu0 %v982, 32
        %v1042 = vpop.permute.xlu0 %1041
        %1043 = vrot.lane.b32.xlu0 %v985, 32
        %v1044 = vpop.permute.xlu0 %1043
        %1045 = vrot.lane.b32.xlu0 %v988, 32
        %v1046 = vpop.permute.xlu0 %1045
        %1055 = vrot.lane.b32.xlu0 %v968, 96
        %v1056 = vpop.permute.xlu0 %1055
        %1057 = vrot.lane.b32.xlu0 %v971, 96
        %v1058 = vpop.permute.xlu0 %1057
        %1059 = vrot.lane.b32.xlu0 %v974, 96
        %v1060 = vpop.permute.xlu0 %1059
        %1061 = vrot.lane.b32.xlu0 %v977, 96
        %v1062 = vpop.permute.xlu0 %1061
        %1063 = vrot.lane.b32.xlu0 %v980, 96
        %v1064 = vpop.permute.xlu0 %1063
        %1065 = vrot.lane.b32.xlu0 %v983, 96
        %v1066 = vpop.permute.xlu0 %1065
        %1067 = vrot.lane.b32.xlu0 %v986, 96
        %v1068 = vpop.permute.xlu0 %1067
        %1069 = vrot.lane.b32.xlu0 %v989, 96
        %v1070 = vpop.permute.xlu0 %1069
        %1071 = vrot.lane.b32.xlu0 %v968, 64
        %v1072 = vpop.permute.xlu0 %1071
        %1073 = vrot.lane.b32.xlu0 %v971, 64
        %v1074 = vpop.permute.xlu0 %1073
        %1075 = vrot.lane.b32.xlu0 %v974, 64
        %v1076 = vpop.permute.xlu0 %1075
        %1077 = vrot.lane.b32.xlu0 %v977, 64
        %v1078 = vpop.permute.xlu0 %1077
        %1079 = vrot.lane.b32.xlu0 %v980, 64
        %v1080 = vpop.permute.xlu0 %1079
        %1081 = vrot.lane.b32.xlu0 %v983, 64
        %v1082 = vpop.permute.xlu0 %1081
        %1083 = vrot.lane.b32.xlu0 %v986, 64
        %v1084 = vpop.permute.xlu0 %1083
        %1085 = vrot.lane.b32.xlu0 %v989, 64
        %v1086 = vpop.permute.xlu0 %1085
        %1087 = vrot.lane.b32.xlu0 %v968, 32
        %v1088 = vpop.permute.xlu0 %1087
        %1089 = vrot.lane.b32.xlu0 %v971, 32
        %v1090 = vpop.permute.xlu0 %1089
        %1091 = vrot.lane.b32.xlu0 %v974, 32
        %v1092 = vpop.permute.xlu0 %1091
        %1093 = vrot.lane.b32.xlu0 %v977, 32
        %v1094 = vpop.permute.xlu0 %1093
        %1095 = vrot.lane.b32.xlu0 %v980, 32
        %v1096 = vpop.permute.xlu0 %1095
        %1097 = vrot.lane.b32.xlu0 %v983, 32
        %v1098 = vpop.permute.xlu0 %1097
        %1099 = vrot.lane.b32.xlu0 %v986, 32
        %v1100 = vpop.permute.xlu0 %1099
        %1101 = vrot.lane.b32.xlu0 %v989, 32
        %v1102 = vpop.permute.xlu0 %1101
        %1111 = vrot.lane.b32.xlu0 %v969, 96
        %v1112 = vpop.permute.xlu0 %1111
        %1113 = vrot.lane.b32.xlu0 %v972, 96
        %v1114 = vpop.permute.xlu0 %1113
        %1115 = vrot.lane.b32.xlu0 %v975, 96
        %v1116 = vpop.permute.xlu0 %1115
        %1117 = vrot.lane.b32.xlu0 %v978, 96
        %v1118 = vpop.permute.xlu0 %1117
        %1119 = vrot.lane.b32.xlu0 %v981, 96
        %v1120 = vpop.permute.xlu0 %1119
        %1121 = vrot.lane.b32.xlu0 %v984, 96
        %v1122 = vpop.permute.xlu0 %1121
        %1123 = vrot.lane.b32.xlu0 %v987, 96
        %v1124 = vpop.permute.xlu0 %1123
        %1125 = vrot.lane.b32.xlu0 %v990, 96
        %v1126 = vpop.permute.xlu0 %1125
        %1135 = vrot.lane.b32.xlu0 %v969, 64
        %v1136 = vpop.permute.xlu0 %1135
        %1137 = vrot.lane.b32.xlu0 %v972, 64
        %v1138 = vpop.permute.xlu0 %1137
        %1139 = vrot.lane.b32.xlu0 %v975, 64
        %v1140 = vpop.permute.xlu0 %1139
        %1141 = vrot.lane.b32.xlu0 %v978, 64
        %v1142 = vpop.permute.xlu0 %1141
        %1143 = vrot.lane.b32.xlu0 %v981, 64
        %v1144 = vpop.permute.xlu0 %1143
        %1145 = vrot.lane.b32.xlu0 %v984, 64
        %v1146 = vpop.permute.xlu0 %1145
        %1147 = vrot.lane.b32.xlu0 %v987, 64
        %v1148 = vpop.permute.xlu0 %1147
        %1149 = vrot.lane.b32.xlu0 %v990, 64
        %v1150 = vpop.permute.xlu0 %1149
        %1159 = vrot.lane.b32.xlu0 %v969, 32
        %v1160 = vpop.permute.xlu0 %1159
        %1161 = vrot.lane.b32.xlu0 %v972, 32
        %v1162 = vpop.permute.xlu0 %1161
        %1163 = vrot.lane.b32.xlu0 %v975, 32
        %v1164 = vpop.permute.xlu0 %1163
        %1165 = vrot.lane.b32.xlu0 %v978, 32
        %v1166 = vpop.permute.xlu0 %1165
        %1167 = vrot.lane.b32.xlu0 %v981, 32
        %v1168 = vpop.permute.xlu0 %1167
        %1169 = vrot.lane.b32.xlu0 %v984, 32
        %v1170 = vpop.permute.xlu0 %1169
        %1171 = vrot.lane.b32.xlu0 %v987, 32
        %v1172 = vpop.permute.xlu0 %1171
        %1173 = vrot.lane.b32.xlu0 %v990, 32
        %v1174 = vpop.permute.xlu0 %1173
        %v1183 = vlaneseq
        %v1184 = vshrl.u32 %v1183, 7
        %v1185 = vadd.s32 %v1184, 8
        %v1186 = vadd.s32 %v1184, 16
        %v1187 = vadd.s32 %v1184, 24
        %v1188 = vadd.s32 %v1184, 32
        %v1189 = vadd.s32 %v1184, 40
        %v1190 = vadd.s32 %v1184, 48
        %v1191 = vadd.s32 %v1184, 56
        %v1192 = vadd.s32 %v1184, 64
        %v1193 = vadd.s32 %v1184, 72
        %v1194 = vadd.s32 %v1184, 80
        %v1195 = vadd.s32 %v1184, 88
        %v1196 = vadd.s32 %v1184, 96
        %v1197 = vadd.s32 %v1184, 104
        %v1198 = vadd.s32 %v1184, 112
        %v1199 = vadd.s32 %v1184, 120
        %v1200 = vlaneseq
        %v1201 = vand.u32 %v1200, 127
        %vm1202 = vcmp.ge.s32.totalorder %v1184, %v1201
        %vm1203 = vcmp.ge.s32.totalorder %v1185, %v1201
        %vm1204 = vcmp.ge.s32.totalorder %v1186, %v1201
        %vm1205 = vcmp.ge.s32.totalorder %v1187, %v1201
        %vm1206 = vcmp.ge.s32.totalorder %v1188, %v1201
        %vm1207 = vcmp.ge.s32.totalorder %v1189, %v1201
        %vm1208 = vcmp.ge.s32.totalorder %v1190, %v1201
        %vm1209 = vcmp.ge.s32.totalorder %v1191, %v1201
        %vm1210 = vcmp.ge.s32.totalorder %v1192, %v1201
        %vm1211 = vcmp.ge.s32.totalorder %v1193, %v1201
        %vm1212 = vcmp.ge.s32.totalorder %v1194, %v1201
        %vm1213 = vcmp.ge.s32.totalorder %v1195, %v1201
        %vm1214 = vcmp.ge.s32.totalorder %v1196, %v1201
        %vm1215 = vcmp.ge.s32.totalorder %v1197, %v1201
        %vm1216 = vcmp.ge.s32.totalorder %v1198, %v1201
        %vm1217 = vcmp.ge.s32.totalorder %v1199, %v1201
        %v1218 = vsel %vm1202, 0.0, -1e+30
        %v1219 = vsel %vm1203, 0.0, -1e+30
        %v1220 = vsel %vm1204, 0.0, -1e+30
        %v1221 = vsel %vm1205, 0.0, -1e+30
        %v1222 = vsel %vm1206, 0.0, -1e+30
        %v1223 = vsel %vm1207, 0.0, -1e+30
        %v1224 = vsel %vm1208, 0.0, -1e+30
        %v1225 = vsel %vm1209, 0.0, -1e+30
        %v1226 = vsel %vm1210, 0.0, -1e+30
        %v1227 = vsel %vm1211, 0.0, -1e+30
        %v1228 = vsel %vm1212, 0.0, -1e+30
        %v1229 = vsel %vm1213, 0.0, -1e+30
        %v1230 = vsel %vm1214, 0.0, -1e+30
        %v1231 = vsel %vm1215, 0.0, -1e+30
        %v1232 = vsel %vm1216, 0.0, -1e+30
        %v1233 = vsel %vm1217, 0.0, -1e+30
        %vm1234 = vcmask 261120
        %v1236 = vsel %vm1234, %v967, 0
        %v1239 = vsel %vm1234, %v970, 0
        %v1242 = vsel %vm1234, %v973, 0
        %v1245 = vsel %vm1234, %v976, 0
        %v1248 = vsel %vm1234, %v979, 0
        %v1251 = vsel %vm1234, %v982, 0
        %v1254 = vsel %vm1234, %v985, 0
        %v1257 = vsel %vm1234, %v988, 0
        %v1260 = vsel %vm1234, %v968, 0
        %v1263 = vsel %vm1234, %v971, 0
        %v1266 = vsel %vm1234, %v974, 0
        %v1269 = vsel %vm1234, %v977, 0
        %v1272 = vsel %vm1234, %v980, 0
        %v1275 = vsel %vm1234, %v983, 0
        %v1278 = vsel %vm1234, %v986, 0
        %v1281 = vsel %vm1234, %v989, 0
        %1283 = vmatprep.subr.bf16.mxu0 0
        %1284 = vmatpush1.bf16.xpose.msra.mxu0 %v1260
        %1285 = vmatprep.subr.bf16.mxu0 0
        %1286 = vmatpush1.bf16.xpose.msra.mxu0 %v1263
        %1287 = vmatprep.subr.bf16.mxu0 0
        %1288 = vmatpush1.bf16.xpose.msra.mxu0 %v1266
        %1289 = vmatprep.subr.bf16.mxu0 0
        %1290 = vmatpush1.bf16.xpose.msra.mxu0 %v1269
        %1291 = vmatprep.subr.bf16.mxu0 0
        %1292 = vmatpush1.bf16.xpose.msra.mxu0 %v1272
        %1293 = vmatprep.subr.bf16.mxu0 0
        %1294 = vmatpush1.bf16.xpose.msra.mxu0 %v1275
        %1295 = vmatprep.subr.bf16.mxu0 0
        %1296 = vmatpush1.bf16.xpose.msra.mxu0 %v1278
        %1297 = vmatprep.subr.bf16.mxu0 0
        %1298 = vmatpush1.bf16.xpose.msra.mxu0 %v1281
        %1299 = vmatprep.subr.bf16.mxu0 0
        %1300 = vmatpush1.bf16.xpose.msra.mxu0 0
        %1301 = vmatprep.subr.bf16.mxu0 0
        %1302 = vmatpush1.bf16.xpose.msra.mxu0 0
        %1303 = vmatprep.subr.bf16.mxu0 0
        %1304 = vmatpush1.bf16.xpose.msra.mxu0 0
        %1305 = vmatprep.subr.bf16.mxu0 0
        %1306 = vmatpush1.bf16.xpose.msra.mxu0 0
        %1307 = vmatprep.subr.bf16.mxu0 0
        %1308 = vmatpush1.bf16.xpose.msra.mxu0 0
        %1309 = vmatprep.subr.bf16.mxu0 0
        %1310 = vmatpush1.bf16.xpose.msra.mxu0 0
        %1311 = vmatprep.subr.bf16.mxu0 0
        %1312 = vmatpush1.bf16.xpose.msra.mxu0 0
        %1313 = vmatprep.subr.bf16.mxu0 0
        %1314 = vmatpush1.bf16.xpose.msra.mxu0 0
        %1315 = vmatprep.mubr.bf16.mxu0 0
        %1316 = vmatmul.mubr.bf16.gmra.mrb[0].mxu0 %v1236
        %v1317 = vpop.f32.mrb[0].mxu0
        %v1318 = vadd.f32 0.0, %v1317
        %v1319 = vpop.f32.mrb[0].mxu0
        %v1320 = vpop.f32.mrb[0].mxu0
        %v1321 = vadd.f32 0.0, %v1320
        %v1322 = vpop.f32.mrb[0].mxu0
        %1323 = vmatprep.mubr.bf16.mxu0 0
        %1324 = vmatmul.mubr.bf16.gmra.mrb[0].mxu0 %v1239
        %v1325 = vpop.f32.mrb[0].mxu0
        %v1326 = vadd.f32 0.0, %v1325
        %v1327 = vpop.f32.mrb[0].mxu0
        %v1328 = vpop.f32.mrb[0].mxu0
        %v1329 = vadd.f32 0.0, %v1328
        %v1330 = vpop.f32.mrb[0].mxu0
        %1331 = vmatprep.mubr.bf16.mxu0 0
        %1332 = vmatmul.mubr.bf16.gmra.mrb[0].mxu0 %v1242
        %v1333 = vpop.f32.mrb[0].mxu0
        %v1334 = vadd.f32 0.0, %v1333
        %v1335 = vpop.f32.mrb[0].mxu0
        %v1336 = vpop.f32.mrb[0].mxu0
        %v1337 = vadd.f32 0.0, %v1336
        %v1338 = vpop.f32.mrb[0].mxu0
        %1339 = vmatprep.mubr.bf16.mxu0 0
        %1340 = vmatmul.mubr.bf16.gmra.mrb[0].mxu0 %v1245
        %v1341 = vpop.f32.mrb[0].mxu0
        %v1342 = vadd.f32 0.0, %v1341
        %v1343 = vpop.f32.mrb[0].mxu0
        %v1344 = vpop.f32.mrb[0].mxu0
        %v1345 = vadd.f32 0.0, %v1344
        %v1346 = vpop.f32.mrb[0].mxu0
        %1347 = vmatprep.mubr.bf16.mxu0 0
        %1348 = vmatmul.mubr.bf16.gmra.mrb[0].mxu0 %v1248
        %v1349 = vpop.f32.mrb[0].mxu0
        %v1350 = vadd.f32 0.0, %v1349
        %v1351 = vpop.f32.mrb[0].mxu0
        %v1352 = vpop.f32.mrb[0].mxu0
        %v1353 = vadd.f32 0.0, %v1352
        %v1354 = vpop.f32.mrb[0].mxu0
        %1355 = vmatprep.mubr.bf16.mxu0 0
        %1356 = vmatmul.mubr.bf16.gmra.mrb[0].mxu0 %v1251
        %v1357 = vpop.f32.mrb[0].mxu0
        %v1358 = vadd.f32 0.0, %v1357
        %v1359 = vpop.f32.mrb[0].mxu0
        %v1360 = vpop.f32.mrb[0].mxu0
        %v1361 = vadd.f32 0.0, %v1360
        %v1362 = vpop.f32.mrb[0].mxu0
        %1363 = vmatprep.mubr.bf16.mxu0 0
        %1364 = vmatmul.mubr.bf16.gmra.mrb[0].mxu0 %v1254
        %v1365 = vpop.f32.mrb[0].mxu0
        %v1366 = vadd.f32 0.0, %v1365
        %v1367 = vpop.f32.mrb[0].mxu0
        %v1368 = vpop.f32.mrb[0].mxu0
        %v1369 = vadd.f32 0.0, %v1368
        %v1370 = vpop.f32.mrb[0].mxu0
        %1371 = vmatprep.mubr.bf16.mxu0 0
        %1372 = vmatmul.mubr.bf16.gmra.mrb[0].mxu0 %v1257
        %v1373 = vpop.f32.mrb[0].mxu0
        %v1374 = vadd.f32 0.0, %v1373
        %v1375 = vpop.f32.mrb[0].mxu0
        %v1376 = vpop.f32.mrb[0].mxu0
        %v1377 = vadd.f32 0.0, %v1376
        %v1378 = vpop.f32.mrb[0].mxu0
        %1379 = vdwg.mxu0
        %v1381 = vsel %vm1234, %v1000, 0
        %v1384 = vsel %vm1234, %v1002, 0
        %v1387 = vsel %vm1234, %v1004, 0
        %v1390 = vsel %vm1234, %v1006, 0
        %v1393 = vsel %vm1234, %v1008, 0
        %v1396 = vsel %vm1234, %v1010, 0
        %v1399 = vsel %vm1234, %v1012, 0
        %v1402 = vsel %vm1234, %v1014, 0
        %v1405 = vsel %vm1234, %v1056, 0
        %v1408 = vsel %vm1234, %v1058, 0
        %v1411 = vsel %vm1234, %v1060, 0
        %v1414 = vsel %vm1234, %v1062, 0
        %v1417 = vsel %vm1234, %v1064, 0
        %v1420 = vsel %vm1234, %v1066, 0
        %v1423 = vsel %vm1234, %v1068, 0
        %v1426 = vsel %vm1234, %v1070, 0
        %1428 = vmatprep.subr.bf16.mxu0 0
        %1429 = vmatpush1.bf16.xpose.msra.mxu0 %v1405
        %1430 = vmatprep.subr.bf16.mxu0 0
        %1431 = vmatpush1.bf16.xpose.msra.mxu0 %v1408
        %1432 = vmatprep.subr.bf16.mxu0 0
        %1433 = vmatpush1.bf16.xpose.msra.mxu0 %v1411
        %1434 = vmatprep.subr.bf16.mxu0 0
        %1435 = vmatpush1.bf16.xpose.msra.mxu0 %v1414
        %1436 = vmatprep.subr.bf16.mxu0 0
        %1437 = vmatpush1.bf16.xpose.msra.mxu0 %v1417
        %1438 = vmatprep.subr.bf16.mxu0 0
        %1439 = vmatpush1.bf16.xpose.msra.mxu0 %v1420
        %1440 = vmatprep.subr.bf16.mxu0 0
        %1441 = vmatpush1.bf16.xpose.msra.mxu0 %v1423
        %1442 = vmatprep.subr.bf16.mxu0 0
        %1443 = vmatpush1.bf16.xpose.msra.mxu0 %v1426
        %1444 = vmatprep.subr.bf16.mxu0 0
        %1445 = vmatpush1.bf16.xpose.msra.mxu0 0
        %1446 = vmatprep.subr.bf16.mxu0 0
        %1447 = vmatpush1.bf16.xpose.msra.mxu0 0
        %1448 = vmatprep.subr.bf16.mxu0 0
        %1449 = vmatpush1.bf16.xpose.msra.mxu0 0
        %1450 = vmatprep.subr.bf16.mxu0 0
        %1451 = vmatpush1.bf16.xpose.msra.mxu0 0
        %1452 = vmatprep.subr.bf16.mxu0 0
        %1453 = vmatpush1.bf16.xpose.msra.mxu0 0
        %1454 = vmatprep.subr.bf16.mxu0 0
        %1455 = vmatpush1.bf16.xpose.msra.mxu0 0
        %1456 = vmatprep.subr.bf16.mxu0 0
        %1457 = vmatpush1.bf16.xpose.msra.mxu0 0
        %1458 = vmatprep.subr.bf16.mxu0 0
        %1459 = vmatpush1.bf16.xpose.msra.mxu0 0
        %1460 = vmatprep.mubr.bf16.mxu0 0
        %1461 = vmatmul.mubr.bf16.gmra.mrb[0].mxu0 %v1381
        %v1462 = vpop.f32.mrb[0].mxu0
        %v1463 = vadd.f32 0.0, %v1462
        %v1464 = vpop.f32.mrb[0].mxu0
        %v1465 = vpop.f32.mrb[0].mxu0
        %v1466 = vadd.f32 0.0, %v1465
        %v1467 = vpop.f32.mrb[0].mxu0
        %1468 = vmatprep.mubr.bf16.mxu0 0
        %1469 = vmatmul.mubr.bf16.gmra.mrb[0].mxu0 %v1384
        %v1470 = vpop.f32.mrb[0].mxu0
        %v1471 = vadd.f32 0.0, %v1470
        %v1472 = vpop.f32.mrb[0].mxu0
        %v1473 = vpop.f32.mrb[0].mxu0
        %v1474 = vadd.f32 0.0, %v1473
        %v1475 = vpop.f32.mrb[0].mxu0
        %1476 = vmatprep.mubr.bf16.mxu0 0
        %1477 = vmatmul.mubr.bf16.gmra.mrb[0].mxu0 %v1387
        %v1478 = vpop.f32.mrb[0].mxu0
        %v1479 = vadd.f32 0.0, %v1478
        %v1480 = vpop.f32.mrb[0].mxu0
        %v1481 = vpop.f32.mrb[0].mxu0
        %v1482 = vadd.f32 0.0, %v1481
        %v1483 = vpop.f32.mrb[0].mxu0
        %1484 = vmatprep.mubr.bf16.mxu0 0
        %1485 = vmatmul.mubr.bf16.gmra.mrb[0].mxu0 %v1390
        %v1486 = vpop.f32.mrb[0].mxu0
        %v1487 = vadd.f32 0.0, %v1486
        %v1488 = vpop.f32.mrb[0].mxu0
        %v1489 = vpop.f32.mrb[0].mxu0
        %v1490 = vadd.f32 0.0, %v1489
        %v1491 = vpop.f32.mrb[0].mxu0
        %1492 = vmatprep.mubr.bf16.mxu0 0
        %1493 = vmatmul.mubr.bf16.gmra.mrb[0].mxu0 %v1393
        %v1494 = vpop.f32.mrb[0].mxu0
        %v1495 = vadd.f32 0.0, %v1494
        %v1496 = vpop.f32.mrb[0].mxu0
        %v1497 = vpop.f32.mrb[0].mxu0
        %v1498 = vadd.f32 0.0, %v1497
        %v1499 = vpop.f32.mrb[0].mxu0
        %1500 = vmatprep.mubr.bf16.mxu0 0
        %1501 = vmatmul.mubr.bf16.gmra.mrb[0].mxu0 %v1396
        %v1502 = vpop.f32.mrb[0].mxu0
        %v1503 = vadd.f32 0.0, %v1502
        %v1504 = vpop.f32.mrb[0].mxu0
        %v1505 = vpop.f32.mrb[0].mxu0
        %v1506 = vadd.f32 0.0, %v1505
        %v1507 = vpop.f32.mrb[0].mxu0
        %1508 = vmatprep.mubr.bf16.mxu0 0
        %1509 = vmatmul.mubr.bf16.gmra.mrb[0].mxu0 %v1399
        %v1510 = vpop.f32.mrb[0].mxu0
        %v1511 = vadd.f32 0.0, %v1510
        %v1512 = vpop.f32.mrb[0].mxu0
        %v1513 = vpop.f32.mrb[0].mxu0
        %v1514 = vadd.f32 0.0, %v1513
        %v1515 = vpop.f32.mrb[0].mxu0
        %1516 = vmatprep.mubr.bf16.mxu0 0
        %1517 = vmatmul.mubr.bf16.gmra.mrb[0].mxu0 %v1402
        %v1518 = vpop.f32.mrb[0].mxu0
        %v1519 = vadd.f32 0.0, %v1518
        %v1520 = vpop.f32.mrb[0].mxu0
        %v1521 = vpop.f32.mrb[0].mxu0
        %v1522 = vadd.f32 0.0, %v1521
        %v1523 = vpop.f32.mrb[0].mxu0
        %1524 = vdwg.mxu0
        %v1526 = vsel %vm1234, %v1016, 0
        %v1529 = vsel %vm1234, %v1018, 0
        %v1532 = vsel %vm1234, %v1020, 0
        %v1535 = vsel %vm1234, %v1022, 0
        %v1538 = vsel %vm1234, %v1024, 0
        %v1541 = vsel %vm1234, %v1026, 0
        %v1544 = vsel %vm1234, %v1028, 0
        %v1547 = vsel %vm1234, %v1030, 0
        %v1550 = vsel %vm1234, %v1072, 0
        %v1553 = vsel %vm1234, %v1074, 0
        %v1556 = vsel %vm1234, %v1076, 0
        %v1559 = vsel %vm1234, %v1078, 0
        %v1562 = vsel %vm1234, %v1080, 0
        %v1565 = vsel %vm1234, %v1082, 0
        %v1568 = vsel %vm1234, %v1084, 0
        %v1571 = vsel %vm1234, %v1086, 0
        %1573 = vmatprep.subr.bf16.mxu0 0
        %1574 = vmatpush1.bf16.xpose.msra.mxu0 %v1550
        %1575 = vmatprep.subr.bf16.mxu0 0
        %1576 = vmatpush1.bf16.xpose.msra.mxu0 %v1553
        %1577 = vmatprep.subr.bf16.mxu0 0
        %1578 = vmatpush1.bf16.xpose.msra.mxu0 %v1556
        %1579 = vmatprep.subr.bf16.mxu0 0
        %1580 = vmatpush1.bf16.xpose.msra.mxu0 %v1559
        %1581 = vmatprep.subr.bf16.mxu0 0
        %1582 = vmatpush1.bf16.xpose.msra.mxu0 %v1562
        %1583 = vmatprep.subr.bf16.mxu0 0
        %1584 = vmatpush1.bf16.xpose.msra.mxu0 %v1565
        %1585 = vmatprep.subr.bf16.mxu0 0
        %1586 = vmatpush1.bf16.xpose.msra.mxu0 %v1568
        %1587 = vmatprep.subr.bf16.mxu0 0
        %1588 = vmatpush1.bf16.xpose.msra.mxu0 %v1571
        %1589 = vmatprep.subr.bf16.mxu0 0
        %1590 = vmatpush1.bf16.xpose.msra.mxu0 0
        %1591 = vmatprep.subr.bf16.mxu0 0
        %1592 = vmatpush1.bf16.xpose.msra.mxu0 0
        %1593 = vmatprep.subr.bf16.mxu0 0
        %1594 = vmatpush1.bf16.xpose.msra.mxu0 0
        %1595 = vmatprep.subr.bf16.mxu0 0
        %1596 = vmatpush1.bf16.xpose.msra.mxu0 0
        %1597 = vmatprep.subr.bf16.mxu0 0
        %1598 = vmatpush1.bf16.xpose.msra.mxu0 0
        %1599 = vmatprep.subr.bf16.mxu0 0
        %1600 = vmatpush1.bf16.xpose.msra.mxu0 0
        %1601 = vmatprep.subr.bf16.mxu0 0
        %1602 = vmatpush1.bf16.xpose.msra.mxu0 0
        %1603 = vmatprep.subr.bf16.mxu0 0
        %1604 = vmatpush1.bf16.xpose.msra.mxu0 0
        %1605 = vmatprep.mubr.bf16.mxu0 0
        %1606 = vmatmul.mubr.bf16.gmra.mrb[0].mxu0 %v1526
        %v1607 = vpop.f32.mrb[0].mxu0
        %v1608 = vadd.f32 0.0, %v1607
        %v1609 = vpop.f32.mrb[0].mxu0
        %v1610 = vpop.f32.mrb[0].mxu0
        %v1611 = vadd.f32 0.0, %v1610
        %v1612 = vpop.f32.mrb[0].mxu0
        %1613 = vmatprep.mubr.bf16.mxu0 0
        %1614 = vmatmul.mubr.bf16.gmra.mrb[0].mxu0 %v1529
        %v1615 = vpop.f32.mrb[0].mxu0
        %v1616 = vadd.f32 0.0, %v1615
        %v1617 = vpop.f32.mrb[0].mxu0
        %v1618 = vpop.f32.mrb[0].mxu0
        %v1619 = vadd.f32 0.0, %v1618
        %v1620 = vpop.f32.mrb[0].mxu0
        %1621 = vmatprep.mubr.bf16.mxu0 0
        %1622 = vmatmul.mubr.bf16.gmra.mrb[0].mxu0 %v1532
        %v1623 = vpop.f32.mrb[0].mxu0
        %v1624 = vadd.f32 0.0, %v1623
        %v1625 = vpop.f32.mrb[0].mxu0
        %v1626 = vpop.f32.mrb[0].mxu0
        %v1627 = vadd.f32 0.0, %v1626
        %v1628 = vpop.f32.mrb[0].mxu0
        %1629 = vmatprep.mubr.bf16.mxu0 0
        %1630 = vmatmul.mubr.bf16.gmra.mrb[0].mxu0 %v1535
        %v1631 = vpop.f32.mrb[0].mxu0
        %v1632 = vadd.f32 0.0, %v1631
        %v1633 = vpop.f32.mrb[0].mxu0
        %v1634 = vpop.f32.mrb[0].mxu0
        %v1635 = vadd.f32 0.0, %v1634
        %v1636 = vpop.f32.mrb[0].mxu0
        %1637 = vmatprep.mubr.bf16.mxu0 0
        %1638 = vmatmul.mubr.bf16.gmra.mrb[0].mxu0 %v1538
        %v1639 = vpop.f32.mrb[0].mxu0
        %v1640 = vadd.f32 0.0, %v1639
        %v1641 = vpop.f32.mrb[0].mxu0
        %v1642 = vpop.f32.mrb[0].mxu0
        %v1643 = vadd.f32 0.0, %v1642
        %v1644 = vpop.f32.mrb[0].mxu0
        %1645 = vmatprep.mubr.bf16.mxu0 0
        %1646 = vmatmul.mubr.bf16.gmra.mrb[0].mxu0 %v1541
        %v1647 = vpop.f32.mrb[0].mxu0
        %v1648 = vadd.f32 0.0, %v1647
        %v1649 = vpop.f32.mrb[0].mxu0
        %v1650 = vpop.f32.mrb[0].mxu0
        %v1651 = vadd.f32 0.0, %v1650
        %v1652 = vpop.f32.mrb[0].mxu0
        %1653 = vmatprep.mubr.bf16.mxu0 0
        %1654 = vmatmul.mubr.bf16.gmra.mrb[0].mxu0 %v1544
        %v1655 = vpop.f32.mrb[0].mxu0
        %v1656 = vadd.f32 0.0, %v1655
        %v1657 = vpop.f32.mrb[0].mxu0
        %v1658 = vpop.f32.mrb[0].mxu0
        %v1659 = vadd.f32 0.0, %v1658
        %v1660 = vpop.f32.mrb[0].mxu0
        %1661 = vmatprep.mubr.bf16.mxu0 0
        %1662 = vmatmul.mubr.bf16.gmra.mrb[0].mxu0 %v1547
        %v1663 = vpop.f32.mrb[0].mxu0
        %v1664 = vadd.f32 0.0, %v1663
        %v1665 = vpop.f32.mrb[0].mxu0
        %v1666 = vpop.f32.mrb[0].mxu0
        %v1667 = vadd.f32 0.0, %v1666
        %v1668 = vpop.f32.mrb[0].mxu0
        %1669 = vdwg.mxu0
        %v1671 = vsel %vm1234, %v1032, 0
        %v1674 = vsel %vm1234, %v1034, 0
        %v1677 = vsel %vm1234, %v1036, 0
        %v1680 = vsel %vm1234, %v1038, 0
        %v1683 = vsel %vm1234, %v1040, 0
        %v1686 = vsel %vm1234, %v1042, 0
        %v1689 = vsel %vm1234, %v1044, 0
        %v1692 = vsel %vm1234, %v1046, 0
        %v1695 = vsel %vm1234, %v1088, 0
        %v1698 = vsel %vm1234, %v1090, 0
        %v1701 = vsel %vm1234, %v1092, 0
        %v1704 = vsel %vm1234, %v1094, 0
        %v1707 = vsel %vm1234, %v1096, 0
        %v1710 = vsel %vm1234, %v1098, 0
        %v1713 = vsel %vm1234, %v1100, 0
        %v1716 = vsel %vm1234, %v1102, 0
        %1718 = vmatprep.subr.bf16.mxu0 0
        %1719 = vmatpush1.bf16.xpose.msra.mxu0 %v1695
        %1720 = vmatprep.subr.bf16.mxu0 0
        %1721 = vmatpush1.bf16.xpose.msra.mxu0 %v1698
        %1722 = vmatprep.subr.bf16.mxu0 0
        %1723 = vmatpush1.bf16.xpose.msra.mxu0 %v1701
        %1724 = vmatprep.subr.bf16.mxu0 0
        %1725 = vmatpush1.bf16.xpose.msra.mxu0 %v1704
        %1726 = vmatprep.subr.bf16.mxu0 0
        %1727 = vmatpush1.bf16.xpose.msra.mxu0 %v1707
        %1728 = vmatprep.subr.bf16.mxu0 0
        %1729 = vmatpush1.bf16.xpose.msra.mxu0 %v1710
        %1730 = vmatprep.subr.bf16.mxu0 0
        %1731 = vmatpush1.bf16.xpose.msra.mxu0 %v1713
        %1732 = vmatprep.subr.bf16.mxu0 0
        %1733 = vmatpush1.bf16.xpose.msra.mxu0 %v1716
        %1734 = vmatprep.subr.bf16.mxu0 0
        %1735 = vmatpush1.bf16.xpose.msra.mxu0 0
        %1736 = vmatprep.subr.bf16.mxu0 0
        %1737 = vmatpush1.bf16.xpose.msra.mxu0 0
        %1738 = vmatprep.subr.bf16.mxu0 0
        %1739 = vmatpush1.bf16.xpose.msra.mxu0 0
        %1740 = vmatprep.subr.bf16.mxu0 0
        %1741 = vmatpush1.bf16.xpose.msra.mxu0 0
        %1742 = vmatprep.subr.bf16.mxu0 0
        %1743 = vmatpush1.bf16.xpose.msra.mxu0 0
        %1744 = vmatprep.subr.bf16.mxu0 0
        %1745 = vmatpush1.bf16.xpose.msra.mxu0 0
        %1746 = vmatprep.subr.bf16.mxu0 0
        %1747 = vmatpush1.bf16.xpose.msra.mxu0 0
        %1748 = vmatprep.subr.bf16.mxu0 0
        %1749 = vmatpush1.bf16.xpose.msra.mxu0 0
        %1750 = vmatprep.mubr.bf16.mxu0 0
        %1751 = vmatmul.mubr.bf16.gmra.mrb[0].mxu0 %v1671
        %v1752 = vpop.f32.mrb[0].mxu0
        %v1753 = vadd.f32 0.0, %v1752
        %v1754 = vpop.f32.mrb[0].mxu0
        %v1755 = vpop.f32.mrb[0].mxu0
        %v1756 = vadd.f32 0.0, %v1755
        %v1757 = vpop.f32.mrb[0].mxu0
        %1758 = vmatprep.mubr.bf16.mxu0 0
        %1759 = vmatmul.mubr.bf16.gmra.mrb[0].mxu0 %v1674
        %v1760 = vpop.f32.mrb[0].mxu0
        %v1761 = vadd.f32 0.0, %v1760
        %v1762 = vpop.f32.mrb[0].mxu0
        %v1763 = vpop.f32.mrb[0].mxu0
        %v1764 = vadd.f32 0.0, %v1763
        %v1765 = vpop.f32.mrb[0].mxu0
        %1766 = vmatprep.mubr.bf16.mxu0 0
        %1767 = vmatmul.mubr.bf16.gmra.mrb[0].mxu0 %v1677
        %v1768 = vpop.f32.mrb[0].mxu0
        %v1769 = vadd.f32 0.0, %v1768
        %v1770 = vpop.f32.mrb[0].mxu0
        %v1771 = vpop.f32.mrb[0].mxu0
        %v1772 = vadd.f32 0.0, %v1771
        %v1773 = vpop.f32.mrb[0].mxu0
        %1774 = vmatprep.mubr.bf16.mxu0 0
        %1775 = vmatmul.mubr.bf16.gmra.mrb[0].mxu0 %v1680
        %v1776 = vpop.f32.mrb[0].mxu0
        %v1777 = vadd.f32 0.0, %v1776
        %v1778 = vpop.f32.mrb[0].mxu0
        %v1779 = vpop.f32.mrb[0].mxu0
        %v1780 = vadd.f32 0.0, %v1779
        %v1781 = vpop.f32.mrb[0].mxu0
        %1782 = vmatprep.mubr.bf16.mxu0 0
        %1783 = vmatmul.mubr.bf16.gmra.mrb[0].mxu0 %v1683
        %v1784 = vpop.f32.mrb[0].mxu0
        %v1785 = vadd.f32 0.0, %v1784
        %v1786 = vpop.f32.mrb[0].mxu0
        %v1787 = vpop.f32.mrb[0].mxu0
        %v1788 = vadd.f32 0.0, %v1787
        %v1789 = vpop.f32.mrb[0].mxu0
        %1790 = vmatprep.mubr.bf16.mxu0 0
        %1791 = vmatmul.mubr.bf16.gmra.mrb[0].mxu0 %v1686
        %v1792 = vpop.f32.mrb[0].mxu0
        %v1793 = vadd.f32 0.0, %v1792
        %v1794 = vpop.f32.mrb[0].mxu0
        %v1795 = vpop.f32.mrb[0].mxu0
        %v1796 = vadd.f32 0.0, %v1795
        %v1797 = vpop.f32.mrb[0].mxu0
        %1798 = vmatprep.mubr.bf16.mxu0 0
        %1799 = vmatmul.mubr.bf16.gmra.mrb[0].mxu0 %v1689
        %v1800 = vpop.f32.mrb[0].mxu0
        %v1801 = vadd.f32 0.0, %v1800
        %v1802 = vpop.f32.mrb[0].mxu0
        %v1803 = vpop.f32.mrb[0].mxu0
        %v1804 = vadd.f32 0.0, %v1803
        %v1805 = vpop.f32.mrb[0].mxu0
        %1806 = vmatprep.mubr.bf16.mxu0 0
        %1807 = vmatmul.mubr.bf16.gmra.mrb[0].mxu0 %v1692
        %v1808 = vpop.f32.mrb[0].mxu0
        %v1809 = vadd.f32 0.0, %v1808
        %v1810 = vpop.f32.mrb[0].mxu0
        %v1811 = vpop.f32.mrb[0].mxu0
        %v1812 = vadd.f32 0.0, %v1811
        %v1813 = vpop.f32.mrb[0].mxu0
        %1814 = vdwg.mxu0
        %v1815 = vmul.f32 %v1318, 0.17677669
        %v1816 = vmul.f32 %v1321, 0.17677669
        %v1817 = vmul.f32 %v1326, 0.17677669
        %v1818 = vmul.f32 %v1329, 0.17677669
        %v1819 = vmul.f32 %v1334, 0.17677669
        %v1820 = vmul.f32 %v1337, 0.17677669
        %v1821 = vmul.f32 %v1342, 0.17677669
        %v1822 = vmul.f32 %v1345, 0.17677669
        %v1823 = vmul.f32 %v1350, 0.17677669
        %v1824 = vmul.f32 %v1353, 0.17677669
        %v1825 = vmul.f32 %v1358, 0.17677669
        %v1826 = vmul.f32 %v1361, 0.17677669
        %v1827 = vmul.f32 %v1366, 0.17677669
        %v1828 = vmul.f32 %v1369, 0.17677669
        %v1829 = vmul.f32 %v1374, 0.17677669
        %v1830 = vmul.f32 %v1377, 0.17677669
        %v1831 = vmul.f32 %v1463, 0.17677669
        %v1832 = vmul.f32 %v1466, 0.17677669
        %v1833 = vmul.f32 %v1471, 0.17677669
        %v1834 = vmul.f32 %v1474, 0.17677669
        %v1835 = vmul.f32 %v1479, 0.17677669
        %v1836 = vmul.f32 %v1482, 0.17677669
        %v1837 = vmul.f32 %v1487, 0.17677669
        %v1838 = vmul.f32 %v1490, 0.17677669
        %v1839 = vmul.f32 %v1495, 0.17677669
        %v1840 = vmul.f32 %v1498, 0.17677669
        %v1841 = vmul.f32 %v1503, 0.17677669
        %v1842 = vmul.f32 %v1506, 0.17677669
        %v1843 = vmul.f32 %v1511, 0.17677669
        %v1844 = vmul.f32 %v1514, 0.17677669
        %v1845 = vmul.f32 %v1519, 0.17677669
        %v1846 = vmul.f32 %v1522, 0.17677669
        %v1847 = vmul.f32 %v1608, 0.17677669
        %v1848 = vmul.f32 %v1611, 0.17677669
        %v1849 = vmul.f32 %v1616, 0.17677669
        %v1850 = vmul.f32 %v1619, 0.17677669
        %v1851 = vmul.f32 %v1624, 0.17677669
        %v1852 = vmul.f32 %v1627, 0.17677669
        %v1853 = vmul.f32 %v1632, 0.17677669
        %v1854 = vmul.f32 %v1635, 0.17677669
        %v1855 = vmul.f32 %v1640, 0.17677669
        %v1856 = vmul.f32 %v1643, 0.17677669
        %v1857 = vmul.f32 %v1648, 0.17677669
        %v1858 = vmul.f32 %v1651, 0.17677669
        %v1859 = vmul.f32 %v1656, 0.17677669
        %v1860 = vmul.f32 %v1659, 0.17677669
        %v1861 = vmul.f32 %v1664, 0.17677669
        %v1862 = vmul.f32 %v1667, 0.17677669
        %v1863 = vmul.f32 %v1753, 0.17677669
        %v1864 = vmul.f32 %v1756, 0.17677669
        %v1865 = vmul.f32 %v1761, 0.17677669
        %v1866 = vmul.f32 %v1764, 0.17677669
        %v1867 = vmul.f32 %v1769, 0.17677669
        %v1868 = vmul.f32 %v1772, 0.17677669
        %v1869 = vmul.f32 %v1777, 0.17677669
        %v1870 = vmul.f32 %v1780, 0.17677669
        %v1871 = vmul.f32 %v1785, 0.17677669
        %v1872 = vmul.f32 %v1788, 0.17677669
        %v1873 = vmul.f32 %v1793, 0.17677669
        %v1874 = vmul.f32 %v1796, 0.17677669
        %v1875 = vmul.f32 %v1801, 0.17677669
        %v1876 = vmul.f32 %v1804, 0.17677669
        %v1877 = vmul.f32 %v1809, 0.17677669
        %v1878 = vmul.f32 %v1812, 0.17677669
        %v1879 = vadd.f32 %v1815, %v1218
        %v1880 = vadd.f32 %v1816, %v1219
        %v1881 = vadd.f32 %v1817, %v1220
        %v1882 = vadd.f32 %v1818, %v1221
        %v1883 = vadd.f32 %v1819, %v1222
        %v1884 = vadd.f32 %v1820, %v1223
        %v1885 = vadd.f32 %v1821, %v1224
        %v1886 = vadd.f32 %v1822, %v1225
        %v1887 = vadd.f32 %v1823, %v1226
        %v1888 = vadd.f32 %v1824, %v1227
        %v1889 = vadd.f32 %v1825, %v1228
        %v1890 = vadd.f32 %v1826, %v1229
        %v1891 = vadd.f32 %v1827, %v1230
        %v1892 = vadd.f32 %v1828, %v1231
        %v1893 = vadd.f32 %v1829, %v1232
        %v1894 = vadd.f32 %v1830, %v1233
        %v1895 = vadd.f32 %v1831, %v1218
        %v1896 = vadd.f32 %v1832, %v1219
        %v1897 = vadd.f32 %v1833, %v1220
        %v1898 = vadd.f32 %v1834, %v1221
        %v1899 = vadd.f32 %v1835, %v1222
        %v1900 = vadd.f32 %v1836, %v1223
        %v1901 = vadd.f32 %v1837, %v1224
        %v1902 = vadd.f32 %v1838, %v1225
        %v1903 = vadd.f32 %v1839, %v1226
        %v1904 = vadd.f32 %v1840, %v1227
        %v1905 = vadd.f32 %v1841, %v1228
        %v1906 = vadd.f32 %v1842, %v1229
        %v1907 = vadd.f32 %v1843, %v1230
        %v1908 = vadd.f32 %v1844, %v1231
        %v1909 = vadd.f32 %v1845, %v1232
        %v1910 = vadd.f32 %v1846, %v1233
        %v1911 = vadd.f32 %v1847, %v1218
        %v1912 = vadd.f32 %v1848, %v1219
        %v1913 = vadd.f32 %v1849, %v1220
        %v1914 = vadd.f32 %v1850, %v1221
        %v1915 = vadd.f32 %v1851, %v1222
        %v1916 = vadd.f32 %v1852, %v1223
        %v1917 = vadd.f32 %v1853, %v1224
        %v1918 = vadd.f32 %v1854, %v1225
        %v1919 = vadd.f32 %v1855, %v1226
        %v1920 = vadd.f32 %v1856, %v1227
        %v1921 = vadd.f32 %v1857, %v1228
        %v1922 = vadd.f32 %v1858, %v1229
        %v1923 = vadd.f32 %v1859, %v1230
        %v1924 = vadd.f32 %v1860, %v1231
        %v1925 = vadd.f32 %v1861, %v1232
        %v1926 = vadd.f32 %v1862, %v1233
        %v1927 = vadd.f32 %v1863, %v1218
        %v1928 = vadd.f32 %v1864, %v1219
        %v1929 = vadd.f32 %v1865, %v1220
        %v1930 = vadd.f32 %v1866, %v1221
        %v1931 = vadd.f32 %v1867, %v1222
        %v1932 = vadd.f32 %v1868, %v1223
        %v1933 = vadd.f32 %v1869, %v1224
        %v1934 = vadd.f32 %v1870, %v1225
        %v1935 = vadd.f32 %v1871, %v1226
        %v1936 = vadd.f32 %v1872, %v1227
        %v1937 = vadd.f32 %v1873, %v1228
        %v1938 = vadd.f32 %v1874, %v1229
        %v1939 = vadd.f32 %v1875, %v1230
        %v1940 = vadd.f32 %v1876, %v1231
        %v1941 = vadd.f32 %v1877, %v1232
        %v1942 = vadd.f32 %v1878, %v1233
        %1943 = vmax.xlane.f32.xlu0 %v1879
        %v1944 = vpop.xlane.xlu0 %1943
        %1945 = vmax.xlane.f32.xlu0 %v1880
        %v1946 = vpop.xlane.xlu0 %1945
        %1947 = vmax.xlane.f32.xlu0 %v1881
        %v1948 = vpop.xlane.xlu0 %1947
        %1949 = vmax.xlane.f32.xlu0 %v1882
        %v1950 = vpop.xlane.xlu0 %1949
        %1951 = vmax.xlane.f32.xlu0 %v1883
        %v1952 = vpop.xlane.xlu0 %1951
        %1953 = vmax.xlane.f32.xlu0 %v1884
        %v1954 = vpop.xlane.xlu0 %1953
        %1955 = vmax.xlane.f32.xlu0 %v1885
        %v1956 = vpop.xlane.xlu0 %1955
        %1957 = vmax.xlane.f32.xlu0 %v1886
        %v1958 = vpop.xlane.xlu0 %1957
        %1959 = vmax.xlane.f32.xlu0 %v1887
        %v1960 = vpop.xlane.xlu0 %1959
        %1961 = vmax.xlane.f32.xlu0 %v1888
        %v1962 = vpop.xlane.xlu0 %1961
        %1963 = vmax.xlane.f32.xlu0 %v1889
        %v1964 = vpop.xlane.xlu0 %1963
        %1965 = vmax.xlane.f32.xlu0 %v1890
        %v1966 = vpop.xlane.xlu0 %1965
        %1967 = vmax.xlane.f32.xlu0 %v1891
        %v1968 = vpop.xlane.xlu0 %1967
        %1969 = vmax.xlane.f32.xlu0 %v1892
        %v1970 = vpop.xlane.xlu0 %1969
        %1971 = vmax.xlane.f32.xlu0 %v1893
        %v1972 = vpop.xlane.xlu0 %1971
        %1973 = vmax.xlane.f32.xlu0 %v1894
        %v1974 = vpop.xlane.xlu0 %1973
        %1975 = vmax.xlane.f32.xlu0 %v1895
        %v1976 = vpop.xlane.xlu0 %1975
        %1977 = vmax.xlane.f32.xlu0 %v1896
        %v1978 = vpop.xlane.xlu0 %1977
        %1979 = vmax.xlane.f32.xlu0 %v1897
        %v1980 = vpop.xlane.xlu0 %1979
        %1981 = vmax.xlane.f32.xlu0 %v1898
        %v1982 = vpop.xlane.xlu0 %1981
        %1983 = vmax.xlane.f32.xlu0 %v1899
        %v1984 = vpop.xlane.xlu0 %1983
        %1985 = vmax.xlane.f32.xlu0 %v1900
        %v1986 = vpop.xlane.xlu0 %1985
        %1987 = vmax.xlane.f32.xlu0 %v1901
        %v1988 = vpop.xlane.xlu0 %1987
        %1989 = vmax.xlane.f32.xlu0 %v1902
        %v1990 = vpop.xlane.xlu0 %1989
        %1991 = vmax.xlane.f32.xlu0 %v1903
        %v1992 = vpop.xlane.xlu0 %1991
        %1993 = vmax.xlane.f32.xlu0 %v1904
        %v1994 = vpop.xlane.xlu0 %1993
        %1995 = vmax.xlane.f32.xlu0 %v1905
        %v1996 = vpop.xlane.xlu0 %1995
        %1997 = vmax.xlane.f32.xlu0 %v1906
        %v1998 = vpop.xlane.xlu0 %1997
        %1999 = vmax.xlane.f32.xlu0 %v1907
        %v2000 = vpop.xlane.xlu0 %1999
        %2001 = vmax.xlane.f32.xlu0 %v1908
        %v2002 = vpop.xlane.xlu0 %2001
        %2003 = vmax.xlane.f32.xlu0 %v1909
        %v2004 = vpop.xlane.xlu0 %2003
        %2005 = vmax.xlane.f32.xlu0 %v1910
        %v2006 = vpop.xlane.xlu0 %2005
        %2007 = vmax.xlane.f32.xlu0 %v1911
        %v2008 = vpop.xlane.xlu0 %2007
        %2009 = vmax.xlane.f32.xlu0 %v1912
        %v2010 = vpop.xlane.xlu0 %2009
        %2011 = vmax.xlane.f32.xlu0 %v1913
        %v2012 = vpop.xlane.xlu0 %2011
        %2013 = vmax.xlane.f32.xlu0 %v1914
        %v2014 = vpop.xlane.xlu0 %2013
        %2015 = vmax.xlane.f32.xlu0 %v1915
        %v2016 = vpop.xlane.xlu0 %2015
        %2017 = vmax.xlane.f32.xlu0 %v1916
        %v2018 = vpop.xlane.xlu0 %2017
        %2019 = vmax.xlane.f32.xlu0 %v1917
        %v2020 = vpop.xlane.xlu0 %2019
        %2021 = vmax.xlane.f32.xlu0 %v1918
        %v2022 = vpop.xlane.xlu0 %2021
        %2023 = vmax.xlane.f32.xlu0 %v1919
        %v2024 = vpop.xlane.xlu0 %2023
        %2025 = vmax.xlane.f32.xlu0 %v1920
        %v2026 = vpop.xlane.xlu0 %2025
        %2027 = vmax.xlane.f32.xlu0 %v1921
        %v2028 = vpop.xlane.xlu0 %2027
        %2029 = vmax.xlane.f32.xlu0 %v1922
        %v2030 = vpop.xlane.xlu0 %2029
        %2031 = vmax.xlane.f32.xlu0 %v1923
        %v2032 = vpop.xlane.xlu0 %2031
        %2033 = vmax.xlane.f32.xlu0 %v1924
        %v2034 = vpop.xlane.xlu0 %2033
        %2035 = vmax.xlane.f32.xlu0 %v1925
        %v2036 = vpop.xlane.xlu0 %2035
        %2037 = vmax.xlane.f32.xlu0 %v1926
        %v2038 = vpop.xlane.xlu0 %2037
        %2039 = vmax.xlane.f32.xlu0 %v1927
        %v2040 = vpop.xlane.xlu0 %2039
        %2041 = vmax.xlane.f32.xlu0 %v1928
        %v2042 = vpop.xlane.xlu0 %2041
        %2043 = vmax.xlane.f32.xlu0 %v1929
        %v2044 = vpop.xlane.xlu0 %2043
        %2045 = vmax.xlane.f32.xlu0 %v1930
        %v2046 = vpop.xlane.xlu0 %2045
        %2047 = vmax.xlane.f32.xlu0 %v1931
        %v2048 = vpop.xlane.xlu0 %2047
        %2049 = vmax.xlane.f32.xlu0 %v1932
        %v2050 = vpop.xlane.xlu0 %2049
        %2051 = vmax.xlane.f32.xlu0 %v1933
        %v2052 = vpop.xlane.xlu0 %2051
        %2053 = vmax.xlane.f32.xlu0 %v1934
        %v2054 = vpop.xlane.xlu0 %2053
        %2055 = vmax.xlane.f32.xlu0 %v1935
        %v2056 = vpop.xlane.xlu0 %2055
        %2057 = vmax.xlane.f32.xlu0 %v1936
        %v2058 = vpop.xlane.xlu0 %2057
        %2059 = vmax.xlane.f32.xlu0 %v1937
        %v2060 = vpop.xlane.xlu0 %2059
        %2061 = vmax.xlane.f32.xlu0 %v1938
        %v2062 = vpop.xlane.xlu0 %2061
        %2063 = vmax.xlane.f32.xlu0 %v1939
        %v2064 = vpop.xlane.xlu0 %2063
        %2065 = vmax.xlane.f32.xlu0 %v1940
        %v2066 = vpop.xlane.xlu0 %2065
        %2067 = vmax.xlane.f32.xlu0 %v1941
        %v2068 = vpop.xlane.xlu0 %2067
        %2069 = vmax.xlane.f32.xlu0 %v1942
        %v2070 = vpop.xlane.xlu0 %2069
        %v2071 = vsub.f32 %v1879, %v1944
        %v2072 = vsub.f32 %v1880, %v1946
        %v2073 = vsub.f32 %v1881, %v1948
        %v2074 = vsub.f32 %v1882, %v1950
        %v2075 = vsub.f32 %v1883, %v1952
        %v2076 = vsub.f32 %v1884, %v1954
        %v2077 = vsub.f32 %v1885, %v1956
        %v2078 = vsub.f32 %v1886, %v1958
        %v2079 = vsub.f32 %v1887, %v1960
        %v2080 = vsub.f32 %v1888, %v1962
        %v2081 = vsub.f32 %v1889, %v1964
        %v2082 = vsub.f32 %v1890, %v1966
        %v2083 = vsub.f32 %v1891, %v1968
        %v2084 = vsub.f32 %v1892, %v1970
        %v2085 = vsub.f32 %v1893, %v1972
        %v2086 = vsub.f32 %v1894, %v1974
        %v2087 = vsub.f32 %v1895, %v1976
        %v2088 = vsub.f32 %v1896, %v1978
        %v2089 = vsub.f32 %v1897, %v1980
        %v2090 = vsub.f32 %v1898, %v1982
        %v2091 = vsub.f32 %v1899, %v1984
        %v2092 = vsub.f32 %v1900, %v1986
        %v2093 = vsub.f32 %v1901, %v1988
        %v2094 = vsub.f32 %v1902, %v1990
        %v2095 = vsub.f32 %v1903, %v1992
        %v2096 = vsub.f32 %v1904, %v1994
        %v2097 = vsub.f32 %v1905, %v1996
        %v2098 = vsub.f32 %v1906, %v1998
        %v2099 = vsub.f32 %v1907, %v2000
        %v2100 = vsub.f32 %v1908, %v2002
        %v2101 = vsub.f32 %v1909, %v2004
        %v2102 = vsub.f32 %v1910, %v2006
        %v2103 = vsub.f32 %v1911, %v2008
        %v2104 = vsub.f32 %v1912, %v2010
        %v2105 = vsub.f32 %v1913, %v2012
        %v2106 = vsub.f32 %v1914, %v2014
        %v2107 = vsub.f32 %v1915, %v2016
        %v2108 = vsub.f32 %v1916, %v2018
        %v2109 = vsub.f32 %v1917, %v2020
        %v2110 = vsub.f32 %v1918, %v2022
        %v2111 = vsub.f32 %v1919, %v2024
        %v2112 = vsub.f32 %v1920, %v2026
        %v2113 = vsub.f32 %v1921, %v2028
        %v2114 = vsub.f32 %v1922, %v2030
        %v2115 = vsub.f32 %v1923, %v2032
        %v2116 = vsub.f32 %v1924, %v2034
        %v2117 = vsub.f32 %v1925, %v2036
        %v2118 = vsub.f32 %v1926, %v2038
        %v2119 = vsub.f32 %v1927, %v2040
        %v2120 = vsub.f32 %v1928, %v2042
        %v2121 = vsub.f32 %v1929, %v2044
        %v2122 = vsub.f32 %v1930, %v2046
        %v2123 = vsub.f32 %v1931, %v2048
        %v2124 = vsub.f32 %v1932, %v2050
        %v2125 = vsub.f32 %v1933, %v2052
        %v2126 = vsub.f32 %v1934, %v2054
        %v2127 = vsub.f32 %v1935, %v2056
        %v2128 = vsub.f32 %v1936, %v2058
        %v2129 = vsub.f32 %v1937, %v2060
        %v2130 = vsub.f32 %v1938, %v2062
        %v2131 = vsub.f32 %v1939, %v2064
        %v2132 = vsub.f32 %v1940, %v2066
        %v2133 = vsub.f32 %v1941, %v2068
        %v2134 = vsub.f32 %v1942, %v2070
        %v2135 = vmul.f32 %v2071, 1.442695
        %v2136 = vpow.pop %v2135
        %v2137 = vmul.f32 %v2072, 1.442695
        %v2138 = vpow.pop %v2137
        %v2139 = vmul.f32 %v2073, 1.442695
        %v2140 = vpow.pop %v2139
        %v2141 = vmul.f32 %v2074, 1.442695
        %v2142 = vpow.pop %v2141
        %v2143 = vmul.f32 %v2075, 1.442695
        %v2144 = vpow.pop %v2143
        %v2145 = vmul.f32 %v2076, 1.442695
        %v2146 = vpow.pop %v2145
        %v2147 = vmul.f32 %v2077, 1.442695
        %v2148 = vpow.pop %v2147
        %v2149 = vmul.f32 %v2078, 1.442695
        %v2150 = vpow.pop %v2149
        %v2151 = vmul.f32 %v2079, 1.442695
        %v2152 = vpow.pop %v2151
        %v2153 = vmul.f32 %v2080, 1.442695
        %v2154 = vpow.pop %v2153
        %v2155 = vmul.f32 %v2081, 1.442695
        %v2156 = vpow.pop %v2155
        %v2157 = vmul.f32 %v2082, 1.442695
        %v2158 = vpow.pop %v2157
        %v2159 = vmul.f32 %v2083, 1.442695
        %v2160 = vpow.pop %v2159
        %v2161 = vmul.f32 %v2084, 1.442695
        %v2162 = vpow.pop %v2161
        %v2163 = vmul.f32 %v2085, 1.442695
        %v2164 = vpow.pop %v2163
        %v2165 = vmul.f32 %v2086, 1.442695
        %v2166 = vpow.pop %v2165
        %v2167 = vmul.f32 %v2087, 1.442695
        %v2168 = vpow.pop %v2167
        %v2169 = vmul.f32 %v2088, 1.442695
        %v2170 = vpow.pop %v2169
        %v2171 = vmul.f32 %v2089, 1.442695
        %v2172 = vpow.pop %v2171
        %v2173 = vmul.f32 %v2090, 1.442695
        %v2174 = vpow.pop %v2173
        %v2175 = vmul.f32 %v2091, 1.442695
        %v2176 = vpow.pop %v2175
        %v2177 = vmul.f32 %v2092, 1.442695
        %v2178 = vpow.pop %v2177
        %v2179 = vmul.f32 %v2093, 1.442695
        %v2180 = vpow.pop %v2179
        %v2181 = vmul.f32 %v2094, 1.442695
        %v2182 = vpow.pop %v2181
        %v2183 = vmul.f32 %v2095, 1.442695
        %v2184 = vpow.pop %v2183
        %v2185 = vmul.f32 %v2096, 1.442695
        %v2186 = vpow.pop %v2185
        %v2187 = vmul.f32 %v2097, 1.442695
        %v2188 = vpow.pop %v2187
        %v2189 = vmul.f32 %v2098, 1.442695
        %v2190 = vpow.pop %v2189
        %v2191 = vmul.f32 %v2099, 1.442695
        %v2192 = vpow.pop %v2191
        %v2193 = vmul.f32 %v2100, 1.442695
        %v2194 = vpow.pop %v2193
        %v2195 = vmul.f32 %v2101, 1.442695
        %v2196 = vpow.pop %v2195
        %v2197 = vmul.f32 %v2102, 1.442695
        %v2198 = vpow.pop %v2197
        %v2199 = vmul.f32 %v2103, 1.442695
        %v2200 = vpow.pop %v2199
        %v2201 = vmul.f32 %v2104, 1.442695
        %v2202 = vpow.pop %v2201
        %v2203 = vmul.f32 %v2105, 1.442695
        %v2204 = vpow.pop %v2203
        %v2205 = vmul.f32 %v2106, 1.442695
        %v2206 = vpow.pop %v2205
        %v2207 = vmul.f32 %v2107, 1.442695
        %v2208 = vpow.pop %v2207
        %v2209 = vmul.f32 %v2108, 1.442695
        %v2210 = vpow.pop %v2209
        %v2211 = vmul.f32 %v2109, 1.442695
        %v2212 = vpow.pop %v2211
        %v2213 = vmul.f32 %v2110, 1.442695
        %v2214 = vpow.pop %v2213
        %v2215 = vmul.f32 %v2111, 1.442695
        %v2216 = vpow.pop %v2215
        %v2217 = vmul.f32 %v2112, 1.442695
        %v2218 = vpow.pop %v2217
        %v2219 = vmul.f32 %v2113, 1.442695
        %v2220 = vpow.pop %v2219
        %v2221 = vmul.f32 %v2114, 1.442695
        %v2222 = vpow.pop %v2221
        %v2223 = vmul.f32 %v2115, 1.442695
        %v2224 = vpow.pop %v2223
        %v2225 = vmul.f32 %v2116, 1.442695
        %v2226 = vpow.pop %v2225
        %v2227 = vmul.f32 %v2117, 1.442695
        %v2228 = vpow.pop %v2227
        %v2229 = vmul.f32 %v2118, 1.442695
        %v2230 = vpow.pop %v2229
        %v2231 = vmul.f32 %v2119, 1.442695
        %v2232 = vpow.pop %v2231
        %v2233 = vmul.f32 %v2120, 1.442695
        %v2234 = vpow.pop %v2233
        %v2235 = vmul.f32 %v2121, 1.442695
        %v2236 = vpow.pop %v2235
        %v2237 = vmul.f32 %v2122, 1.442695
        %v2238 = vpow.pop %v2237
        %v2239 = vmul.f32 %v2123, 1.442695
        %v2240 = vpow.pop %v2239
        %v2241 = vmul.f32 %v2124, 1.442695
        %v2242 = vpow.pop %v2241
        %v2243 = vmul.f32 %v2125, 1.442695
        %v2244 = vpow.pop %v2243
        %v2245 = vmul.f32 %v2126, 1.442695
        %v2246 = vpow.pop %v2245
        %v2247 = vmul.f32 %v2127, 1.442695
        %v2248 = vpow.pop %v2247
        %v2249 = vmul.f32 %v2128, 1.442695
        %v2250 = vpow.pop %v2249
        %v2251 = vmul.f32 %v2129, 1.442695
        %v2252 = vpow.pop %v2251
        %v2253 = vmul.f32 %v2130, 1.442695
        %v2254 = vpow.pop %v2253
        %v2255 = vmul.f32 %v2131, 1.442695
        %v2256 = vpow.pop %v2255
        %v2257 = vmul.f32 %v2132, 1.442695
        %v2258 = vpow.pop %v2257
        %v2259 = vmul.f32 %v2133, 1.442695
        %v2260 = vpow.pop %v2259
        %v2261 = vmul.f32 %v2134, 1.442695
        %v2262 = vpow.pop %v2261
        %2263 = vadd.xlane.f32.xlu0 %v2136
        %v2264 = vpop.xlane.xlu0 %2263
        %2265 = vadd.xlane.f32.xlu0 %v2138
        %v2266 = vpop.xlane.xlu0 %2265
        %2267 = vadd.xlane.f32.xlu0 %v2140
        %v2268 = vpop.xlane.xlu0 %2267
        %2269 = vadd.xlane.f32.xlu0 %v2142
        %v2270 = vpop.xlane.xlu0 %2269
        %2271 = vadd.xlane.f32.xlu0 %v2144
        %v2272 = vpop.xlane.xlu0 %2271
        %2273 = vadd.xlane.f32.xlu0 %v2146
        %v2274 = vpop.xlane.xlu0 %2273
        %2275 = vadd.xlane.f32.xlu0 %v2148
        %v2276 = vpop.xlane.xlu0 %2275
        %2277 = vadd.xlane.f32.xlu0 %v2150
        %v2278 = vpop.xlane.xlu0 %2277
        %2279 = vadd.xlane.f32.xlu0 %v2152
        %v2280 = vpop.xlane.xlu0 %2279
        %2281 = vadd.xlane.f32.xlu0 %v2154
        %v2282 = vpop.xlane.xlu0 %2281
        %2283 = vadd.xlane.f32.xlu0 %v2156
        %v2284 = vpop.xlane.xlu0 %2283
        %2285 = vadd.xlane.f32.xlu0 %v2158
        %v2286 = vpop.xlane.xlu0 %2285
        %2287 = vadd.xlane.f32.xlu0 %v2160
        %v2288 = vpop.xlane.xlu0 %2287
        %2289 = vadd.xlane.f32.xlu0 %v2162
        %v2290 = vpop.xlane.xlu0 %2289
        %2291 = vadd.xlane.f32.xlu0 %v2164
        %v2292 = vpop.xlane.xlu0 %2291
        %2293 = vadd.xlane.f32.xlu0 %v2166
        %v2294 = vpop.xlane.xlu0 %2293
        %2295 = vadd.xlane.f32.xlu0 %v2168
        %v2296 = vpop.xlane.xlu0 %2295
        %2297 = vadd.xlane.f32.xlu0 %v2170
        %v2298 = vpop.xlane.xlu0 %2297
        %2299 = vadd.xlane.f32.xlu0 %v2172
        %v2300 = vpop.xlane.xlu0 %2299
        %2301 = vadd.xlane.f32.xlu0 %v2174
        %v2302 = vpop.xlane.xlu0 %2301
        %2303 = vadd.xlane.f32.xlu0 %v2176
        %v2304 = vpop.xlane.xlu0 %2303
        %2305 = vadd.xlane.f32.xlu0 %v2178
        %v2306 = vpop.xlane.xlu0 %2305
        %2307 = vadd.xlane.f32.xlu0 %v2180
        %v2308 = vpop.xlane.xlu0 %2307
        %2309 = vadd.xlane.f32.xlu0 %v2182
        %v2310 = vpop.xlane.xlu0 %2309
        %2311 = vadd.xlane.f32.xlu0 %v2184
        %v2312 = vpop.xlane.xlu0 %2311
        %2313 = vadd.xlane.f32.xlu0 %v2186
        %v2314 = vpop.xlane.xlu0 %2313
        %2315 = vadd.xlane.f32.xlu0 %v2188
        %v2316 = vpop.xlane.xlu0 %2315
        %2317 = vadd.xlane.f32.xlu0 %v2190
        %v2318 = vpop.xlane.xlu0 %2317
        %2319 = vadd.xlane.f32.xlu0 %v2192
        %v2320 = vpop.xlane.xlu0 %2319
        %2321 = vadd.xlane.f32.xlu0 %v2194
        %v2322 = vpop.xlane.xlu0 %2321
        %2323 = vadd.xlane.f32.xlu0 %v2196
        %v2324 = vpop.xlane.xlu0 %2323
        %2325 = vadd.xlane.f32.xlu0 %v2198
        %v2326 = vpop.xlane.xlu0 %2325
        %2327 = vadd.xlane.f32.xlu0 %v2200
        %v2328 = vpop.xlane.xlu0 %2327
        %2329 = vadd.xlane.f32.xlu0 %v2202
        %v2330 = vpop.xlane.xlu0 %2329
        %2331 = vadd.xlane.f32.xlu0 %v2204
        %v2332 = vpop.xlane.xlu0 %2331
        %2333 = vadd.xlane.f32.xlu0 %v2206
        %v2334 = vpop.xlane.xlu0 %2333
        %2335 = vadd.xlane.f32.xlu0 %v2208
        %v2336 = vpop.xlane.xlu0 %2335
        %2337 = vadd.xlane.f32.xlu0 %v2210
        %v2338 = vpop.xlane.xlu0 %2337
        %2339 = vadd.xlane.f32.xlu0 %v2212
        %v2340 = vpop.xlane.xlu0 %2339
        %2341 = vadd.xlane.f32.xlu0 %v2214
        %v2342 = vpop.xlane.xlu0 %2341
        %2343 = vadd.xlane.f32.xlu0 %v2216
        %v2344 = vpop.xlane.xlu0 %2343
        %2345 = vadd.xlane.f32.xlu0 %v2218
        %v2346 = vpop.xlane.xlu0 %2345
        %2347 = vadd.xlane.f32.xlu0 %v2220
        %v2348 = vpop.xlane.xlu0 %2347
        %2349 = vadd.xlane.f32.xlu0 %v2222
        %v2350 = vpop.xlane.xlu0 %2349
        %2351 = vadd.xlane.f32.xlu0 %v2224
        %v2352 = vpop.xlane.xlu0 %2351
        %2353 = vadd.xlane.f32.xlu0 %v2226
        %v2354 = vpop.xlane.xlu0 %2353
        %2355 = vadd.xlane.f32.xlu0 %v2228
        %v2356 = vpop.xlane.xlu0 %2355
        %2357 = vadd.xlane.f32.xlu0 %v2230
        %v2358 = vpop.xlane.xlu0 %2357
        %2359 = vadd.xlane.f32.xlu0 %v2232
        %v2360 = vpop.xlane.xlu0 %2359
        %2361 = vadd.xlane.f32.xlu0 %v2234
        %v2362 = vpop.xlane.xlu0 %2361
        %2363 = vadd.xlane.f32.xlu0 %v2236
        %v2364 = vpop.xlane.xlu0 %2363
        %2365 = vadd.xlane.f32.xlu0 %v2238
        %v2366 = vpop.xlane.xlu0 %2365
        %2367 = vadd.xlane.f32.xlu0 %v2240
        %v2368 = vpop.xlane.xlu0 %2367
        %2369 = vadd.xlane.f32.xlu0 %v2242
        %v2370 = vpop.xlane.xlu0 %2369
        %2371 = vadd.xlane.f32.xlu0 %v2244
        %v2372 = vpop.xlane.xlu0 %2371
        %2373 = vadd.xlane.f32.xlu0 %v2246
        %v2374 = vpop.xlane.xlu0 %2373
        %2375 = vadd.xlane.f32.xlu0 %v2248
        %v2376 = vpop.xlane.xlu0 %2375
        %2377 = vadd.xlane.f32.xlu0 %v2250
        %v2378 = vpop.xlane.xlu0 %2377
        %2379 = vadd.xlane.f32.xlu0 %v2252
        %v2380 = vpop.xlane.xlu0 %2379
        %2381 = vadd.xlane.f32.xlu0 %v2254
        %v2382 = vpop.xlane.xlu0 %2381
        %2383 = vadd.xlane.f32.xlu0 %v2256
        %v2384 = vpop.xlane.xlu0 %2383
        %2385 = vadd.xlane.f32.xlu0 %v2258
        %v2386 = vpop.xlane.xlu0 %2385
        %2387 = vadd.xlane.f32.xlu0 %v2260
        %v2388 = vpop.xlane.xlu0 %2387
        %2389 = vadd.xlane.f32.xlu0 %v2262
        %v2390 = vpop.xlane.xlu0 %2389
        %v2391 = vrcp.pop %v2264
        %v2392 = vrcp.pop %v2266
        %v2393 = vrcp.pop %v2268
        %v2394 = vrcp.pop %v2270
        %v2395 = vrcp.pop %v2272
        %v2396 = vrcp.pop %v2274
        %v2397 = vrcp.pop %v2276
        %v2398 = vrcp.pop %v2278
        %v2399 = vrcp.pop %v2280
        %v2400 = vrcp.pop %v2282
        %v2401 = vrcp.pop %v2284
        %v2402 = vrcp.pop %v2286
        %v2403 = vrcp.pop %v2288
        %v2404 = vrcp.pop %v2290
        %v2405 = vrcp.pop %v2292
        %v2406 = vrcp.pop %v2294
        %v2407 = vrcp.pop %v2296
        %v2408 = vrcp.pop %v2298
        %v2409 = vrcp.pop %v2300
        %v2410 = vrcp.pop %v2302
        %v2411 = vrcp.pop %v2304
        %v2412 = vrcp.pop %v2306
        %v2413 = vrcp.pop %v2308
        %v2414 = vrcp.pop %v2310
        %v2415 = vrcp.pop %v2312
        %v2416 = vrcp.pop %v2314
        %v2417 = vrcp.pop %v2316
        %v2418 = vrcp.pop %v2318
        %v2419 = vrcp.pop %v2320
        %v2420 = vrcp.pop %v2322
        %v2421 = vrcp.pop %v2324
        %v2422 = vrcp.pop %v2326
        %v2423 = vrcp.pop %v2328
        %v2424 = vrcp.pop %v2330
        %v2425 = vrcp.pop %v2332
        %v2426 = vrcp.pop %v2334
        %v2427 = vrcp.pop %v2336
        %v2428 = vrcp.pop %v2338
        %v2429 = vrcp.pop %v2340
        %v2430 = vrcp.pop %v2342
        %v2431 = vrcp.pop %v2344
        %v2432 = vrcp.pop %v2346
        %v2433 = vrcp.pop %v2348
        %v2434 = vrcp.pop %v2350
        %v2435 = vrcp.pop %v2352
        %v2436 = vrcp.pop %v2354
        %v2437 = vrcp.pop %v2356
        %v2438 = vrcp.pop %v2358
        %v2439 = vrcp.pop %v2360
        %v2440 = vrcp.pop %v2362
        %v2441 = vrcp.pop %v2364
        %v2442 = vrcp.pop %v2366
        %v2443 = vrcp.pop %v2368
        %v2444 = vrcp.pop %v2370
        %v2445 = vrcp.pop %v2372
        %v2446 = vrcp.pop %v2374
        %v2447 = vrcp.pop %v2376
        %v2448 = vrcp.pop %v2378
        %v2449 = vrcp.pop %v2380
        %v2450 = vrcp.pop %v2382
        %v2451 = vrcp.pop %v2384
        %v2452 = vrcp.pop %v2386
        %v2453 = vrcp.pop %v2388
        %v2454 = vrcp.pop %v2390
        %v2455 = vmul.f32 %v2136, %v2391
        %v2456 = vmul.f32 %v2138, %v2392
        %v2457 = vmul.f32 %v2140, %v2393
        %v2458 = vmul.f32 %v2142, %v2394
        %v2459 = vmul.f32 %v2144, %v2395
        %v2460 = vmul.f32 %v2146, %v2396
        %v2461 = vmul.f32 %v2148, %v2397
        %v2462 = vmul.f32 %v2150, %v2398
        %v2463 = vmul.f32 %v2152, %v2399
        %v2464 = vmul.f32 %v2154, %v2400
        %v2465 = vmul.f32 %v2156, %v2401
        %v2466 = vmul.f32 %v2158, %v2402
        %v2467 = vmul.f32 %v2160, %v2403
        %v2468 = vmul.f32 %v2162, %v2404
        %v2469 = vmul.f32 %v2164, %v2405
        %v2470 = vmul.f32 %v2166, %v2406
        %v2471 = vmul.f32 %v2168, %v2407
        %v2472 = vmul.f32 %v2170, %v2408
        %v2473 = vmul.f32 %v2172, %v2409
        %v2474 = vmul.f32 %v2174, %v2410
        %v2475 = vmul.f32 %v2176, %v2411
        %v2476 = vmul.f32 %v2178, %v2412
        %v2477 = vmul.f32 %v2180, %v2413
        %v2478 = vmul.f32 %v2182, %v2414
        %v2479 = vmul.f32 %v2184, %v2415
        %v2480 = vmul.f32 %v2186, %v2416
        %v2481 = vmul.f32 %v2188, %v2417
        %v2482 = vmul.f32 %v2190, %v2418
        %v2483 = vmul.f32 %v2192, %v2419
        %v2484 = vmul.f32 %v2194, %v2420
        %v2485 = vmul.f32 %v2196, %v2421
        %v2486 = vmul.f32 %v2198, %v2422
        %v2487 = vmul.f32 %v2200, %v2423
        %v2488 = vmul.f32 %v2202, %v2424
        %v2489 = vmul.f32 %v2204, %v2425
        %v2490 = vmul.f32 %v2206, %v2426
        %v2491 = vmul.f32 %v2208, %v2427
        %v2492 = vmul.f32 %v2210, %v2428
        %v2493 = vmul.f32 %v2212, %v2429
        %v2494 = vmul.f32 %v2214, %v2430
        %v2495 = vmul.f32 %v2216, %v2431
        %v2496 = vmul.f32 %v2218, %v2432
        %v2497 = vmul.f32 %v2220, %v2433
        %v2498 = vmul.f32 %v2222, %v2434
        %v2499 = vmul.f32 %v2224, %v2435
        %v2500 = vmul.f32 %v2226, %v2436
        %v2501 = vmul.f32 %v2228, %v2437
        %v2502 = vmul.f32 %v2230, %v2438
        %v2503 = vmul.f32 %v2232, %v2439
        %v2504 = vmul.f32 %v2234, %v2440
        %v2505 = vmul.f32 %v2236, %v2441
        %v2506 = vmul.f32 %v2238, %v2442
        %v2507 = vmul.f32 %v2240, %v2443
        %v2508 = vmul.f32 %v2242, %v2444
        %v2509 = vmul.f32 %v2244, %v2445
        %v2510 = vmul.f32 %v2246, %v2446
        %v2511 = vmul.f32 %v2248, %v2447
        %v2512 = vmul.f32 %v2250, %v2448
        %v2513 = vmul.f32 %v2252, %v2449
        %v2514 = vmul.f32 %v2254, %v2450
        %v2515 = vmul.f32 %v2256, %v2451
        %v2516 = vmul.f32 %v2258, %v2452
        %v2517 = vmul.f32 %v2260, %v2453
        %v2518 = vmul.f32 %v2262, %v2454
        %2519 = vst [vmem:[%s554] sm:$0xff] %v2455
        %2520 = vst [vmem:[%s554 + $0x8] sm:$0xff] %v2456
        %2521 = vst [vmem:[%s554 + $0x10] sm:$0xff] %v2457
        %2522 = vst [vmem:[%s554 + $0x18] sm:$0xff] %v2458
        %2523 = vst [vmem:[%s554 + $0x20] sm:$0xff] %v2459
        %2524 = vst [vmem:[%s554 + $0x28] sm:$0xff] %v2460
        %2525 = vst [vmem:[%s554 + $0x30] sm:$0xff] %v2461
        %2526 = vst [vmem:[%s554 + $0x38] sm:$0xff] %v2462
        %2527 = vst [vmem:[%s554 + $0x40] sm:$0xff] %v2463
        %2528 = vst [vmem:[%s554 + $0x48] sm:$0xff] %v2464
        %2529 = vst [vmem:[%s554 + $0x50] sm:$0xff] %v2465
        %2530 = vst [vmem:[%s554 + $0x58] sm:$0xff] %v2466
        %2531 = vst [vmem:[%s554 + $0x60] sm:$0xff] %v2467
        %2532 = vst [vmem:[%s554 + $0x68] sm:$0xff] %v2468
        %2533 = vst [vmem:[%s554 + $0x70] sm:$0xff] %v2469
        %2534 = vst [vmem:[%s554 + $0x78] sm:$0xff] %v2470
        %2535 = vst [vmem:[%s554 + $0x80] sm:$0xff] %v2471
        %2536 = vst [vmem:[%s554 + $0x88] sm:$0xff] %v2472
        %2537 = vst [vmem:[%s554 + $0x90] sm:$0xff] %v2473
        %2538 = vst [vmem:[%s554 + $0x98] sm:$0xff] %v2474
        %2539 = vst [vmem:[%s554 + $0xa0] sm:$0xff] %v2475
        %2540 = vst [vmem:[%s554 + $0xa8] sm:$0xff] %v2476
        %2541 = vst [vmem:[%s554 + $0xb0] sm:$0xff] %v2477
        %2542 = vst [vmem:[%s554 + $0xb8] sm:$0xff] %v2478
        %2543 = vst [vmem:[%s554 + $0xc0] sm:$0xff] %v2479
        %2544 = vst [vmem:[%s554 + $0xc8] sm:$0xff] %v2480
        %2545 = vst [vmem:[%s554 + $0xd0] sm:$0xff] %v2481
        %2546 = vst [vmem:[%s554 + $0xd8] sm:$0xff] %v2482
        %2547 = vst [vmem:[%s554 + $0xe0] sm:$0xff] %v2483
        %2548 = vst [vmem:[%s554 + $0xe8] sm:$0xff] %v2484
        %2549 = vst [vmem:[%s554 + $0xf0] sm:$0xff] %v2485
        %2550 = vst [vmem:[%s554 + $0xf8] sm:$0xff] %v2486
        %2551 = vst [vmem:[%s554 + $0x100] sm:$0xff] %v2487
        %2552 = vst [vmem:[%s554 + $0x108] sm:$0xff] %v2488
        %2553 = vst [vmem:[%s554 + $0x110] sm:$0xff] %v2489
        %2554 = vst [vmem:[%s554 + $0x118] sm:$0xff] %v2490
        %2555 = vst [vmem:[%s554 + $0x120] sm:$0xff] %v2491
        %2556 = vst [vmem:[%s554 + $0x128] sm:$0xff] %v2492
        %2557 = vst [vmem:[%s554 + $0x130] sm:$0xff] %v2493
        %2558 = vst [vmem:[%s554 + $0x138] sm:$0xff] %v2494
        %2559 = vst [vmem:[%s554 + $0x140] sm:$0xff] %v2495
        %2560 = vst [vmem:[%s554 + $0x148] sm:$0xff] %v2496
        %2561 = vst [vmem:[%s554 + $0x150] sm:$0xff] %v2497
        %2562 = vst [vmem:[%s554 + $0x158] sm:$0xff] %v2498
        %2563 = vst [vmem:[%s554 + $0x160] sm:$0xff] %v2499
        %2564 = vst [vmem:[%s554 + $0x168] sm:$0xff] %v2500
        %2565 = vst [vmem:[%s554 + $0x170] sm:$0xff] %v2501
        %2566 = vst [vmem:[%s554 + $0x178] sm:$0xff] %v2502
        %2567 = vst [vmem:[%s554 + $0x180] sm:$0xff] %v2503
        %2568 = vst [vmem:[%s554 + $0x188] sm:$0xff] %v2504
        %2569 = vst [vmem:[%s554 + $0x190] sm:$0xff] %v2505
        %2570 = vst [vmem:[%s554 + $0x198] sm:$0xff] %v2506
        %2571 = vst [vmem:[%s554 + $0x1a0] sm:$0xff] %v2507
        %2572 = vst [vmem:[%s554 + $0x1a8] sm:$0xff] %v2508
        %2573 = vst [vmem:[%s554 + $0x1b0] sm:$0xff] %v2509
        %2574 = vst [vmem:[%s554 + $0x1b8] sm:$0xff] %v2510
        %2575 = vst [vmem:[%s554 + $0x1c0] sm:$0xff] %v2511
        %2576 = vst [vmem:[%s554 + $0x1c8] sm:$0xff] %v2512
        %2577 = vst [vmem:[%s554 + $0x1d0] sm:$0xff] %v2513
        %2578 = vst [vmem:[%s554 + $0x1d8] sm:$0xff] %v2514
        %2579 = vst [vmem:[%s554 + $0x1e0] sm:$0xff] %v2515
        %2580 = vst [vmem:[%s554 + $0x1e8] sm:$0xff] %v2516
        %2581 = vst [vmem:[%s554 + $0x1f0] sm:$0xff] %v2517
        %2582 = vst [vmem:[%s554 + $0x1f8] sm:$0xff] %v2518
        %v2583 = vpack.c.bf16 %v2456, %v2455
        %v2584 = vpack.c.bf16 %v2458, %v2457
        %v2585 = vpack.c.bf16 %v2460, %v2459
        %v2586 = vpack.c.bf16 %v2462, %v2461
        %v2587 = vpack.c.bf16 %v2464, %v2463
        %v2588 = vpack.c.bf16 %v2466, %v2465
        %v2589 = vpack.c.bf16 %v2468, %v2467
        %v2590 = vpack.c.bf16 %v2470, %v2469
        %v2591 = vpack.c.bf16 %v2472, %v2471
        %v2592 = vpack.c.bf16 %v2474, %v2473
        %v2593 = vpack.c.bf16 %v2476, %v2475
        %v2594 = vpack.c.bf16 %v2478, %v2477
        %v2595 = vpack.c.bf16 %v2480, %v2479
        %v2596 = vpack.c.bf16 %v2482, %v2481
        %v2597 = vpack.c.bf16 %v2484, %v2483
        %v2598 = vpack.c.bf16 %v2486, %v2485
        %v2599 = vpack.c.bf16 %v2488, %v2487
        %v2600 = vpack.c.bf16 %v2490, %v2489
        %v2601 = vpack.c.bf16 %v2492, %v2491
        %v2602 = vpack.c.bf16 %v2494, %v2493
        %v2603 = vpack.c.bf16 %v2496, %v2495
        %v2604 = vpack.c.bf16 %v2498, %v2497
        %v2605 = vpack.c.bf16 %v2500, %v2499
        %v2606 = vpack.c.bf16 %v2502, %v2501
        %v2607 = vpack.c.bf16 %v2504, %v2503
        %v2608 = vpack.c.bf16 %v2506, %v2505
        %v2609 = vpack.c.bf16 %v2508, %v2507
        %v2610 = vpack.c.bf16 %v2510, %v2509
        %v2611 = vpack.c.bf16 %v2512, %v2511
        %v2612 = vpack.c.bf16 %v2514, %v2513
        %v2613 = vpack.c.bf16 %v2516, %v2515
        %v2614 = vpack.c.bf16 %v2518, %v2517
        %2615 = vmatprep.subr.bf16.mxu0 0
        %2616 = vmatpush1.bf16.msra.mxu0 %v969
        %2617 = vmatprep.subr.bf16.mxu0 0
        %2618 = vmatpush1.bf16.msra.mxu0 %v972
        %2619 = vmatprep.subr.bf16.mxu0 0
        %2620 = vmatpush1.bf16.msra.mxu0 %v975
        %2621 = vmatprep.subr.bf16.mxu0 0
        %2622 = vmatpush1.bf16.msra.mxu0 %v978
        %2623 = vmatprep.subr.bf16.mxu0 0
        %2624 = vmatpush1.bf16.msra.mxu0 %v981
        %2625 = vmatprep.subr.bf16.mxu0 0
        %2626 = vmatpush1.bf16.msra.mxu0 %v984
        %2627 = vmatprep.subr.bf16.mxu0 0
        %2628 = vmatpush1.bf16.msra.mxu0 %v987
        %2629 = vmatprep.subr.bf16.mxu0 0
        %2630 = vmatpush1.bf16.msra.mxu0 %v990
        %2631 = vmatprep.subr.bf16.mxu0 0
        %2632 = vmatpush1.bf16.msra.mxu0 0
        %2633 = vmatprep.subr.bf16.mxu0 0
        %2634 = vmatpush1.bf16.msra.mxu0 0
        %2635 = vmatprep.subr.bf16.mxu0 0
        %2636 = vmatpush1.bf16.msra.mxu0 0
        %2637 = vmatprep.subr.bf16.mxu0 0
        %2638 = vmatpush1.bf16.msra.mxu0 0
        %2639 = vmatprep.subr.bf16.mxu0 0
        %2640 = vmatpush1.bf16.msra.mxu0 0
        %2641 = vmatprep.subr.bf16.mxu0 0
        %2642 = vmatpush1.bf16.msra.mxu0 0
        %2643 = vmatprep.subr.bf16.mxu0 0
        %2644 = vmatpush1.bf16.msra.mxu0 0
        %2645 = vmatprep.subr.bf16.mxu0 0
        %2646 = vmatpush1.bf16.msra.mxu0 0
        %2647 = vmatprep.mubr.bf16.mxu0 0
        %2648 = vmatmul.mubr.bf16.gmra.mrb[0].mxu0 %v2583
        %v2649 = vpop.f32.mrb[0].mxu0
        %v2650 = vadd.f32 0.0, %v2649
        %v2651 = vpop.f32.mrb[0].mxu0
        %v2652 = vpop.f32.mrb[0].mxu0
        %v2653 = vadd.f32 0.0, %v2652
        %v2654 = vpop.f32.mrb[0].mxu0
        %2655 = vmatprep.mubr.bf16.mxu0 0
        %2656 = vmatmul.mubr.bf16.gmra.mrb[0].mxu0 %v2584
        %v2657 = vpop.f32.mrb[0].mxu0
        %v2658 = vadd.f32 0.0, %v2657
        %v2659 = vpop.f32.mrb[0].mxu0
        %v2660 = vpop.f32.mrb[0].mxu0
        %v2661 = vadd.f32 0.0, %v2660
        %v2662 = vpop.f32.mrb[0].mxu0
        %2663 = vmatprep.mubr.bf16.mxu0 0
        %2664 = vmatmul.mubr.bf16.gmra.mrb[0].mxu0 %v2585
        %v2665 = vpop.f32.mrb[0].mxu0
        %v2666 = vadd.f32 0.0, %v2665
        %v2667 = vpop.f32.mrb[0].mxu0
        %v2668 = vpop.f32.mrb[0].mxu0
        %v2669 = vadd.f32 0.0, %v2668
        %v2670 = vpop.f32.mrb[0].mxu0
        %2671 = vmatprep.mubr.bf16.mxu0 0
        %2672 = vmatmul.mubr.bf16.gmra.mrb[0].mxu0 %v2586
        %v2673 = vpop.f32.mrb[0].mxu0
        %v2674 = vadd.f32 0.0, %v2673
        %v2675 = vpop.f32.mrb[0].mxu0
        %v2676 = vpop.f32.mrb[0].mxu0
        %v2677 = vadd.f32 0.0, %v2676
        %v2678 = vpop.f32.mrb[0].mxu0
        %2679 = vmatprep.mubr.bf16.mxu0 0
        %2680 = vmatmul.mubr.bf16.gmra.mrb[0].mxu0 %v2587
        %v2681 = vpop.f32.mrb[0].mxu0
        %v2682 = vadd.f32 0.0, %v2681
        %v2683 = vpop.f32.mrb[0].mxu0
        %v2684 = vpop.f32.mrb[0].mxu0
        %v2685 = vadd.f32 0.0, %v2684
        %v2686 = vpop.f32.mrb[0].mxu0
        %2687 = vmatprep.mubr.bf16.mxu0 0
        %2688 = vmatmul.mubr.bf16.gmra.mrb[0].mxu0 %v2588
        %v2689 = vpop.f32.mrb[0].mxu0
        %v2690 = vadd.f32 0.0, %v2689
        %v2691 = vpop.f32.mrb[0].mxu0
        %v2692 = vpop.f32.mrb[0].mxu0
        %v2693 = vadd.f32 0.0, %v2692
        %v2694 = vpop.f32.mrb[0].mxu0
        %2695 = vmatprep.mubr.bf16.mxu0 0
        %2696 = vmatmul.mubr.bf16.gmra.mrb[0].mxu0 %v2589
        %v2697 = vpop.f32.mrb[0].mxu0
        %v2698 = vadd.f32 0.0, %v2697
        %v2699 = vpop.f32.mrb[0].mxu0
        %v2700 = vpop.f32.mrb[0].mxu0
        %v2701 = vadd.f32 0.0, %v2700
        %v2702 = vpop.f32.mrb[0].mxu0
        %2703 = vmatprep.mubr.bf16.mxu0 0
        %2704 = vmatmul.mubr.bf16.gmra.mrb[0].mxu0 %v2590
        %v2705 = vpop.f32.mrb[0].mxu0
        %v2706 = vadd.f32 0.0, %v2705
        %v2707 = vpop.f32.mrb[0].mxu0
        %v2708 = vpop.f32.mrb[0].mxu0
        %v2709 = vadd.f32 0.0, %v2708
        %v2710 = vpop.f32.mrb[0].mxu0
        %2711 = vdwg.mxu0
        %2712 = vmatprep.subr.bf16.mxu0 0
        %2713 = vmatpush1.bf16.msra.mxu0 %v1112
        %2714 = vmatprep.subr.bf16.mxu0 0
        %2715 = vmatpush1.bf16.msra.mxu0 %v1114
        %2716 = vmatprep.subr.bf16.mxu0 0
        %2717 = vmatpush1.bf16.msra.mxu0 %v1116
        %2718 = vmatprep.subr.bf16.mxu0 0
        %2719 = vmatpush1.bf16.msra.mxu0 %v1118
        %2720 = vmatprep.subr.bf16.mxu0 0
        %2721 = vmatpush1.bf16.msra.mxu0 %v1120
        %2722 = vmatprep.subr.bf16.mxu0 0
        %2723 = vmatpush1.bf16.msra.mxu0 %v1122
        %2724 = vmatprep.subr.bf16.mxu0 0
        %2725 = vmatpush1.bf16.msra.mxu0 %v1124
        %2726 = vmatprep.subr.bf16.mxu0 0
        %2727 = vmatpush1.bf16.msra.mxu0 %v1126
        %2728 = vmatprep.subr.bf16.mxu0 0
        %2729 = vmatpush1.bf16.msra.mxu0 0
        %2730 = vmatprep.subr.bf16.mxu0 0
        %2731 = vmatpush1.bf16.msra.mxu0 0
        %2732 = vmatprep.subr.bf16.mxu0 0
        %2733 = vmatpush1.bf16.msra.mxu0 0
        %2734 = vmatprep.subr.bf16.mxu0 0
        %2735 = vmatpush1.bf16.msra.mxu0 0
        %2736 = vmatprep.subr.bf16.mxu0 0
        %2737 = vmatpush1.bf16.msra.mxu0 0
        %2738 = vmatprep.subr.bf16.mxu0 0
        %2739 = vmatpush1.bf16.msra.mxu0 0
        %2740 = vmatprep.subr.bf16.mxu0 0
        %2741 = vmatpush1.bf16.msra.mxu0 0
        %2742 = vmatprep.subr.bf16.mxu0 0
        %2743 = vmatpush1.bf16.msra.mxu0 0
        %2744 = vmatprep.mubr.bf16.mxu0 0
        %2745 = vmatmul.mubr.bf16.gmra.mrb[0].mxu0 %v2591
        %v2746 = vpop.f32.mrb[0].mxu0
        %v2747 = vadd.f32 0.0, %v2746
        %v2748 = vpop.f32.mrb[0].mxu0
        %v2749 = vpop.f32.mrb[0].mxu0
        %v2750 = vadd.f32 0.0, %v2749
        %v2751 = vpop.f32.mrb[0].mxu0
        %2752 = vmatprep.mubr.bf16.mxu0 0
        %2753 = vmatmul.mubr.bf16.gmra.mrb[0].mxu0 %v2592
        %v2754 = vpop.f32.mrb[0].mxu0
        %v2755 = vadd.f32 0.0, %v2754
        %v2756 = vpop.f32.mrb[0].mxu0
        %v2757 = vpop.f32.mrb[0].mxu0
        %v2758 = vadd.f32 0.0, %v2757
        %v2759 = vpop.f32.mrb[0].mxu0
        %2760 = vmatprep.mubr.bf16.mxu0 0
        %2761 = vmatmul.mubr.bf16.gmra.mrb[0].mxu0 %v2593
        %v2762 = vpop.f32.mrb[0].mxu0
        %v2763 = vadd.f32 0.0, %v2762
        %v2764 = vpop.f32.mrb[0].mxu0
        %v2765 = vpop.f32.mrb[0].mxu0
        %v2766 = vadd.f32 0.0, %v2765
        %v2767 = vpop.f32.mrb[0].mxu0
        %2768 = vmatprep.mubr.bf16.mxu0 0
        %2769 = vmatmul.mubr.bf16.gmra.mrb[0].mxu0 %v2594
        %v2770 = vpop.f32.mrb[0].mxu0
        %v2771 = vadd.f32 0.0, %v2770
        %v2772 = vpop.f32.mrb[0].mxu0
        %v2773 = vpop.f32.mrb[0].mxu0
        %v2774 = vadd.f32 0.0, %v2773
        %v2775 = vpop.f32.mrb[0].mxu0
        %2776 = vmatprep.mubr.bf16.mxu0 0
        %2777 = vmatmul.mubr.bf16.gmra.mrb[0].mxu0 %v2595
        %v2778 = vpop.f32.mrb[0].mxu0
        %v2779 = vadd.f32 0.0, %v2778
        %v2780 = vpop.f32.mrb[0].mxu0
        %v2781 = vpop.f32.mrb[0].mxu0
        %v2782 = vadd.f32 0.0, %v2781
        %v2783 = vpop.f32.mrb[0].mxu0
        %2784 = vmatprep.mubr.bf16.mxu0 0
        %2785 = vmatmul.mubr.bf16.gmra.mrb[0].mxu0 %v2596
        %v2786 = vpop.f32.mrb[0].mxu0
        %v2787 = vadd.f32 0.0, %v2786
        %v2788 = vpop.f32.mrb[0].mxu0
        %v2789 = vpop.f32.mrb[0].mxu0
        %v2790 = vadd.f32 0.0, %v2789
        %v2791 = vpop.f32.mrb[0].mxu0
        %2792 = vmatprep.mubr.bf16.mxu0 0
        %2793 = vmatmul.mubr.bf16.gmra.mrb[0].mxu0 %v2597
        %v2794 = vpop.f32.mrb[0].mxu0
        %v2795 = vadd.f32 0.0, %v2794
        %v2796 = vpop.f32.mrb[0].mxu0
        %v2797 = vpop.f32.mrb[0].mxu0
        %v2798 = vadd.f32 0.0, %v2797
        %v2799 = vpop.f32.mrb[0].mxu0
        %2800 = vmatprep.mubr.bf16.mxu0 0
        %2801 = vmatmul.mubr.bf16.gmra.mrb[0].mxu0 %v2598
        %v2802 = vpop.f32.mrb[0].mxu0
        %v2803 = vadd.f32 0.0, %v2802
        %v2804 = vpop.f32.mrb[0].mxu0
        %v2805 = vpop.f32.mrb[0].mxu0
        %v2806 = vadd.f32 0.0, %v2805
        %v2807 = vpop.f32.mrb[0].mxu0
        %2808 = vdwg.mxu0
        %2809 = vmatprep.subr.bf16.mxu0 0
        %2810 = vmatpush1.bf16.msra.mxu0 %v1136
        %2811 = vmatprep.subr.bf16.mxu0 0
        %2812 = vmatpush1.bf16.msra.mxu0 %v1138
        %2813 = vmatprep.subr.bf16.mxu0 0
        %2814 = vmatpush1.bf16.msra.mxu0 %v1140
        %2815 = vmatprep.subr.bf16.mxu0 0
        %2816 = vmatpush1.bf16.msra.mxu0 %v1142
        %2817 = vmatprep.subr.bf16.mxu0 0
        %2818 = vmatpush1.bf16.msra.mxu0 %v1144
        %2819 = vmatprep.subr.bf16.mxu0 0
        %2820 = vmatpush1.bf16.msra.mxu0 %v1146
        %2821 = vmatprep.subr.bf16.mxu0 0
        %2822 = vmatpush1.bf16.msra.mxu0 %v1148
        %2823 = vmatprep.subr.bf16.mxu0 0
        %2824 = vmatpush1.bf16.msra.mxu0 %v1150
        %2825 = vmatprep.subr.bf16.mxu0 0
        %2826 = vmatpush1.bf16.msra.mxu0 0
        %2827 = vmatprep.subr.bf16.mxu0 0
        %2828 = vmatpush1.bf16.msra.mxu0 0
        %2829 = vmatprep.subr.bf16.mxu0 0
        %2830 = vmatpush1.bf16.msra.mxu0 0
        %2831 = vmatprep.subr.bf16.mxu0 0
        %2832 = vmatpush1.bf16.msra.mxu0 0
        %2833 = vmatprep.subr.bf16.mxu0 0
        %2834 = vmatpush1.bf16.msra.mxu0 0
        %2835 = vmatprep.subr.bf16.mxu0 0
        %2836 = vmatpush1.bf16.msra.mxu0 0
        %2837 = vmatprep.subr.bf16.mxu0 0
        %2838 = vmatpush1.bf16.msra.mxu0 0
        %2839 = vmatprep.subr.bf16.mxu0 0
        %2840 = vmatpush1.bf16.msra.mxu0 0
        %2841 = vmatprep.mubr.bf16.mxu0 0
        %2842 = vmatmul.mubr.bf16.gmra.mrb[0].mxu0 %v2599
        %v2843 = vpop.f32.mrb[0].mxu0
        %v2844 = vadd.f32 0.0, %v2843
        %v2845 = vpop.f32.mrb[0].mxu0
        %v2846 = vpop.f32.mrb[0].mxu0
        %v2847 = vadd.f32 0.0, %v2846
        %v2848 = vpop.f32.mrb[0].mxu0
        %2849 = vmatprep.mubr.bf16.mxu0 0
        %2850 = vmatmul.mubr.bf16.gmra.mrb[0].mxu0 %v2600
        %v2851 = vpop.f32.mrb[0].mxu0
        %v2852 = vadd.f32 0.0, %v2851
        %v2853 = vpop.f32.mrb[0].mxu0
        %v2854 = vpop.f32.mrb[0].mxu0
        %v2855 = vadd.f32 0.0, %v2854
        %v2856 = vpop.f32.mrb[0].mxu0
        %2857 = vmatprep.mubr.bf16.mxu0 0
        %2858 = vmatmul.mubr.bf16.gmra.mrb[0].mxu0 %v2601
        %v2859 = vpop.f32.mrb[0].mxu0
        %v2860 = vadd.f32 0.0, %v2859
        %v2861 = vpop.f32.mrb[0].mxu0
        %v2862 = vpop.f32.mrb[0].mxu0
        %v2863 = vadd.f32 0.0, %v2862
        %v2864 = vpop.f32.mrb[0].mxu0
        %2865 = vmatprep.mubr.bf16.mxu0 0
        %2866 = vmatmul.mubr.bf16.gmra.mrb[0].mxu0 %v2602
        %v2867 = vpop.f32.mrb[0].mxu0
        %v2868 = vadd.f32 0.0, %v2867
        %v2869 = vpop.f32.mrb[0].mxu0
        %v2870 = vpop.f32.mrb[0].mxu0
        %v2871 = vadd.f32 0.0, %v2870
        %v2872 = vpop.f32.mrb[0].mxu0
        %2873 = vmatprep.mubr.bf16.mxu0 0
        %2874 = vmatmul.mubr.bf16.gmra.mrb[0].mxu0 %v2603
        %v2875 = vpop.f32.mrb[0].mxu0
        %v2876 = vadd.f32 0.0, %v2875
        %v2877 = vpop.f32.mrb[0].mxu0
        %v2878 = vpop.f32.mrb[0].mxu0
        %v2879 = vadd.f32 0.0, %v2878
        %v2880 = vpop.f32.mrb[0].mxu0
        %2881 = vmatprep.mubr.bf16.mxu0 0
        %2882 = vmatmul.mubr.bf16.gmra.mrb[0].mxu0 %v2604
        %v2883 = vpop.f32.mrb[0].mxu0
        %v2884 = vadd.f32 0.0, %v2883
        %v2885 = vpop.f32.mrb[0].mxu0
        %v2886 = vpop.f32.mrb[0].mxu0
        %v2887 = vadd.f32 0.0, %v2886
        %v2888 = vpop.f32.mrb[0].mxu0
        %2889 = vmatprep.mubr.bf16.mxu0 0
        %2890 = vmatmul.mubr.bf16.gmra.mrb[0].mxu0 %v2605
        %v2891 = vpop.f32.mrb[0].mxu0
        %v2892 = vadd.f32 0.0, %v2891
        %v2893 = vpop.f32.mrb[0].mxu0
        %v2894 = vpop.f32.mrb[0].mxu0
        %v2895 = vadd.f32 0.0, %v2894
        %v2896 = vpop.f32.mrb[0].mxu0
        %2897 = vmatprep.mubr.bf16.mxu0 0
        %2898 = vmatmul.mubr.bf16.gmra.mrb[0].mxu0 %v2606
        %v2899 = vpop.f32.mrb[0].mxu0
        %v2900 = vadd.f32 0.0, %v2899
        %v2901 = vpop.f32.mrb[0].mxu0
        %v2902 = vpop.f32.mrb[0].mxu0
        %v2903 = vadd.f32 0.0, %v2902
        %v2904 = vpop.f32.mrb[0].mxu0
        %2905 = vdwg.mxu0
        %2906 = vmatprep.subr.bf16.mxu0 0
        %2907 = vmatpush1.bf16.msra.mxu0 %v1160
        %2908 = vmatprep.subr.bf16.mxu0 0
        %2909 = vmatpush1.bf16.msra.mxu0 %v1162
        %2910 = vmatprep.subr.bf16.mxu0 0
        %2911 = vmatpush1.bf16.msra.mxu0 %v1164
        %2912 = vmatprep.subr.bf16.mxu0 0
        %2913 = vmatpush1.bf16.msra.mxu0 %v1166
        %2914 = vmatprep.subr.bf16.mxu0 0
        %2915 = vmatpush1.bf16.msra.mxu0 %v1168
        %2916 = vmatprep.subr.bf16.mxu0 0
        %2917 = vmatpush1.bf16.msra.mxu0 %v1170
        %2918 = vmatprep.subr.bf16.mxu0 0
        %2919 = vmatpush1.bf16.msra.mxu0 %v1172
        %2920 = vmatprep.subr.bf16.mxu0 0
        %2921 = vmatpush1.bf16.msra.mxu0 %v1174
        %2922 = vmatprep.subr.bf16.mxu0 0
        %2923 = vmatpush1.bf16.msra.mxu0 0
        %2924 = vmatprep.subr.bf16.mxu0 0
        %2925 = vmatpush1.bf16.msra.mxu0 0
        %2926 = vmatprep.subr.bf16.mxu0 0
        %2927 = vmatpush1.bf16.msra.mxu0 0
        %2928 = vmatprep.subr.bf16.mxu0 0
        %2929 = vmatpush1.bf16.msra.mxu0 0
        %2930 = vmatprep.subr.bf16.mxu0 0
        %2931 = vmatpush1.bf16.msra.mxu0 0
        %2932 = vmatprep.subr.bf16.mxu0 0
        %2933 = vmatpush1.bf16.msra.mxu0 0
        %2934 = vmatprep.subr.bf16.mxu0 0
        %2935 = vmatpush1.bf16.msra.mxu0 0
        %2936 = vmatprep.subr.bf16.mxu0 0
        %2937 = vmatpush1.bf16.msra.mxu0 0
        %2938 = vmatprep.mubr.bf16.mxu0 0
        %2939 = vmatmul.mubr.bf16.gmra.mrb[0].mxu0 %v2607
        %v2940 = vpop.f32.mrb[0].mxu0
        %v2941 = vadd.f32 0.0, %v2940
        %v2942 = vpop.f32.mrb[0].mxu0
        %v2943 = vpop.f32.mrb[0].mxu0
        %v2944 = vadd.f32 0.0, %v2943
        %v2945 = vpop.f32.mrb[0].mxu0
        %2946 = vmatprep.mubr.bf16.mxu0 0
        %2947 = vmatmul.mubr.bf16.gmra.mrb[0].mxu0 %v2608
        %v2948 = vpop.f32.mrb[0].mxu0
        %v2949 = vadd.f32 0.0, %v2948
        %v2950 = vpop.f32.mrb[0].mxu0
        %v2951 = vpop.f32.mrb[0].mxu0
        %v2952 = vadd.f32 0.0, %v2951
        %v2953 = vpop.f32.mrb[0].mxu0
        %2954 = vmatprep.mubr.bf16.mxu0 0
        %2955 = vmatmul.mubr.bf16.gmra.mrb[0].mxu0 %v2609
        %v2956 = vpop.f32.mrb[0].mxu0
        %v2957 = vadd.f32 0.0, %v2956
        %v2958 = vpop.f32.mrb[0].mxu0
        %v2959 = vpop.f32.mrb[0].mxu0
        %v2960 = vadd.f32 0.0, %v2959
        %v2961 = vpop.f32.mrb[0].mxu0
        %2962 = vmatprep.mubr.bf16.mxu0 0
        %2963 = vmatmul.mubr.bf16.gmra.mrb[0].mxu0 %v2610
        %v2964 = vpop.f32.mrb[0].mxu0
        %v2965 = vadd.f32 0.0, %v2964
        %v2966 = vpop.f32.mrb[0].mxu0
        %v2967 = vpop.f32.mrb[0].mxu0
        %v2968 = vadd.f32 0.0, %v2967
        %v2969 = vpop.f32.mrb[0].mxu0
        %2970 = vmatprep.mubr.bf16.mxu0 0
        %2971 = vmatmul.mubr.bf16.gmra.mrb[0].mxu0 %v2611
        %v2972 = vpop.f32.mrb[0].mxu0
        %v2973 = vadd.f32 0.0, %v2972
        %v2974 = vpop.f32.mrb[0].mxu0
        %v2975 = vpop.f32.mrb[0].mxu0
        %v2976 = vadd.f32 0.0, %v2975
        %v2977 = vpop.f32.mrb[0].mxu0
        %2978 = vmatprep.mubr.bf16.mxu0 0
        %2979 = vmatmul.mubr.bf16.gmra.mrb[0].mxu0 %v2612
        %v2980 = vpop.f32.mrb[0].mxu0
        %v2981 = vadd.f32 0.0, %v2980
        %v2982 = vpop.f32.mrb[0].mxu0
        %v2983 = vpop.f32.mrb[0].mxu0
        %v2984 = vadd.f32 0.0, %v2983
        %v2985 = vpop.f32.mrb[0].mxu0
        %2986 = vmatprep.mubr.bf16.mxu0 0
        %2987 = vmatmul.mubr.bf16.gmra.mrb[0].mxu0 %v2613
        %v2988 = vpop.f32.mrb[0].mxu0
        %v2989 = vadd.f32 0.0, %v2988
        %v2990 = vpop.f32.mrb[0].mxu0
        %v2991 = vpop.f32.mrb[0].mxu0
        %v2992 = vadd.f32 0.0, %v2991
        %v2993 = vpop.f32.mrb[0].mxu0
        %2994 = vmatprep.mubr.bf16.mxu0 0
        %2995 = vmatmul.mubr.bf16.gmra.mrb[0].mxu0 %v2614
        %v2996 = vpop.f32.mrb[0].mxu0
        %v2997 = vadd.f32 0.0, %v2996
        %v2998 = vpop.f32.mrb[0].mxu0
        %v2999 = vpop.f32.mrb[0].mxu0
        %v3000 = vadd.f32 0.0, %v2999
        %v3001 = vpop.f32.mrb[0].mxu0
        %3002 = vdwg.mxu0
        %v3003 = vpack.c.bf16 %v2653, %v2650
        %v3004 = vpack.c.bf16 %v2661, %v2658
        %v3005 = vpack.c.bf16 %v2669, %v2666
        %v3006 = vpack.c.bf16 %v2677, %v2674
        %v3007 = vpack.c.bf16 %v2685, %v2682
        %v3008 = vpack.c.bf16 %v2693, %v2690
        %v3009 = vpack.c.bf16 %v2701, %v2698
        %v3010 = vpack.c.bf16 %v2709, %v2706
        %v3011 = vpack.c.bf16 %v2750, %v2747
        %v3012 = vpack.c.bf16 %v2758, %v2755
        %v3013 = vpack.c.bf16 %v2766, %v2763
        %v3014 = vpack.c.bf16 %v2774, %v2771
        %v3015 = vpack.c.bf16 %v2782, %v2779
        %v3016 = vpack.c.bf16 %v2790, %v2787
        %v3017 = vpack.c.bf16 %v2798, %v2795
        %v3018 = vpack.c.bf16 %v2806, %v2803
        %v3019 = vpack.c.bf16 %v2847, %v2844
        %v3020 = vpack.c.bf16 %v2855, %v2852
        %v3021 = vpack.c.bf16 %v2863, %v2860
        %v3022 = vpack.c.bf16 %v2871, %v2868
        %v3023 = vpack.c.bf16 %v2879, %v2876
        %v3024 = vpack.c.bf16 %v2887, %v2884
        %v3025 = vpack.c.bf16 %v2895, %v2892
        %v3026 = vpack.c.bf16 %v2903, %v2900
        %v3027 = vpack.c.bf16 %v2944, %v2941
        %v3028 = vpack.c.bf16 %v2952, %v2949
        %v3029 = vpack.c.bf16 %v2960, %v2957
        %v3030 = vpack.c.bf16 %v2968, %v2965
        %v3031 = vpack.c.bf16 %v2976, %v2973
        %v3032 = vpack.c.bf16 %v2984, %v2981
        %v3033 = vpack.c.bf16 %v2992, %v2989
        %v3034 = vpack.c.bf16 %v3000, %v2997
        %v3035 = vld [vmem:[#allocation7] sm:$0xf]
        %v3036 = vld [vmem:[#allocation7 + $0x4] sm:$0xf]
        %v3037 = vld [vmem:[#allocation7 + $0x8] sm:$0xf]
        %v3038 = vld [vmem:[#allocation7 + $0xc] sm:$0xf]
        %v3039 = vld [vmem:[#allocation7 + $0x10] sm:$0xf]
        %v3040 = vld [vmem:[#allocation7 + $0x14] sm:$0xf]
        %v3041 = vld [vmem:[#allocation7 + $0x18] sm:$0xf]
        %v3042 = vld [vmem:[#allocation7 + $0x1c] sm:$0xf]
        %v3043 = vld [vmem:[#allocation7 + $0x20] sm:$0xf]
        %v3044 = vld [vmem:[#allocation7 + $0x24] sm:$0xf]
        %v3045 = vld [vmem:[#allocation7 + $0x28] sm:$0xf]
        %v3046 = vld [vmem:[#allocation7 + $0x2c] sm:$0xf]
        %v3047 = vld [vmem:[#allocation7 + $0x30] sm:$0xf]
        %v3048 = vld [vmem:[#allocation7 + $0x34] sm:$0xf]
        %v3049 = vld [vmem:[#allocation7 + $0x38] sm:$0xf]
        %v3050 = vld [vmem:[#allocation7 + $0x3c] sm:$0xf]
        %v3055 = vunpack.c.l.b16 %v3035
        %v3056 = vunpack.c.l.b16 %v3036
        %v3057 = vunpack.c.l.b16 %v3037
        %v3058 = vunpack.c.l.b16 %v3038
        %v3059 = vpack.c.b16 %v3056, %v3055
        %v3060 = vpack.c.b16 %v3058, %v3057
        %v3064 = vsel %vm1234, %v3003, 0
        %v3067 = vsel %vm1234, %v3004, 0
        %v3070 = vsel %vm1234, %v3005, 0
        %v3073 = vsel %vm1234, %v3006, 0
        %v3076 = vsel %vm1234, %v3007, 0
        %v3079 = vsel %vm1234, %v3008, 0
        %v3082 = vsel %vm1234, %v3009, 0
        %v3085 = vsel %vm1234, %v3010, 0
        %3087 = vmatprep.subr.bf16.mxu0 0
        %3088 = vmatpush1.bf16.msra.mxu0 %v3059
        %3089 = vmatprep.subr.bf16.mxu0 0
        %3090 = vmatpush1.bf16.msra.mxu0 %v3060
        %3091 = vmatprep.subr.bf16.mxu0 0
        %3092 = vmatpush1.bf16.msra.mxu0 0
        %3093 = vmatprep.subr.bf16.mxu0 0
        %3094 = vmatpush1.bf16.msra.mxu0 0
        %3095 = vmatprep.subr.bf16.mxu0 0
        %3096 = vmatpush1.bf16.msra.mxu0 0
        %3097 = vmatprep.subr.bf16.mxu0 0
        %3098 = vmatpush1.bf16.msra.mxu0 0
        %3099 = vmatprep.subr.bf16.mxu0 0
        %3100 = vmatpush1.bf16.msra.mxu0 0
        %3101 = vmatprep.subr.bf16.mxu0 0
        %3102 = vmatpush1.bf16.msra.mxu0 0
        %3103 = vmatprep.subr.bf16.mxu0 0
        %3104 = vmatpush1.bf16.msra.mxu0 0
        %3105 = vmatprep.subr.bf16.mxu0 0
        %3106 = vmatpush1.bf16.msra.mxu0 0
        %3107 = vmatprep.subr.bf16.mxu0 0
        %3108 = vmatpush1.bf16.msra.mxu0 0
        %3109 = vmatprep.subr.bf16.mxu0 0
        %3110 = vmatpush1.bf16.msra.mxu0 0
        %3111 = vmatprep.subr.bf16.mxu0 0
        %3112 = vmatpush1.bf16.msra.mxu0 0
        %3113 = vmatprep.subr.bf16.mxu0 0
        %3114 = vmatpush1.bf16.msra.mxu0 0
        %3115 = vmatprep.subr.bf16.mxu0 0
        %3116 = vmatpush1.bf16.msra.mxu0 0
        %3117 = vmatprep.subr.bf16.mxu0 0
        %3118 = vmatpush1.bf16.msra.mxu0 0
        %3119 = vmatprep.mubr.bf16.mxu0 0
        %3120 = vmatmul.mubr.bf16.gmra.mrb[0].mxu0 %v3064
        %v3121 = vpop.f32.mrb[0].mxu0
        %v3122 = vadd.f32 0.0, %v3121
        %v3123 = vpop.f32.mrb[0].mxu0
        %v3124 = vpop.f32.mrb[0].mxu0
        %v3125 = vadd.f32 0.0, %v3124
        %v3126 = vpop.f32.mrb[0].mxu0
        %3127 = vmatprep.mubr.bf16.mxu0 0
        %3128 = vmatmul.mubr.bf16.gmra.mrb[0].mxu0 %v3067
        %v3129 = vpop.f32.mrb[0].mxu0
        %v3130 = vadd.f32 0.0, %v3129
        %v3131 = vpop.f32.mrb[0].mxu0
        %v3132 = vpop.f32.mrb[0].mxu0
        %v3133 = vadd.f32 0.0, %v3132
        %v3134 = vpop.f32.mrb[0].mxu0
        %3135 = vmatprep.mubr.bf16.mxu0 0
        %3136 = vmatmul.mubr.bf16.gmra.mrb[0].mxu0 %v3070
        %v3137 = vpop.f32.mrb[0].mxu0
        %v3138 = vadd.f32 0.0, %v3137
        %v3139 = vpop.f32.mrb[0].mxu0
        %v3140 = vpop.f32.mrb[0].mxu0
        %v3141 = vadd.f32 0.0, %v3140
        %v3142 = vpop.f32.mrb[0].mxu0
        %3143 = vmatprep.mubr.bf16.mxu0 0
        %3144 = vmatmul.mubr.bf16.gmra.mrb[0].mxu0 %v3073
        %v3145 = vpop.f32.mrb[0].mxu0
        %v3146 = vadd.f32 0.0, %v3145
        %v3147 = vpop.f32.mrb[0].mxu0
        %v3148 = vpop.f32.mrb[0].mxu0
        %v3149 = vadd.f32 0.0, %v3148
        %v3150 = vpop.f32.mrb[0].mxu0
        %3151 = vmatprep.mubr.bf16.mxu0 0
        %3152 = vmatmul.mubr.bf16.gmra.mrb[0].mxu0 %v3076
        %v3153 = vpop.f32.mrb[0].mxu0
        %v3154 = vadd.f32 0.0, %v3153
        %v3155 = vpop.f32.mrb[0].mxu0
        %v3156 = vpop.f32.mrb[0].mxu0
        %v3157 = vadd.f32 0.0, %v3156
        %v3158 = vpop.f32.mrb[0].mxu0
        %3159 = vmatprep.mubr.bf16.mxu0 0
        %3160 = vmatmul.mubr.bf16.gmra.mrb[0].mxu0 %v3079
        %v3161 = vpop.f32.mrb[0].mxu0
        %v3162 = vadd.f32 0.0, %v3161
        %v3163 = vpop.f32.mrb[0].mxu0
        %v3164 = vpop.f32.mrb[0].mxu0
        %v3165 = vadd.f32 0.0, %v3164
        %v3166 = vpop.f32.mrb[0].mxu0
        %3167 = vmatprep.mubr.bf16.mxu0 0
        %3168 = vmatmul.mubr.bf16.gmra.mrb[0].mxu0 %v3082
        %v3169 = vpop.f32.mrb[0].mxu0
        %v3170 = vadd.f32 0.0, %v3169
        %v3171 = vpop.f32.mrb[0].mxu0
        %v3172 = vpop.f32.mrb[0].mxu0
        %v3173 = vadd.f32 0.0, %v3172
        %v3174 = vpop.f32.mrb[0].mxu0
        %3175 = vmatprep.mubr.bf16.mxu0 0
        %3176 = vmatmul.mubr.bf16.gmra.mrb[0].mxu0 %v3085
        %v3177 = vpop.f32.mrb[0].mxu0
        %v3178 = vadd.f32 0.0, %v3177
        %v3179 = vpop.f32.mrb[0].mxu0
        %v3180 = vpop.f32.mrb[0].mxu0
        %v3181 = vadd.f32 0.0, %v3180
        %v3182 = vpop.f32.mrb[0].mxu0
        %3183 = vdwg.mxu0
        %v3188 = vunpack.c.l.b16 %v3039
        %v3189 = vunpack.c.l.b16 %v3040
        %v3190 = vunpack.c.l.b16 %v3041
        %v3191 = vunpack.c.l.b16 %v3042
        %v3192 = vpack.c.b16 %v3189, %v3188
        %v3193 = vpack.c.b16 %v3191, %v3190
        %v3197 = vsel %vm1234, %v3011, 0
        %v3200 = vsel %vm1234, %v3012, 0
        %v3203 = vsel %vm1234, %v3013, 0
        %v3206 = vsel %vm1234, %v3014, 0
        %v3209 = vsel %vm1234, %v3015, 0
        %v3212 = vsel %vm1234, %v3016, 0
        %v3215 = vsel %vm1234, %v3017, 0
        %v3218 = vsel %vm1234, %v3018, 0
        %3220 = vmatprep.subr.bf16.mxu0 0
        %3221 = vmatpush1.bf16.msra.mxu0 %v3192
        %3222 = vmatprep.subr.bf16.mxu0 0
        %3223 = vmatpush1.bf16.msra.mxu0 %v3193
        %3224 = vmatprep.subr.bf16.mxu0 0
        %3225 = vmatpush1.bf16.msra.mxu0 0
        %3226 = vmatprep.subr.bf16.mxu0 0
        %3227 = vmatpush1.bf16.msra.mxu0 0
        %3228 = vmatprep.subr.bf16.mxu0 0
        %3229 = vmatpush1.bf16.msra.mxu0 0
        %3230 = vmatprep.subr.bf16.mxu0 0
        %3231 = vmatpush1.bf16.msra.mxu0 0
        %3232 = vmatprep.subr.bf16.mxu0 0
        %3233 = vmatpush1.bf16.msra.mxu0 0
        %3234 = vmatprep.subr.bf16.mxu0 0
        %3235 = vmatpush1.bf16.msra.mxu0 0
        %3236 = vmatprep.subr.bf16.mxu0 0
        %3237 = vmatpush1.bf16.msra.mxu0 0
        %3238 = vmatprep.subr.bf16.mxu0 0
        %3239 = vmatpush1.bf16.msra.mxu0 0
        %3240 = vmatprep.subr.bf16.mxu0 0
        %3241 = vmatpush1.bf16.msra.mxu0 0
        %3242 = vmatprep.subr.bf16.mxu0 0
        %3243 = vmatpush1.bf16.msra.mxu0 0
        %3244 = vmatprep.subr.bf16.mxu0 0
        %3245 = vmatpush1.bf16.msra.mxu0 0
        %3246 = vmatprep.subr.bf16.mxu0 0
        %3247 = vmatpush1.bf16.msra.mxu0 0
        %3248 = vmatprep.subr.bf16.mxu0 0
        %3249 = vmatpush1.bf16.msra.mxu0 0
        %3250 = vmatprep.subr.bf16.mxu0 0
        %3251 = vmatpush1.bf16.msra.mxu0 0
        %3252 = vmatprep.mubr.bf16.mxu0 0
        %3253 = vmatmul.mubr.bf16.gmra.mrb[0].mxu0 %v3197
        %v3254 = vpop.f32.mrb[0].mxu0
        %v3255 = vadd.f32 0.0, %v3254
        %v3256 = vpop.f32.mrb[0].mxu0
        %v3257 = vpop.f32.mrb[0].mxu0
        %v3258 = vadd.f32 0.0, %v3257
        %v3259 = vpop.f32.mrb[0].mxu0
        %3260 = vmatprep.mubr.bf16.mxu0 0
        %3261 = vmatmul.mubr.bf16.gmra.mrb[0].mxu0 %v3200
        %v3262 = vpop.f32.mrb[0].mxu0
        %v3263 = vadd.f32 0.0, %v3262
        %v3264 = vpop.f32.mrb[0].mxu0
        %v3265 = vpop.f32.mrb[0].mxu0
        %v3266 = vadd.f32 0.0, %v3265
        %v3267 = vpop.f32.mrb[0].mxu0
        %3268 = vmatprep.mubr.bf16.mxu0 0
        %3269 = vmatmul.mubr.bf16.gmra.mrb[0].mxu0 %v3203
        %v3270 = vpop.f32.mrb[0].mxu0
        %v3271 = vadd.f32 0.0, %v3270
        %v3272 = vpop.f32.mrb[0].mxu0
        %v3273 = vpop.f32.mrb[0].mxu0
        %v3274 = vadd.f32 0.0, %v3273
        %v3275 = vpop.f32.mrb[0].mxu0
        %3276 = vmatprep.mubr.bf16.mxu0 0
        %3277 = vmatmul.mubr.bf16.gmra.mrb[0].mxu0 %v3206
        %v3278 = vpop.f32.mrb[0].mxu0
        %v3279 = vadd.f32 0.0, %v3278
        %v3280 = vpop.f32.mrb[0].mxu0
        %v3281 = vpop.f32.mrb[0].mxu0
        %v3282 = vadd.f32 0.0, %v3281
        %v3283 = vpop.f32.mrb[0].mxu0
        %3284 = vmatprep.mubr.bf16.mxu0 0
        %3285 = vmatmul.mubr.bf16.gmra.mrb[0].mxu0 %v3209
        %v3286 = vpop.f32.mrb[0].mxu0
        %v3287 = vadd.f32 0.0, %v3286
        %v3288 = vpop.f32.mrb[0].mxu0
        %v3289 = vpop.f32.mrb[0].mxu0
        %v3290 = vadd.f32 0.0, %v3289
        %v3291 = vpop.f32.mrb[0].mxu0
        %3292 = vmatprep.mubr.bf16.mxu0 0
        %3293 = vmatmul.mubr.bf16.gmra.mrb[0].mxu0 %v3212
        %v3294 = vpop.f32.mrb[0].mxu0
        %v3295 = vadd.f32 0.0, %v3294
        %v3296 = vpop.f32.mrb[0].mxu0
        %v3297 = vpop.f32.mrb[0].mxu0
        %v3298 = vadd.f32 0.0, %v3297
        %v3299 = vpop.f32.mrb[0].mxu0
        %3300 = vmatprep.mubr.bf16.mxu0 0
        %3301 = vmatmul.mubr.bf16.gmra.mrb[0].mxu0 %v3215
        %v3302 = vpop.f32.mrb[0].mxu0
        %v3303 = vadd.f32 0.0, %v3302
        %v3304 = vpop.f32.mrb[0].mxu0
        %v3305 = vpop.f32.mrb[0].mxu0
        %v3306 = vadd.f32 0.0, %v3305
        %v3307 = vpop.f32.mrb[0].mxu0
        %3308 = vmatprep.mubr.bf16.mxu0 0
        %3309 = vmatmul.mubr.bf16.gmra.mrb[0].mxu0 %v3218
        %v3310 = vpop.f32.mrb[0].mxu0
        %v3311 = vadd.f32 0.0, %v3310
        %v3312 = vpop.f32.mrb[0].mxu0
        %v3313 = vpop.f32.mrb[0].mxu0
        %v3314 = vadd.f32 0.0, %v3313
        %v3315 = vpop.f32.mrb[0].mxu0
        %3316 = vdwg.mxu0
        %v3321 = vunpack.c.l.b16 %v3043
        %v3322 = vunpack.c.l.b16 %v3044
        %v3323 = vunpack.c.l.b16 %v3045
        %v3324 = vunpack.c.l.b16 %v3046
        %v3325 = vpack.c.b16 %v3322, %v3321
        %v3326 = vpack.c.b16 %v3324, %v3323
        %v3330 = vsel %vm1234, %v3019, 0
        %v3333 = vsel %vm1234, %v3020, 0
        %v3336 = vsel %vm1234, %v3021, 0
        %v3339 = vsel %vm1234, %v3022, 0
        %v3342 = vsel %vm1234, %v3023, 0
        %v3345 = vsel %vm1234, %v3024, 0
        %v3348 = vsel %vm1234, %v3025, 0
        %v3351 = vsel %vm1234, %v3026, 0
        %3353 = vmatprep.subr.bf16.mxu0 0
        %3354 = vmatpush1.bf16.msra.mxu0 %v3325
        %3355 = vmatprep.subr.bf16.mxu0 0
        %3356 = vmatpush1.bf16.msra.mxu0 %v3326
        %3357 = vmatprep.subr.bf16.mxu0 0
        %3358 = vmatpush1.bf16.msra.mxu0 0
        %3359 = vmatprep.subr.bf16.mxu0 0
        %3360 = vmatpush1.bf16.msra.mxu0 0
        %3361 = vmatprep.subr.bf16.mxu0 0
        %3362 = vmatpush1.bf16.msra.mxu0 0
        %3363 = vmatprep.subr.bf16.mxu0 0
        %3364 = vmatpush1.bf16.msra.mxu0 0
        %3365 = vmatprep.subr.bf16.mxu0 0
        %3366 = vmatpush1.bf16.msra.mxu0 0
        %3367 = vmatprep.subr.bf16.mxu0 0
        %3368 = vmatpush1.bf16.msra.mxu0 0
        %3369 = vmatprep.subr.bf16.mxu0 0
        %3370 = vmatpush1.bf16.msra.mxu0 0
        %3371 = vmatprep.subr.bf16.mxu0 0
        %3372 = vmatpush1.bf16.msra.mxu0 0
        %3373 = vmatprep.subr.bf16.mxu0 0
        %3374 = vmatpush1.bf16.msra.mxu0 0
        %3375 = vmatprep.subr.bf16.mxu0 0
        %3376 = vmatpush1.bf16.msra.mxu0 0
        %3377 = vmatprep.subr.bf16.mxu0 0
        %3378 = vmatpush1.bf16.msra.mxu0 0
        %3379 = vmatprep.subr.bf16.mxu0 0
        %3380 = vmatpush1.bf16.msra.mxu0 0
        %3381 = vmatprep.subr.bf16.mxu0 0
        %3382 = vmatpush1.bf16.msra.mxu0 0
        %3383 = vmatprep.subr.bf16.mxu0 0
        %3384 = vmatpush1.bf16.msra.mxu0 0
        %3385 = vmatprep.mubr.bf16.mxu0 0
        %3386 = vmatmul.mubr.bf16.gmra.mrb[0].mxu0 %v3330
        %v3387 = vpop.f32.mrb[0].mxu0
        %v3388 = vadd.f32 0.0, %v3387
        %v3389 = vpop.f32.mrb[0].mxu0
        %v3390 = vpop.f32.mrb[0].mxu0
        %v3391 = vadd.f32 0.0, %v3390
        %v3392 = vpop.f32.mrb[0].mxu0
        %3393 = vmatprep.mubr.bf16.mxu0 0
        %3394 = vmatmul.mubr.bf16.gmra.mrb[0].mxu0 %v3333
        %v3395 = vpop.f32.mrb[0].mxu0
        %v3396 = vadd.f32 0.0, %v3395
        %v3397 = vpop.f32.mrb[0].mxu0
        %v3398 = vpop.f32.mrb[0].mxu0
        %v3399 = vadd.f32 0.0, %v3398
        %v3400 = vpop.f32.mrb[0].mxu0
        %3401 = vmatprep.mubr.bf16.mxu0 0
        %3402 = vmatmul.mubr.bf16.gmra.mrb[0].mxu0 %v3336
        %v3403 = vpop.f32.mrb[0].mxu0
        %v3404 = vadd.f32 0.0, %v3403
        %v3405 = vpop.f32.mrb[0].mxu0
        %v3406 = vpop.f32.mrb[0].mxu0
        %v3407 = vadd.f32 0.0, %v3406
        %v3408 = vpop.f32.mrb[0].mxu0
        %3409 = vmatprep.mubr.bf16.mxu0 0
        %3410 = vmatmul.mubr.bf16.gmra.mrb[0].mxu0 %v3339
        %v3411 = vpop.f32.mrb[0].mxu0
        %v3412 = vadd.f32 0.0, %v3411
        %v3413 = vpop.f32.mrb[0].mxu0
        %v3414 = vpop.f32.mrb[0].mxu0
        %v3415 = vadd.f32 0.0, %v3414
        %v3416 = vpop.f32.mrb[0].mxu0
        %3417 = vmatprep.mubr.bf16.mxu0 0
        %3418 = vmatmul.mubr.bf16.gmra.mrb[0].mxu0 %v3342
        %v3419 = vpop.f32.mrb[0].mxu0
        %v3420 = vadd.f32 0.0, %v3419
        %v3421 = vpop.f32.mrb[0].mxu0
        %v3422 = vpop.f32.mrb[0].mxu0
        %v3423 = vadd.f32 0.0, %v3422
        %v3424 = vpop.f32.mrb[0].mxu0
        %3425 = vmatprep.mubr.bf16.mxu0 0
        %3426 = vmatmul.mubr.bf16.gmra.mrb[0].mxu0 %v3345
        %v3427 = vpop.f32.mrb[0].mxu0
        %v3428 = vadd.f32 0.0, %v3427
        %v3429 = vpop.f32.mrb[0].mxu0
        %v3430 = vpop.f32.mrb[0].mxu0
        %v3431 = vadd.f32 0.0, %v3430
        %v3432 = vpop.f32.mrb[0].mxu0
        %3433 = vmatprep.mubr.bf16.mxu0 0
        %3434 = vmatmul.mubr.bf16.gmra.mrb[0].mxu0 %v3348
        %v3435 = vpop.f32.mrb[0].mxu0
        %v3436 = vadd.f32 0.0, %v3435
        %v3437 = vpop.f32.mrb[0].mxu0
        %v3438 = vpop.f32.mrb[0].mxu0
        %v3439 = vadd.f32 0.0, %v3438
        %v3440 = vpop.f32.mrb[0].mxu0
        %3441 = vmatprep.mubr.bf16.mxu0 0
        %3442 = vmatmul.mubr.bf16.gmra.mrb[0].mxu0 %v3351
        %v3443 = vpop.f32.mrb[0].mxu0
        %v3444 = vadd.f32 0.0, %v3443
        %v3445 = vpop.f32.mrb[0].mxu0
        %v3446 = vpop.f32.mrb[0].mxu0
        %v3447 = vadd.f32 0.0, %v3446
        %v3448 = vpop.f32.mrb[0].mxu0
        %3449 = vdwg.mxu0
        %v3454 = vunpack.c.l.b16 %v3047
        %v3455 = vunpack.c.l.b16 %v3048
        %v3456 = vunpack.c.l.b16 %v3049
        %v3457 = vunpack.c.l.b16 %v3050
        %v3458 = vpack.c.b16 %v3455, %v3454
        %v3459 = vpack.c.b16 %v3457, %v3456
        %v3463 = vsel %vm1234, %v3027, 0
        %v3466 = vsel %vm1234, %v3028, 0
        %v3469 = vsel %vm1234, %v3029, 0
        %v3472 = vsel %vm1234, %v3030, 0
        %v3475 = vsel %vm1234, %v3031, 0
        %v3478 = vsel %vm1234, %v3032, 0
        %v3481 = vsel %vm1234, %v3033, 0
        %v3484 = vsel %vm1234, %v3034, 0
        %3486 = vmatprep.subr.bf16.mxu0 0
        %3487 = vmatpush1.bf16.msra.mxu0 %v3458
        %3488 = vmatprep.subr.bf16.mxu0 0
        %3489 = vmatpush1.bf16.msra.mxu0 %v3459
        %3490 = vmatprep.subr.bf16.mxu0 0
        %3491 = vmatpush1.bf16.msra.mxu0 0
        %3492 = vmatprep.subr.bf16.mxu0 0
        %3493 = vmatpush1.bf16.msra.mxu0 0
        %3494 = vmatprep.subr.bf16.mxu0 0
        %3495 = vmatpush1.bf16.msra.mxu0 0
        %3496 = vmatprep.subr.bf16.mxu0 0
        %3497 = vmatpush1.bf16.msra.mxu0 0
        %3498 = vmatprep.subr.bf16.mxu0 0
        %3499 = vmatpush1.bf16.msra.mxu0 0
        %3500 = vmatprep.subr.bf16.mxu0 0
        %3501 = vmatpush1.bf16.msra.mxu0 0
        %3502 = vmatprep.subr.bf16.mxu0 0
        %3503 = vmatpush1.bf16.msra.mxu0 0
        %3504 = vmatprep.subr.bf16.mxu0 0
        %3505 = vmatpush1.bf16.msra.mxu0 0
        %3506 = vmatprep.subr.bf16.mxu0 0
        %3507 = vmatpush1.bf16.msra.mxu0 0
        %3508 = vmatprep.subr.bf16.mxu0 0
        %3509 = vmatpush1.bf16.msra.mxu0 0
        %3510 = vmatprep.subr.bf16.mxu0 0
        %3511 = vmatpush1.bf16.msra.mxu0 0
        %3512 = vmatprep.subr.bf16.mxu0 0
        %3513 = vmatpush1.bf16.msra.mxu0 0
        %3514 = vmatprep.subr.bf16.mxu0 0
        %3515 = vmatpush1.bf16.msra.mxu0 0
        %3516 = vmatprep.subr.bf16.mxu0 0
        %3517 = vmatpush1.bf16.msra.mxu0 0
        %3518 = vmatprep.mubr.bf16.mxu0 0
        %3519 = vmatmul.mubr.bf16.gmra.mrb[0].mxu0 %v3463
        %v3520 = vpop.f32.mrb[0].mxu0
        %v3521 = vadd.f32 0.0, %v3520
        %v3522 = vpop.f32.mrb[0].mxu0
        %v3523 = vpop.f32.mrb[0].mxu0
        %v3524 = vadd.f32 0.0, %v3523
        %v3525 = vpop.f32.mrb[0].mxu0
        %3526 = vmatprep.mubr.bf16.mxu0 0
        %3527 = vmatmul.mubr.bf16.gmra.mrb[0].mxu0 %v3466
        %v3528 = vpop.f32.mrb[0].mxu0
        %v3529 = vadd.f32 0.0, %v3528
        %v3530 = vpop.f32.mrb[0].mxu0
        %v3531 = vpop.f32.mrb[0].mxu0
        %v3532 = vadd.f32 0.0, %v3531
        %v3533 = vpop.f32.mrb[0].mxu0
        %3534 = vmatprep.mubr.bf16.mxu0 0
        %3535 = vmatmul.mubr.bf16.gmra.mrb[0].mxu0 %v3469
        %v3536 = vpop.f32.mrb[0].mxu0
        %v3537 = vadd.f32 0.0, %v3536
        %v3538 = vpop.f32.mrb[0].mxu0
        %v3539 = vpop.f32.mrb[0].mxu0
        %v3540 = vadd.f32 0.0, %v3539
        %v3541 = vpop.f32.mrb[0].mxu0
        %3542 = vmatprep.mubr.bf16.mxu0 0
        %3543 = vmatmul.mubr.bf16.gmra.mrb[0].mxu0 %v3472
        %v3544 = vpop.f32.mrb[0].mxu0
        %v3545 = vadd.f32 0.0, %v3544
        %v3546 = vpop.f32.mrb[0].mxu0
        %v3547 = vpop.f32.mrb[0].mxu0
        %v3548 = vadd.f32 0.0, %v3547
        %v3549 = vpop.f32.mrb[0].mxu0
        %3550 = vmatprep.mubr.bf16.mxu0 0
        %3551 = vmatmul.mubr.bf16.gmra.mrb[0].mxu0 %v3475
        %v3552 = vpop.f32.mrb[0].mxu0
        %v3553 = vadd.f32 0.0, %v3552
        %v3554 = vpop.f32.mrb[0].mxu0
        %v3555 = vpop.f32.mrb[0].mxu0
        %v3556 = vadd.f32 0.0, %v3555
        %v3557 = vpop.f32.mrb[0].mxu0
        %3558 = vmatprep.mubr.bf16.mxu0 0
        %3559 = vmatmul.mubr.bf16.gmra.mrb[0].mxu0 %v3478
        %v3560 = vpop.f32.mrb[0].mxu0
        %v3561 = vadd.f32 0.0, %v3560
        %v3562 = vpop.f32.mrb[0].mxu0
        %v3563 = vpop.f32.mrb[0].mxu0
        %v3564 = vadd.f32 0.0, %v3563
        %v3565 = vpop.f32.mrb[0].mxu0
        %3566 = vmatprep.mubr.bf16.mxu0 0
        %3567 = vmatmul.mubr.bf16.gmra.mrb[0].mxu0 %v3481
        %v3568 = vpop.f32.mrb[0].mxu0
        %v3569 = vadd.f32 0.0, %v3568
        %v3570 = vpop.f32.mrb[0].mxu0
        %v3571 = vpop.f32.mrb[0].mxu0
        %v3572 = vadd.f32 0.0, %v3571
        %v3573 = vpop.f32.mrb[0].mxu0
        %3574 = vmatprep.mubr.bf16.mxu0 0
        %3575 = vmatmul.mubr.bf16.gmra.mrb[0].mxu0 %v3484
        %v3576 = vpop.f32.mrb[0].mxu0
        %v3577 = vadd.f32 0.0, %v3576
        %v3578 = vpop.f32.mrb[0].mxu0
        %v3579 = vpop.f32.mrb[0].mxu0
        %v3580 = vadd.f32 0.0, %v3579
        %v3581 = vpop.f32.mrb[0].mxu0
        %3582 = vdwg.mxu0
        %v3583 = vadd.f32 %v3122, %v3255
        %v3584 = vadd.f32 %v3583, %v3388
        %v3585 = vadd.f32 %v3584, %v3521
        %v3586 = vadd.f32 %v3125, %v3258
        %v3587 = vadd.f32 %v3586, %v3391
        %v3588 = vadd.f32 %v3587, %v3524
        %v3589 = vadd.f32 %v3130, %v3263
        %v3590 = vadd.f32 %v3589, %v3396
        %v3591 = vadd.f32 %v3590, %v3529
        %v3592 = vadd.f32 %v3133, %v3266
        %v3593 = vadd.f32 %v3592, %v3399
        %v3594 = vadd.f32 %v3593, %v3532
        %v3595 = vadd.f32 %v3138, %v3271
        %v3596 = vadd.f32 %v3595, %v3404
        %v3597 = vadd.f32 %v3596, %v3537
        %v3598 = vadd.f32 %v3141, %v3274
        %v3599 = vadd.f32 %v3598, %v3407
        %v3600 = vadd.f32 %v3599, %v3540
        %v3601 = vadd.f32 %v3146, %v3279
        %v3602 = vadd.f32 %v3601, %v3412
        %v3603 = vadd.f32 %v3602, %v3545
        %v3604 = vadd.f32 %v3149, %v3282
        %v3605 = vadd.f32 %v3604, %v3415
        %v3606 = vadd.f32 %v3605, %v3548
        %v3607 = vadd.f32 %v3154, %v3287
        %v3608 = vadd.f32 %v3607, %v3420
        %v3609 = vadd.f32 %v3608, %v3553
        %v3610 = vadd.f32 %v3157, %v3290
        %v3611 = vadd.f32 %v3610, %v3423
        %v3612 = vadd.f32 %v3611, %v3556
        %v3613 = vadd.f32 %v3162, %v3295
        %v3614 = vadd.f32 %v3613, %v3428
        %v3615 = vadd.f32 %v3614, %v3561
        %v3616 = vadd.f32 %v3165, %v3298
        %v3617 = vadd.f32 %v3616, %v3431
        %v3618 = vadd.f32 %v3617, %v3564
        %v3619 = vadd.f32 %v3170, %v3303
        %v3620 = vadd.f32 %v3619, %v3436
        %v3621 = vadd.f32 %v3620, %v3569
        %v3622 = vadd.f32 %v3173, %v3306
        %v3623 = vadd.f32 %v3622, %v3439
        %v3624 = vadd.f32 %v3623, %v3572
        %v3625 = vadd.f32 %v3178, %v3311
        %v3626 = vadd.f32 %v3625, %v3444
        %v3627 = vadd.f32 %v3626, %v3577
        %v3628 = vadd.f32 %v3181, %v3314
        %v3629 = vadd.f32 %v3628, %v3447
        %v3630 = vadd.f32 %v3629, %v3580
        %v3631 = vld [vmem:[%s4] sm:$0x1]
        %v3633 = vlaneseq
        %v3634 = vshrl.u32 %v3633, 7
        %v3635 = vsub.s32 0, %v3634
        %v3636 = vrot.slane %v3631, %v3635
        %v3638 = vadd.f32 %v3585, %v3636
        %v3639 = vadd.f32 %v3588, %v3636
        %v3640 = vadd.f32 %v3591, %v3636
        %v3641 = vadd.f32 %v3594, %v3636
        %v3642 = vadd.f32 %v3597, %v3636
        %v3643 = vadd.f32 %v3600, %v3636
        %v3644 = vadd.f32 %v3603, %v3636
        %v3645 = vadd.f32 %v3606, %v3636
        %v3646 = vadd.f32 %v3609, %v3636
        %v3647 = vadd.f32 %v3612, %v3636
        %v3648 = vadd.f32 %v3615, %v3636
        %v3649 = vadd.f32 %v3618, %v3636
        %v3650 = vadd.f32 %v3621, %v3636
        %v3651 = vadd.f32 %v3624, %v3636
        %v3652 = vadd.f32 %v3627, %v3636
        %v3653 = vadd.f32 %v3630, %v3636
        %v3654 = vadd.f32 %v556, %v3638
        %v3655 = vadd.f32 %v557, %v3639
        %v3656 = vadd.f32 %v558, %v3640
        %v3657 = vadd.f32 %v559, %v3641
        %v3658 = vadd.f32 %v560, %v3642
        %v3659 = vadd.f32 %v561, %v3643
        %v3660 = vadd.f32 %v562, %v3644
        %v3661 = vadd.f32 %v563, %v3645
        %v3662 = vadd.f32 %v564, %v3646
        %v3663 = vadd.f32 %v565, %v3647
        %v3664 = vadd.f32 %v566, %v3648
        %v3665 = vadd.f32 %v567, %v3649
        %v3666 = vadd.f32 %v568, %v3650
        %v3667 = vadd.f32 %v569, %v3651
        %v3668 = vadd.f32 %v570, %v3652
        %v3669 = vadd.f32 %v571, %v3653
        %3670 = vadd.xlane.f32.xlu0 %v3654
        %v3671 = vpop.xlane.xlu0 %3670
        %3672 = vadd.xlane.f32.xlu0 %v3655
        %v3673 = vpop.xlane.xlu0 %3672
        %3674 = vadd.xlane.f32.xlu0 %v3656
        %v3675 = vpop.xlane.xlu0 %3674
        %3676 = vadd.xlane.f32.xlu0 %v3657
        %v3677 = vpop.xlane.xlu0 %3676
        %3678 = vadd.xlane.f32.xlu0 %v3658
        %v3679 = vpop.xlane.xlu0 %3678
        %3680 = vadd.xlane.f32.xlu0 %v3659
        %v3681 = vpop.xlane.xlu0 %3680
        %3682 = vadd.xlane.f32.xlu0 %v3660
        %v3683 = vpop.xlane.xlu0 %3682
        %3684 = vadd.xlane.f32.xlu0 %v3661
        %v3685 = vpop.xlane.xlu0 %3684
        %3686 = vadd.xlane.f32.xlu0 %v3662
        %v3687 = vpop.xlane.xlu0 %3686
        %3688 = vadd.xlane.f32.xlu0 %v3663
        %v3689 = vpop.xlane.xlu0 %3688
        %3690 = vadd.xlane.f32.xlu0 %v3664
        %v3691 = vpop.xlane.xlu0 %3690
        %3692 = vadd.xlane.f32.xlu0 %v3665
        %v3693 = vpop.xlane.xlu0 %3692
        %3694 = vadd.xlane.f32.xlu0 %v3666
        %v3695 = vpop.xlane.xlu0 %3694
        %3696 = vadd.xlane.f32.xlu0 %v3667
        %v3697 = vpop.xlane.xlu0 %3696
        %3698 = vadd.xlane.f32.xlu0 %v3668
        %v3699 = vpop.xlane.xlu0 %3698
        %3700 = vadd.xlane.f32.xlu0 %v3669
        %v3701 = vpop.xlane.xlu0 %3700
        %v3702 = vrcp.pop 128.0
        %v3703 = vmul.f32 %v3671, %v3702
        %v3704 = vmul.f32 %v3673, %v3702
        %v3705 = vmul.f32 %v3675, %v3702
        %v3706 = vmul.f32 %v3677, %v3702
        %v3707 = vmul.f32 %v3679, %v3702
        %v3708 = vmul.f32 %v3681, %v3702
        %v3709 = vmul.f32 %v3683, %v3702
        %v3710 = vmul.f32 %v3685, %v3702
        %v3711 = vmul.f32 %v3687, %v3702
        %v3712 = vmul.f32 %v3689, %v3702
        %v3713 = vmul.f32 %v3691, %v3702
        %v3714 = vmul.f32 %v3693, %v3702
        %v3715 = vmul.f32 %v3695, %v3702
        %v3716 = vmul.f32 %v3697, %v3702
        %v3717 = vmul.f32 %v3699, %v3702
        %v3718 = vmul.f32 %v3701, %v3702
        %v3719 = vsub.f32 %v3654, %v3703
        %v3720 = vsub.f32 %v3655, %v3704
        %v3721 = vsub.f32 %v3656, %v3705
        %v3722 = vsub.f32 %v3657, %v3706
        %v3723 = vsub.f32 %v3658, %v3707
        %v3724 = vsub.f32 %v3659, %v3708
        %v3725 = vsub.f32 %v3660, %v3709
        %v3726 = vsub.f32 %v3661, %v3710
        %v3727 = vsub.f32 %v3662, %v3711
        %v3728 = vsub.f32 %v3663, %v3712
        %v3729 = vsub.f32 %v3664, %v3713
        %v3730 = vsub.f32 %v3665, %v3714
        %v3731 = vsub.f32 %v3666, %v3715
        %v3732 = vsub.f32 %v3667, %v3716
        %v3733 = vsub.f32 %v3668, %v3717
        %v3734 = vsub.f32 %v3669, %v3718
        %v3735 = vmul.f32 %v3719, %v3719
        %v3736 = vmul.f32 %v3720, %v3720
        %v3737 = vmul.f32 %v3721, %v3721
        %v3738 = vmul.f32 %v3722, %v3722
        %v3739 = vmul.f32 %v3723, %v3723
        %v3740 = vmul.f32 %v3724, %v3724
        %v3741 = vmul.f32 %v3725, %v3725
        %v3742 = vmul.f32 %v3726, %v3726
        %v3743 = vmul.f32 %v3727, %v3727
        %v3744 = vmul.f32 %v3728, %v3728
        %v3745 = vmul.f32 %v3729, %v3729
        %v3746 = vmul.f32 %v3730, %v3730
        %v3747 = vmul.f32 %v3731, %v3731
        %v3748 = vmul.f32 %v3732, %v3732
        %v3749 = vmul.f32 %v3733, %v3733
        %v3750 = vmul.f32 %v3734, %v3734
        %3751 = vadd.xlane.f32.xlu0 %v3735
        %v3752 = vpop.xlane.xlu0 %3751
        %3753 = vadd.xlane.f32.xlu0 %v3736
        %v3754 = vpop.xlane.xlu0 %3753
        %3755 = vadd.xlane.f32.xlu0 %v3737
        %v3756 = vpop.xlane.xlu0 %3755
        %3757 = vadd.xlane.f32.xlu0 %v3738
        %v3758 = vpop.xlane.xlu0 %3757
        %3759 = vadd.xlane.f32.xlu0 %v3739
        %v3760 = vpop.xlane.xlu0 %3759
        %3761 = vadd.xlane.f32.xlu0 %v3740
        %v3762 = vpop.xlane.xlu0 %3761
        %3763 = vadd.xlane.f32.xlu0 %v3741
        %v3764 = vpop.xlane.xlu0 %3763
        %3765 = vadd.xlane.f32.xlu0 %v3742
        %v3766 = vpop.xlane.xlu0 %3765
        %3767 = vadd.xlane.f32.xlu0 %v3743
        %v3768 = vpop.xlane.xlu0 %3767
        %3769 = vadd.xlane.f32.xlu0 %v3744
        %v3770 = vpop.xlane.xlu0 %3769
        %3771 = vadd.xlane.f32.xlu0 %v3745
        %v3772 = vpop.xlane.xlu0 %3771
        %3773 = vadd.xlane.f32.xlu0 %v3746
        %v3774 = vpop.xlane.xlu0 %3773
        %3775 = vadd.xlane.f32.xlu0 %v3747
        %v3776 = vpop.xlane.xlu0 %3775
        %3777 = vadd.xlane.f32.xlu0 %v3748
        %v3778 = vpop.xlane.xlu0 %3777
        %3779 = vadd.xlane.f32.xlu0 %v3749
        %v3780 = vpop.xlane.xlu0 %3779
        %3781 = vadd.xlane.f32.xlu0 %v3750
        %v3782 = vpop.xlane.xlu0 %3781
        %v3783 = vmul.f32 %v3752, %v3702
        %v3784 = vmul.f32 %v3754, %v3702
        %v3785 = vmul.f32 %v3756, %v3702
        %v3786 = vmul.f32 %v3758, %v3702
        %v3787 = vmul.f32 %v3760, %v3702
        %v3788 = vmul.f32 %v3762, %v3702
        %v3789 = vmul.f32 %v3764, %v3702
        %v3790 = vmul.f32 %v3766, %v3702
        %v3791 = vmul.f32 %v3768, %v3702
        %v3792 = vmul.f32 %v3770, %v3702
        %v3793 = vmul.f32 %v3772, %v3702
        %v3794 = vmul.f32 %v3774, %v3702
        %v3795 = vmul.f32 %v3776, %v3702
        %v3796 = vmul.f32 %v3778, %v3702
        %v3797 = vmul.f32 %v3780, %v3702
        %v3798 = vmul.f32 %v3782, %v3702
        %v3799 = vadd.f32 %v3783, 1e-05
        %v3800 = vadd.f32 %v3784, 1e-05
        %v3801 = vadd.f32 %v3785, 1e-05
        %v3802 = vadd.f32 %v3786, 1e-05
        %v3803 = vadd.f32 %v3787, 1e-05
        %v3804 = vadd.f32 %v3788, 1e-05
        %v3805 = vadd.f32 %v3789, 1e-05
        %v3806 = vadd.f32 %v3790, 1e-05
        %v3807 = vadd.f32 %v3791, 1e-05
        %v3808 = vadd.f32 %v3792, 1e-05
        %v3809 = vadd.f32 %v3793, 1e-05
        %v3810 = vadd.f32 %v3794, 1e-05
        %v3811 = vadd.f32 %v3795, 1e-05
        %v3812 = vadd.f32 %v3796, 1e-05
        %v3813 = vadd.f32 %v3797, 1e-05
        %v3814 = vadd.f32 %v3798, 1e-05
        %v3815 = vrsqrt.pop %v3799
        %v3816 = vrsqrt.pop %v3800
        %v3817 = vrsqrt.pop %v3801
        %v3818 = vrsqrt.pop %v3802
        %v3819 = vrsqrt.pop %v3803
        %v3820 = vrsqrt.pop %v3804
        %v3821 = vrsqrt.pop %v3805
        %v3822 = vrsqrt.pop %v3806
        %v3823 = vrsqrt.pop %v3807
        %v3824 = vrsqrt.pop %v3808
        %v3825 = vrsqrt.pop %v3809
        %v3826 = vrsqrt.pop %v3810
        %v3827 = vrsqrt.pop %v3811
        %v3828 = vrsqrt.pop %v3812
        %v3829 = vrsqrt.pop %v3813
        %v3830 = vrsqrt.pop %v3814
        %v3831 = vmul.f32 %v3719, %v3815
        %v3832 = vmul.f32 %v3720, %v3816
        %v3833 = vmul.f32 %v3721, %v3817
        %v3834 = vmul.f32 %v3722, %v3818
        %v3835 = vmul.f32 %v3723, %v3819
        %v3836 = vmul.f32 %v3724, %v3820
        %v3837 = vmul.f32 %v3725, %v3821
        %v3838 = vmul.f32 %v3726, %v3822
        %v3839 = vmul.f32 %v3727, %v3823
        %v3840 = vmul.f32 %v3728, %v3824
        %v3841 = vmul.f32 %v3729, %v3825
        %v3842 = vmul.f32 %v3730, %v3826
        %v3843 = vmul.f32 %v3731, %v3827
        %v3844 = vmul.f32 %v3732, %v3828
        %v3845 = vmul.f32 %v3733, %v3829
        %v3846 = vmul.f32 %v3734, %v3830
        %v3847 = vld [vmem:[%s5] sm:$0x1]
        %v3849 = vlaneseq
        %v3850 = vshrl.u32 %v3849, 7
        %v3851 = vsub.s32 0, %v3850
        %v3852 = vrot.slane %v3847, %v3851
        %v3854 = vmul.f32 %v3831, %v3852
        %v3855 = vmul.f32 %v3832, %v3852
        %v3856 = vmul.f32 %v3833, %v3852
        %v3857 = vmul.f32 %v3834, %v3852
        %v3858 = vmul.f32 %v3835, %v3852
        %v3859 = vmul.f32 %v3836, %v3852
        %v3860 = vmul.f32 %v3837, %v3852
        %v3861 = vmul.f32 %v3838, %v3852
        %v3862 = vmul.f32 %v3839, %v3852
        %v3863 = vmul.f32 %v3840, %v3852
        %v3864 = vmul.f32 %v3841, %v3852
        %v3865 = vmul.f32 %v3842, %v3852
        %v3866 = vmul.f32 %v3843, %v3852
        %v3867 = vmul.f32 %v3844, %v3852
        %v3868 = vmul.f32 %v3845, %v3852
        %v3869 = vmul.f32 %v3846, %v3852
        %v3870 = vld [vmem:[%s6] sm:$0x1]
        %v3872 = vlaneseq
        %v3873 = vshrl.u32 %v3872, 7
        %v3874 = vsub.s32 0, %v3873
        %v3875 = vrot.slane %v3870, %v3874
        %v3877 = vadd.f32 %v3854, %v3875
        %v3878 = vadd.f32 %v3855, %v3875
        %v3879 = vadd.f32 %v3856, %v3875
        %v3880 = vadd.f32 %v3857, %v3875
        %v3881 = vadd.f32 %v3858, %v3875
        %v3882 = vadd.f32 %v3859, %v3875
        %v3883 = vadd.f32 %v3860, %v3875
        %v3884 = vadd.f32 %v3861, %v3875
        %v3885 = vadd.f32 %v3862, %v3875
        %v3886 = vadd.f32 %v3863, %v3875
        %v3887 = vadd.f32 %v3864, %v3875
        %v3888 = vadd.f32 %v3865, %v3875
        %v3889 = vadd.f32 %v3866, %v3875
        %v3890 = vadd.f32 %v3867, %v3875
        %v3891 = vadd.f32 %v3868, %v3875
        %v3892 = vadd.f32 %v3869, %v3875
        %v3893 = vpack.c.bf16 %v3878, %v3877
        %v3894 = vpack.c.bf16 %v3880, %v3879
        %v3895 = vpack.c.bf16 %v3882, %v3881
        %v3896 = vpack.c.bf16 %v3884, %v3883
        %v3897 = vpack.c.bf16 %v3886, %v3885
        %v3898 = vpack.c.bf16 %v3888, %v3887
        %v3899 = vpack.c.bf16 %v3890, %v3889
        %v3900 = vpack.c.bf16 %v3892, %v3891
        %v3901 = vld [vmem:[#allocation8] sm:$0xff]
        %v3902 = vld [vmem:[#allocation8 + $0x8] sm:$0xff]
        %v3903 = vld [vmem:[#allocation8 + $0x10] sm:$0xff]
        %v3904 = vld [vmem:[#allocation8 + $0x18] sm:$0xff]
        %v3905 = vld [vmem:[#allocation8 + $0x20] sm:$0xff]
        %v3906 = vld [vmem:[#allocation8 + $0x28] sm:$0xff]
        %v3907 = vld [vmem:[#allocation8 + $0x30] sm:$0xff]
        %v3908 = vld [vmem:[#allocation8 + $0x38] sm:$0xff]
        %v3909 = vld [vmem:[#allocation8 + $0x40] sm:$0xff]
        %v3910 = vld [vmem:[#allocation8 + $0x48] sm:$0xff]
        %v3911 = vld [vmem:[#allocation8 + $0x50] sm:$0xff]
        %v3912 = vld [vmem:[#allocation8 + $0x58] sm:$0xff]
        %v3913 = vld [vmem:[#allocation8 + $0x60] sm:$0xff]
        %v3914 = vld [vmem:[#allocation8 + $0x68] sm:$0xff]
        %v3915 = vld [vmem:[#allocation8 + $0x70] sm:$0xff]
        %v3916 = vld [vmem:[#allocation8 + $0x78] sm:$0xff]
        %v3917 = vld [vmem:[%s8] sm:$0x3]
        %v3919 = vlaneseq
        %v3920 = vshrl.u32 %v3919, 7
        %v3921 = vsub.s32 0, %v3920
        %v3922 = vrot.slane %v3917, %v3921
        %v3923 = vlaneseq
        %v3924 = vshrl.u32 %v3923, 7
        %v3925 = vsub.s32 1, %v3924
        %v3926 = vrot.slane %v3917, %v3925
        %v3945 = vunpack.c.l.b16 %v3901
        %v3946 = vunpack.c.h.b16 %v3901
        %v3947 = vunpack.c.l.b16 %v3902
        %v3948 = vunpack.c.h.b16 %v3902
        %v3949 = vunpack.c.l.b16 %v3903
        %v3950 = vunpack.c.h.b16 %v3903
        %v3951 = vunpack.c.l.b16 %v3904
        %v3952 = vunpack.c.h.b16 %v3904
        %v3953 = vunpack.c.l.b16 %v3905
        %v3954 = vunpack.c.h.b16 %v3905
        %v3955 = vunpack.c.l.b16 %v3906
        %v3956 = vunpack.c.h.b16 %v3906
        %v3957 = vunpack.c.l.b16 %v3907
        %v3958 = vunpack.c.h.b16 %v3907
        %v3959 = vunpack.c.l.b16 %v3908
        %v3960 = vunpack.c.h.b16 %v3908
        %v3961 = vunpack.c.l.b16 %v3909
        %v3962 = vunpack.c.h.b16 %v3909
        %v3963 = vunpack.c.l.b16 %v3910
        %v3964 = vunpack.c.h.b16 %v3910
        %v3965 = vunpack.c.l.b16 %v3911
        %v3966 = vunpack.c.h.b16 %v3911
        %v3967 = vunpack.c.l.b16 %v3912
        %v3968 = vunpack.c.h.b16 %v3912
        %v3969 = vunpack.c.l.b16 %v3913
        %v3970 = vunpack.c.h.b16 %v3913
        %v3971 = vunpack.c.l.b16 %v3914
        %v3972 = vunpack.c.h.b16 %v3914
        %v3973 = vunpack.c.l.b16 %v3915
        %v3974 = vunpack.c.h.b16 %v3915
        %v3975 = vunpack.c.l.b16 %v3916
        %v3976 = vunpack.c.h.b16 %v3916
        %v3977 = vpack.c.b16 %v3947, %v3945
        %v3978 = vpack.c.b16 %v3948, %v3946
        %v3979 = vpack.c.b16 %v3951, %v3949
        %v3980 = vpack.c.b16 %v3952, %v3950
        %v3981 = vpack.c.b16 %v3955, %v3953
        %v3982 = vpack.c.b16 %v3956, %v3954
        %v3983 = vpack.c.b16 %v3959, %v3957
        %v3984 = vpack.c.b16 %v3960, %v3958
        %v3985 = vpack.c.b16 %v3963, %v3961
        %v3986 = vpack.c.b16 %v3964, %v3962
        %v3987 = vpack.c.b16 %v3967, %v3965
        %v3988 = vpack.c.b16 %v3968, %v3966
        %v3989 = vpack.c.b16 %v3971, %v3969
        %v3990 = vpack.c.b16 %v3972, %v3970
        %v3991 = vpack.c.b16 %v3975, %v3973
        %v3992 = vpack.c.b16 %v3976, %v3974
        %4009 = vmatprep.subr.bf16.mxu0 %v3978
        %4010 = vmatpush1.bf16.msra.mxu0 %v3977
        %4011 = vmatprep.subr.bf16.mxu0 %v3980
        %4012 = vmatpush1.bf16.msra.mxu0 %v3979
        %4013 = vmatprep.subr.bf16.mxu0 %v3982
        %4014 = vmatpush1.bf16.msra.mxu0 %v3981
        %4015 = vmatprep.subr.bf16.mxu0 %v3984
        %4016 = vmatpush1.bf16.msra.mxu0 %v3983
        %4017 = vmatprep.subr.bf16.mxu0 %v3986
        %4018 = vmatpush1.bf16.msra.mxu0 %v3985
        %4019 = vmatprep.subr.bf16.mxu0 %v3988
        %4020 = vmatpush1.bf16.msra.mxu0 %v3987
        %4021 = vmatprep.subr.bf16.mxu0 %v3990
        %4022 = vmatpush1.bf16.msra.mxu0 %v3989
        %4023 = vmatprep.subr.bf16.mxu0 %v3992
        %4024 = vmatpush1.bf16.msra.mxu0 %v3991
        %4025 = vmatprep.subr.bf16.mxu0 0
        %4026 = vmatpush1.bf16.msra.mxu0 0
        %4027 = vmatprep.subr.bf16.mxu0 0
        %4028 = vmatpush1.bf16.msra.mxu0 0
        %4029 = vmatprep.subr.bf16.mxu0 0
        %4030 = vmatpush1.bf16.msra.mxu0 0
        %4031 = vmatprep.subr.bf16.mxu0 0
        %4032 = vmatpush1.bf16.msra.mxu0 0
        %4033 = vmatprep.subr.bf16.mxu0 0
        %4034 = vmatpush1.bf16.msra.mxu0 0
        %4035 = vmatprep.subr.bf16.mxu0 0
        %4036 = vmatpush1.bf16.msra.mxu0 0
        %4037 = vmatprep.subr.bf16.mxu0 0
        %4038 = vmatpush1.bf16.msra.mxu0 0
        %4039 = vmatprep.subr.bf16.mxu0 0
        %4040 = vmatpush1.bf16.msra.mxu0 0
        %4041 = vmatprep.mubr.bf16.mxu0 0
        %4042 = vmatmul.mubr.bf16.gmra.mrb[0].mxu0 %v3893
        %v4043 = vpop.f32.mrb[0].mxu0
        %v4044 = vadd.f32 %v3922, %v4043
        %v4045 = vpop.f32.mrb[0].mxu0
        %v4046 = vadd.f32 %v3926, %v4045
        %v4047 = vpop.f32.mrb[0].mxu0
        %v4048 = vadd.f32 %v3922, %v4047
        %v4049 = vpop.f32.mrb[0].mxu0
        %v4050 = vadd.f32 %v3926, %v4049
        %4051 = vmatprep.mubr.bf16.mxu0 0
        %4052 = vmatmul.mubr.bf16.gmra.mrb[0].mxu0 %v3894
        %v4053 = vpop.f32.mrb[0].mxu0
        %v4054 = vadd.f32 %v3922, %v4053
        %v4055 = vpop.f32.mrb[0].mxu0
        %v4056 = vadd.f32 %v3926, %v4055
        %v4057 = vpop.f32.mrb[0].mxu0
        %v4058 = vadd.f32 %v3922, %v4057
        %v4059 = vpop.f32.mrb[0].mxu0
        %v4060 = vadd.f32 %v3926, %v4059
        %4061 = vmatprep.mubr.bf16.mxu0 0
        %4062 = vmatmul.mubr.bf16.gmra.mrb[0].mxu0 %v3895
        %v4063 = vpop.f32.mrb[0].mxu0
        %v4064 = vadd.f32 %v3922, %v4063
        %v4065 = vpop.f32.mrb[0].mxu0
        %v4066 = vadd.f32 %v3926, %v4065
        %v4067 = vpop.f32.mrb[0].mxu0
        %v4068 = vadd.f32 %v3922, %v4067
        %v4069 = vpop.f32.mrb[0].mxu0
        %v4070 = vadd.f32 %v3926, %v4069
        %4071 = vmatprep.mubr.bf16.mxu0 0
        %4072 = vmatmul.mubr.bf16.gmra.mrb[0].mxu0 %v3896
        %v4073 = vpop.f32.mrb[0].mxu0
        %v4074 = vadd.f32 %v3922, %v4073
        %v4075 = vpop.f32.mrb[0].mxu0
        %v4076 = vadd.f32 %v3926, %v4075
        %v4077 = vpop.f32.mrb[0].mxu0
        %v4078 = vadd.f32 %v3922, %v4077
        %v4079 = vpop.f32.mrb[0].mxu0
        %v4080 = vadd.f32 %v3926, %v4079
        %4081 = vmatprep.mubr.bf16.mxu0 0
        %4082 = vmatmul.mubr.bf16.gmra.mrb[0].mxu0 %v3897
        %v4083 = vpop.f32.mrb[0].mxu0
        %v4084 = vadd.f32 %v3922, %v4083
        %v4085 = vpop.f32.mrb[0].mxu0
        %v4086 = vadd.f32 %v3926, %v4085
        %v4087 = vpop.f32.mrb[0].mxu0
        %v4088 = vadd.f32 %v3922, %v4087
        %v4089 = vpop.f32.mrb[0].mxu0
        %v4090 = vadd.f32 %v3926, %v4089
        %4091 = vmatprep.mubr.bf16.mxu0 0
        %4092 = vmatmul.mubr.bf16.gmra.mrb[0].mxu0 %v3898
        %v4093 = vpop.f32.mrb[0].mxu0
        %v4094 = vadd.f32 %v3922, %v4093
        %v4095 = vpop.f32.mrb[0].mxu0
        %v4096 = vadd.f32 %v3926, %v4095
        %v4097 = vpop.f32.mrb[0].mxu0
        %v4098 = vadd.f32 %v3922, %v4097
        %v4099 = vpop.f32.mrb[0].mxu0
        %v4100 = vadd.f32 %v3926, %v4099
        %4101 = vmatprep.mubr.bf16.mxu0 0
        %4102 = vmatmul.mubr.bf16.gmra.mrb[0].mxu0 %v3899
        %v4103 = vpop.f32.mrb[0].mxu0
        %v4104 = vadd.f32 %v3922, %v4103
        %v4105 = vpop.f32.mrb[0].mxu0
        %v4106 = vadd.f32 %v3926, %v4105
        %v4107 = vpop.f32.mrb[0].mxu0
        %v4108 = vadd.f32 %v3922, %v4107
        %v4109 = vpop.f32.mrb[0].mxu0
        %v4110 = vadd.f32 %v3926, %v4109
        %4111 = vmatprep.mubr.bf16.mxu0 0
        %4112 = vmatmul.mubr.bf16.gmra.mrb[0].mxu0 %v3900
        %v4113 = vpop.f32.mrb[0].mxu0
        %v4114 = vadd.f32 %v3922, %v4113
        %v4115 = vpop.f32.mrb[0].mxu0
        %v4116 = vadd.f32 %v3926, %v4115
        %v4117 = vpop.f32.mrb[0].mxu0
        %v4118 = vadd.f32 %v3922, %v4117
        %v4119 = vpop.f32.mrb[0].mxu0
        %v4120 = vadd.f32 %v3926, %v4119
        %4121 = vdwg.mxu0
        %v4122 = vmax.f32 %v4044, 0.0
        %v4123 = vmax.f32 %v4046, 0.0
        %v4124 = vmax.f32 %v4048, 0.0
        %v4125 = vmax.f32 %v4050, 0.0
        %v4126 = vmax.f32 %v4054, 0.0
        %v4127 = vmax.f32 %v4056, 0.0
        %v4128 = vmax.f32 %v4058, 0.0
        %v4129 = vmax.f32 %v4060, 0.0
        %v4130 = vmax.f32 %v4064, 0.0
        %v4131 = vmax.f32 %v4066, 0.0
        %v4132 = vmax.f32 %v4068, 0.0
        %v4133 = vmax.f32 %v4070, 0.0
        %v4134 = vmax.f32 %v4074, 0.0
        %v4135 = vmax.f32 %v4076, 0.0
        %v4136 = vmax.f32 %v4078, 0.0
        %v4137 = vmax.f32 %v4080, 0.0
        %v4138 = vmax.f32 %v4084, 0.0
        %v4139 = vmax.f32 %v4086, 0.0
        %v4140 = vmax.f32 %v4088, 0.0
        %v4141 = vmax.f32 %v4090, 0.0
        %v4142 = vmax.f32 %v4094, 0.0
        %v4143 = vmax.f32 %v4096, 0.0
        %v4144 = vmax.f32 %v4098, 0.0
        %v4145 = vmax.f32 %v4100, 0.0
        %v4146 = vmax.f32 %v4104, 0.0
        %v4147 = vmax.f32 %v4106, 0.0
        %v4148 = vmax.f32 %v4108, 0.0
        %v4149 = vmax.f32 %v4110, 0.0
        %v4150 = vmax.f32 %v4114, 0.0
        %v4151 = vmax.f32 %v4116, 0.0
        %v4152 = vmax.f32 %v4118, 0.0
        %v4153 = vmax.f32 %v4120, 0.0
        %v4154 = vpack.c.bf16 %v4124, %v4122
        %v4155 = vpack.c.bf16 %v4125, %v4123
        %v4156 = vpack.c.bf16 %v4128, %v4126
        %v4157 = vpack.c.bf16 %v4129, %v4127
        %v4158 = vpack.c.bf16 %v4132, %v4130
        %v4159 = vpack.c.bf16 %v4133, %v4131
        %v4160 = vpack.c.bf16 %v4136, %v4134
        %v4161 = vpack.c.bf16 %v4137, %v4135
        %v4162 = vpack.c.bf16 %v4140, %v4138
        %v4163 = vpack.c.bf16 %v4141, %v4139
        %v4164 = vpack.c.bf16 %v4144, %v4142
        %v4165 = vpack.c.bf16 %v4145, %v4143
        %v4166 = vpack.c.bf16 %v4148, %v4146
        %v4167 = vpack.c.bf16 %v4149, %v4147
        %v4168 = vpack.c.bf16 %v4152, %v4150
        %v4169 = vpack.c.bf16 %v4153, %v4151
        %v4170 = vld [vmem:[#allocation10] sm:$0xf]
        %v4171 = vld [vmem:[#allocation10 + $0x4] sm:$0xf]
        %v4172 = vld [vmem:[#allocation10 + $0x8] sm:$0xf]
        %v4173 = vld [vmem:[#allocation10 + $0xc] sm:$0xf]
        %v4174 = vld [vmem:[#allocation10 + $0x10] sm:$0xf]
        %v4175 = vld [vmem:[#allocation10 + $0x14] sm:$0xf]
        %v4176 = vld [vmem:[#allocation10 + $0x18] sm:$0xf]
        %v4177 = vld [vmem:[#allocation10 + $0x1c] sm:$0xf]
        %v4178 = vld [vmem:[#allocation10 + $0x20] sm:$0xf]
        %v4179 = vld [vmem:[#allocation10 + $0x24] sm:$0xf]
        %v4180 = vld [vmem:[#allocation10 + $0x28] sm:$0xf]
        %v4181 = vld [vmem:[#allocation10 + $0x2c] sm:$0xf]
        %v4182 = vld [vmem:[#allocation10 + $0x30] sm:$0xf]
        %v4183 = vld [vmem:[#allocation10 + $0x34] sm:$0xf]
        %v4184 = vld [vmem:[#allocation10 + $0x38] sm:$0xf]
        %v4185 = vld [vmem:[#allocation10 + $0x3c] sm:$0xf]
        %v4186 = vld [vmem:[#allocation10 + $0x40] sm:$0xf]
        %v4187 = vld [vmem:[#allocation10 + $0x44] sm:$0xf]
        %v4188 = vld [vmem:[#allocation10 + $0x48] sm:$0xf]
        %v4189 = vld [vmem:[#allocation10 + $0x4c] sm:$0xf]
        %v4190 = vld [vmem:[#allocation10 + $0x50] sm:$0xf]
        %v4191 = vld [vmem:[#allocation10 + $0x54] sm:$0xf]
        %v4192 = vld [vmem:[#allocation10 + $0x58] sm:$0xf]
        %v4193 = vld [vmem:[#allocation10 + $0x5c] sm:$0xf]
        %v4194 = vld [vmem:[#allocation10 + $0x60] sm:$0xf]
        %v4195 = vld [vmem:[#allocation10 + $0x64] sm:$0xf]
        %v4196 = vld [vmem:[#allocation10 + $0x68] sm:$0xf]
        %v4197 = vld [vmem:[#allocation10 + $0x6c] sm:$0xf]
        %v4198 = vld [vmem:[#allocation10 + $0x70] sm:$0xf]
        %v4199 = vld [vmem:[#allocation10 + $0x74] sm:$0xf]
        %v4200 = vld [vmem:[#allocation10 + $0x78] sm:$0xf]
        %v4201 = vld [vmem:[#allocation10 + $0x7c] sm:$0xf]
        %v4202 = vld [vmem:[%s10] sm:$0x1]
        %v4204 = vlaneseq
        %v4205 = vshrl.u32 %v4204, 7
        %v4206 = vsub.s32 0, %v4205
        %v4207 = vrot.slane %v4202, %v4206
        %v4241 = vunpack.c.l.b16 %v4170
        %v4242 = vunpack.c.l.b16 %v4171
        %v4243 = vunpack.c.l.b16 %v4172
        %v4244 = vunpack.c.l.b16 %v4173
        %v4245 = vunpack.c.l.b16 %v4174
        %v4246 = vunpack.c.l.b16 %v4175
        %v4247 = vunpack.c.l.b16 %v4176
        %v4248 = vunpack.c.l.b16 %v4177
        %v4249 = vunpack.c.l.b16 %v4178
        %v4250 = vunpack.c.l.b16 %v4179
        %v4251 = vunpack.c.l.b16 %v4180
        %v4252 = vunpack.c.l.b16 %v4181
        %v4253 = vunpack.c.l.b16 %v4182
        %v4254 = vunpack.c.l.b16 %v4183
        %v4255 = vunpack.c.l.b16 %v4184
        %v4256 = vunpack.c.l.b16 %v4185
        %v4257 = vunpack.c.l.b16 %v4186
        %v4258 = vunpack.c.l.b16 %v4187
        %v4259 = vunpack.c.l.b16 %v4188
        %v4260 = vunpack.c.l.b16 %v4189
        %v4261 = vunpack.c.l.b16 %v4190
        %v4262 = vunpack.c.l.b16 %v4191
        %v4263 = vunpack.c.l.b16 %v4192
        %v4264 = vunpack.c.l.b16 %v4193
        %v4265 = vunpack.c.l.b16 %v4194
        %v4266 = vunpack.c.l.b16 %v4195
        %v4267 = vunpack.c.l.b16 %v4196
        %v4268 = vunpack.c.l.b16 %v4197
        %v4269 = vunpack.c.l.b16 %v4198
        %v4270 = vunpack.c.l.b16 %v4199
        %v4271 = vunpack.c.l.b16 %v4200
        %v4272 = vunpack.c.l.b16 %v4201
        %v4273 = vpack.c.b16 %v4242, %v4241
        %v4274 = vpack.c.b16 %v4244, %v4243
        %v4275 = vpack.c.b16 %v4246, %v4245
        %v4276 = vpack.c.b16 %v4248, %v4247
        %v4277 = vpack.c.b16 %v4250, %v4249
        %v4278 = vpack.c.b16 %v4252, %v4251
        %v4279 = vpack.c.b16 %v4254, %v4253
        %v4280 = vpack.c.b16 %v4256, %v4255
        %v4281 = vpack.c.b16 %v4258, %v4257
        %v4282 = vpack.c.b16 %v4260, %v4259
        %v4283 = vpack.c.b16 %v4262, %v4261
        %v4284 = vpack.c.b16 %v4264, %v4263
        %v4285 = vpack.c.b16 %v4266, %v4265
        %v4286 = vpack.c.b16 %v4268, %v4267
        %v4287 = vpack.c.b16 %v4270, %v4269
        %v4288 = vpack.c.b16 %v4272, %v4271
        %4305 = vmatprep.subr.bf16.mxu0 0
        %4306 = vmatpush1.bf16.msra.mxu0 %v4273
        %4307 = vmatprep.subr.bf16.mxu0 0
        %4308 = vmatpush1.bf16.msra.mxu0 %v4274
        %4309 = vmatprep.subr.bf16.mxu0 0
        %4310 = vmatpush1.bf16.msra.mxu0 %v4275
        %4311 = vmatprep.subr.bf16.mxu0 0
        %4312 = vmatpush1.bf16.msra.mxu0 %v4276
        %4313 = vmatprep.subr.bf16.mxu0 0
        %4314 = vmatpush1.bf16.msra.mxu0 %v4277
        %4315 = vmatprep.subr.bf16.mxu0 0
        %4316 = vmatpush1.bf16.msra.mxu0 %v4278
        %4317 = vmatprep.subr.bf16.mxu0 0
        %4318 = vmatpush1.bf16.msra.mxu0 %v4279
        %4319 = vmatprep.subr.bf16.mxu0 0
        %4320 = vmatpush1.bf16.msra.mxu0 %v4280
        %4321 = vmatprep.subr.bf16.mxu0 0
        %4322 = vmatpush1.bf16.msra.mxu0 %v4281
        %4323 = vmatprep.subr.bf16.mxu0 0
        %4324 = vmatpush1.bf16.msra.mxu0 %v4282
        %4325 = vmatprep.subr.bf16.mxu0 0
        %4326 = vmatpush1.bf16.msra.mxu0 %v4283
        %4327 = vmatprep.subr.bf16.mxu0 0
        %4328 = vmatpush1.bf16.msra.mxu0 %v4284
        %4329 = vmatprep.subr.bf16.mxu0 0
        %4330 = vmatpush1.bf16.msra.mxu0 %v4285
        %4331 = vmatprep.subr.bf16.mxu0 0
        %4332 = vmatpush1.bf16.msra.mxu0 %v4286
        %4333 = vmatprep.subr.bf16.mxu0 0
        %4334 = vmatpush1.bf16.msra.mxu0 %v4287
        %4335 = vmatprep.subr.bf16.mxu0 0
        %4336 = vmatpush1.bf16.msra.mxu0 %v4288
        %4337 = vmatprep.mubr.bf16.mxu0 %v4155
        %4338 = vmatmul.mubr.bf16.gmra.mrb[0].mxu0 %v4154
        %v4339 = vpop.f32.mrb[0].mxu0
        %v4340 = vadd.f32 %v4207, %v4339
        %v4341 = vpop.f32.mrb[0].mxu0
        %v4342 = vpop.f32.mrb[0].mxu0
        %v4343 = vadd.f32 %v4207, %v4342
        %v4344 = vpop.f32.mrb[0].mxu0
        %4345 = vmatprep.mubr.bf16.mxu0 %v4157
        %4346 = vmatmul.mubr.bf16.gmra.mrb[0].mxu0 %v4156
        %v4347 = vpop.f32.mrb[0].mxu0
        %v4348 = vadd.f32 %v4207, %v4347
        %v4349 = vpop.f32.mrb[0].mxu0
        %v4350 = vpop.f32.mrb[0].mxu0
        %v4351 = vadd.f32 %v4207, %v4350
        %v4352 = vpop.f32.mrb[0].mxu0
        %4353 = vmatprep.mubr.bf16.mxu0 %v4159
        %4354 = vmatmul.mubr.bf16.gmra.mrb[0].mxu0 %v4158
        %v4355 = vpop.f32.mrb[0].mxu0
        %v4356 = vadd.f32 %v4207, %v4355
        %v4357 = vpop.f32.mrb[0].mxu0
        %v4358 = vpop.f32.mrb[0].mxu0
        %v4359 = vadd.f32 %v4207, %v4358
        %v4360 = vpop.f32.mrb[0].mxu0
        %4361 = vmatprep.mubr.bf16.mxu0 %v4161
        %4362 = vmatmul.mubr.bf16.gmra.mrb[0].mxu0 %v4160
        %v4363 = vpop.f32.mrb[0].mxu0
        %v4364 = vadd.f32 %v4207, %v4363
        %v4365 = vpop.f32.mrb[0].mxu0
        %v4366 = vpop.f32.mrb[0].mxu0
        %v4367 = vadd.f32 %v4207, %v4366
        %v4368 = vpop.f32.mrb[0].mxu0
        %4369 = vmatprep.mubr.bf16.mxu0 %v4163
        %4370 = vmatmul.mubr.bf16.gmra.mrb[0].mxu0 %v4162
        %v4371 = vpop.f32.mrb[0].mxu0
        %v4372 = vadd.f32 %v4207, %v4371
        %v4373 = vpop.f32.mrb[0].mxu0
        %v4374 = vpop.f32.mrb[0].mxu0
        %v4375 = vadd.f32 %v4207, %v4374
        %v4376 = vpop.f32.mrb[0].mxu0
        %4377 = vmatprep.mubr.bf16.mxu0 %v4165
        %4378 = vmatmul.mubr.bf16.gmra.mrb[0].mxu0 %v4164
        %v4379 = vpop.f32.mrb[0].mxu0
        %v4380 = vadd.f32 %v4207, %v4379
        %v4381 = vpop.f32.mrb[0].mxu0
        %v4382 = vpop.f32.mrb[0].mxu0
        %v4383 = vadd.f32 %v4207, %v4382
        %v4384 = vpop.f32.mrb[0].mxu0
        %4385 = vmatprep.mubr.bf16.mxu0 %v4167
        %4386 = vmatmul.mubr.bf16.gmra.mrb[0].mxu0 %v4166
        %v4387 = vpop.f32.mrb[0].mxu0
        %v4388 = vadd.f32 %v4207, %v4387
        %v4389 = vpop.f32.mrb[0].mxu0
        %v4390 = vpop.f32.mrb[0].mxu0
        %v4391 = vadd.f32 %v4207, %v4390
        %v4392 = vpop.f32.mrb[0].mxu0
        %4393 = vmatprep.mubr.bf16.mxu0 %v4169
        %4394 = vmatmul.mubr.bf16.gmra.mrb[0].mxu0 %v4168
        %v4395 = vpop.f32.mrb[0].mxu0
        %v4396 = vadd.f32 %v4207, %v4395
        %v4397 = vpop.f32.mrb[0].mxu0
        %v4398 = vpop.f32.mrb[0].mxu0
        %v4399 = vadd.f32 %v4207, %v4398
        %v4400 = vpop.f32.mrb[0].mxu0
        %4401 = vdwg.mxu0
        %v4402 = vadd.f32 %v3877, %v4340
        %v4403 = vadd.f32 %v3878, %v4343
        %v4404 = vadd.f32 %v3879, %v4348
        %v4405 = vadd.f32 %v3880, %v4351
        %v4406 = vadd.f32 %v3881, %v4356
        %v4407 = vadd.f32 %v3882, %v4359
        %v4408 = vadd.f32 %v3883, %v4364
        %v4409 = vadd.f32 %v3884, %v4367
        %v4410 = vadd.f32 %v3885, %v4372
        %v4411 = vadd.f32 %v3886, %v4375
        %v4412 = vadd.f32 %v3887, %v4380
        %v4413 = vadd.f32 %v3888, %v4383
        %v4414 = vadd.f32 %v3889, %v4388
        %v4415 = vadd.f32 %v3890, %v4391
        %v4416 = vadd.f32 %v3891, %v4396
        %v4417 = vadd.f32 %v3892, %v4399
        %4418 = vadd.xlane.f32.xlu0 %v4402
        %v4419 = vpop.xlane.xlu0 %4418
        %4420 = vadd.xlane.f32.xlu0 %v4403
        %v4421 = vpop.xlane.xlu0 %4420
        %4422 = vadd.xlane.f32.xlu0 %v4404
        %v4423 = vpop.xlane.xlu0 %4422
        %4424 = vadd.xlane.f32.xlu0 %v4405
        %v4425 = vpop.xlane.xlu0 %4424
        %4426 = vadd.xlane.f32.xlu0 %v4406
        %v4427 = vpop.xlane.xlu0 %4426
        %4428 = vadd.xlane.f32.xlu0 %v4407
        %v4429 = vpop.xlane.xlu0 %4428
        %4430 = vadd.xlane.f32.xlu0 %v4408
        %v4431 = vpop.xlane.xlu0 %4430
        %4432 = vadd.xlane.f32.xlu0 %v4409
        %v4433 = vpop.xlane.xlu0 %4432
        %4434 = vadd.xlane.f32.xlu0 %v4410
        %v4435 = vpop.xlane.xlu0 %4434
        %4436 = vadd.xlane.f32.xlu0 %v4411
        %v4437 = vpop.xlane.xlu0 %4436
        %4438 = vadd.xlane.f32.xlu0 %v4412
        %v4439 = vpop.xlane.xlu0 %4438
        %4440 = vadd.xlane.f32.xlu0 %v4413
        %v4441 = vpop.xlane.xlu0 %4440
        %4442 = vadd.xlane.f32.xlu0 %v4414
        %v4443 = vpop.xlane.xlu0 %4442
        %4444 = vadd.xlane.f32.xlu0 %v4415
        %v4445 = vpop.xlane.xlu0 %4444
        %4446 = vadd.xlane.f32.xlu0 %v4416
        %v4447 = vpop.xlane.xlu0 %4446
        %4448 = vadd.xlane.f32.xlu0 %v4417
        %v4449 = vpop.xlane.xlu0 %4448
        %v4450 = vmul.f32 %v4419, %v3702
        %v4451 = vmul.f32 %v4421, %v3702
        %v4452 = vmul.f32 %v4423, %v3702
        %v4453 = vmul.f32 %v4425, %v3702
        %v4454 = vmul.f32 %v4427, %v3702
        %v4455 = vmul.f32 %v4429, %v3702
        %v4456 = vmul.f32 %v4431, %v3702
        %v4457 = vmul.f32 %v4433, %v3702
        %v4458 = vmul.f32 %v4435, %v3702
        %v4459 = vmul.f32 %v4437, %v3702
        %v4460 = vmul.f32 %v4439, %v3702
        %v4461 = vmul.f32 %v4441, %v3702
        %v4462 = vmul.f32 %v4443, %v3702
        %v4463 = vmul.f32 %v4445, %v3702
        %v4464 = vmul.f32 %v4447, %v3702
        %v4465 = vmul.f32 %v4449, %v3702
        %v4466 = vsub.f32 %v4402, %v4450
        %v4467 = vsub.f32 %v4403, %v4451
        %v4468 = vsub.f32 %v4404, %v4452
        %v4469 = vsub.f32 %v4405, %v4453
        %v4470 = vsub.f32 %v4406, %v4454
        %v4471 = vsub.f32 %v4407, %v4455
        %v4472 = vsub.f32 %v4408, %v4456
        %v4473 = vsub.f32 %v4409, %v4457
        %v4474 = vsub.f32 %v4410, %v4458
        %v4475 = vsub.f32 %v4411, %v4459
        %v4476 = vsub.f32 %v4412, %v4460
        %v4477 = vsub.f32 %v4413, %v4461
        %v4478 = vsub.f32 %v4414, %v4462
        %v4479 = vsub.f32 %v4415, %v4463
        %v4480 = vsub.f32 %v4416, %v4464
        %v4481 = vsub.f32 %v4417, %v4465
        %v4482 = vmul.f32 %v4466, %v4466
        %v4483 = vmul.f32 %v4467, %v4467
        %v4484 = vmul.f32 %v4468, %v4468
        %v4485 = vmul.f32 %v4469, %v4469
        %v4486 = vmul.f32 %v4470, %v4470
        %v4487 = vmul.f32 %v4471, %v4471
        %v4488 = vmul.f32 %v4472, %v4472
        %v4489 = vmul.f32 %v4473, %v4473
        %v4490 = vmul.f32 %v4474, %v4474
        %v4491 = vmul.f32 %v4475, %v4475
        %v4492 = vmul.f32 %v4476, %v4476
        %v4493 = vmul.f32 %v4477, %v4477
        %v4494 = vmul.f32 %v4478, %v4478
        %v4495 = vmul.f32 %v4479, %v4479
        %v4496 = vmul.f32 %v4480, %v4480
        %v4497 = vmul.f32 %v4481, %v4481
        %4498 = vadd.xlane.f32.xlu0 %v4482
        %v4499 = vpop.xlane.xlu0 %4498
        %4500 = vadd.xlane.f32.xlu0 %v4483
        %v4501 = vpop.xlane.xlu0 %4500
        %4502 = vadd.xlane.f32.xlu0 %v4484
        %v4503 = vpop.xlane.xlu0 %4502
        %4504 = vadd.xlane.f32.xlu0 %v4485
        %v4505 = vpop.xlane.xlu0 %4504
        %4506 = vadd.xlane.f32.xlu0 %v4486
        %v4507 = vpop.xlane.xlu0 %4506
        %4508 = vadd.xlane.f32.xlu0 %v4487
        %v4509 = vpop.xlane.xlu0 %4508
        %4510 = vadd.xlane.f32.xlu0 %v4488
        %v4511 = vpop.xlane.xlu0 %4510
        %4512 = vadd.xlane.f32.xlu0 %v4489
        %v4513 = vpop.xlane.xlu0 %4512
        %4514 = vadd.xlane.f32.xlu0 %v4490
        %v4515 = vpop.xlane.xlu0 %4514
        %4516 = vadd.xlane.f32.xlu0 %v4491
        %v4517 = vpop.xlane.xlu0 %4516
        %4518 = vadd.xlane.f32.xlu0 %v4492
        %v4519 = vpop.xlane.xlu0 %4518
        %4520 = vadd.xlane.f32.xlu0 %v4493
        %v4521 = vpop.xlane.xlu0 %4520
        %4522 = vadd.xlane.f32.xlu0 %v4494
        %v4523 = vpop.xlane.xlu0 %4522
        %4524 = vadd.xlane.f32.xlu0 %v4495
        %v4525 = vpop.xlane.xlu0 %4524
        %4526 = vadd.xlane.f32.xlu0 %v4496
        %v4527 = vpop.xlane.xlu0 %4526
        %4528 = vadd.xlane.f32.xlu0 %v4497
        %v4529 = vpop.xlane.xlu0 %4528
        %v4530 = vmul.f32 %v4499, %v3702
        %v4531 = vmul.f32 %v4501, %v3702
        %v4532 = vmul.f32 %v4503, %v3702
        %v4533 = vmul.f32 %v4505, %v3702
        %v4534 = vmul.f32 %v4507, %v3702
        %v4535 = vmul.f32 %v4509, %v3702
        %v4536 = vmul.f32 %v4511, %v3702
        %v4537 = vmul.f32 %v4513, %v3702
        %v4538 = vmul.f32 %v4515, %v3702
        %v4539 = vmul.f32 %v4517, %v3702
        %v4540 = vmul.f32 %v4519, %v3702
        %v4541 = vmul.f32 %v4521, %v3702
        %v4542 = vmul.f32 %v4523, %v3702
        %v4543 = vmul.f32 %v4525, %v3702
        %v4544 = vmul.f32 %v4527, %v3702
        %v4545 = vmul.f32 %v4529, %v3702
        %v4546 = vadd.f32 %v4530, 1e-05
        %v4547 = vadd.f32 %v4531, 1e-05
        %v4548 = vadd.f32 %v4532, 1e-05
        %v4549 = vadd.f32 %v4533, 1e-05
        %v4550 = vadd.f32 %v4534, 1e-05
        %v4551 = vadd.f32 %v4535, 1e-05
        %v4552 = vadd.f32 %v4536, 1e-05
        %v4553 = vadd.f32 %v4537, 1e-05
        %v4554 = vadd.f32 %v4538, 1e-05
        %v4555 = vadd.f32 %v4539, 1e-05
        %v4556 = vadd.f32 %v4540, 1e-05
        %v4557 = vadd.f32 %v4541, 1e-05
        %v4558 = vadd.f32 %v4542, 1e-05
        %v4559 = vadd.f32 %v4543, 1e-05
        %v4560 = vadd.f32 %v4544, 1e-05
        %v4561 = vadd.f32 %v4545, 1e-05
        %v4562 = vrsqrt.pop %v4546
        %v4563 = vrsqrt.pop %v4547
        %v4564 = vrsqrt.pop %v4548
        %v4565 = vrsqrt.pop %v4549
        %v4566 = vrsqrt.pop %v4550
        %v4567 = vrsqrt.pop %v4551
        %v4568 = vrsqrt.pop %v4552
        %v4569 = vrsqrt.pop %v4553
        %v4570 = vrsqrt.pop %v4554
        %v4571 = vrsqrt.pop %v4555
        %v4572 = vrsqrt.pop %v4556
        %v4573 = vrsqrt.pop %v4557
        %v4574 = vrsqrt.pop %v4558
        %v4575 = vrsqrt.pop %v4559
        %v4576 = vrsqrt.pop %v4560
        %v4577 = vrsqrt.pop %v4561
        %v4578 = vmul.f32 %v4466, %v4562
        %v4579 = vmul.f32 %v4467, %v4563
        %v4580 = vmul.f32 %v4468, %v4564
        %v4581 = vmul.f32 %v4469, %v4565
        %v4582 = vmul.f32 %v4470, %v4566
        %v4583 = vmul.f32 %v4471, %v4567
        %v4584 = vmul.f32 %v4472, %v4568
        %v4585 = vmul.f32 %v4473, %v4569
        %v4586 = vmul.f32 %v4474, %v4570
        %v4587 = vmul.f32 %v4475, %v4571
        %v4588 = vmul.f32 %v4476, %v4572
        %v4589 = vmul.f32 %v4477, %v4573
        %v4590 = vmul.f32 %v4478, %v4574
        %v4591 = vmul.f32 %v4479, %v4575
        %v4592 = vmul.f32 %v4480, %v4576
        %v4593 = vmul.f32 %v4481, %v4577
        %v4594 = vld [vmem:[%s11] sm:$0x1]
        %v4596 = vlaneseq
        %v4597 = vshrl.u32 %v4596, 7
        %v4598 = vsub.s32 0, %v4597
        %v4599 = vrot.slane %v4594, %v4598
        %v4601 = vmul.f32 %v4578, %v4599
        %v4602 = vmul.f32 %v4579, %v4599
        %v4603 = vmul.f32 %v4580, %v4599
        %v4604 = vmul.f32 %v4581, %v4599
        %v4605 = vmul.f32 %v4582, %v4599
        %v4606 = vmul.f32 %v4583, %v4599
        %v4607 = vmul.f32 %v4584, %v4599
        %v4608 = vmul.f32 %v4585, %v4599
        %v4609 = vmul.f32 %v4586, %v4599
        %v4610 = vmul.f32 %v4587, %v4599
        %v4611 = vmul.f32 %v4588, %v4599
        %v4612 = vmul.f32 %v4589, %v4599
        %v4613 = vmul.f32 %v4590, %v4599
        %v4614 = vmul.f32 %v4591, %v4599
        %v4615 = vmul.f32 %v4592, %v4599
        %v4616 = vmul.f32 %v4593, %v4599
        %v4617 = vld [vmem:[%s12] sm:$0x1]
        %v4619 = vlaneseq
        %v4620 = vshrl.u32 %v4619, 7
        %v4621 = vsub.s32 0, %v4620
        %v4622 = vrot.slane %v4617, %v4621
        %v4624 = vadd.f32 %v4601, %v4622
        %v4625 = vadd.f32 %v4602, %v4622
        %v4626 = vadd.f32 %v4603, %v4622
        %v4627 = vadd.f32 %v4604, %v4622
        %v4628 = vadd.f32 %v4605, %v4622
        %v4629 = vadd.f32 %v4606, %v4622
        %v4630 = vadd.f32 %v4607, %v4622
        %v4631 = vadd.f32 %v4608, %v4622
        %v4632 = vadd.f32 %v4609, %v4622
        %v4633 = vadd.f32 %v4610, %v4622
        %v4634 = vadd.f32 %v4611, %v4622
        %v4635 = vadd.f32 %v4612, %v4622
        %v4636 = vadd.f32 %v4613, %v4622
        %v4637 = vadd.f32 %v4614, %v4622
        %v4638 = vadd.f32 %v4615, %v4622
        %v4639 = vadd.f32 %v4616, %v4622
        %4640 = vst [vmem:[%s547] sm:$0xff] %v4624
        %4641 = vst [vmem:[%s547 + $0x8] sm:$0xff] %v4625
        %4642 = vst [vmem:[%s547 + $0x10] sm:$0xff] %v4626
        %4643 = vst [vmem:[%s547 + $0x18] sm:$0xff] %v4627
        %4644 = vst [vmem:[%s547 + $0x20] sm:$0xff] %v4628
        %4645 = vst [vmem:[%s547 + $0x28] sm:$0xff] %v4629
        %4646 = vst [vmem:[%s547 + $0x30] sm:$0xff] %v4630
        %4647 = vst [vmem:[%s547 + $0x38] sm:$0xff] %v4631
        %4648 = vst [vmem:[%s547 + $0x40] sm:$0xff] %v4632
        %4649 = vst [vmem:[%s547 + $0x48] sm:$0xff] %v4633
        %4650 = vst [vmem:[%s547 + $0x50] sm:$0xff] %v4634
        %4651 = vst [vmem:[%s547 + $0x58] sm:$0xff] %v4635
        %4652 = vst [vmem:[%s547 + $0x60] sm:$0xff] %v4636
        %4653 = vst [vmem:[%s547 + $0x68] sm:$0xff] %v4637
        %4654 = vst [vmem:[%s547 + $0x70] sm:$0xff] %v4638
        %4655 = vst [vmem:[%s547 + $0x78] sm:$0xff] %v4639
        %s4656 = sand.u32 %s323, 1
        %s4657 = scalar_lea.sflag [#allocation4], %s4656
        %s4658 = sand.u32 %s323, 1
        %s4659 = smul.addr %s4658, 128
        %s4660 = scalar_lea.vmem [#allocation11], %s4659
        %s4661 = sand.u32 %s349, 1
        %s4662 = scalar_lea.sflag [#allocation13], %s4661
        %s4663 = sand.u32 %s349, 1
        %s4664 = smul.addr %s4663, 512
        %s4665 = scalar_lea.vmem [#allocation12], %s4664
        // Predicated region
        $region93: #{tpu_custom_call.1} parent=71 // pred_check
          %p4666 = pneg %p333
        $region94: #{tpu_custom_call.1} parent=71 // pred_check_branch
          %4668 = sbr.rel (%p4666) target = $region96
        $region95: #{tpu_custom_call.1} parent=71 // pred_region
          %s4670 = ssub.s32 2048, 2048
          %4671 = vsyncadd %s4657, %s4670
          %s4672 = smul.addr %s37, 16
          %s4673 = smul.addr %s4672, 128
          %s4674 = scalar_lea.hbm %s13, %s4673
          %s4675 = sshll.u32 %s4660, 4
          %s4676 = int_to_ptr.vmem [resolvable:$true] %s4675
          %4681 = dma.vmem_to_hbm [thread:$0]  %s4676, 2048, %s4674, %s4657, 128, 128, 8
        $region96: #{tpu_custom_call.1} parent=71 // pred_fallthru
          _
        // Predicated region
        $region97: #{tpu_custom_call.1} parent=71 // pred_check
          %p4682 = pneg %p359
        $region98: #{tpu_custom_call.1} parent=71 // pred_check_branch
          %4684 = sbr.rel (%p4682) target = $region100
        $region99: #{tpu_custom_call.1} parent=71 // pred_region
          %s4686 = ssub.s32 8192, 8192
          %4687 = vsyncadd %s4662, %s4686
          %s4688 = smul.addr %s37, 64
          %s4689 = smul.addr %s4688, 128
          %s4690 = scalar_lea.hbm %s14, %s4689
          %s4691 = sshll.u32 %s4665, 4
          %s4692 = int_to_ptr.vmem [resolvable:$true] %s4691
          %4697 = dma.vmem_to_hbm [thread:$0]  %s4692, 8192, %s4690, %s4662, 128, 128, 8
        $region100: #{tpu_custom_call.1} parent=71 // pred_fallthru
          _
      $region72: #{tpu_custom_call.1} parent=5 // pred_fallthru
        _
      %p4698 = scmp.le.s32.totalorder 2, %s32
      // Predicated region
      $region101: #{tpu_custom_call.1} parent=5 // pred_check
        %p4699 = pneg %p4698
      $region102: #{tpu_custom_call.1} parent=5 // pred_check_branch
        %4701 = sbr.rel (%p4699) target = $region104
      $region103: #{tpu_custom_call.1} parent=5 // pred_region
        %s4702 = ssub.s32 %s32, 2
        // Predicated region
        $region105: #{tpu_custom_call.1} parent=103 // pred_check
          %p4703 = pneg %p339
        $region106: #{tpu_custom_call.1} parent=103 // pred_check_branch
          %4705 = sbr.rel (%p4703) target = $region108
        $region107: #{tpu_custom_call.1} parent=103 // pred_region
          %s4706 = sand.u32 %s324, 1
          %s4707 = scalar_lea.sflag [#allocation4], %s4706
          %s4708 = sand.u32 %s324, 1
          %s4709 = smul.addr %s4708, 128
          %s4710 = scalar_lea.vmem [#allocation11], %s4709
          %4711 = dma.done %s4707, 2048
        $region108: #{tpu_custom_call.1} parent=103 // pred_fallthru
          _
        // Predicated region
        $region109: #{tpu_custom_call.1} parent=103 // pred_check
          %p4712 = pneg %p365
        $region110: #{tpu_custom_call.1} parent=103 // pred_check_branch
          %4714 = sbr.rel (%p4712) target = $region112
        $region111: #{tpu_custom_call.1} parent=103 // pred_region
          %s4715 = sand.u32 %s350, 1
          %s4716 = scalar_lea.sflag [#allocation13], %s4715
          %s4717 = sand.u32 %s350, 1
          %s4718 = smul.addr %s4717, 512
          %s4719 = scalar_lea.vmem [#allocation12], %s4718
          %4720 = dma.done %s4716, 8192
        $region112: #{tpu_custom_call.1} parent=103 // pred_fallthru
          _
      $region104: #{tpu_custom_call.1} parent=5 // pred_fallthru
        _
    $region6: #{tpu_custom_call.1} parent=1 // loop_footer
      %s36 = sadd.s32 1, %s32
    $region7: #{tpu_custom_call.1} parent=1 // loop_footer_branch
      %31 = sbr.rel target = $region3
    $region8: #{tpu_custom_call.1} parent=1 // loop_exit
      _
    %4721 = vsyncpa [#allocation3], 1
    %s4722 = scalar_lea.sflag [#allocation3], 1
    %4723 = vsyncpa %s4722, 1
    %4724 = vsyncpa [#allocation6], 1
    %4725 = vsyncpa [#allocation9], 1
    %4726 = vsyncpa [#allocation4], 1
    %s4727 = scalar_lea.sflag [#allocation4], 1
    %4728 = vsyncpa %s4727, 1
    %4729 = vsyncpa [#allocation13], 1
    %s4730 = scalar_lea.sflag [#allocation13], 1
    %4731 = vsyncpa %s4730, 1

// kernel: tpu_custom_call.1
$region0: #{tpu_custom_call.1}
  #allocation0 [shape = 'u32[]', space=smem, size = 0x4, offset = 0x4, fixed_abs, tag = 'smem constant byte address 0x4 - core index']
  #allocation1 [shape = 'u32[144,128]{1,0:T(1,128)}', space=vmem, size = 0x12000, scoped, tag = 'internal scratch']
  %s0 = inlined_call_operand.hbm [shape: f32[2,128,128], index: 0, kind: input, shape index: {}]
  %s1 = inlined_call_operand.hbm [shape: bf16[128,384], index: 1, kind: input, shape index: {}]
  %s2 = inlined_call_operand.vmem [shape: f32[1,384], index: 2, kind: input, shape index: {}]
  %s3 = inlined_call_operand.hbm [shape: bf16[4,32,128], index: 3, kind: input, shape index: {}]
  %s4 = inlined_call_operand.vmem [shape: f32[1,128], index: 4, kind: input, shape index: {}]
  %s5 = inlined_call_operand.vmem [shape: f32[1,128], index: 5, kind: input, shape index: {}]
  %s6 = inlined_call_operand.vmem [shape: f32[1,128], index: 6, kind: input, shape index: {}]
  %s7 = inlined_call_operand.hbm [shape: bf16[128,256], index: 7, kind: input, shape index: {}]
  %s8 = inlined_call_operand.vmem [shape: f32[1,256], index: 8, kind: input, shape index: {}]
  %s9 = inlined_call_operand.hbm [shape: bf16[256,128], index: 9, kind: input, shape index: {}]
  %s10 = inlined_call_operand.vmem [shape: f32[1,128], index: 10, kind: input, shape index: {}]
  %s11 = inlined_call_operand.vmem [shape: f32[1,128], index: 11, kind: input, shape index: {}]
  %s12 = inlined_call_operand.vmem [shape: f32[1,128], index: 12, kind: input, shape index: {}]
  %s13 = inlined_call_operand.hbm [shape: f32[2,128,128], index: 13, kind: output, shape index: {0}]
  %s14 = inlined_call_operand.hbm [shape: f32[2,4,128,128], index: 14, kind: output, shape index: {1}]
  %15 = xla_tuple %s13, %s14
  %s16 = sld [smem:[#allocation0]]
  $region113: #{tpu_custom_call.1} parent=0
    _
  %s18 = ssub.s32 1, %s16
  %s19 = scalar_select 0, %s18, %s16
  $region1: #{tpu_custom_call.1} parent=0
    #allocation2 [shape = 'u8[131072]{0}', space=vmem, size = 0x20000, scoped, tag = 'input window, operand 0']
    #allocation3 [shape = 's32[2]{0}', space=sflag, size = 0x8, scoped, tag = 'scoped memory for tpu_custom_call.1']
    #allocation4 [shape = 's32[2]{0}', space=sflag, size = 0x8, scoped, tag = 'scoped memory for tpu_custom_call.1']
    #allocation5 [shape = 'u8[98304]{0}', space=vmem, size = 0x18000, scoped, tag = 'input window, operand 1, single buffered']
    #allocation6 [shape = 's32[1]{0}', space=sflag, size = 0x4, scoped, tag = 'scoped memory for tpu_custom_call.1']
    #allocation7 [shape = 'u8[32768]{0}', space=vmem, size = 0x8000, scoped, tag = 'input window, operand 3, single buffered']
    #allocation8 [shape = 'u8[65536]{0}', space=vmem, size = 0x10000, scoped, tag = 'input window, operand 7, single buffered']
    #allocation9 [shape = 's32[1]{0}', space=sflag, size = 0x4, scoped, tag = 'scoped memory for tpu_custom_call.1']
    #allocation10 [shape = 'u8[65536]{0}', space=vmem, size = 0x10000, scoped, tag = 'input window, operand 9, single buffered']
    #allocation11 [shape = 'u8[131072]{0}', space=vmem, size = 0x20000, scoped, tag = 'output window, operand 0']
    #allocation12 [shape = 'u8[524288]{0}', space=vmem, size = 0x80000, scoped, tag = 'output window, operand 1']
    #allocation13 [shape = 's32[2]{0}', space=sflag, size = 0x8, scoped, tag = 'scoped memory for tpu_custom_call.1']
    %20 = vsyncpa [#allocation3], 0
    %s21 = scalar_lea.sflag [#allocation3], 1
    %22 = vsyncpa %s21, 0
    %23 = vsyncpa [#allocation6], 0
    %24 = vsyncpa [#allocation9], 0
    %25 = vsyncpa [#allocation4], 0
    %s26 = scalar_lea.sflag [#allocation4], 1
    %27 = vsyncpa %s26, 0
    %28 = vsyncpa [#allocation13], 0
    %s29 = scalar_lea.sflag [#allocation13], 1
    %30 = vsyncpa %s29, 0
    loop: start=0, step=1, limit=4
    $region2: #{tpu_custom_call.1} parent=1 // loop_pre_header
      _
    $region3: #{tpu_custom_call.1} parent=1 // loop_header
      %s32 = sphi 0, %s36
      %p33 = scmp.ge.s32.totalorder %s32, 4
      %s42 = sphi 0, %s44
      %s45 = sphi 0, %s42
      %s46 = sphi 0, %s45
      %s62 = sphi 0, %s46
      %s66 = sphi 0, %s66
      %s68 = sphi 0, %s66
      %s69 = sphi 0, %s68
      %s83 = sphi 0, %s69
      %s87 = sphi 0, %s87
      %s89 = sphi 0, %s87
      %s90 = sphi 0, %s89
      %s104 = sphi 0, %s90
      %s108 = sphi 0, %s108
      %s110 = sphi 0, %s108
      %s111 = sphi 0, %s110
      %s125 = sphi 0, %s111
      %s129 = sphi 0, %s129
      %s131 = sphi 0, %s129
      %s132 = sphi 0, %s131
      %s146 = sphi 0, %s132
      %s150 = sphi 0, %s150
      %s152 = sphi 0, %s150
      %s153 = sphi 0, %s152
      %s167 = sphi 0, %s153
      %s171 = sphi 0, %s171
      %s173 = sphi 0, %s171
      %s174 = sphi 0, %s173
      %s188 = sphi 0, %s174
      %s192 = sphi 0, %s192
      %s194 = sphi 0, %s192
      %s195 = sphi 0, %s194
      %s209 = sphi 0, %s195
      %s213 = sphi 0, %s213
      %s215 = sphi 0, %s213
      %s216 = sphi 0, %s215
      %s230 = sphi 0, %s216
      %s234 = sphi 0, %s234
      %s236 = sphi 0, %s234
      %s237 = sphi 0, %s236
      %s251 = sphi 0, %s237
      %s255 = sphi 0, %s255
      %s257 = sphi 0, %s255
      %s258 = sphi 0, %s257
      %s272 = sphi 0, %s258
      %s276 = sphi 0, %s276
      %s278 = sphi 0, %s276
      %s279 = sphi 0, %s278
      %s293 = sphi 0, %s279
      %s297 = sphi 0, %s297
      %s299 = sphi 0, %s297
      %s300 = sphi 0, %s299
      %s314 = sphi 0, %s300
      %s320 = sphi 0, %s322
      %s323 = sphi 0, %s320
      %s324 = sphi 0, %s323
      %s340 = sphi 0, %s324
      %s346 = sphi 0, %s348
      %s349 = sphi 0, %s346
      %s350 = sphi 0, %s349
      %s366 = sphi 0, %s350
    $region4: #{tpu_custom_call.1} parent=1 // loop_header_branch
      %35 = sbr.rel (%p33) target = $region8
    $region5: #{tpu_custom_call.1} parent=1 // loop_body
      %s37 = ssub.s32 %s32, 1
      %s38 = ssub.s32 %s32, 2
      %s39 = sadd.s32 %s32, 1
      %s40 = ssub.s32 %s32, %s39
      %p41 = scmp.eq.s32.totalorder %s40, 0
      %s43 = sadd.s32 %s42, 1
      %s44 = scalar_select %p41, %s42, %s43
      %p47 = pneg %p41
      %p48 = scmp.eq.s32.totalorder %s32, 1
      %p49 = por %p47, %p48
      %p50 = scmp.ne.s32.totalorder %s42, %s45
      %p51 = scmp.eq.s32.totalorder %s32, 0
      %p52 = por %p50, %p51
      %p53 = scmp.ne.s32.totalorder %s42, %s45
      %p54 = scmp.eq.s32.totalorder %s37, 1
      %p55 = por %p53, %p54
      %p56 = scmp.ne.s32.totalorder %s45, %s46
      %p57 = scmp.eq.s32.totalorder %s37, 0
      %p58 = por %p56, %p57
      %p59 = scmp.ne.s32.totalorder %s45, %s46
      %p60 = scmp.eq.s32.totalorder %s38, 1
      %p61 = por %p59, %p60
      %p63 = scmp.ne.s32.totalorder %s46, %s62
      %p64 = scmp.eq.s32.totalorder %s38, 0
      %p65 = por %p63, %p64
      %s67 = sadd.s32 %s66, 1
      %p70 = scmp.eq.s32.totalorder %s32, 1
      %p71 = scmp.ne.s32.totalorder %s66, %s68
      %p72 = scmp.eq.s32.totalorder %s32, 0
      %p73 = por %p71, %p72
      %p74 = scmp.ne.s32.totalorder %s66, %s68
      %p75 = scmp.eq.s32.totalorder %s37, 1
      %p76 = por %p74, %p75
      %p77 = scmp.ne.s32.totalorder %s68, %s69
      %p78 = scmp.eq.s32.totalorder %s37, 0
      %p79 = por %p77, %p78
      %p80 = scmp.ne.s32.totalorder %s68, %s69
      %p81 = scmp.eq.s32.totalorder %s38, 1
      %p82 = por %p80, %p81
      %p84 = scmp.ne.s32.totalorder %s69, %s83
      %p85 = scmp.eq.s32.totalorder %s38, 0
      %p86 = por %p84, %p85
      %s88 = sadd.s32 %s87, 1
      %p91 = scmp.eq.s32.totalorder %s32, 1
      %p92 = scmp.ne.s32.totalorder %s87, %s89
      %p93 = scmp.eq.s32.totalorder %s32, 0
      %p94 = por %p92, %p93
      %p95 = scmp.ne.s32.totalorder %s87, %s89
      %p96 = scmp.eq.s32.totalorder %s37, 1
      %p97 = por %p95, %p96
      %p98 = scmp.ne.s32.totalorder %s89, %s90
      %p99 = scmp.eq.s32.totalorder %s37, 0
      %p100 = por %p98, %p99
      %p101 = scmp.ne.s32.totalorder %s89, %s90
      %p102 = scmp.eq.s32.totalorder %s38, 1
      %p103 = por %p101, %p102
      %p105 = scmp.ne.s32.totalorder %s90, %s104
      %p106 = scmp.eq.s32.totalorder %s38, 0
      %p107 = por %p105, %p106
      %s109 = sadd.s32 %s108, 1
      %p112 = scmp.eq.s32.totalorder %s32, 1
      %p113 = scmp.ne.s32.totalorder %s108, %s110
      %p114 = scmp.eq.s32.totalorder %s32, 0
      %p115 = por %p113, %p114
      %p116 = scmp.ne.s32.totalorder %s108, %s110
      %p117 = scmp.eq.s32.totalorder %s37, 1
      %p118 = por %p116, %p117
      %p119 = scmp.ne.s32.totalorder %s110, %s111
      %p120 = scmp.eq.s32.totalorder %s37, 0
      %p121 = por %p119, %p120
      %p122 = scmp.ne.s32.totalorder %s110, %s111
      %p123 = scmp.eq.s32.totalorder %s38, 1
      %p124 = por %p122, %p123
      %p126 = scmp.ne.s32.totalorder %s111, %s125
      %p127 = scmp.eq.s32.totalorder %s38, 0
      %p128 = por %p126, %p127
      %s130 = sadd.s32 %s129, 1
      %p133 = scmp.eq.s32.totalorder %s32, 1
      %p134 = scmp.ne.s32.totalorder %s129, %s131
      %p135 = scmp.eq.s32.totalorder %s32, 0
      %p136 = por %p134, %p135
      %p137 = scmp.ne.s32.totalorder %s129, %s131
      %p138 = scmp.eq.s32.totalorder %s37, 1
      %p139 = por %p137, %p138
      %p140 = scmp.ne.s32.totalorder %s131, %s132
      %p141 = scmp.eq.s32.totalorder %s37, 0
      %p142 = por %p140, %p141
      %p143 = scmp.ne.s32.totalorder %s131, %s132
      %p144 = scmp.eq.s32.totalorder %s38, 1
      %p145 = por %p143, %p144
      %p147 = scmp.ne.s32.totalorder %s132, %s146
      %p148 = scmp.eq.s32.totalorder %s38, 0
      %p149 = por %p147, %p148
      %s151 = sadd.s32 %s150, 1
      %p154 = scmp.eq.s32.totalorder %s32, 1
      %p155 = scmp.ne.s32.totalorder %s150, %s152
      %p156 = scmp.eq.s32.totalorder %s32, 0
      %p157 = por %p155, %p156
      %p158 = scmp.ne.s32.totalorder %s150, %s152
      %p159 = scmp.eq.s32.totalorder %s37, 1
      %p160 = por %p158, %p159
      %p161 = scmp.ne.s32.totalorder %s152, %s153
      %p162 = scmp.eq.s32.totalorder %s37, 0
      %p163 = por %p161, %p162
      %p164 = scmp.ne.s32.totalorder %s152, %s153
      %p165 = scmp.eq.s32.totalorder %s38, 1
      %p166 = por %p164, %p165
      %p168 = scmp.ne.s32.totalorder %s153, %s167
      %p169 = scmp.eq.s32.totalorder %s38, 0
      %p170 = por %p168, %p169
      %s172 = sadd.s32 %s171, 1
      %p175 = scmp.eq.s32.totalorder %s32, 1
      %p176 = scmp.ne.s32.totalorder %s171, %s173
      %p177 = scmp.eq.s32.totalorder %s32, 0
      %p178 = por %p176, %p177
      %p179 = scmp.ne.s32.totalorder %s171, %s173
      %p180 = scmp.eq.s32.totalorder %s37, 1
      %p181 = por %p179, %p180
      %p182 = scmp.ne.s32.totalorder %s173, %s174
      %p183 = scmp.eq.s32.totalorder %s37, 0
      %p184 = por %p182, %p183
      %p185 = scmp.ne.s32.totalorder %s173, %s174
      %p186 = scmp.eq.s32.totalorder %s38, 1
      %p187 = por %p185, %p186
      %p189 = scmp.ne.s32.totalorder %s174, %s188
      %p190 = scmp.eq.s32.totalorder %s38, 0
      %p191 = por %p189, %p190
      %s193 = sadd.s32 %s192, 1
      %p196 = scmp.eq.s32.totalorder %s32, 1
      %p197 = scmp.ne.s32.totalorder %s192, %s194
      %p198 = scmp.eq.s32.totalorder %s32, 0
      %p199 = por %p197, %p198
      %p200 = scmp.ne.s32.totalorder %s192, %s194
      %p201 = scmp.eq.s32.totalorder %s37, 1
      %p202 = por %p200, %p201
      %p203 = scmp.ne.s32.totalorder %s194, %s195
      %p204 = scmp.eq.s32.totalorder %s37, 0
      %p205 = por %p203, %p204
      %p206 = scmp.ne.s32.totalorder %s194, %s195
      %p207 = scmp.eq.s32.totalorder %s38, 1
      %p208 = por %p206, %p207
      %p210 = scmp.ne.s32.totalorder %s195, %s209
      %p211 = scmp.eq.s32.totalorder %s38, 0
      %p212 = por %p210, %p211
      %s214 = sadd.s32 %s213, 1
      %p217 = scmp.eq.s32.totalorder %s32, 1
      %p218 = scmp.ne.s32.totalorder %s213, %s215
      %p219 = scmp.eq.s32.totalorder %s32, 0
      %p220 = por %p218, %p219
      %p221 = scmp.ne.s32.totalorder %s213, %s215
      %p222 = scmp.eq.s32.totalorder %s37, 1
      %p223 = por %p221, %p222
      %p224 = scmp.ne.s32.totalorder %s215, %s216
      %p225 = scmp.eq.s32.totalorder %s37, 0
      %p226 = por %p224, %p225
      %p227 = scmp.ne.s32.totalorder %s215, %s216
      %p228 = scmp.eq.s32.totalorder %s38, 1
      %p229 = por %p227, %p228
      %p231 = scmp.ne.s32.totalorder %s216, %s230
      %p232 = scmp.eq.s32.totalorder %s38, 0
      %p233 = por %p231, %p232
      %s235 = sadd.s32 %s234, 1
      %p238 = scmp.eq.s32.totalorder %s32, 1
      %p239 = scmp.ne.s32.totalorder %s234, %s236
      %p240 = scmp.eq.s32.totalorder %s32, 0
      %p241 = por %p239, %p240
      %p242 = scmp.ne.s32.totalorder %s234, %s236
      %p243 = scmp.eq.s32.totalorder %s37, 1
      %p244 = por %p242, %p243
      %p245 = scmp.ne.s32.totalorder %s236, %s237
      %p246 = scmp.eq.s32.totalorder %s37, 0
      %p247 = por %p245, %p246
      %p248 = scmp.ne.s32.totalorder %s236, %s237
      %p249 = scmp.eq.s32.totalorder %s38, 1
      %p250 = por %p248, %p249
      %p252 = scmp.ne.s32.totalorder %s237, %s251
      %p253 = scmp.eq.s32.totalorder %s38, 0
      %p254 = por %p252, %p253
      %s256 = sadd.s32 %s255, 1
      %p259 = scmp.eq.s32.totalorder %s32, 1
      %p260 = scmp.ne.s32.totalorder %s255, %s257
      %p261 = scmp.eq.s32.totalorder %s32, 0
      %p262 = por %p260, %p261
      %p263 = scmp.ne.s32.totalorder %s255, %s257
      %p264 = scmp.eq.s32.totalorder %s37, 1
      %p265 = por %p263, %p264
      %p266 = scmp.ne.s32.totalorder %s257, %s258
      %p267 = scmp.eq.s32.totalorder %s37, 0
      %p268 = por %p266, %p267
      %p269 = scmp.ne.s32.totalorder %s257, %s258
      %p270 = scmp.eq.s32.totalorder %s38, 1
      %p271 = por %p269, %p270
      %p273 = scmp.ne.s32.totalorder %s258, %s272
      %p274 = scmp.eq.s32.totalorder %s38, 0
      %p275 = por %p273, %p274
      %s277 = sadd.s32 %s276, 1
      %p280 = scmp.eq.s32.totalorder %s32, 1
      %p281 = scmp.ne.s32.totalorder %s276, %s278
      %p282 = scmp.eq.s32.totalorder %s32, 0
      %p283 = por %p281, %p282
      %p284 = scmp.ne.s32.totalorder %s276, %s278
      %p285 = scmp.eq.s32.totalorder %s37, 1
      %p286 = por %p284, %p285
      %p287 = scmp.ne.s32.totalorder %s278, %s279
      %p288 = scmp.eq.s32.totalorder %s37, 0
      %p289 = por %p287, %p288
      %p290 = scmp.ne.s32.totalorder %s278, %s279
      %p291 = scmp.eq.s32.totalorder %s38, 1
      %p292 = por %p290, %p291
      %p294 = scmp.ne.s32.totalorder %s279, %s293
      %p295 = scmp.eq.s32.totalorder %s38, 0
      %p296 = por %p294, %p295
      %s298 = sadd.s32 %s297, 1
      %p301 = scmp.eq.s32.totalorder %s32, 1
      %p302 = scmp.ne.s32.totalorder %s297, %s299
      %p303 = scmp.eq.s32.totalorder %s32, 0
      %p304 = por %p302, %p303
      %p305 = scmp.ne.s32.totalorder %s297, %s299
      %p306 = scmp.eq.s32.totalorder %s37, 1
      %p307 = por %p305, %p306
      %p308 = scmp.ne.s32.totalorder %s299, %s300
      %p309 = scmp.eq.s32.totalorder %s37, 0
      %p310 = por %p308, %p309
      %p311 = scmp.ne.s32.totalorder %s299, %s300
      %p312 = scmp.eq.s32.totalorder %s38, 1
      %p313 = por %p311, %p312
      %p315 = scmp.ne.s32.totalorder %s300, %s314
      %p316 = scmp.eq.s32.totalorder %s38, 0
      %p317 = por %p315, %p316
      %s318 = ssub.s32 %s32, %s39
      %p319 = scmp.eq.s32.totalorder %s318, 0
      %s321 = sadd.s32 %s320, 1
      %s322 = scalar_select %p319, %s320, %s321
      %p325 = pneg %p319
      %p326 = scmp.eq.s32.totalorder %s32, 1
      %p327 = por %p325, %p326
      %p328 = scmp.ne.s32.totalorder %s320, %s323
      %p329 = scmp.eq.s32.totalorder %s32, 0
      %p330 = por %p328, %p329
      %p331 = scmp.ne.s32.totalorder %s320, %s323
      %p332 = scmp.eq.s32.totalorder %s37, 1
      %p333 = por %p331, %p332
      %p334 = scmp.ne.s32.totalorder %s323, %s324
      %p335 = scmp.eq.s32.totalorder %s37, 0
      %p336 = por %p334, %p335
      %p337 = scmp.ne.s32.totalorder %s323, %s324
      %p338 = scmp.eq.s32.totalorder %s38, 1
      %p339 = por %p337, %p338
      %p341 = scmp.ne.s32.totalorder %s324, %s340
      %p342 = scmp.eq.s32.totalorder %s38, 0
      %p343 = por %p341, %p342
      %s344 = ssub.s32 %s32, %s39
      %p345 = scmp.eq.s32.totalorder %s344, 0
      %s347 = sadd.s32 %s346, 1
      %s348 = scalar_select %p345, %s346, %s347
      %p351 = pneg %p345
      %p352 = scmp.eq.s32.totalorder %s32, 1
      %p353 = por %p351, %p352
      %p354 = scmp.ne.s32.totalorder %s346, %s349
      %p355 = scmp.eq.s32.totalorder %s32, 0
      %p356 = por %p354, %p355
      %p357 = scmp.ne.s32.totalorder %s346, %s349
      %p358 = scmp.eq.s32.totalorder %s37, 1
      %p359 = por %p357, %p358
      %p360 = scmp.ne.s32.totalorder %s349, %s350
      %p361 = scmp.eq.s32.totalorder %s37, 0
      %p362 = por %p360, %p361
      %p363 = scmp.ne.s32.totalorder %s349, %s350
      %p364 = scmp.eq.s32.totalorder %s38, 1
      %p365 = por %p363, %p364
      %p367 = scmp.ne.s32.totalorder %s350, %s366
      %p368 = scmp.eq.s32.totalorder %s38, 0
      %p369 = por %p367, %p368
      %p370 = scmp.le.s32.totalorder 1, %s32
      %p371 = scmp.lt.s32.totalorder %s32, 3
      %p372 = pnand %p370, %p371
      %p373 = pneg %p372
      // Predicated region
      $region9: #{tpu_custom_call.1} parent=5 // pred_check
        _
      $region10: #{tpu_custom_call.1} parent=5 // pred_check_branch
        %375 = sbr.rel (%p372) target = $region12
      $region11: #{tpu_custom_call.1} parent=5 // pred_region
        %s376 = ssub.s32 %s32, 1
        // Predicated region
        $region13: #{tpu_custom_call.1} parent=11 // pred_check
          %p377 = pneg %p79
        $region14: #{tpu_custom_call.1} parent=11 // pred_check_branch
          %379 = sbr.rel (%p377) target = $region16
        $region15: #{tpu_custom_call.1} parent=11 // pred_region
          %s381 = ssub.s32 3072, 3072
          %382 = vsyncadd [#allocation6], %s381
          %s383 = sshll.u32 [#allocation5], 4
          %s384 = int_to_ptr.vmem [resolvable:$true] %s383
          %389 = dma.hbm_to_vmem [thread:$0]  %s1, 3072, %s384, [#allocation6], 192, 192, 12
        $region16: #{tpu_custom_call.1} parent=11 // pred_fallthru
          _
        // Predicated region
        $region17: #{tpu_custom_call.1} parent=11 // pred_check
          %p390 = pneg %p100
        $region18: #{tpu_custom_call.1} parent=11 // pred_check_branch
          %392 = sbr.rel (%p390) target = $region20
        $region19: #{tpu_custom_call.1} parent=11 // pred_region
          _
        $region20: #{tpu_custom_call.1} parent=11 // pred_fallthru
          _
        // Predicated region
        $region21: #{tpu_custom_call.1} parent=11 // pred_check
          %p393 = pneg %p121
        $region22: #{tpu_custom_call.1} parent=11 // pred_check_branch
          %395 = sbr.rel (%p393) target = $region24
        $region23: #{tpu_custom_call.1} parent=11 // pred_region
          %s397 = ssub.s32 1024, 1024
          %398 = vsyncadd [#allocation6], %s397
          %s399 = sshll.u32 [#allocation7], 4
          %s400 = int_to_ptr.vmem [resolvable:$true] %s399
          %405 = dma.hbm_to_vmem [thread:$0]  %s3, 1024, %s400, [#allocation6], 64, 64, 4
        $region24: #{tpu_custom_call.1} parent=11 // pred_fallthru
          _
        // Predicated region
        $region25: #{tpu_custom_call.1} parent=11 // pred_check
          %p406 = pneg %p142
        $region26: #{tpu_custom_call.1} parent=11 // pred_check_branch
          %408 = sbr.rel (%p406) target = $region28
        $region27: #{tpu_custom_call.1} parent=11 // pred_region
          _
        $region28: #{tpu_custom_call.1} parent=11 // pred_fallthru
          _
        // Predicated region
        $region29: #{tpu_custom_call.1} parent=11 // pred_check
          %p409 = pneg %p163
        $region30: #{tpu_custom_call.1} parent=11 // pred_check_branch
          %411 = sbr.rel (%p409) target = $region32
        $region31: #{tpu_custom_call.1} parent=11 // pred_region
          _
        $region32: #{tpu_custom_call.1} parent=11 // pred_fallthru
          _
        // Predicated region
        $region33: #{tpu_custom_call.1} parent=11 // pred_check
          %p412 = pneg %p184
        $region34: #{tpu_custom_call.1} parent=11 // pred_check_branch
          %414 = sbr.rel (%p412) target = $region36
        $region35: #{tpu_custom_call.1} parent=11 // pred_region
          _
        $region36: #{tpu_custom_call.1} parent=11 // pred_fallthru
          _
        // Predicated region
        $region37: #{tpu_custom_call.1} parent=11 // pred_check
          %p415 = pneg %p205
        $region38: #{tpu_custom_call.1} parent=11 // pred_check_branch
          %417 = sbr.rel (%p415) target = $region40
        $region39: #{tpu_custom_call.1} parent=11 // pred_region
          %s419 = ssub.s32 2048, 2048
          %420 = vsyncadd [#allocation9], %s419
          %s421 = sshll.u32 [#allocation8], 4
          %s422 = int_to_ptr.vmem [resolvable:$true] %s421
          %427 = dma.hbm_to_vmem [thread:$0]  %s7, 2048, %s422, [#allocation9], 128, 128, 8
        $region40: #{tpu_custom_call.1} parent=11 // pred_fallthru
          _
        // Predicated region
        $region41: #{tpu_custom_call.1} parent=11 // pred_check
          %p428 = pneg %p226
        $region42: #{tpu_custom_call.1} parent=11 // pred_check_branch
          %430 = sbr.rel (%p428) target = $region44
        $region43: #{tpu_custom_call.1} parent=11 // pred_region
          _
        $region44: #{tpu_custom_call.1} parent=11 // pred_fallthru
          _
        // Predicated region
        $region45: #{tpu_custom_call.1} parent=11 // pred_check
          %p431 = pneg %p247
        $region46: #{tpu_custom_call.1} parent=11 // pred_check_branch
          %433 = sbr.rel (%p431) target = $region48
        $region47: #{tpu_custom_call.1} parent=11 // pred_region
          %s435 = ssub.s32 2048, 2048
          %436 = vsyncadd [#allocation9], %s435
          %s437 = sshll.u32 [#allocation10], 4
          %s438 = int_to_ptr.vmem [resolvable:$true] %s437
          %443 = dma.hbm_to_vmem [thread:$0]  %s9, 2048, %s438, [#allocation9], 64, 64, 4
        $region48: #{tpu_custom_call.1} parent=11 // pred_fallthru
          _
        // Predicated region
        $region49: #{tpu_custom_call.1} parent=11 // pred_check
          %p444 = pneg %p268
        $region50: #{tpu_custom_call.1} parent=11 // pred_check_branch
          %446 = sbr.rel (%p444) target = $region52
        $region51: #{tpu_custom_call.1} parent=11 // pred_region
          _
        $region52: #{tpu_custom_call.1} parent=11 // pred_fallthru
          _
        // Predicated region
        $region53: #{tpu_custom_call.1} parent=11 // pred_check
          %p447 = pneg %p289
        $region54: #{tpu_custom_call.1} parent=11 // pred_check_branch
          %449 = sbr.rel (%p447) target = $region56
        $region55: #{tpu_custom_call.1} parent=11 // pred_region
          _
        $region56: #{tpu_custom_call.1} parent=11 // pred_fallthru
          _
        // Predicated region
        $region57: #{tpu_custom_call.1} parent=11 // pred_check
          %p450 = pneg %p310
        $region58: #{tpu_custom_call.1} parent=11 // pred_check_branch
          %452 = sbr.rel (%p450) target = $region60
        $region59: #{tpu_custom_call.1} parent=11 // pred_region
          _
        $region60: #{tpu_custom_call.1} parent=11 // pred_fallthru
          _
      $region12: #{tpu_custom_call.1} parent=5 // pred_fallthru
        _
      %p453 = scmp.lt.s32.totalorder %s32, 2
      // Predicated region
      $region61: #{tpu_custom_call.1} parent=5 // pred_check
        %p454 = pneg %p453
      $region62: #{tpu_custom_call.1} parent=5 // pred_check_branch
        %456 = sbr.rel (%p454) target = $region64
      $region63: #{tpu_custom_call.1} parent=5 // pred_region
        // Predicated region
        $region65: #{tpu_custom_call.1} parent=63 // pred_check
          %p457 = pneg %p52
        $region66: #{tpu_custom_call.1} parent=63 // pred_check_branch
          %459 = sbr.rel (%p457) target = $region68
        $region67: #{tpu_custom_call.1} parent=63 // pred_region
          %s460 = sand.u32 %s42, 1
          %s461 = scalar_lea.sflag [#allocation3], %s460
          %s462 = sand.u32 %s42, 1
          %s463 = smul.addr %s462, 128
          %s464 = scalar_lea.vmem [#allocation2], %s463
          %s466 = ssub.s32 2048, 2048
          %467 = vsyncadd %s461, %s466
          %s468 = smul.addr %s32, 16
          %s469 = smul.addr %s468, 128
          %s470 = scalar_lea.hbm %s0, %s469
          %s471 = sshll.u32 %s464, 4
          %s472 = int_to_ptr.vmem [resolvable:$true] %s471
          %477 = dma.hbm_to_vmem [thread:$0]  %s470, 2048, %s472, %s461, 128, 128, 8
        $region68: #{tpu_custom_call.1} parent=63 // pred_fallthru
          _
      $region64: #{tpu_custom_call.1} parent=5 // pred_fallthru
        _
      %p478 = scmp.le.s32.totalorder 1, %s32
      %p479 = scmp.lt.s32.totalorder %s32, 3
      %p480 = pnand %p478, %p479
      %p481 = pneg %p480
      // Predicated region
      $region69: #{tpu_custom_call.1} parent=5 // pred_check
        _
      $region70: #{tpu_custom_call.1} parent=5 // pred_check_branch
        %483 = sbr.rel (%p480) target = $region72
      $region71: #{tpu_custom_call.1} parent=5 // pred_region
        %s484 = ssub.s32 %s32, 1
        %s485 = sand.u32 %s45, 1
        %s486 = scalar_lea.sflag [#allocation3], %s485
        %s487 = sand.u32 %s45, 1
        %s488 = smul.addr %s487, 128
        %s489 = scalar_lea.vmem [#allocation2], %s488
        // Predicated region
        $region73: #{tpu_custom_call.1} parent=71 // pred_check
          %p490 = pneg %p58
        $region74: #{tpu_custom_call.1} parent=71 // pred_check_branch
          %492 = sbr.rel (%p490) target = $region76
        $region75: #{tpu_custom_call.1} parent=71 // pred_region
          %493 = dma.done %s486, 2048
        $region76: #{tpu_custom_call.1} parent=71 // pred_fallthru
          _
        // Predicated region
        $region77: #{tpu_custom_call.1} parent=71 // pred_check
          %p494 = pneg %p79
        $region78: #{tpu_custom_call.1} parent=71 // pred_check_branch
          %496 = sbr.rel (%p494) target = $region80
        $region79: #{tpu_custom_call.1} parent=71 // pred_region
          %497 = dma.done [#allocation6], 3072
        $region80: #{tpu_custom_call.1} parent=71 // pred_fallthru
          _
        // Predicated region
        $region81: #{tpu_custom_call.1} parent=71 // pred_check
          %p498 = pneg %p121
        $region82: #{tpu_custom_call.1} parent=71 // pred_check_branch
          %500 = sbr.rel (%p498) target = $region84
        $region83: #{tpu_custom_call.1} parent=71 // pred_region
          %501 = dma.done [#allocation6], 1024
        $region84: #{tpu_custom_call.1} parent=71 // pred_fallthru
          _
        // Predicated region
        $region85: #{tpu_custom_call.1} parent=71 // pred_check
          %p502 = pneg %p205
        $region86: #{tpu_custom_call.1} parent=71 // pred_check_branch
          %504 = sbr.rel (%p502) target = $region88
        $region87: #{tpu_custom_call.1} parent=71 // pred_region
          %505 = dma.done [#allocation9], 2048
        $region88: #{tpu_custom_call.1} parent=71 // pred_fallthru
          _
        // Predicated region
        $region89: #{tpu_custom_call.1} parent=71 // pred_check
          %p506 = pneg %p247
        $region90: #{tpu_custom_call.1} parent=71 // pred_check_branch
          %508 = sbr.rel (%p506) target = $region92
        $region91: #{tpu_custom_call.1} parent=71 // pred_region
          %509 = dma.done [#allocation9], 2048
        $region92: #{tpu_custom_call.1} parent=71 // pred_fallthru
          _
        %s510 = sand.u32 %s45, 1
        %s511 = scalar_lea.sflag [#allocation3], %s510
        %s512 = sand.u32 %s45, 1
        %s513 = smul.addr %s512, 128
        %s514 = scalar_lea.vmem [#allocation2], %s513
        %p515 = pneg %p58
        %p516 = pneg %p55
        %p517 = pneg %p79
        %p518 = pneg %p76
        %p519 = pneg %p100
        %p520 = pneg %p97
        %p521 = pneg %p121
        %p522 = pneg %p118
        %p523 = pneg %p142
        %p524 = pneg %p139
        %p525 = pneg %p163
        %p526 = pneg %p160
        %p527 = pneg %p184
        %p528 = pneg %p181
        %p529 = pneg %p205
        %p530 = pneg %p202
        %p531 = pneg %p226
        %p532 = pneg %p223
        %p533 = pneg %p247
        %p534 = pneg %p244
        %p535 = pneg %p268
        %p536 = pneg %p265
        %p537 = pneg %p289
        %p538 = pneg %p286
        %p539 = pneg %p310
        %p540 = pneg %p307
        %p541 = pneg %p336
        %p542 = pneg %p333
        %s543 = sand.u32 %s323, 1
        %s544 = scalar_lea.sflag [#allocation4], %s543
        %s545 = sand.u32 %s323, 1
        %s546 = smul.addr %s545, 128
        %s547 = scalar_lea.vmem [#allocation11], %s546
        %p548 = pneg %p362
        %p549 = pneg %p359
        %s550 = sand.u32 %s349, 1
        %s551 = scalar_lea.sflag [#allocation13], %s550
        %s552 = sand.u32 %s349, 1
        %s553 = smul.addr %s552, 512
        %s554 = scalar_lea.vmem [#allocation12], %s553
        %v556 = vld [vmem:[%s489] sm:$0xff]
        %v557 = vld [vmem:[%s489 + $0x8] sm:$0xff]
        %v558 = vld [vmem:[%s489 + $0x10] sm:$0xff]
        %v559 = vld [vmem:[%s489 + $0x18] sm:$0xff]
        %v560 = vld [vmem:[%s489 + $0x20] sm:$0xff]
        %v561 = vld [vmem:[%s489 + $0x28] sm:$0xff]
        %v562 = vld [vmem:[%s489 + $0x30] sm:$0xff]
        %v563 = vld [vmem:[%s489 + $0x38] sm:$0xff]
        %v564 = vld [vmem:[%s489 + $0x40] sm:$0xff]
        %v565 = vld [vmem:[%s489 + $0x48] sm:$0xff]
        %v566 = vld [vmem:[%s489 + $0x50] sm:$0xff]
        %v567 = vld [vmem:[%s489 + $0x58] sm:$0xff]
        %v568 = vld [vmem:[%s489 + $0x60] sm:$0xff]
        %v569 = vld [vmem:[%s489 + $0x68] sm:$0xff]
        %v570 = vld [vmem:[%s489 + $0x70] sm:$0xff]
        %v571 = vld [vmem:[%s489 + $0x78] sm:$0xff]
        %v572 = vpack.c.bf16 %v557, %v556
        %v573 = vpack.c.bf16 %v559, %v558
        %v574 = vpack.c.bf16 %v561, %v560
        %v575 = vpack.c.bf16 %v563, %v562
        %v576 = vpack.c.bf16 %v565, %v564
        %v577 = vpack.c.bf16 %v567, %v566
        %v578 = vpack.c.bf16 %v569, %v568
        %v579 = vpack.c.bf16 %v571, %v570
        %v580 = vld [vmem:[#allocation5] sm:$0xff]
        %v581 = vld [vmem:[#allocation5 + $0x8] sm:$0xf]
        %v582 = vld [vmem:[#allocation5 + $0xc] sm:$0xff]
        %v583 = vld [vmem:[#allocation5 + $0x14] sm:$0xf]
        %v584 = vld [vmem:[#allocation5 + $0x18] sm:$0xff]
        %v585 = vld [vmem:[#allocation5 + $0x20] sm:$0xf]
        %v586 = vld [vmem:[#allocation5 + $0x24] sm:$0xff]
        %v587 = vld [vmem:[#allocation5 + $0x2c] sm:$0xf]
        %v588 = vld [vmem:[#allocation5 + $0x30] sm:$0xff]
        %v589 = vld [vmem:[#allocation5 + $0x38] sm:$0xf]
        %v590 = vld [vmem:[#allocation5 + $0x3c] sm:$0xff]
        %v591 = vld [vmem:[#allocation5 + $0x44] sm:$0xf]
        %v592 = vld [vmem:[#allocation5 + $0x48] sm:$0xff]
        %v593 = vld [vmem:[#allocation5 + $0x50] sm:$0xf]
        %v594 = vld [vmem:[#allocation5 + $0x54] sm:$0xff]
        %v595 = vld [vmem:[#allocation5 + $0x5c] sm:$0xf]
        %v596 = vld [vmem:[#allocation5 + $0x60] sm:$0xff]
        %v597 = vld [vmem:[#allocation5 + $0x68] sm:$0xf]
        %v598 = vld [vmem:[#allocation5 + $0x6c] sm:$0xff]
        %v599 = vld [vmem:[#allocation5 + $0x74] sm:$0xf]
        %v600 = vld [vmem:[#allocation5 + $0x78] sm:$0xff]
        %v601 = vld [vmem:[#allocation5 + $0x80] sm:$0xf]
        %v602 = vld [vmem:[#allocation5 + $0x84] sm:$0xff]
        %v603 = vld [vmem:[#allocation5 + $0x8c] sm:$0xf]
        %v604 = vld [vmem:[#allocation5 + $0x90] sm:$0xff]
        %v605 = vld [vmem:[#allocation5 + $0x98] sm:$0xf]
        %v606 = vld [vmem:[#allocation5 + $0x9c] sm:$0xff]
        %v607 = vld [vmem:[#allocation5 + $0xa4] sm:$0xf]
        %v608 = vld [vmem:[#allocation5 + $0xa8] sm:$0xff]
        %v609 = vld [vmem:[#allocation5 + $0xb0] sm:$0xf]
        %v610 = vld [vmem:[#allocation5 + $0xb4] sm:$0xff]
        %v611 = vld [vmem:[#allocation5 + $0xbc] sm:$0xf]
        %v612 = vld [vmem:[%s2] sm:$0x7]
        %v614 = vlaneseq
        %v615 = vshrl.u32 %v614, 7
        %v616 = vsub.s32 0, %v615
        %v617 = vrot.slane %v612, %v616
        %v618 = vlaneseq
        %v619 = vshrl.u32 %v618, 7
        %v620 = vsub.s32 1, %v619
        %v621 = vrot.slane %v612, %v620
        %v622 = vlaneseq
        %v623 = vshrl.u32 %v622, 7
        %v624 = vsub.s32 2, %v623
        %v625 = vrot.slane %v612, %v624
        %v661 = vunpack.c.l.b16 %v580
        %v662 = vunpack.c.h.b16 %v580
        %v663 = vunpack.c.l.b16 %v581
        %v664 = vunpack.c.l.b16 %v582
        %v665 = vunpack.c.h.b16 %v582
        %v666 = vunpack.c.l.b16 %v583
        %v667 = vunpack.c.l.b16 %v584
        %v668 = vunpack.c.h.b16 %v584
        %v669 = vunpack.c.l.b16 %v585
        %v670 = vunpack.c.l.b16 %v586
        %v671 = vunpack.c.h.b16 %v586
        %v672 = vunpack.c.l.b16 %v587
        %v673 = vunpack.c.l.b16 %v588
        %v674 = vunpack.c.h.b16 %v588
        %v675 = vunpack.c.l.b16 %v589
        %v676 = vunpack.c.l.b16 %v590
        %v677 = vunpack.c.h.b16 %v590
        %v678 = vunpack.c.l.b16 %v591
        %v679 = vunpack.c.l.b16 %v592
        %v680 = vunpack.c.h.b16 %v592
        %v681 = vunpack.c.l.b16 %v593
        %v682 = vunpack.c.l.b16 %v594
        %v683 = vunpack.c.h.b16 %v594
        %v684 = vunpack.c.l.b16 %v595
        %v685 = vunpack.c.l.b16 %v596
        %v686 = vunpack.c.h.b16 %v596
        %v687 = vunpack.c.l.b16 %v597
        %v688 = vunpack.c.l.b16 %v598
        %v689 = vunpack.c.h.b16 %v598
        %v690 = vunpack.c.l.b16 %v599
        %v691 = vunpack.c.l.b16 %v600
        %v692 = vunpack.c.h.b16 %v600
        %v693 = vunpack.c.l.b16 %v601
        %v694 = vunpack.c.l.b16 %v602
        %v695 = vunpack.c.h.b16 %v602
        %v696 = vunpack.c.l.b16 %v603
        %v697 = vunpack.c.l.b16 %v604
        %v698 = vunpack.c.h.b16 %v604
        %v699 = vunpack.c.l.b16 %v605
        %v700 = vunpack.c.l.b16 %v606
        %v701 = vunpack.c.h.b16 %v606
        %v702 = vunpack.c.l.b16 %v607
        %v703 = vunpack.c.l.b16 %v608
        %v704 = vunpack.c.h.b16 %v608
        %v705 = vunpack.c.l.b16 %v609
        %v706 = vunpack.c.l.b16 %v610
        %v707 = vunpack.c.h.b16 %v610
        %v708 = vunpack.c.l.b16 %v611
        %v709 = vpack.c.b16 %v664, %v661
        %v710 = vpack.c.b16 %v665, %v662
        %v711 = vpack.c.b16 %v666, %v663
        %v712 = vpack.c.b16 %v670, %v667
        %v713 = vpack.c.b16 %v671, %v668
        %v714 = vpack.c.b16 %v672, %v669
        %v715 = vpack.c.b16 %v676, %v673
        %v716 = vpack.c.b16 %v677, %v674
        %v717 = vpack.c.b16 %v678, %v675
        %v718 = vpack.c.b16 %v682, %v679
        %v719 = vpack.c.b16 %v683, %v680
        %v720 = vpack.c.b16 %v684, %v681
        %v721 = vpack.c.b16 %v688, %v685
        %v722 = vpack.c.b16 %v689, %v686
        %v723 = vpack.c.b16 %v690, %v687
        %v724 = vpack.c.b16 %v694, %v691
        %v725 = vpack.c.b16 %v695, %v692
        %v726 = vpack.c.b16 %v696, %v693
        %v727 = vpack.c.b16 %v700, %v697
        %v728 = vpack.c.b16 %v701, %v698
        %v729 = vpack.c.b16 %v702, %v699
        %v730 = vpack.c.b16 %v706, %v703
        %v731 = vpack.c.b16 %v707, %v704
        %v732 = vpack.c.b16 %v708, %v705
        %757 = vmatprep.subr.bf16.mxu0 %v710
        %758 = vmatpush1.bf16.msra.mxu0 %v709
        %759 = vmatprep.subr.bf16.mxu0 %v713
        %760 = vmatpush1.bf16.msra.mxu0 %v712
        %761 = vmatprep.subr.bf16.mxu0 %v716
        %762 = vmatpush1.bf16.msra.mxu0 %v715
        %763 = vmatprep.subr.bf16.mxu0 %v719
        %764 = vmatpush1.bf16.msra.mxu0 %v718
        %765 = vmatprep.subr.bf16.mxu0 %v722
        %766 = vmatpush1.bf16.msra.mxu0 %v721
        %767 = vmatprep.subr.bf16.mxu0 %v725
        %768 = vmatpush1.bf16.msra.mxu0 %v724
        %769 = vmatprep.subr.bf16.mxu0 %v728
        %770 = vmatpush1.bf16.msra.mxu0 %v727
        %771 = vmatprep.subr.bf16.mxu0 %v731
        %772 = vmatpush1.bf16.msra.mxu0 %v730
        %773 = vmatprep.subr.bf16.mxu0 0
        %774 = vmatpush1.bf16.msra.mxu0 0
        %775 = vmatprep.subr.bf16.mxu0 0
        %776 = vmatpush1.bf16.msra.mxu0 0
        %777 = vmatprep.subr.bf16.mxu0 0
        %778 = vmatpush1.bf16.msra.mxu0 0
        %779 = vmatprep.subr.bf16.mxu0 0
        %780 = vmatpush1.bf16.msra.mxu0 0
        %781 = vmatprep.subr.bf16.mxu0 0
        %782 = vmatpush1.bf16.msra.mxu0 0
        %783 = vmatprep.subr.bf16.mxu0 0
        %784 = vmatpush1.bf16.msra.mxu0 0
        %785 = vmatprep.subr.bf16.mxu0 0
        %786 = vmatpush1.bf16.msra.mxu0 0
        %787 = vmatprep.subr.bf16.mxu0 0
        %788 = vmatpush1.bf16.msra.mxu0 0
        %789 = vmatprep.mubr.bf16.mxu0 0
        %790 = vmatmul.mubr.bf16.gmra.mrb[0].mxu0 %v572
        %v791 = vpop.f32.mrb[0].mxu0
        %v792 = vadd.f32 %v617, %v791
        %v793 = vpop.f32.mrb[0].mxu0
        %v794 = vadd.f32 %v621, %v793
        %v795 = vpop.f32.mrb[0].mxu0
        %v796 = vadd.f32 %v617, %v795
        %v797 = vpop.f32.mrb[0].mxu0
        %v798 = vadd.f32 %v621, %v797
        %799 = vmatprep.mubr.bf16.mxu0 0
        %800 = vmatmul.mubr.bf16.gmra.mrb[0].mxu0 %v573
        %v801 = vpop.f32.mrb[0].mxu0
        %v802 = vadd.f32 %v617, %v801
        %v803 = vpop.f32.mrb[0].mxu0
        %v804 = vadd.f32 %v621, %v803
        %v805 = vpop.f32.mrb[0].mxu0
        %v806 = vadd.f32 %v617, %v805
        %v807 = vpop.f32.mrb[0].mxu0
        %v808 = vadd.f32 %v621, %v807
        %809 = vmatprep.mubr.bf16.mxu0 0
        %810 = vmatmul.mubr.bf16.gmra.mrb[0].mxu0 %v574
        %v811 = vpop.f32.mrb[0].mxu0
        %v812 = vadd.f32 %v617, %v811
        %v813 = vpop.f32.mrb[0].mxu0
        %v814 = vadd.f32 %v621, %v813
        %v815 = vpop.f32.mrb[0].mxu0
        %v816 = vadd.f32 %v617, %v815
        %v817 = vpop.f32.mrb[0].mxu0
        %v818 = vadd.f32 %v621, %v817
        %819 = vmatprep.mubr.bf16.mxu0 0
        %820 = vmatmul.mubr.bf16.gmra.mrb[0].mxu0 %v575
        %v821 = vpop.f32.mrb[0].mxu0
        %v822 = vadd.f32 %v617, %v821
        %v823 = vpop.f32.mrb[0].mxu0
        %v824 = vadd.f32 %v621, %v823
        %v825 = vpop.f32.mrb[0].mxu0
        %v826 = vadd.f32 %v617, %v825
        %v827 = vpop.f32.mrb[0].mxu0
        %v828 = vadd.f32 %v621, %v827
        %829 = vmatprep.mubr.bf16.mxu0 0
        %830 = vmatmul.mubr.bf16.gmra.mrb[0].mxu0 %v576
        %v831 = vpop.f32.mrb[0].mxu0
        %v832 = vadd.f32 %v617, %v831
        %v833 = vpop.f32.mrb[0].mxu0
        %v834 = vadd.f32 %v621, %v833
        %v835 = vpop.f32.mrb[0].mxu0
        %v836 = vadd.f32 %v617, %v835
        %v837 = vpop.f32.mrb[0].mxu0
        %v838 = vadd.f32 %v621, %v837
        %839 = vmatprep.mubr.bf16.mxu0 0
        %840 = vmatmul.mubr.bf16.gmra.mrb[0].mxu0 %v577
        %v841 = vpop.f32.mrb[0].mxu0
        %v842 = vadd.f32 %v617, %v841
        %v843 = vpop.f32.mrb[0].mxu0
        %v844 = vadd.f32 %v621, %v843
        %v845 = vpop.f32.mrb[0].mxu0
        %v846 = vadd.f32 %v617, %v845
        %v847 = vpop.f32.mrb[0].mxu0
        %v848 = vadd.f32 %v621, %v847
        %849 = vmatprep.mubr.bf16.mxu0 0
        %850 = vmatmul.mubr.bf16.gmra.mrb[0].mxu0 %v578
        %v851 = vpop.f32.mrb[0].mxu0
        %v852 = vadd.f32 %v617, %v851
        %v853 = vpop.f32.mrb[0].mxu0
        %v854 = vadd.f32 %v621, %v853
        %v855 = vpop.f32.mrb[0].mxu0
        %v856 = vadd.f32 %v617, %v855
        %v857 = vpop.f32.mrb[0].mxu0
        %v858 = vadd.f32 %v621, %v857
        %859 = vmatprep.mubr.bf16.mxu0 0
        %860 = vmatmul.mubr.bf16.gmra.mrb[0].mxu0 %v579
        %v861 = vpop.f32.mrb[0].mxu0
        %v862 = vadd.f32 %v617, %v861
        %v863 = vpop.f32.mrb[0].mxu0
        %v864 = vadd.f32 %v621, %v863
        %v865 = vpop.f32.mrb[0].mxu0
        %v866 = vadd.f32 %v617, %v865
        %v867 = vpop.f32.mrb[0].mxu0
        %v868 = vadd.f32 %v621, %v867
        %869 = vdwg.mxu0
        %870 = vmatprep.subr.bf16.mxu0 0
        %871 = vmatpush1.bf16.msra.mxu0 %v711
        %872 = vmatprep.subr.bf16.mxu0 0
        %873 = vmatpush1.bf16.msra.mxu0 %v714
        %874 = vmatprep.subr.bf16.mxu0 0
        %875 = vmatpush1.bf16.msra.mxu0 %v717
        %876 = vmatprep.subr.bf16.mxu0 0
        %877 = vmatpush1.bf16.msra.mxu0 %v720
        %878 = vmatprep.subr.bf16.mxu0 0
        %879 = vmatpush1.bf16.msra.mxu0 %v723
        %880 = vmatprep.subr.bf16.mxu0 0
        %881 = vmatpush1.bf16.msra.mxu0 %v726
        %882 = vmatprep.subr.bf16.mxu0 0
        %883 = vmatpush1.bf16.msra.mxu0 %v729
        %884 = vmatprep.subr.bf16.mxu0 0
        %885 = vmatpush1.bf16.msra.mxu0 %v732
        %886 = vmatprep.subr.bf16.mxu0 0
        %887 = vmatpush1.bf16.msra.mxu0 0
        %888 = vmatprep.subr.bf16.mxu0 0
        %889 = vmatpush1.bf16.msra.mxu0 0
        %890 = vmatprep.subr.bf16.mxu0 0
        %891 = vmatpush1.bf16.msra.mxu0 0
        %892 = vmatprep.subr.bf16.mxu0 0
        %893 = vmatpush1.bf16.msra.mxu0 0
        %894 = vmatprep.subr.bf16.mxu0 0
        %895 = vmatpush1.bf16.msra.mxu0 0
        %896 = vmatprep.subr.bf16.mxu0 0
        %897 = vmatpush1.bf16.msra.mxu0 0
        %898 = vmatprep.subr.bf16.mxu0 0
        %899 = vmatpush1.bf16.msra.mxu0 0
        %900 = vmatprep.subr.bf16.mxu0 0
        %901 = vmatpush1.bf16.msra.mxu0 0
        %902 = vmatprep.mubr.bf16.mxu0 0
        %903 = vmatmul.mubr.bf16.gmra.mrb[0].mxu0 %v572
        %v904 = vpop.f32.mrb[0].mxu0
        %v905 = vadd.f32 %v625, %v904
        %v906 = vpop.f32.mrb[0].mxu0
        %v907 = vpop.f32.mrb[0].mxu0
        %v908 = vadd.f32 %v625, %v907
        %v909 = vpop.f32.mrb[0].mxu0
        %910 = vmatprep.mubr.bf16.mxu0 0
        %911 = vmatmul.mubr.bf16.gmra.mrb[0].mxu0 %v573
        %v912 = vpop.f32.mrb[0].mxu0
        %v913 = vadd.f32 %v625, %v912
        %v914 = vpop.f32.mrb[0].mxu0
        %v915 = vpop.f32.mrb[0].mxu0
        %v916 = vadd.f32 %v625, %v915
        %v917 = vpop.f32.mrb[0].mxu0
        %918 = vmatprep.mubr.bf16.mxu0 0
        %919 = vmatmul.mubr.bf16.gmra.mrb[0].mxu0 %v574
        %v920 = vpop.f32.mrb[0].mxu0
        %v921 = vadd.f32 %v625, %v920
        %v922 = vpop.f32.mrb[0].mxu0
        %v923 = vpop.f32.mrb[0].mxu0
        %v924 = vadd.f32 %v625, %v923
        %v925 = vpop.f32.mrb[0].mxu0
        %926 = vmatprep.mubr.bf16.mxu0 0
        %927 = vmatmul.mubr.bf16.gmra.mrb[0].mxu0 %v575
        %v928 = vpop.f32.mrb[0].mxu0
        %v929 = vadd.f32 %v625, %v928
        %v930 = vpop.f32.mrb[0].mxu0
        %v931 = vpop.f32.mrb[0].mxu0
        %v932 = vadd.f32 %v625, %v931
        %v933 = vpop.f32.mrb[0].mxu0
        %934 = vmatprep.mubr.bf16.mxu0 0
        %935 = vmatmul.mubr.bf16.gmra.mrb[0].mxu0 %v576
        %v936 = vpop.f32.mrb[0].mxu0
        %v937 = vadd.f32 %v625, %v936
        %v938 = vpop.f32.mrb[0].mxu0
        %v939 = vpop.f32.mrb[0].mxu0
        %v940 = vadd.f32 %v625, %v939
        %v941 = vpop.f32.mrb[0].mxu0
        %942 = vmatprep.mubr.bf16.mxu0 0
        %943 = vmatmul.mubr.bf16.gmra.mrb[0].mxu0 %v577
        %v944 = vpop.f32.mrb[0].mxu0
        %v945 = vadd.f32 %v625, %v944
        %v946 = vpop.f32.mrb[0].mxu0
        %v947 = vpop.f32.mrb[0].mxu0
        %v948 = vadd.f32 %v625, %v947
        %v949 = vpop.f32.mrb[0].mxu0
        %950 = vmatprep.mubr.bf16.mxu0 0
        %951 = vmatmul.mubr.bf16.gmra.mrb[0].mxu0 %v578
        %v952 = vpop.f32.mrb[0].mxu0
        %v953 = vadd.f32 %v625, %v952
        %v954 = vpop.f32.mrb[0].mxu0
        %v955 = vpop.f32.mrb[0].mxu0
        %v956 = vadd.f32 %v625, %v955
        %v957 = vpop.f32.mrb[0].mxu0
        %958 = vmatprep.mubr.bf16.mxu0 0
        %959 = vmatmul.mubr.bf16.gmra.mrb[0].mxu0 %v579
        %v960 = vpop.f32.mrb[0].mxu0
        %v961 = vadd.f32 %v625, %v960
        %v962 = vpop.f32.mrb[0].mxu0
        %v963 = vpop.f32.mrb[0].mxu0
        %v964 = vadd.f32 %v625, %v963
        %v965 = vpop.f32.mrb[0].mxu0
        %966 = vdwg.mxu0
        %v967 = vpack.c.bf16 %v796, %v792
        %v968 = vpack.c.bf16 %v798, %v794
        %v969 = vpack.c.bf16 %v908, %v905
        %v970 = vpack.c.bf16 %v806, %v802
        %v971 = vpack.c.bf16 %v808, %v804
        %v972 = vpack.c.bf16 %v916, %v913
        %v973 = vpack.c.bf16 %v816, %v812
        %v974 = vpack.c.bf16 %v818, %v814
        %v975 = vpack.c.bf16 %v924, %v921
        %v976 = vpack.c.bf16 %v826, %v822
        %v977 = vpack.c.bf16 %v828, %v824
        %v978 = vpack.c.bf16 %v932, %v929
        %v979 = vpack.c.bf16 %v836, %v832
        %v980 = vpack.c.bf16 %v838, %v834
        %v981 = vpack.c.bf16 %v940, %v937
        %v982 = vpack.c.bf16 %v846, %v842
        %v983 = vpack.c.bf16 %v848, %v844
        %v984 = vpack.c.bf16 %v948, %v945
        %v985 = vpack.c.bf16 %v856, %v852
        %v986 = vpack.c.bf16 %v858, %v854
        %v987 = vpack.c.bf16 %v956, %v953
        %v988 = vpack.c.bf16 %v866, %v862
        %v989 = vpack.c.bf16 %v868, %v864
        %v990 = vpack.c.bf16 %v964, %v961
        %999 = vrot.lane.b32.xlu0 %v967, 96
        %v1000 = vpop.permute.xlu0 %999
        %1001 = vrot.lane.b32.xlu0 %v970, 96
        %v1002 = vpop.permute.xlu0 %1001
        %1003 = vrot.lane.b32.xlu0 %v973, 96
        %v1004 = vpop.permute.xlu0 %1003
        %1005 = vrot.lane.b32.xlu0 %v976, 96
        %v1006 = vpop.permute.xlu0 %1005
        %1007 = vrot.lane.b32.xlu0 %v979, 96
        %v1008 = vpop.permute.xlu0 %1007
        %1009 = vrot.lane.b32.xlu0 %v982, 96
        %v1010 = vpop.permute.xlu0 %1009
        %1011 = vrot.lane.b32.xlu0 %v985, 96
        %v1012 = vpop.permute.xlu0 %1011
        %1013 = vrot.lane.b32.xlu0 %v988, 96
        %v1014 = vpop.permute.xlu0 %1013
        %1015 = vrot.lane.b32.xlu0 %v967, 64
        %v1016 = vpop.permute.xlu0 %1015
        %1017 = vrot.lane.b32.xlu0 %v970, 64
        %v1018 = vpop.permute.xlu0 %1017
        %1019 = vrot.lane.b32.xlu0 %v973, 64
        %v1020 = vpop.permute.xlu0 %1019
        %1021 = vrot.lane.b32.xlu0 %v976, 64
        %v1022 = vpop.permute.xlu0 %1021
        %1023 = vrot.lane.b32.xlu0 %v979, 64
        %v1024 = vpop.permute.xlu0 %1023
        %1025 = vrot.lane.b32.xlu0 %v982, 64
        %v1026 = vpop.permute.xlu0 %1025
        %1027 = vrot.lane.b32.xlu0 %v985, 64
        %v1028 = vpop.permute.xlu0 %1027
        %1029 = vrot.lane.b32.xlu0 %v988, 64
        %v1030 = vpop.permute.xlu0 %1029
        %1031 = vrot.lane.b32.xlu0 %v967, 32
        %v1032 = vpop.permute.xlu0 %1031
        %1033 = vrot.lane.b32.xlu0 %v970, 32
        %v1034 = vpop.permute.xlu0 %1033
        %1035 = vrot.lane.b32.xlu0 %v973, 32
        %v1036 = vpop.permute.xlu0 %1035
        %1037 = vrot.lane.b32.xlu0 %v976, 32
        %v1038 = vpop.permute.xlu0 %1037
        %1039 = vrot.lane.b32.xlu0 %v979, 32
        %v1040 = vpop.permute.xlu0 %1039
        %1041 = vrot.lane.b32.xlu0 %v982, 32
        %v1042 = vpop.permute.xlu0 %1041
        %1043 = vrot.lane.b32.xlu0 %v985, 32
        %v1044 = vpop.permute.xlu0 %1043
        %1045 = vrot.lane.b32.xlu0 %v988, 32
        %v1046 = vpop.permute.xlu0 %1045
        %1055 = vrot.lane.b32.xlu0 %v968, 96
        %v1056 = vpop.permute.xlu0 %1055
        %1057 = vrot.lane.b32.xlu0 %v971, 96
        %v1058 = vpop.permute.xlu0 %1057
        %1059 = vrot.lane.b32.xlu0 %v974, 96
        %v1060 = vpop.permute.xlu0 %1059
        %1061 = vrot.lane.b32.xlu0 %v977, 96
        %v1062 = vpop.permute.xlu0 %1061
        %1063 = vrot.lane.b32.xlu0 %v980, 96
        %v1064 = vpop.permute.xlu0 %1063
        %1065 = vrot.lane.b32.xlu0 %v983, 96
        %v1066 = vpop.permute.xlu0 %1065
        %1067 = vrot.lane.b32.xlu0 %v986, 96
        %v1068 = vpop.permute.xlu0 %1067
        %1069 = vrot.lane.b32.xlu0 %v989, 96
        %v1070 = vpop.permute.xlu0 %1069
        %1071 = vrot.lane.b32.xlu0 %v968, 64
        %v1072 = vpop.permute.xlu0 %1071
        %1073 = vrot.lane.b32.xlu0 %v971, 64
        %v1074 = vpop.permute.xlu0 %1073
        %1075 = vrot.lane.b32.xlu0 %v974, 64
        %v1076 = vpop.permute.xlu0 %1075
        %1077 = vrot.lane.b32.xlu0 %v977, 64
        %v1078 = vpop.permute.xlu0 %1077
        %1079 = vrot.lane.b32.xlu0 %v980, 64
        %v1080 = vpop.permute.xlu0 %1079
        %1081 = vrot.lane.b32.xlu0 %v983, 64
        %v1082 = vpop.permute.xlu0 %1081
        %1083 = vrot.lane.b32.xlu0 %v986, 64
        %v1084 = vpop.permute.xlu0 %1083
        %1085 = vrot.lane.b32.xlu0 %v989, 64
        %v1086 = vpop.permute.xlu0 %1085
        %1087 = vrot.lane.b32.xlu0 %v968, 32
        %v1088 = vpop.permute.xlu0 %1087
        %1089 = vrot.lane.b32.xlu0 %v971, 32
        %v1090 = vpop.permute.xlu0 %1089
        %1091 = vrot.lane.b32.xlu0 %v974, 32
        %v1092 = vpop.permute.xlu0 %1091
        %1093 = vrot.lane.b32.xlu0 %v977, 32
        %v1094 = vpop.permute.xlu0 %1093
        %1095 = vrot.lane.b32.xlu0 %v980, 32
        %v1096 = vpop.permute.xlu0 %1095
        %1097 = vrot.lane.b32.xlu0 %v983, 32
        %v1098 = vpop.permute.xlu0 %1097
        %1099 = vrot.lane.b32.xlu0 %v986, 32
        %v1100 = vpop.permute.xlu0 %1099
        %1101 = vrot.lane.b32.xlu0 %v989, 32
        %v1102 = vpop.permute.xlu0 %1101
        %1111 = vrot.lane.b32.xlu0 %v969, 96
        %v1112 = vpop.permute.xlu0 %1111
        %1113 = vrot.lane.b32.xlu0 %v972, 96
        %v1114 = vpop.permute.xlu0 %1113
        %1115 = vrot.lane.b32.xlu0 %v975, 96
        %v1116 = vpop.permute.xlu0 %1115
        %1117 = vrot.lane.b32.xlu0 %v978, 96
        %v1118 = vpop.permute.xlu0 %1117
        %1119 = vrot.lane.b32.xlu0 %v981, 96
        %v1120 = vpop.permute.xlu0 %1119
        %1121 = vrot.lane.b32.xlu0 %v984, 96
        %v1122 = vpop.permute.xlu0 %1121
        %1123 = vrot.lane.b32.xlu0 %v987, 96
        %v1124 = vpop.permute.xlu0 %1123
        %1125 = vrot.lane.b32.xlu0 %v990, 96
        %v1126 = vpop.permute.xlu0 %1125
        %1135 = vrot.lane.b32.xlu0 %v969, 64
        %v1136 = vpop.permute.xlu0 %1135
        %1137 = vrot.lane.b32.xlu0 %v972, 64
        %v1138 = vpop.permute.xlu0 %1137
        %1139 = vrot.lane.b32.xlu0 %v975, 64
        %v1140 = vpop.permute.xlu0 %1139
        %1141 = vrot.lane.b32.xlu0 %v978, 64
        %v1142 = vpop.permute.xlu0 %1141
        %1143 = vrot.lane.b32.xlu0 %v981, 64
        %v1144 = vpop.permute.xlu0 %1143
        %1145 = vrot.lane.b32.xlu0 %v984, 64
        %v1146 = vpop.permute.xlu0 %1145
        %1147 = vrot.lane.b32.xlu0 %v987, 64
        %v1148 = vpop.permute.xlu0 %1147
        %1149 = vrot.lane.b32.xlu0 %v990, 64
        %v1150 = vpop.permute.xlu0 %1149
        %1159 = vrot.lane.b32.xlu0 %v969, 32
        %v1160 = vpop.permute.xlu0 %1159
        %1161 = vrot.lane.b32.xlu0 %v972, 32
        %v1162 = vpop.permute.xlu0 %1161
        %1163 = vrot.lane.b32.xlu0 %v975, 32
        %v1164 = vpop.permute.xlu0 %1163
        %1165 = vrot.lane.b32.xlu0 %v978, 32
        %v1166 = vpop.permute.xlu0 %1165
        %1167 = vrot.lane.b32.xlu0 %v981, 32
        %v1168 = vpop.permute.xlu0 %1167
        %1169 = vrot.lane.b32.xlu0 %v984, 32
        %v1170 = vpop.permute.xlu0 %1169
        %1171 = vrot.lane.b32.xlu0 %v987, 32
        %v1172 = vpop.permute.xlu0 %1171
        %1173 = vrot.lane.b32.xlu0 %v990, 32
        %v1174 = vpop.permute.xlu0 %1173
        %v1183 = vlaneseq
        %v1184 = vshrl.u32 %v1183, 7
        %v1185 = vadd.s32 %v1184, 8
        %v1186 = vadd.s32 %v1184, 16
        %v1187 = vadd.s32 %v1184, 24
        %v1188 = vadd.s32 %v1184, 32
        %v1189 = vadd.s32 %v1184, 40
        %v1190 = vadd.s32 %v1184, 48
        %v1191 = vadd.s32 %v1184, 56
        %v1192 = vadd.s32 %v1184, 64
        %v1193 = vadd.s32 %v1184, 72
        %v1194 = vadd.s32 %v1184, 80
        %v1195 = vadd.s32 %v1184, 88
        %v1196 = vadd.s32 %v1184, 96
        %v1197 = vadd.s32 %v1184, 104
        %v1198 = vadd.s32 %v1184, 112
        %v1199 = vadd.s32 %v1184, 120
        %v1200 = vlaneseq
        %v1201 = vand.u32 %v1200, 127
        %vm1202 = vcmp.ge.s32.totalorder %v1184, %v1201
        %vm1203 = vcmp.ge.s32.totalorder %v1185, %v1201
        %vm1204 = vcmp.ge.s32.totalorder %v1186, %v1201
        %vm1205 = vcmp.ge.s32.totalorder %v1187, %v1201
        %vm1206 = vcmp.ge.s32.totalorder %v1188, %v1201
        %vm1207 = vcmp.ge.s32.totalorder %v1189, %v1201
        %vm1208 = vcmp.ge.s32.totalorder %v1190, %v1201
        %vm1209 = vcmp.ge.s32.totalorder %v1191, %v1201
        %vm1210 = vcmp.ge.s32.totalorder %v1192, %v1201
        %vm1211 = vcmp.ge.s32.totalorder %v1193, %v1201
        %vm1212 = vcmp.ge.s32.totalorder %v1194, %v1201
        %vm1213 = vcmp.ge.s32.totalorder %v1195, %v1201
        %vm1214 = vcmp.ge.s32.totalorder %v1196, %v1201
        %vm1215 = vcmp.ge.s32.totalorder %v1197, %v1201
        %vm1216 = vcmp.ge.s32.totalorder %v1198, %v1201
        %vm1217 = vcmp.ge.s32.totalorder %v1199, %v1201
        %v1218 = vsel %vm1202, 0.0, -1e+30
        %v1219 = vsel %vm1203, 0.0, -1e+30
        %v1220 = vsel %vm1204, 0.0, -1e+30
        %v1221 = vsel %vm1205, 0.0, -1e+30
        %v1222 = vsel %vm1206, 0.0, -1e+30
        %v1223 = vsel %vm1207, 0.0, -1e+30
        %v1224 = vsel %vm1208, 0.0, -1e+30
        %v1225 = vsel %vm1209, 0.0, -1e+30
        %v1226 = vsel %vm1210, 0.0, -1e+30
        %v1227 = vsel %vm1211, 0.0, -1e+30
        %v1228 = vsel %vm1212, 0.0, -1e+30
        %v1229 = vsel %vm1213, 0.0, -1e+30
        %v1230 = vsel %vm1214, 0.0, -1e+30
        %v1231 = vsel %vm1215, 0.0, -1e+30
        %v1232 = vsel %vm1216, 0.0, -1e+30
        %v1233 = vsel %vm1217, 0.0, -1e+30
        %vm1234 = vcmask 261120
        %v1236 = vsel %vm1234, %v967, 0
        %v1239 = vsel %vm1234, %v970, 0
        %v1242 = vsel %vm1234, %v973, 0
        %v1245 = vsel %vm1234, %v976, 0
        %v1248 = vsel %vm1234, %v979, 0
        %v1251 = vsel %vm1234, %v982, 0
        %v1254 = vsel %vm1234, %v985, 0
        %v1257 = vsel %vm1234, %v988, 0
        %v1260 = vsel %vm1234, %v968, 0
        %v1263 = vsel %vm1234, %v971, 0
        %v1266 = vsel %vm1234, %v974, 0
        %v1269 = vsel %vm1234, %v977, 0
        %v1272 = vsel %vm1234, %v980, 0
        %v1275 = vsel %vm1234, %v983, 0
        %v1278 = vsel %vm1234, %v986, 0
        %v1281 = vsel %vm1234, %v989, 0
        %1283 = vmatprep.subr.bf16.mxu0 0
        %1284 = vmatpush1.bf16.xpose.msra.mxu0 %v1260
        %1285 = vmatprep.subr.bf16.mxu0 0
        %1286 = vmatpush1.bf16.xpose.msra.mxu0 %v1263
        %1287 = vmatprep.subr.bf16.mxu0 0
        %1288 = vmatpush1.bf16.xpose.msra.mxu0 %v1266
        %1289 = vmatprep.subr.bf16.mxu0 0
        %1290 = vmatpush1.bf16.xpose.msra.mxu0 %v1269
        %1291 = vmatprep.subr.bf16.mxu0 0
        %1292 = vmatpush1.bf16.xpose.msra.mxu0 %v1272
        %1293 = vmatprep.subr.bf16.mxu0 0
        %1294 = vmatpush1.bf16.xpose.msra.mxu0 %v1275
        %1295 = vmatprep.subr.bf16.mxu0 0
        %1296 = vmatpush1.bf16.xpose.msra.mxu0 %v1278
        %1297 = vmatprep.subr.bf16.mxu0 0
        %1298 = vmatpush1.bf16.xpose.msra.mxu0 %v1281
        %1299 = vmatprep.subr.bf16.mxu0 0
        %1300 = vmatpush1.bf16.xpose.msra.mxu0 0
        %1301 = vmatprep.subr.bf16.mxu0 0
        %1302 = vmatpush1.bf16.xpose.msra.mxu0 0
        %1303 = vmatprep.subr.bf16.mxu0 0
        %1304 = vmatpush1.bf16.xpose.msra.mxu0 0
        %1305 = vmatprep.subr.bf16.mxu0 0
        %1306 = vmatpush1.bf16.xpose.msra.mxu0 0
        %1307 = vmatprep.subr.bf16.mxu0 0
        %1308 = vmatpush1.bf16.xpose.msra.mxu0 0
        %1309 = vmatprep.subr.bf16.mxu0 0
        %1310 = vmatpush1.bf16.xpose.msra.mxu0 0
        %1311 = vmatprep.subr.bf16.mxu0 0
        %1312 = vmatpush1.bf16.xpose.msra.mxu0 0
        %1313 = vmatprep.subr.bf16.mxu0 0
        %1314 = vmatpush1.bf16.xpose.msra.mxu0 0
        %1315 = vmatprep.mubr.bf16.mxu0 0
        %1316 = vmatmul.mubr.bf16.gmra.mrb[0].mxu0 %v1236
        %v1317 = vpop.f32.mrb[0].mxu0
        %v1318 = vadd.f32 0.0, %v1317
        %v1319 = vpop.f32.mrb[0].mxu0
        %v1320 = vpop.f32.mrb[0].mxu0
        %v1321 = vadd.f32 0.0, %v1320
        %v1322 = vpop.f32.mrb[0].mxu0
        %1323 = vmatprep.mubr.bf16.mxu0 0
        %1324 = vmatmul.mubr.bf16.gmra.mrb[0].mxu0 %v1239
        %v1325 = vpop.f32.mrb[0].mxu0
        %v1326 = vadd.f32 0.0, %v1325
        %v1327 = vpop.f32.mrb[0].mxu0
        %v1328 = vpop.f32.mrb[0].mxu0
        %v1329 = vadd.f32 0.0, %v1328
        %v1330 = vpop.f32.mrb[0].mxu0
        %1331 = vmatprep.mubr.bf16.mxu0 0
        %1332 = vmatmul.mubr.bf16.gmra.mrb[0].mxu0 %v1242
        %v1333 = vpop.f32.mrb[0].mxu0
        %v1334 = vadd.f32 0.0, %v1333
        %v1335 = vpop.f32.mrb[0].mxu0
        %v1336 = vpop.f32.mrb[0].mxu0
        %v1337 = vadd.f32 0.0, %v1336
        %v1338 = vpop.f32.mrb[0].mxu0
        %1339 = vmatprep.mubr.bf16.mxu0 0
        %1340 = vmatmul.mubr.bf16.gmra.mrb[0].mxu0 %v1245
        %v1341 = vpop.f32.mrb[0].mxu0
        %v1342 = vadd.f32 0.0, %v1341
        %v1343 = vpop.f32.mrb[0].mxu0
        %v1344 = vpop.f32.mrb[0].mxu0
        %v1345 = vadd.f32 0.0, %v1344
        %v1346 = vpop.f32.mrb[0].mxu0
        %1347 = vmatprep.mubr.bf16.mxu0 0
        %1348 = vmatmul.mubr.bf16.gmra.mrb[0].mxu0 %v1248
        %v1349 = vpop.f32.mrb[0].mxu0
        %v1350 = vadd.f32 0.0, %v1349
        %v1351 = vpop.f32.mrb[0].mxu0
        %v1352 = vpop.f32.mrb[0].mxu0
        %v1353 = vadd.f32 0.0, %v1352
        %v1354 = vpop.f32.mrb[0].mxu0
        %1355 = vmatprep.mubr.bf16.mxu0 0
        %1356 = vmatmul.mubr.bf16.gmra.mrb[0].mxu0 %v1251
        %v1357 = vpop.f32.mrb[0].mxu0
        %v1358 = vadd.f32 0.0, %v1357
        %v1359 = vpop.f32.mrb[0].mxu0
        %v1360 = vpop.f32.mrb[0].mxu0
        %v1361 = vadd.f32 0.0, %v1360
        %v1362 = vpop.f32.mrb[0].mxu0
        %1363 = vmatprep.mubr.bf16.mxu0 0
        %1364 = vmatmul.mubr.bf16.gmra.mrb[0].mxu0 %v1254
        %v1365 = vpop.f32.mrb[0].mxu0
        %v1366 = vadd.f32 0.0, %v1365
        %v1367 = vpop.f32.mrb[0].mxu0
        %v1368 = vpop.f32.mrb[0].mxu0
        %v1369 = vadd.f32 0.0, %v1368
        %v1370 = vpop.f32.mrb[0].mxu0
        %1371 = vmatprep.mubr.bf16.mxu0 0
        %1372 = vmatmul.mubr.bf16.gmra.mrb[0].mxu0 %v1257
        %v1373 = vpop.f32.mrb[0].mxu0
        %v1374 = vadd.f32 0.0, %v1373
        %v1375 = vpop.f32.mrb[0].mxu0
        %v1376 = vpop.f32.mrb[0].mxu0
        %v1377 = vadd.f32 0.0, %v1376
        %v1378 = vpop.f32.mrb[0].mxu0
        %1379 = vdwg.mxu0
        %v1381 = vsel %vm1234, %v1000, 0
        %v1384 = vsel %vm1234, %v1002, 0
        %v1387 = vsel %vm1234, %v1004, 0
        %v1390 = vsel %vm1234, %v1006, 0
        %v1393 = vsel %vm1234, %v1008, 0
        %v1396 = vsel %vm1234, %v1010, 0
        %v1399 = vsel %vm1234, %v1012, 0
        %v1402 = vsel %vm1234, %v1014, 0
        %v1405 = vsel %vm1234, %v1056, 0
        %v1408 = vsel %vm1234, %v1058, 0
        %v1411 = vsel %vm1234, %v1060, 0
        %v1414 = vsel %vm1234, %v1062, 0
        %v1417 = vsel %vm1234, %v1064, 0
        %v1420 = vsel %vm1234, %v1066, 0
        %v1423 = vsel %vm1234, %v1068, 0
        %v1426 = vsel %vm1234, %v1070, 0
        %1428 = vmatprep.subr.bf16.mxu0 0
        %1429 = vmatpush1.bf16.xpose.msra.mxu0 %v1405
        %1430 = vmatprep.subr.bf16.mxu0 0
        %1431 = vmatpush1.bf16.xpose.msra.mxu0 %v1408
        %1432 = vmatprep.subr.bf16.mxu0 0
        %1433 = vmatpush1.bf16.xpose.msra.mxu0 %v1411
        %1434 = vmatprep.subr.bf16.mxu0 0
        %1435 = vmatpush1.bf16.xpose.msra.mxu0 %v1414
        %1436 = vmatprep.subr.bf16.mxu0 0
        %1437 = vmatpush1.bf16.xpose.msra.mxu0 %v1417
        %1438 = vmatprep.subr.bf16.mxu0 0
        %1439 = vmatpush1.bf16.xpose.msra.mxu0 %v1420
        %1440 = vmatprep.subr.bf16.mxu0 0
        %1441 = vmatpush1.bf16.xpose.msra.mxu0 %v1423
        %1442 = vmatprep.subr.bf16.mxu0 0
        %1443 = vmatpush1.bf16.xpose.msra.mxu0 %v1426
        %1444 = vmatprep.subr.bf16.mxu0 0
        %1445 = vmatpush1.bf16.xpose.msra.mxu0 0
        %1446 = vmatprep.subr.bf16.mxu0 0
        %1447 = vmatpush1.bf16.xpose.msra.mxu0 0
        %1448 = vmatprep.subr.bf16.mxu0 0
        %1449 = vmatpush1.bf16.xpose.msra.mxu0 0
        %1450 = vmatprep.subr.bf16.mxu0 0
        %1451 = vmatpush1.bf16.xpose.msra.mxu0 0
        %1452 = vmatprep.subr.bf16.mxu0 0
        %1453 = vmatpush1.bf16.xpose.msra.mxu0 0
        %1454 = vmatprep.subr.bf16.mxu0 0
        %1455 = vmatpush1.bf16.xpose.msra.mxu0 0
        %1456 = vmatprep.subr.bf16.mxu0 0
        %1457 = vmatpush1.bf16.xpose.msra.mxu0 0
        %1458 = vmatprep.subr.bf16.mxu0 0
        %1459 = vmatpush1.bf16.xpose.msra.mxu0 0
        %1460 = vmatprep.mubr.bf16.mxu0 0
        %1461 = vmatmul.mubr.bf16.gmra.mrb[0].mxu0 %v1381
        %v1462 = vpop.f32.mrb[0].mxu0
        %v1463 = vadd.f32 0.0, %v1462
        %v1464 = vpop.f32.mrb[0].mxu0
        %v1465 = vpop.f32.mrb[0].mxu0
        %v1466 = vadd.f32 0.0, %v1465
        %v1467 = vpop.f32.mrb[0].mxu0
        %1468 = vmatprep.mubr.bf16.mxu0 0
        %1469 = vmatmul.mubr.bf16.gmra.mrb[0].mxu0 %v1384
        %v1470 = vpop.f32.mrb[0].mxu0
        %v1471 = vadd.f32 0.0, %v1470
        %v1472 = vpop.f32.mrb[0].mxu0
        %v1473 = vpop.f32.mrb[0].mxu0
        %v1474 = vadd.f32 0.0, %v1473
        %v1475 = vpop.f32.mrb[0].mxu0
        %1476 = vmatprep.mubr.bf16.mxu0 0
        %1477 = vmatmul.mubr.bf16.gmra.mrb[0].mxu0 %v1387
        %v1478 = vpop.f32.mrb[0].mxu0
        %v1479 = vadd.f32 0.0, %v1478
        %v1480 = vpop.f32.mrb[0].mxu0
        %v1481 = vpop.f32.mrb[0].mxu0
        %v1482 = vadd.f32 0.0, %v1481
        %v1483 = vpop.f32.mrb[0].mxu0
        %1484 = vmatprep.mubr.bf16.mxu0 0
        %1485 = vmatmul.mubr.bf16.gmra.mrb[0].mxu0 %v1390
        %v1486 = vpop.f32.mrb[0].mxu0
        %v1487 = vadd.f32 0.0, %v1486
        %v1488 = vpop.f32.mrb[0].mxu0
        %v1489 = vpop.f32.mrb[0].mxu0
        %v1490 = vadd.f32 0.0, %v1489
        %v1491 = vpop.f32.mrb[0].mxu0
        %1492 = vmatprep.mubr.bf16.mxu0 0
        %1493 = vmatmul.mubr.bf16.gmra.mrb[0].mxu0 %v1393
        %v1494 = vpop.f32.mrb[0].mxu0
        %v1495 = vadd.f32 0.0, %v1494
        %v1496 = vpop.f32.mrb[0].mxu0
        %v1497 = vpop.f32.mrb[0].mxu0
        %v1498 = vadd.f32 0.0, %v1497
        %v1499 = vpop.f32.mrb[0].mxu0
        %1500 = vmatprep.mubr.bf16.mxu0 0
        %1501 = vmatmul.mubr.bf16.gmra.mrb[0].mxu0 %v1396
        %v1502 = vpop.f32.mrb[0].mxu0
        %v1503 = vadd.f32 0.0, %v1502
        %v1504 = vpop.f32.mrb[0].mxu0
        %v1505 = vpop.f32.mrb[0].mxu0
        %v1506 = vadd.f32 0.0, %v1505
        %v1507 = vpop.f32.mrb[0].mxu0
        %1508 = vmatprep.mubr.bf16.mxu0 0
        %1509 = vmatmul.mubr.bf16.gmra.mrb[0].mxu0 %v1399
        %v1510 = vpop.f32.mrb[0].mxu0
        %v1511 = vadd.f32 0.0, %v1510
        %v1512 = vpop.f32.mrb[0].mxu0
        %v1513 = vpop.f32.mrb[0].mxu0
        %v1514 = vadd.f32 0.0, %v1513
        %v1515 = vpop.f32.mrb[0].mxu0
        %1516 = vmatprep.mubr.bf16.mxu0 0
        %1517 = vmatmul.mubr.bf16.gmra.mrb[0].mxu0 %v1402
        %v1518 = vpop.f32.mrb[0].mxu0
        %v1519 = vadd.f32 0.0, %v1518
        %v1520 = vpop.f32.mrb[0].mxu0
        %v1521 = vpop.f32.mrb[0].mxu0
        %v1522 = vadd.f32 0.0, %v1521
        %v1523 = vpop.f32.mrb[0].mxu0
        %1524 = vdwg.mxu0
        %v1526 = vsel %vm1234, %v1016, 0
        %v1529 = vsel %vm1234, %v1018, 0
        %v1532 = vsel %vm1234, %v1020, 0
        %v1535 = vsel %vm1234, %v1022, 0
        %v1538 = vsel %vm1234, %v1024, 0
        %v1541 = vsel %vm1234, %v1026, 0
        %v1544 = vsel %vm1234, %v1028, 0
        %v1547 = vsel %vm1234, %v1030, 0
        %v1550 = vsel %vm1234, %v1072, 0
        %v1553 = vsel %vm1234, %v1074, 0
        %v1556 = vsel %vm1234, %v1076, 0
        %v1559 = vsel %vm1234, %v1078, 0
        %v1562 = vsel %vm1234, %v1080, 0
        %v1565 = vsel %vm1234, %v1082, 0
        %v1568 = vsel %vm1234, %v1084, 0
        %v1571 = vsel %vm1234, %v1086, 0
        %1573 = vmatprep.subr.bf16.mxu0 0
        %1574 = vmatpush1.bf16.xpose.msra.mxu0 %v1550
        %1575 = vmatprep.subr.bf16.mxu0 0
        %1576 = vmatpush1.bf16.xpose.msra.mxu0 %v1553
        %1577 = vmatprep.subr.bf16.mxu0 0
        %1578 = vmatpush1.bf16.xpose.msra.mxu0 %v1556
        %1579 = vmatprep.subr.bf16.mxu0 0
        %1580 = vmatpush1.bf16.xpose.msra.mxu0 %v1559
        %1581 = vmatprep.subr.bf16.mxu0 0
        %1582 = vmatpush1.bf16.xpose.msra.mxu0 %v1562
        %1583 = vmatprep.subr.bf16.mxu0 0
        %1584 = vmatpush1.bf16.xpose.msra.mxu0 %v1565
        %1585 = vmatprep.subr.bf16.mxu0 0
        %1586 = vmatpush1.bf16.xpose.msra.mxu0 %v1568
        %1587 = vmatprep.subr.bf16.mxu0 0
        %1588 = vmatpush1.bf16.xpose.msra.mxu0 %v1571
        %1589 = vmatprep.subr.bf16.mxu0 0
        %1590 = vmatpush1.bf16.xpose.msra.mxu0 0
        %1591 = vmatprep.subr.bf16.mxu0 0
        %1592 = vmatpush1.bf16.xpose.msra.mxu0 0
        %1593 = vmatprep.subr.bf16.mxu0 0
        %1594 = vmatpush1.bf16.xpose.msra.mxu0 0
        %1595 = vmatprep.subr.bf16.mxu0 0
        %1596 = vmatpush1.bf16.xpose.msra.mxu0 0
        %1597 = vmatprep.subr.bf16.mxu0 0
        %1598 = vmatpush1.bf16.xpose.msra.mxu0 0
        %1599 = vmatprep.subr.bf16.mxu0 0
        %1600 = vmatpush1.bf16.xpose.msra.mxu0 0
        %1601 = vmatprep.subr.bf16.mxu0 0
        %1602 = vmatpush1.bf16.xpose.msra.mxu0 0
        %1603 = vmatprep.subr.bf16.mxu0 0
        %1604 = vmatpush1.bf16.xpose.msra.mxu0 0
        %1605 = vmatprep.mubr.bf16.mxu0 0
        %1606 = vmatmul.mubr.bf16.gmra.mrb[0].mxu0 %v1526
        %v1607 = vpop.f32.mrb[0].mxu0
        %v1608 = vadd.f32 0.0, %v1607
        %v1609 = vpop.f32.mrb[0].mxu0
        %v1610 = vpop.f32.mrb[0].mxu0
        %v1611 = vadd.f32 0.0, %v1610
        %v1612 = vpop.f32.mrb[0].mxu0
        %1613 = vmatprep.mubr.bf16.mxu0 0
        %1614 = vmatmul.mubr.bf16.gmra.mrb[0].mxu0 %v1529
        %v1615 = vpop.f32.mrb[0].mxu0
        %v1616 = vadd.f32 0.0, %v1615
        %v1617 = vpop.f32.mrb[0].mxu0
        %v1618 = vpop.f32.mrb[0].mxu0
        %v1619 = vadd.f32 0.0, %v1618
        %v1620 = vpop.f32.mrb[0].mxu0
        %1621 = vmatprep.mubr.bf16.mxu0 0
        %1622 = vmatmul.mubr.bf16.gmra.mrb[0].mxu0 %v1532
        %v1623 = vpop.f32.mrb[0].mxu0
        %v1624 = vadd.f32 0.0, %v1623
        %v1625 = vpop.f32.mrb[0].mxu0
        %v1626 = vpop.f32.mrb[0].mxu0
        %v1627 = vadd.f32 0.0, %v1626
        %v1628 = vpop.f32.mrb[0].mxu0
        %1629 = vmatprep.mubr.bf16.mxu0 0
        %1630 = vmatmul.mubr.bf16.gmra.mrb[0].mxu0 %v1535
        %v1631 = vpop.f32.mrb[0].mxu0
        %v1632 = vadd.f32 0.0, %v1631
        %v1633 = vpop.f32.mrb[0].mxu0
        %v1634 = vpop.f32.mrb[0].mxu0
        %v1635 = vadd.f32 0.0, %v1634
        %v1636 = vpop.f32.mrb[0].mxu0
        %1637 = vmatprep.mubr.bf16.mxu0 0
        %1638 = vmatmul.mubr.bf16.gmra.mrb[0].mxu0 %v1538
        %v1639 = vpop.f32.mrb[0].mxu0
        %v1640 = vadd.f32 0.0, %v1639
        %v1641 = vpop.f32.mrb[0].mxu0
        %v1642 = vpop.f32.mrb[0].mxu0
        %v1643 = vadd.f32 0.0, %v1642
        %v1644 = vpop.f32.mrb[0].mxu0
        %1645 = vmatprep.mubr.bf16.mxu0 0
        %1646 = vmatmul.mubr.bf16.gmra.mrb[0].mxu0 %v1541
        %v1647 = vpop.f32.mrb[0].mxu0
        %v1648 = vadd.f32 0.0, %v1647
        %v1649 = vpop.f32.mrb[0].mxu0
        %v1650 = vpop.f32.mrb[0].mxu0
        %v1651 = vadd.f32 0.0, %v1650
        %v1652 = vpop.f32.mrb[0].mxu0
        %1653 = vmatprep.mubr.bf16.mxu0 0
        %1654 = vmatmul.mubr.bf16.gmra.mrb[0].mxu0 %v1544
        %v1655 = vpop.f32.mrb[0].mxu0
        %v1656 = vadd.f32 0.0, %v1655
        %v1657 = vpop.f32.mrb[0].mxu0
        %v1658 = vpop.f32.mrb[0].mxu0
        %v1659 = vadd.f32 0.0, %v1658
        %v1660 = vpop.f32.mrb[0].mxu0
        %1661 = vmatprep.mubr.bf16.mxu0 0
        %1662 = vmatmul.mubr.bf16.gmra.mrb[0].mxu0 %v1547
        %v1663 = vpop.f32.mrb[0].mxu0
        %v1664 = vadd.f32 0.0, %v1663
        %v1665 = vpop.f32.mrb[0].mxu0
        %v1666 = vpop.f32.mrb[0].mxu0
        %v1667 = vadd.f32 0.0, %v1666
        %v1668 = vpop.f32.mrb[0].mxu0
        %1669 = vdwg.mxu0
        %v1671 = vsel %vm1234, %v1032, 0
        %v1674 = vsel %vm1234, %v1034, 0
        %v1677 = vsel %vm1234, %v1036, 0
        %v1680 = vsel %vm1234, %v1038, 0
        %v1683 = vsel %vm1234, %v1040, 0
        %v1686 = vsel %vm1234, %v1042, 0
        %v1689 = vsel %vm1234, %v1044, 0
        %v1692 = vsel %vm1234, %v1046, 0
        %v1695 = vsel %vm1234, %v1088, 0
        %v1698 = vsel %vm1234, %v1090, 0
        %v1701 = vsel %vm1234, %v1092, 0
        %v1704 = vsel %vm1234, %v1094, 0
        %v1707 = vsel %vm1234, %v1096, 0
        %v1710 = vsel %vm1234, %v1098, 0
        %v1713 = vsel %vm1234, %v1100, 0
        %v1716 = vsel %vm1234, %v1102, 0
        %1718 = vmatprep.subr.bf16.mxu0 0
        %1719 = vmatpush1.bf16.xpose.msra.mxu0 %v1695
        %1720 = vmatprep.subr.bf16.mxu0 0
        %1721 = vmatpush1.bf16.xpose.msra.mxu0 %v1698
        %1722 = vmatprep.subr.bf16.mxu0 0
        %1723 = vmatpush1.bf16.xpose.msra.mxu0 %v1701
        %1724 = vmatprep.subr.bf16.mxu0 0
        %1725 = vmatpush1.bf16.xpose.msra.mxu0 %v1704
        %1726 = vmatprep.subr.bf16.mxu0 0
        %1727 = vmatpush1.bf16.xpose.msra.mxu0 %v1707
        %1728 = vmatprep.subr.bf16.mxu0 0
        %1729 = vmatpush1.bf16.xpose.msra.mxu0 %v1710
        %1730 = vmatprep.subr.bf16.mxu0 0
        %1731 = vmatpush1.bf16.xpose.msra.mxu0 %v1713
        %1732 = vmatprep.subr.bf16.mxu0 0
        %1733 = vmatpush1.bf16.xpose.msra.mxu0 %v1716
        %1734 = vmatprep.subr.bf16.mxu0 0
        %1735 = vmatpush1.bf16.xpose.msra.mxu0 0
        %1736 = vmatprep.subr.bf16.mxu0 0
        %1737 = vmatpush1.bf16.xpose.msra.mxu0 0
        %1738 = vmatprep.subr.bf16.mxu0 0
        %1739 = vmatpush1.bf16.xpose.msra.mxu0 0
        %1740 = vmatprep.subr.bf16.mxu0 0
        %1741 = vmatpush1.bf16.xpose.msra.mxu0 0
        %1742 = vmatprep.subr.bf16.mxu0 0
        %1743 = vmatpush1.bf16.xpose.msra.mxu0 0
        %1744 = vmatprep.subr.bf16.mxu0 0
        %1745 = vmatpush1.bf16.xpose.msra.mxu0 0
        %1746 = vmatprep.subr.bf16.mxu0 0
        %1747 = vmatpush1.bf16.xpose.msra.mxu0 0
        %1748 = vmatprep.subr.bf16.mxu0 0
        %1749 = vmatpush1.bf16.xpose.msra.mxu0 0
        %1750 = vmatprep.mubr.bf16.mxu0 0
        %1751 = vmatmul.mubr.bf16.gmra.mrb[0].mxu0 %v1671
        %v1752 = vpop.f32.mrb[0].mxu0
        %v1753 = vadd.f32 0.0, %v1752
        %v1754 = vpop.f32.mrb[0].mxu0
        %v1755 = vpop.f32.mrb[0].mxu0
        %v1756 = vadd.f32 0.0, %v1755
        %v1757 = vpop.f32.mrb[0].mxu0
        %1758 = vmatprep.mubr.bf16.mxu0 0
        %1759 = vmatmul.mubr.bf16.gmra.mrb[0].mxu0 %v1674
        %v1760 = vpop.f32.mrb[0].mxu0
        %v1761 = vadd.f32 0.0, %v1760
        %v1762 = vpop.f32.mrb[0].mxu0
        %v1763 = vpop.f32.mrb[0].mxu0
        %v1764 = vadd.f32 0.0, %v1763
        %v1765 = vpop.f32.mrb[0].mxu0
        %1766 = vmatprep.mubr.bf16.mxu0 0
        %1767 = vmatmul.mubr.bf16.gmra.mrb[0].mxu0 %v1677
        %v1768 = vpop.f32.mrb[0].mxu0
        %v1769 = vadd.f32 0.0, %v1768
        %v1770 = vpop.f32.mrb[0].mxu0
        %v1771 = vpop.f32.mrb[0].mxu0
        %v1772 = vadd.f32 0.0, %v1771
        %v1773 = vpop.f32.mrb[0].mxu0
        %1774 = vmatprep.mubr.bf16.mxu0 0
        %1775 = vmatmul.mubr.bf16.gmra.mrb[0].mxu0 %v1680
        %v1776 = vpop.f32.mrb[0].mxu0
        %v1777 = vadd.f32 0.0, %v1776
        %v1778 = vpop.f32.mrb[0].mxu0
        %v1779 = vpop.f32.mrb[0].mxu0
        %v1780 = vadd.f32 0.0, %v1779
        %v1781 = vpop.f32.mrb[0].mxu0
        %1782 = vmatprep.mubr.bf16.mxu0 0
        %1783 = vmatmul.mubr.bf16.gmra.mrb[0].mxu0 %v1683
        %v1784 = vpop.f32.mrb[0].mxu0
        %v1785 = vadd.f32 0.0, %v1784
        %v1786 = vpop.f32.mrb[0].mxu0
        %v1787 = vpop.f32.mrb[0].mxu0
        %v1788 = vadd.f32 0.0, %v1787
        %v1789 = vpop.f32.mrb[0].mxu0
        %1790 = vmatprep.mubr.bf16.mxu0 0
        %1791 = vmatmul.mubr.bf16.gmra.mrb[0].mxu0 %v1686
        %v1792 = vpop.f32.mrb[0].mxu0
        %v1793 = vadd.f32 0.0, %v1792
        %v1794 = vpop.f32.mrb[0].mxu0
        %v1795 = vpop.f32.mrb[0].mxu0
        %v1796 = vadd.f32 0.0, %v1795
        %v1797 = vpop.f32.mrb[0].mxu0
        %1798 = vmatprep.mubr.bf16.mxu0 0
        %1799 = vmatmul.mubr.bf16.gmra.mrb[0].mxu0 %v1689
        %v1800 = vpop.f32.mrb[0].mxu0
        %v1801 = vadd.f32 0.0, %v1800
        %v1802 = vpop.f32.mrb[0].mxu0
        %v1803 = vpop.f32.mrb[0].mxu0
        %v1804 = vadd.f32 0.0, %v1803
        %v1805 = vpop.f32.mrb[0].mxu0
        %1806 = vmatprep.mubr.bf16.mxu0 0
        %1807 = vmatmul.mubr.bf16.gmra.mrb[0].mxu0 %v1692
        %v1808 = vpop.f32.mrb[0].mxu0
        %v1809 = vadd.f32 0.0, %v1808
        %v1810 = vpop.f32.mrb[0].mxu0
        %v1811 = vpop.f32.mrb[0].mxu0
        %v1812 = vadd.f32 0.0, %v1811
        %v1813 = vpop.f32.mrb[0].mxu0
        %1814 = vdwg.mxu0
        %v1815 = vmul.f32 %v1318, 0.17677669
        %v1816 = vmul.f32 %v1321, 0.17677669
        %v1817 = vmul.f32 %v1326, 0.17677669
        %v1818 = vmul.f32 %v1329, 0.17677669
        %v1819 = vmul.f32 %v1334, 0.17677669
        %v1820 = vmul.f32 %v1337, 0.17677669
        %v1821 = vmul.f32 %v1342, 0.17677669
        %v1822 = vmul.f32 %v1345, 0.17677669
        %v1823 = vmul.f32 %v1350, 0.17677669
        %v1824 = vmul.f32 %v1353, 0.17677669
        %v1825 = vmul.f32 %v1358, 0.17677669
        %v1826 = vmul.f32 %v1361, 0.17677669
        %v1827 = vmul.f32 %v1366, 0.17677669
        %v1828 = vmul.f32 %v1369, 0.17677669
        %v1829 = vmul.f32 %v1374, 0.17677669
        %v1830 = vmul.f32 %v1377, 0.17677669
        %v1831 = vmul.f32 %v1463, 0.17677669
        %v1832 = vmul.f32 %v1466, 0.17677669
        %v1833 = vmul.f32 %v1471, 0.17677669
        %v1834 = vmul.f32 %v1474, 0.17677669
        %v1835 = vmul.f32 %v1479, 0.17677669
        %v1836 = vmul.f32 %v1482, 0.17677669
        %v1837 = vmul.f32 %v1487, 0.17677669
        %v1838 = vmul.f32 %v1490, 0.17677669
        %v1839 = vmul.f32 %v1495, 0.17677669
        %v1840 = vmul.f32 %v1498, 0.17677669
        %v1841 = vmul.f32 %v1503, 0.17677669
        %v1842 = vmul.f32 %v1506, 0.17677669
        %v1843 = vmul.f32 %v1511, 0.17677669
        %v1844 = vmul.f32 %v1514, 0.17677669
        %v1845 = vmul.f32 %v1519, 0.17677669
        %v1846 = vmul.f32 %v1522, 0.17677669
        %v1847 = vmul.f32 %v1608, 0.17677669
        %v1848 = vmul.f32 %v1611, 0.17677669
        %v1849 = vmul.f32 %v1616, 0.17677669
        %v1850 = vmul.f32 %v1619, 0.17677669
        %v1851 = vmul.f32 %v1624, 0.17677669
        %v1852 = vmul.f32 %v1627, 0.17677669
        %v1853 = vmul.f32 %v1632, 0.17677669
        %v1854 = vmul.f32 %v1635, 0.17677669
        %v1855 = vmul.f32 %v1640, 0.17677669
        %v1856 = vmul.f32 %v1643, 0.17677669
        %v1857 = vmul.f32 %v1648, 0.17677669
        %v1858 = vmul.f32 %v1651, 0.17677669
        %v1859 = vmul.f32 %v1656, 0.17677669
        %v1860 = vmul.f32 %v1659, 0.17677669
        %v1861 = vmul.f32 %v1664, 0.17677669
        %v1862 = vmul.f32 %v1667, 0.17677669
        %v1863 = vmul.f32 %v1753, 0.17677669
        %v1864 = vmul.f32 %v1756, 0.17677669
        %v1865 = vmul.f32 %v1761, 0.17677669
        %v1866 = vmul.f32 %v1764, 0.17677669
        %v1867 = vmul.f32 %v1769, 0.17677669
        %v1868 = vmul.f32 %v1772, 0.17677669
        %v1869 = vmul.f32 %v1777, 0.17677669
        %v1870 = vmul.f32 %v1780, 0.17677669
        %v1871 = vmul.f32 %v1785, 0.17677669
        %v1872 = vmul.f32 %v1788, 0.17677669
        %v1873 = vmul.f32 %v1793, 0.17677669
        %v1874 = vmul.f32 %v1796, 0.17677669
        %v1875 = vmul.f32 %v1801, 0.17677669
        %v1876 = vmul.f32 %v1804, 0.17677669
        %v1877 = vmul.f32 %v1809, 0.17677669
        %v1878 = vmul.f32 %v1812, 0.17677669
        %v1879 = vadd.f32 %v1815, %v1218
        %v1880 = vadd.f32 %v1816, %v1219
        %v1881 = vadd.f32 %v1817, %v1220
        %v1882 = vadd.f32 %v1818, %v1221
        %v1883 = vadd.f32 %v1819, %v1222
        %v1884 = vadd.f32 %v1820, %v1223
        %v1885 = vadd.f32 %v1821, %v1224
        %v1886 = vadd.f32 %v1822, %v1225
        %v1887 = vadd.f32 %v1823, %v1226
        %v1888 = vadd.f32 %v1824, %v1227
        %v1889 = vadd.f32 %v1825, %v1228
        %v1890 = vadd.f32 %v1826, %v1229
        %v1891 = vadd.f32 %v1827, %v1230
        %v1892 = vadd.f32 %v1828, %v1231
        %v1893 = vadd.f32 %v1829, %v1232
        %v1894 = vadd.f32 %v1830, %v1233
        %v1895 = vadd.f32 %v1831, %v1218
        %v1896 = vadd.f32 %v1832, %v1219
        %v1897 = vadd.f32 %v1833, %v1220
        %v1898 = vadd.f32 %v1834, %v1221
        %v1899 = vadd.f32 %v1835, %v1222
        %v1900 = vadd.f32 %v1836, %v1223
        %v1901 = vadd.f32 %v1837, %v1224
        %v1902 = vadd.f32 %v1838, %v1225
        %v1903 = vadd.f32 %v1839, %v1226
        %v1904 = vadd.f32 %v1840, %v1227
        %v1905 = vadd.f32 %v1841, %v1228
        %v1906 = vadd.f32 %v1842, %v1229
        %v1907 = vadd.f32 %v1843, %v1230
        %v1908 = vadd.f32 %v1844, %v1231
        %v1909 = vadd.f32 %v1845, %v1232
        %v1910 = vadd.f32 %v1846, %v1233
        %v1911 = vadd.f32 %v1847, %v1218
        %v1912 = vadd.f32 %v1848, %v1219
        %v1913 = vadd.f32 %v1849, %v1220
        %v1914 = vadd.f32 %v1850, %v1221
        %v1915 = vadd.f32 %v1851, %v1222
        %v1916 = vadd.f32 %v1852, %v1223
        %v1917 = vadd.f32 %v1853, %v1224
        %v1918 = vadd.f32 %v1854, %v1225
        %v1919 = vadd.f32 %v1855, %v1226
        %v1920 = vadd.f32 %v1856, %v1227
        %v1921 = vadd.f32 %v1857, %v1228
        %v1922 = vadd.f32 %v1858, %v1229
        %v1923 = vadd.f32 %v1859, %v1230
        %v1924 = vadd.f32 %v1860, %v1231
        %v1925 = vadd.f32 %v1861, %v1232
        %v1926 = vadd.f32 %v1862, %v1233
        %v1927 = vadd.f32 %v1863, %v1218
        %v1928 = vadd.f32 %v1864, %v1219
        %v1929 = vadd.f32 %v1865, %v1220
        %v1930 = vadd.f32 %v1866, %v1221
        %v1931 = vadd.f32 %v1867, %v1222
        %v1932 = vadd.f32 %v1868, %v1223
        %v1933 = vadd.f32 %v1869, %v1224
        %v1934 = vadd.f32 %v1870, %v1225
        %v1935 = vadd.f32 %v1871, %v1226
        %v1936 = vadd.f32 %v1872, %v1227
        %v1937 = vadd.f32 %v1873, %v1228
        %v1938 = vadd.f32 %v1874, %v1229
        %v1939 = vadd.f32 %v1875, %v1230
        %v1940 = vadd.f32 %v1876, %v1231
        %v1941 = vadd.f32 %v1877, %v1232
        %v1942 = vadd.f32 %v1878, %v1233
        %1943 = vmax.xlane.f32.xlu0 %v1879
        %v1944 = vpop.xlane.xlu0 %1943
        %1945 = vmax.xlane.f32.xlu0 %v1880
        %v1946 = vpop.xlane.xlu0 %1945
        %1947 = vmax.xlane.f32.xlu0 %v1881
        %v1948 = vpop.xlane.xlu0 %1947
        %1949 = vmax.xlane.f32.xlu0 %v1882
        %v1950 = vpop.xlane.xlu0 %1949
        %1951 = vmax.xlane.f32.xlu0 %v1883
        %v1952 = vpop.xlane.xlu0 %1951
        %1953 = vmax.xlane.f32.xlu0 %v1884
        %v1954 = vpop.xlane.xlu0 %1953
        %1955 = vmax.xlane.f32.xlu0 %v1885
        %v1956 = vpop.xlane.xlu0 %1955
        %1957 = vmax.xlane.f32.xlu0 %v1886
        %v1958 = vpop.xlane.xlu0 %1957
        %1959 = vmax.xlane.f32.xlu0 %v1887
        %v1960 = vpop.xlane.xlu0 %1959
        %1961 = vmax.xlane.f32.xlu0 %v1888
        %v1962 = vpop.xlane.xlu0 %1961
        %1963 = vmax.xlane.f32.xlu0 %v1889
        %v1964 = vpop.xlane.xlu0 %1963
        %1965 = vmax.xlane.f32.xlu0 %v1890
        %v1966 = vpop.xlane.xlu0 %1965
        %1967 = vmax.xlane.f32.xlu0 %v1891
        %v1968 = vpop.xlane.xlu0 %1967
        %1969 = vmax.xlane.f32.xlu0 %v1892
        %v1970 = vpop.xlane.xlu0 %1969
        %1971 = vmax.xlane.f32.xlu0 %v1893
        %v1972 = vpop.xlane.xlu0 %1971
        %1973 = vmax.xlane.f32.xlu0 %v1894
        %v1974 = vpop.xlane.xlu0 %1973
        %1975 = vmax.xlane.f32.xlu0 %v1895
        %v1976 = vpop.xlane.xlu0 %1975
        %1977 = vmax.xlane.f32.xlu0 %v1896
        %v1978 = vpop.xlane.xlu0 %1977
        %1979 = vmax.xlane.f32.xlu0 %v1897
        %v1980 = vpop.xlane.xlu0 %1979
        %1981 = vmax.xlane.f32.xlu0 %v1898
        %v1982 = vpop.xlane.xlu0 %1981
        %1983 = vmax.xlane.f32.xlu0 %v1899
        %v1984 = vpop.xlane.xlu0 %1983
        %1985 = vmax.xlane.f32.xlu0 %v1900
        %v1986 = vpop.xlane.xlu0 %1985
        %1987 = vmax.xlane.f32.xlu0 %v1901
        %v1988 = vpop.xlane.xlu0 %1987
        %1989 = vmax.xlane.f32.xlu0 %v1902
        %v1990 = vpop.xlane.xlu0 %1989
        %1991 = vmax.xlane.f32.xlu0 %v1903
        %v1992 = vpop.xlane.xlu0 %1991
        %1993 = vmax.xlane.f32.xlu0 %v1904
        %v1994 = vpop.xlane.xlu0 %1993
        %1995 = vmax.xlane.f32.xlu0 %v1905
        %v1996 = vpop.xlane.xlu0 %1995
        %1997 = vmax.xlane.f32.xlu0 %v1906
        %v1998 = vpop.xlane.xlu0 %1997
        %1999 = vmax.xlane.f32.xlu0 %v1907
        %v2000 = vpop.xlane.xlu0 %1999
        %2001 = vmax.xlane.f32.xlu0 %v1908
        %v2002 = vpop.xlane.xlu0 %2001
        %2003 = vmax.xlane.f32.xlu0 %v1909
        %v2004 = vpop.xlane.xlu0 %2003
        %2005 = vmax.xlane.f32.xlu0 %v1910
        %v2006 = vpop.xlane.xlu0 %2005
        %2007 = vmax.xlane.f32.xlu0 %v1911
        %v2008 = vpop.xlane.xlu0 %2007
        %2009 = vmax.xlane.f32.xlu0 %v1912
        %v2010 = vpop.xlane.xlu0 %2009
        %2011 = vmax.xlane.f32.xlu0 %v1913
        %v2012 = vpop.xlane.xlu0 %2011
        %2013 = vmax.xlane.f32.xlu0 %v1914
        %v2014 = vpop.xlane.xlu0 %2013
        %2015 = vmax.xlane.f32.xlu0 %v1915
        %v2016 = vpop.xlane.xlu0 %2015
        %2017 = vmax.xlane.f32.xlu0 %v1916
        %v2018 = vpop.xlane.xlu0 %2017
        %2019 = vmax.xlane.f32.xlu0 %v1917
        %v2020 = vpop.xlane.xlu0 %2019
        %2021 = vmax.xlane.f32.xlu0 %v1918
        %v2022 = vpop.xlane.xlu0 %2021
        %2023 = vmax.xlane.f32.xlu0 %v1919
        %v2024 = vpop.xlane.xlu0 %2023
        %2025 = vmax.xlane.f32.xlu0 %v1920
        %v2026 = vpop.xlane.xlu0 %2025
        %2027 = vmax.xlane.f32.xlu0 %v1921
        %v2028 = vpop.xlane.xlu0 %2027
        %2029 = vmax.xlane.f32.xlu0 %v1922
        %v2030 = vpop.xlane.xlu0 %2029
        %2031 = vmax.xlane.f32.xlu0 %v1923
        %v2032 = vpop.xlane.xlu0 %2031
        %2033 = vmax.xlane.f32.xlu0 %v1924
        %v2034 = vpop.xlane.xlu0 %2033
        %2035 = vmax.xlane.f32.xlu0 %v1925
        %v2036 = vpop.xlane.xlu0 %2035
        %2037 = vmax.xlane.f32.xlu0 %v1926
        %v2038 = vpop.xlane.xlu0 %2037
        %2039 = vmax.xlane.f32.xlu0 %v1927
        %v2040 = vpop.xlane.xlu0 %2039
        %2041 = vmax.xlane.f32.xlu0 %v1928
        %v2042 = vpop.xlane.xlu0 %2041
        %2043 = vmax.xlane.f32.xlu0 %v1929
        %v2044 = vpop.xlane.xlu0 %2043
        %2045 = vmax.xlane.f32.xlu0 %v1930
        %v2046 = vpop.xlane.xlu0 %2045
        %2047 = vmax.xlane.f32.xlu0 %v1931
        %v2048 = vpop.xlane.xlu0 %2047
        %2049 = vmax.xlane.f32.xlu0 %v1932
        %v2050 = vpop.xlane.xlu0 %2049
        %2051 = vmax.xlane.f32.xlu0 %v1933
        %v2052 = vpop.xlane.xlu0 %2051
        %2053 = vmax.xlane.f32.xlu0 %v1934
        %v2054 = vpop.xlane.xlu0 %2053
        %2055 = vmax.xlane.f32.xlu0 %v1935
        %v2056 = vpop.xlane.xlu0 %2055
        %2057 = vmax.xlane.f32.xlu0 %v1936
        %v2058 = vpop.xlane.xlu0 %2057
        %2059 = vmax.xlane.f32.xlu0 %v1937
        %v2060 = vpop.xlane.xlu0 %2059
        %2061 = vmax.xlane.f32.xlu0 %v1938
        %v2062 = vpop.xlane.xlu0 %2061
        %2063 = vmax.xlane.f32.xlu0 %v1939
        %v2064 = vpop.xlane.xlu0 %2063
        %2065 = vmax.xlane.f32.xlu0 %v1940
        %v2066 = vpop.xlane.xlu0 %2065
        %2067 = vmax.xlane.f32.xlu0 %v1941
        %v2068 = vpop.xlane.xlu0 %2067
        %2069 = vmax.xlane.f32.xlu0 %v1942
        %v2070 = vpop.xlane.xlu0 %2069
        %v2071 = vsub.f32 %v1879, %v1944
        %v2072 = vsub.f32 %v1880, %v1946
        %v2073 = vsub.f32 %v1881, %v1948
        %v2074 = vsub.f32 %v1882, %v1950
        %v2075 = vsub.f32 %v1883, %v1952
        %v2076 = vsub.f32 %v1884, %v1954
        %v2077 = vsub.f32 %v1885, %v1956
        %v2078 = vsub.f32 %v1886, %v1958
        %v2079 = vsub.f32 %v1887, %v1960
        %v2080 = vsub.f32 %v1888, %v1962
        %v2081 = vsub.f32 %v1889, %v1964
        %v2082 = vsub.f32 %v1890, %v1966
        %v2083 = vsub.f32 %v1891, %v1968
        %v2084 = vsub.f32 %v1892, %v1970
        %v2085 = vsub.f32 %v1893, %v1972
        %v2086 = vsub.f32 %v1894, %v1974
        %v2087 = vsub.f32 %v1895, %v1976
        %v2088 = vsub.f32 %v1896, %v1978
        %v2089 = vsub.f32 %v1897, %v1980
        %v2090 = vsub.f32 %v1898, %v1982
        %v2091 = vsub.f32 %v1899, %v1984
        %v2092 = vsub.f32 %v1900, %v1986
        %v2093 = vsub.f32 %v1901, %v1988
        %v2094 = vsub.f32 %v1902, %v1990
        %v2095 = vsub.f32 %v1903, %v1992
        %v2096 = vsub.f32 %v1904, %v1994
        %v2097 = vsub.f32 %v1905, %v1996
        %v2098 = vsub.f32 %v1906, %v1998
        %v2099 = vsub.f32 %v1907, %v2000
        %v2100 = vsub.f32 %v1908, %v2002
        %v2101 = vsub.f32 %v1909, %v2004
        %v2102 = vsub.f32 %v1910, %v2006
        %v2103 = vsub.f32 %v1911, %v2008
        %v2104 = vsub.f32 %v1912, %v2010
        %v2105 = vsub.f32 %v1913, %v2012
        %v2106 = vsub.f32 %v1914, %v2014
        %v2107 = vsub.f32 %v1915, %v2016
        %v2108 = vsub.f32 %v1916, %v2018
        %v2109 = vsub.f32 %v1917, %v2020
        %v2110 = vsub.f32 %v1918, %v2022
        %v2111 = vsub.f32 %v1919, %v2024
        %v2112 = vsub.f32 %v1920, %v2026
        %v2113 = vsub.f32 %v1921, %v2028
        %v2114 = vsub.f32 %v1922, %v2030
        %v2115 = vsub.f32 %v1923, %v2032
        %v2116 = vsub.f32 %v1924, %v2034
        %v2117 = vsub.f32 %v1925, %v2036
        %v2118 = vsub.f32 %v1926, %v2038
        %v2119 = vsub.f32 %v1927, %v2040
        %v2120 = vsub.f32 %v1928, %v2042
        %v2121 = vsub.f32 %v1929, %v2044
        %v2122 = vsub.f32 %v1930, %v2046
        %v2123 = vsub.f32 %v1931, %v2048
        %v2124 = vsub.f32 %v1932, %v2050
        %v2125 = vsub.f32 %v1933, %v2052
        %v2126 = vsub.f32 %v1934, %v2054
        %v2127 = vsub.f32 %v1935, %v2056
        %v2128 = vsub.f32 %v1936, %v2058
        %v2129 = vsub.f32 %v1937, %v2060
        %v2130 = vsub.f32 %v1938, %v2062
        %v2131 = vsub.f32 %v1939, %v2064
        %v2132 = vsub.f32 %v1940, %v2066
        %v2133 = vsub.f32 %v1941, %v2068
        %v2134 = vsub.f32 %v1942, %v2070
        %v2135 = vmul.f32 %v2071, 1.442695
        %v2136 = vpow.pop %v2135
        %v2137 = vmul.f32 %v2072, 1.442695
        %v2138 = vpow.pop %v2137
        %v2139 = vmul.f32 %v2073, 1.442695
        %v2140 = vpow.pop %v2139
        %v2141 = vmul.f32 %v2074, 1.442695
        %v2142 = vpow.pop %v2141
        %v2143 = vmul.f32 %v2075, 1.442695
        %v2144 = vpow.pop %v2143
        %v2145 = vmul.f32 %v2076, 1.442695
        %v2146 = vpow.pop %v2145
        %v2147 = vmul.f32 %v2077, 1.442695
        %v2148 = vpow.pop %v2147
        %v2149 = vmul.f32 %v2078, 1.442695
        %v2150 = vpow.pop %v2149
        %v2151 = vmul.f32 %v2079, 1.442695
        %v2152 = vpow.pop %v2151
        %v2153 = vmul.f32 %v2080, 1.442695
        %v2154 = vpow.pop %v2153
        %v2155 = vmul.f32 %v2081, 1.442695
        %v2156 = vpow.pop %v2155
        %v2157 = vmul.f32 %v2082, 1.442695
        %v2158 = vpow.pop %v2157
        %v2159 = vmul.f32 %v2083, 1.442695
        %v2160 = vpow.pop %v2159
        %v2161 = vmul.f32 %v2084, 1.442695
        %v2162 = vpow.pop %v2161
        %v2163 = vmul.f32 %v2085, 1.442695
        %v2164 = vpow.pop %v2163
        %v2165 = vmul.f32 %v2086, 1.442695
        %v2166 = vpow.pop %v2165
        %v2167 = vmul.f32 %v2087, 1.442695
        %v2168 = vpow.pop %v2167
        %v2169 = vmul.f32 %v2088, 1.442695
        %v2170 = vpow.pop %v2169
        %v2171 = vmul.f32 %v2089, 1.442695
        %v2172 = vpow.pop %v2171
        %v2173 = vmul.f32 %v2090, 1.442695
        %v2174 = vpow.pop %v2173
        %v2175 = vmul.f32 %v2091, 1.442695
        %v2176 = vpow.pop %v2175
        %v2177 = vmul.f32 %v2092, 1.442695
        %v2178 = vpow.pop %v2177
        %v2179 = vmul.f32 %v2093, 1.442695
        %v2180 = vpow.pop %v2179
        %v2181 = vmul.f32 %v2094, 1.442695
        %v2182 = vpow.pop %v2181
        %v2183 = vmul.f32 %v2095, 1.442695
        %v2184 = vpow.pop %v2183
        %v2185 = vmul.f32 %v2096, 1.442695
        %v2186 = vpow.pop %v2185
        %v2187 = vmul.f32 %v2097, 1.442695
        %v2188 = vpow.pop %v2187
        %v2189 = vmul.f32 %v2098, 1.442695
        %v2190 = vpow.pop %v2189
        %v2191 = vmul.f32 %v2099, 1.442695
        %v2192 = vpow.pop %v2191
        %v2193 = vmul.f32 %v2100, 1.442695
        %v2194 = vpow.pop %v2193
        %v2195 = vmul.f32 %v2101, 1.442695
        %v2196 = vpow.pop %v2195
        %v2197 = vmul.f32 %v2102, 1.442695
        %v2198 = vpow.pop %v2197
        %v2199 = vmul.f32 %v2103, 1.442695
        %v2200 = vpow.pop %v2199
        %v2201 = vmul.f32 %v2104, 1.442695
        %v2202 = vpow.pop %v2201
        %v2203 = vmul.f32 %v2105, 1.442695
        %v2204 = vpow.pop %v2203
        %v2205 = vmul.f32 %v2106, 1.442695
        %v2206 = vpow.pop %v2205
        %v2207 = vmul.f32 %v2107, 1.442695
        %v2208 = vpow.pop %v2207
        %v2209 = vmul.f32 %v2108, 1.442695
        %v2210 = vpow.pop %v2209
        %v2211 = vmul.f32 %v2109, 1.442695
        %v2212 = vpow.pop %v2211
        %v2213 = vmul.f32 %v2110, 1.442695
        %v2214 = vpow.pop %v2213
        %v2215 = vmul.f32 %v2111, 1.442695
        %v2216 = vpow.pop %v2215
        %v2217 = vmul.f32 %v2112, 1.442695
        %v2218 = vpow.pop %v2217
        %v2219 = vmul.f32 %v2113, 1.442695
        %v2220 = vpow.pop %v2219
        %v2221 = vmul.f32 %v2114, 1.442695
        %v2222 = vpow.pop %v2221
        %v2223 = vmul.f32 %v2115, 1.442695
        %v2224 = vpow.pop %v2223
        %v2225 = vmul.f32 %v2116, 1.442695
        %v2226 = vpow.pop %v2225
        %v2227 = vmul.f32 %v2117, 1.442695
        %v2228 = vpow.pop %v2227
        %v2229 = vmul.f32 %v2118, 1.442695
        %v2230 = vpow.pop %v2229
        %v2231 = vmul.f32 %v2119, 1.442695
        %v2232 = vpow.pop %v2231
        %v2233 = vmul.f32 %v2120, 1.442695
        %v2234 = vpow.pop %v2233
        %v2235 = vmul.f32 %v2121, 1.442695
        %v2236 = vpow.pop %v2235
        %v2237 = vmul.f32 %v2122, 1.442695
        %v2238 = vpow.pop %v2237
        %v2239 = vmul.f32 %v2123, 1.442695
        %v2240 = vpow.pop %v2239
        %v2241 = vmul.f32 %v2124, 1.442695
        %v2242 = vpow.pop %v2241
        %v2243 = vmul.f32 %v2125, 1.442695
        %v2244 = vpow.pop %v2243
        %v2245 = vmul.f32 %v2126, 1.442695
        %v2246 = vpow.pop %v2245
        %v2247 = vmul.f32 %v2127, 1.442695
        %v2248 = vpow.pop %v2247
        %v2249 = vmul.f32 %v2128, 1.442695
        %v2250 = vpow.pop %v2249
        %v2251 = vmul.f32 %v2129, 1.442695
        %v2252 = vpow.pop %v2251
        %v2253 = vmul.f32 %v2130, 1.442695
        %v2254 = vpow.pop %v2253
        %v2255 = vmul.f32 %v2131, 1.442695
        %v2256 = vpow.pop %v2255
        %v2257 = vmul.f32 %v2132, 1.442695
        %v2258 = vpow.pop %v2257
        %v2259 = vmul.f32 %v2133, 1.442695
        %v2260 = vpow.pop %v2259
        %v2261 = vmul.f32 %v2134, 1.442695
        %v2262 = vpow.pop %v2261
        %2263 = vadd.xlane.f32.xlu0 %v2136
        %v2264 = vpop.xlane.xlu0 %2263
        %2265 = vadd.xlane.f32.xlu0 %v2138
        %v2266 = vpop.xlane.xlu0 %2265
        %2267 = vadd.xlane.f32.xlu0 %v2140
        %v2268 = vpop.xlane.xlu0 %2267
        %2269 = vadd.xlane.f32.xlu0 %v2142
        %v2270 = vpop.xlane.xlu0 %2269
        %2271 = vadd.xlane.f32.xlu0 %v2144
        %v2272 = vpop.xlane.xlu0 %2271
        %2273 = vadd.xlane.f32.xlu0 %v2146
        %v2274 = vpop.xlane.xlu0 %2273
        %2275 = vadd.xlane.f32.xlu0 %v2148
        %v2276 = vpop.xlane.xlu0 %2275
        %2277 = vadd.xlane.f32.xlu0 %v2150
        %v2278 = vpop.xlane.xlu0 %2277
        %2279 = vadd.xlane.f32.xlu0 %v2152
        %v2280 = vpop.xlane.xlu0 %2279
        %2281 = vadd.xlane.f32.xlu0 %v2154
        %v2282 = vpop.xlane.xlu0 %2281
        %2283 = vadd.xlane.f32.xlu0 %v2156
        %v2284 = vpop.xlane.xlu0 %2283
        %2285 = vadd.xlane.f32.xlu0 %v2158
        %v2286 = vpop.xlane.xlu0 %2285
        %2287 = vadd.xlane.f32.xlu0 %v2160
        %v2288 = vpop.xlane.xlu0 %2287
        %2289 = vadd.xlane.f32.xlu0 %v2162
        %v2290 = vpop.xlane.xlu0 %2289
        %2291 = vadd.xlane.f32.xlu0 %v2164
        %v2292 = vpop.xlane.xlu0 %2291
        %2293 = vadd.xlane.f32.xlu0 %v2166
        %v2294 = vpop.xlane.xlu0 %2293
        %2295 = vadd.xlane.f32.xlu0 %v2168
        %v2296 = vpop.xlane.xlu0 %2295
        %2297 = vadd.xlane.f32.xlu0 %v2170
        %v2298 = vpop.xlane.xlu0 %2297
        %2299 = vadd.xlane.f32.xlu0 %v2172
        %v2300 = vpop.xlane.xlu0 %2299
        %2301 = vadd.xlane.f32.xlu0 %v2174
        %v2302 = vpop.xlane.xlu0 %2301
        %2303 = vadd.xlane.f32.xlu0 %v2176
        %v2304 = vpop.xlane.xlu0 %2303
        %2305 = vadd.xlane.f32.xlu0 %v2178
        %v2306 = vpop.xlane.xlu0 %2305
        %2307 = vadd.xlane.f32.xlu0 %v2180
        %v2308 = vpop.xlane.xlu0 %2307
        %2309 = vadd.xlane.f32.xlu0 %v2182
        %v2310 = vpop.xlane.xlu0 %2309
        %2311 = vadd.xlane.f32.xlu0 %v2184
        %v2312 = vpop.xlane.xlu0 %2311
        %2313 = vadd.xlane.f32.xlu0 %v2186
        %v2314 = vpop.xlane.xlu0 %2313
        %2315 = vadd.xlane.f32.xlu0 %v2188
        %v2316 = vpop.xlane.xlu0 %2315
        %2317 = vadd.xlane.f32.xlu0 %v2190
        %v2318 = vpop.xlane.xlu0 %2317
        %2319 = vadd.xlane.f32.xlu0 %v2192
        %v2320 = vpop.xlane.xlu0 %2319
        %2321 = vadd.xlane.f32.xlu0 %v2194
        %v2322 = vpop.xlane.xlu0 %2321
        %2323 = vadd.xlane.f32.xlu0 %v2196
        %v2324 = vpop.xlane.xlu0 %2323
        %2325 = vadd.xlane.f32.xlu0 %v2198
        %v2326 = vpop.xlane.xlu0 %2325
        %2327 = vadd.xlane.f32.xlu0 %v2200
        %v2328 = vpop.xlane.xlu0 %2327
        %2329 = vadd.xlane.f32.xlu0 %v2202
        %v2330 = vpop.xlane.xlu0 %2329
        %2331 = vadd.xlane.f32.xlu0 %v2204
        %v2332 = vpop.xlane.xlu0 %2331
        %2333 = vadd.xlane.f32.xlu0 %v2206
        %v2334 = vpop.xlane.xlu0 %2333
        %2335 = vadd.xlane.f32.xlu0 %v2208
        %v2336 = vpop.xlane.xlu0 %2335
        %2337 = vadd.xlane.f32.xlu0 %v2210
        %v2338 = vpop.xlane.xlu0 %2337
        %2339 = vadd.xlane.f32.xlu0 %v2212
        %v2340 = vpop.xlane.xlu0 %2339
        %2341 = vadd.xlane.f32.xlu0 %v2214
        %v2342 = vpop.xlane.xlu0 %2341
        %2343 = vadd.xlane.f32.xlu0 %v2216
        %v2344 = vpop.xlane.xlu0 %2343
        %2345 = vadd.xlane.f32.xlu0 %v2218
        %v2346 = vpop.xlane.xlu0 %2345
        %2347 = vadd.xlane.f32.xlu0 %v2220
        %v2348 = vpop.xlane.xlu0 %2347
        %2349 = vadd.xlane.f32.xlu0 %v2222
        %v2350 = vpop.xlane.xlu0 %2349
        %2351 = vadd.xlane.f32.xlu0 %v2224
        %v2352 = vpop.xlane.xlu0 %2351
        %2353 = vadd.xlane.f32.xlu0 %v2226
        %v2354 = vpop.xlane.xlu0 %2353
        %2355 = vadd.xlane.f32.xlu0 %v2228
        %v2356 = vpop.xlane.xlu0 %2355
        %2357 = vadd.xlane.f32.xlu0 %v2230
        %v2358 = vpop.xlane.xlu0 %2357
        %2359 = vadd.xlane.f32.xlu0 %v2232
        %v2360 = vpop.xlane.xlu0 %2359
        %2361 = vadd.xlane.f32.xlu0 %v2234
        %v2362 = vpop.xlane.xlu0 %2361
        %2363 = vadd.xlane.f32.xlu0 %v2236
        %v2364 = vpop.xlane.xlu0 %2363
        %2365 = vadd.xlane.f32.xlu0 %v2238
        %v2366 = vpop.xlane.xlu0 %2365
        %2367 = vadd.xlane.f32.xlu0 %v2240
        %v2368 = vpop.xlane.xlu0 %2367
        %2369 = vadd.xlane.f32.xlu0 %v2242
        %v2370 = vpop.xlane.xlu0 %2369
        %2371 = vadd.xlane.f32.xlu0 %v2244
        %v2372 = vpop.xlane.xlu0 %2371
        %2373 = vadd.xlane.f32.xlu0 %v2246
        %v2374 = vpop.xlane.xlu0 %2373
        %2375 = vadd.xlane.f32.xlu0 %v2248
        %v2376 = vpop.xlane.xlu0 %2375
        %2377 = vadd.xlane.f32.xlu0 %v2250
        %v2378 = vpop.xlane.xlu0 %2377
        %2379 = vadd.xlane.f32.xlu0 %v2252
        %v2380 = vpop.xlane.xlu0 %2379
        %2381 = vadd.xlane.f32.xlu0 %v2254
        %v2382 = vpop.xlane.xlu0 %2381
        %2383 = vadd.xlane.f32.xlu0 %v2256
        %v2384 = vpop.xlane.xlu0 %2383
        %2385 = vadd.xlane.f32.xlu0 %v2258
        %v2386 = vpop.xlane.xlu0 %2385
        %2387 = vadd.xlane.f32.xlu0 %v2260
        %v2388 = vpop.xlane.xlu0 %2387
        %2389 = vadd.xlane.f32.xlu0 %v2262
        %v2390 = vpop.xlane.xlu0 %2389
        %v2391 = vrcp.pop %v2264
        %v2392 = vrcp.pop %v2266
        %v2393 = vrcp.pop %v2268
        %v2394 = vrcp.pop %v2270
        %v2395 = vrcp.pop %v2272
        %v2396 = vrcp.pop %v2274
        %v2397 = vrcp.pop %v2276
        %v2398 = vrcp.pop %v2278
        %v2399 = vrcp.pop %v2280
        %v2400 = vrcp.pop %v2282
        %v2401 = vrcp.pop %v2284
        %v2402 = vrcp.pop %v2286
        %v2403 = vrcp.pop %v2288
        %v2404 = vrcp.pop %v2290
        %v2405 = vrcp.pop %v2292
        %v2406 = vrcp.pop %v2294
        %v2407 = vrcp.pop %v2296
        %v2408 = vrcp.pop %v2298
        %v2409 = vrcp.pop %v2300
        %v2410 = vrcp.pop %v2302
        %v2411 = vrcp.pop %v2304
        %v2412 = vrcp.pop %v2306
        %v2413 = vrcp.pop %v2308
        %v2414 = vrcp.pop %v2310
        %v2415 = vrcp.pop %v2312
        %v2416 = vrcp.pop %v2314
        %v2417 = vrcp.pop %v2316
        %v2418 = vrcp.pop %v2318
        %v2419 = vrcp.pop %v2320
        %v2420 = vrcp.pop %v2322
        %v2421 = vrcp.pop %v2324
        %v2422 = vrcp.pop %v2326
        %v2423 = vrcp.pop %v2328
        %v2424 = vrcp.pop %v2330
        %v2425 = vrcp.pop %v2332
        %v2426 = vrcp.pop %v2334
        %v2427 = vrcp.pop %v2336
        %v2428 = vrcp.pop %v2338
        %v2429 = vrcp.pop %v2340
        %v2430 = vrcp.pop %v2342
        %v2431 = vrcp.pop %v2344
        %v2432 = vrcp.pop %v2346
        %v2433 = vrcp.pop %v2348
        %v2434 = vrcp.pop %v2350
        %v2435 = vrcp.pop %v2352
        %v2436 = vrcp.pop %v2354
        %v2437 = vrcp.pop %v2356
        %v2438 = vrcp.pop %v2358
        %v2439 = vrcp.pop %v2360
        %v2440 = vrcp.pop %v2362
        %v2441 = vrcp.pop %v2364
        %v2442 = vrcp.pop %v2366
        %v2443 = vrcp.pop %v2368
        %v2444 = vrcp.pop %v2370
        %v2445 = vrcp.pop %v2372
        %v2446 = vrcp.pop %v2374
        %v2447 = vrcp.pop %v2376
        %v2448 = vrcp.pop %v2378
        %v2449 = vrcp.pop %v2380
        %v2450 = vrcp.pop %v2382
        %v2451 = vrcp.pop %v2384
        %v2452 = vrcp.pop %v2386
        %v2453 = vrcp.pop %v2388
        %v2454 = vrcp.pop %v2390
        %v2455 = vmul.f32 %v2136, %v2391
        %v2456 = vmul.f32 %v2138, %v2392
        %v2457 = vmul.f32 %v2140, %v2393
        %v2458 = vmul.f32 %v2142, %v2394
        %v2459 = vmul.f32 %v2144, %v2395
        %v2460 = vmul.f32 %v2146, %v2396
        %v2461 = vmul.f32 %v2148, %v2397
        %v2462 = vmul.f32 %v2150, %v2398
        %v2463 = vmul.f32 %v2152, %v2399
        %v2464 = vmul.f32 %v2154, %v2400
        %v2465 = vmul.f32 %v2156, %v2401
        %v2466 = vmul.f32 %v2158, %v2402
        %v2467 = vmul.f32 %v2160, %v2403
        %v2468 = vmul.f32 %v2162, %v2404
        %v2469 = vmul.f32 %v2164, %v2405
        %v2470 = vmul.f32 %v2166, %v2406
        %v2471 = vmul.f32 %v2168, %v2407
        %v2472 = vmul.f32 %v2170, %v2408
        %v2473 = vmul.f32 %v2172, %v2409
        %v2474 = vmul.f32 %v2174, %v2410
        %v2475 = vmul.f32 %v2176, %v2411
        %v2476 = vmul.f32 %v2178, %v2412
        %v2477 = vmul.f32 %v2180, %v2413
        %v2478 = vmul.f32 %v2182, %v2414
        %v2479 = vmul.f32 %v2184, %v2415
        %v2480 = vmul.f32 %v2186, %v2416
        %v2481 = vmul.f32 %v2188, %v2417
        %v2482 = vmul.f32 %v2190, %v2418
        %v2483 = vmul.f32 %v2192, %v2419
        %v2484 = vmul.f32 %v2194, %v2420
        %v2485 = vmul.f32 %v2196, %v2421
        %v2486 = vmul.f32 %v2198, %v2422
        %v2487 = vmul.f32 %v2200, %v2423
        %v2488 = vmul.f32 %v2202, %v2424
        %v2489 = vmul.f32 %v2204, %v2425
        %v2490 = vmul.f32 %v2206, %v2426
        %v2491 = vmul.f32 %v2208, %v2427
        %v2492 = vmul.f32 %v2210, %v2428
        %v2493 = vmul.f32 %v2212, %v2429
        %v2494 = vmul.f32 %v2214, %v2430
        %v2495 = vmul.f32 %v2216, %v2431
        %v2496 = vmul.f32 %v2218, %v2432
        %v2497 = vmul.f32 %v2220, %v2433
        %v2498 = vmul.f32 %v2222, %v2434
        %v2499 = vmul.f32 %v2224, %v2435
        %v2500 = vmul.f32 %v2226, %v2436
        %v2501 = vmul.f32 %v2228, %v2437
        %v2502 = vmul.f32 %v2230, %v2438
        %v2503 = vmul.f32 %v2232, %v2439
        %v2504 = vmul.f32 %v2234, %v2440
        %v2505 = vmul.f32 %v2236, %v2441
        %v2506 = vmul.f32 %v2238, %v2442
        %v2507 = vmul.f32 %v2240, %v2443
        %v2508 = vmul.f32 %v2242, %v2444
        %v2509 = vmul.f32 %v2244, %v2445
        %v2510 = vmul.f32 %v2246, %v2446
        %v2511 = vmul.f32 %v2248, %v2447
        %v2512 = vmul.f32 %v2250, %v2448
        %v2513 = vmul.f32 %v2252, %v2449
        %v2514 = vmul.f32 %v2254, %v2450
        %v2515 = vmul.f32 %v2256, %v2451
        %v2516 = vmul.f32 %v2258, %v2452
        %v2517 = vmul.f32 %v2260, %v2453
        %v2518 = vmul.f32 %v2262, %v2454
        %2519 = vst [vmem:[%s554] sm:$0xff] %v2455
        %2520 = vst [vmem:[%s554 + $0x8] sm:$0xff] %v2456
        %2521 = vst [vmem:[%s554 + $0x10] sm:$0xff] %v2457
        %2522 = vst [vmem:[%s554 + $0x18] sm:$0xff] %v2458
        %2523 = vst [vmem:[%s554 + $0x20] sm:$0xff] %v2459
        %2524 = vst [vmem:[%s554 + $0x28] sm:$0xff] %v2460
        %2525 = vst [vmem:[%s554 + $0x30] sm:$0xff] %v2461
        %2526 = vst [vmem:[%s554 + $0x38] sm:$0xff] %v2462
        %2527 = vst [vmem:[%s554 + $0x40] sm:$0xff] %v2463
        %2528 = vst [vmem:[%s554 + $0x48] sm:$0xff] %v2464
        %2529 = vst [vmem:[%s554 + $0x50] sm:$0xff] %v2465
        %2530 = vst [vmem:[%s554 + $0x58] sm:$0xff] %v2466
        %2531 = vst [vmem:[%s554 + $0x60] sm:$0xff] %v2467
        %2532 = vst [vmem:[%s554 + $0x68] sm:$0xff] %v2468
        %2533 = vst [vmem:[%s554 + $0x70] sm:$0xff] %v2469
        %2534 = vst [vmem:[%s554 + $0x78] sm:$0xff] %v2470
        %2535 = vst [vmem:[%s554 + $0x80] sm:$0xff] %v2471
        %2536 = vst [vmem:[%s554 + $0x88] sm:$0xff] %v2472
        %2537 = vst [vmem:[%s554 + $0x90] sm:$0xff] %v2473
        %2538 = vst [vmem:[%s554 + $0x98] sm:$0xff] %v2474
        %2539 = vst [vmem:[%s554 + $0xa0] sm:$0xff] %v2475
        %2540 = vst [vmem:[%s554 + $0xa8] sm:$0xff] %v2476
        %2541 = vst [vmem:[%s554 + $0xb0] sm:$0xff] %v2477
        %2542 = vst [vmem:[%s554 + $0xb8] sm:$0xff] %v2478
        %2543 = vst [vmem:[%s554 + $0xc0] sm:$0xff] %v2479
        %2544 = vst [vmem:[%s554 + $0xc8] sm:$0xff] %v2480
        %2545 = vst [vmem:[%s554 + $0xd0] sm:$0xff] %v2481
        %2546 = vst [vmem:[%s554 + $0xd8] sm:$0xff] %v2482
        %2547 = vst [vmem:[%s554 + $0xe0] sm:$0xff] %v2483
        %2548 = vst [vmem:[%s554 + $0xe8] sm:$0xff] %v2484
        %2549 = vst [vmem:[%s554 + $0xf0] sm:$0xff] %v2485
        %2550 = vst [vmem:[%s554 + $0xf8] sm:$0xff] %v2486
        %2551 = vst [vmem:[%s554 + $0x100] sm:$0xff] %v2487
        %2552 = vst [vmem:[%s554 + $0x108] sm:$0xff] %v2488
        %2553 = vst [vmem:[%s554 + $0x110] sm:$0xff] %v2489
        %2554 = vst [vmem:[%s554 + $0x118] sm:$0xff] %v2490
        %2555 = vst [vmem:[%s554 + $0x120] sm:$0xff] %v2491
        %2556 = vst [vmem:[%s554 + $0x128] sm:$0xff] %v2492
        %2557 = vst [vmem:[%s554 + $0x130] sm:$0xff] %v2493
        %2558 = vst [vmem:[%s554 + $0x138] sm:$0xff] %v2494
        %2559 = vst [vmem:[%s554 + $0x140] sm:$0xff] %v2495
        %2560 = vst [vmem:[%s554 + $0x148] sm:$0xff] %v2496
        %2561 = vst [vmem:[%s554 + $0x150] sm:$0xff] %v2497
        %2562 = vst [vmem:[%s554 + $0x158] sm:$0xff] %v2498
        %2563 = vst [vmem:[%s554 + $0x160] sm:$0xff] %v2499
        %2564 = vst [vmem:[%s554 + $0x168] sm:$0xff] %v2500
        %2565 = vst [vmem:[%s554 + $0x170] sm:$0xff] %v2501
        %2566 = vst [vmem:[%s554 + $0x178] sm:$0xff] %v2502
        %2567 = vst [vmem:[%s554 + $0x180] sm:$0xff] %v2503
        %2568 = vst [vmem:[%s554 + $0x188] sm:$0xff] %v2504
        %2569 = vst [vmem:[%s554 + $0x190] sm:$0xff] %v2505
        %2570 = vst [vmem:[%s554 + $0x198] sm:$0xff] %v2506
        %2571 = vst [vmem:[%s554 + $0x1a0] sm:$0xff] %v2507
        %2572 = vst [vmem:[%s554 + $0x1a8] sm:$0xff] %v2508
        %2573 = vst [vmem:[%s554 + $0x1b0] sm:$0xff] %v2509
        %2574 = vst [vmem:[%s554 + $0x1b8] sm:$0xff] %v2510
        %2575 = vst [vmem:[%s554 + $0x1c0] sm:$0xff] %v2511
        %2576 = vst [vmem:[%s554 + $0x1c8] sm:$0xff] %v2512
        %2577 = vst [vmem:[%s554 + $0x1d0] sm:$0xff] %v2513
        %2578 = vst [vmem:[%s554 + $0x1d8] sm:$0xff] %v2514
        %2579 = vst [vmem:[%s554 + $0x1e0] sm:$0xff] %v2515
        %2580 = vst [vmem:[%s554 + $0x1e8] sm:$0xff] %v2516
        %2581 = vst [vmem:[%s554 + $0x1f0] sm:$0xff] %v2517
        %2582 = vst [vmem:[%s554 + $0x1f8] sm:$0xff] %v2518
        %v2583 = vpack.c.bf16 %v2456, %v2455
        %v2584 = vpack.c.bf16 %v2458, %v2457
        %v2585 = vpack.c.bf16 %v2460, %v2459
        %v2586 = vpack.c.bf16 %v2462, %v2461
        %v2587 = vpack.c.bf16 %v2464, %v2463
        %v2588 = vpack.c.bf16 %v2466, %v2465
        %v2589 = vpack.c.bf16 %v2468, %v2467
        %v2590 = vpack.c.bf16 %v2470, %v2469
        %v2591 = vpack.c.bf16 %v2472, %v2471
        %v2592 = vpack.c.bf16 %v2474, %v2473
        %v2593 = vpack.c.bf16 %v2476, %v2475
        %v2594 = vpack.c.bf16 %v2478, %v2477
        %v2595 = vpack.c.bf16 %v2480, %v2479
        %v2596 = vpack.c.bf16 %v2482, %v2481
        %v2597 = vpack.c.bf16 %v2484, %v2483
        %v2598 = vpack.c.bf16 %v2486, %v2485
        %v2599 = vpack.c.bf16 %v2488, %v2487
        %v2600 = vpack.c.bf16 %v2490, %v2489
        %v2601 = vpack.c.bf16 %v2492, %v2491
        %v2602 = vpack.c.bf16 %v2494, %v2493
        %v2603 = vpack.c.bf16 %v2496, %v2495
        %v2604 = vpack.c.bf16 %v2498, %v2497
        %v2605 = vpack.c.bf16 %v2500, %v2499
        %v2606 = vpack.c.bf16 %v2502, %v2501
        %v2607 = vpack.c.bf16 %v2504, %v2503
        %v2608 = vpack.c.bf16 %v2506, %v2505
        %v2609 = vpack.c.bf16 %v2508, %v2507
        %v2610 = vpack.c.bf16 %v2510, %v2509
        %v2611 = vpack.c.bf16 %v2512, %v2511
        %v2612 = vpack.c.bf16 %v2514, %v2513
        %v2613 = vpack.c.bf16 %v2516, %v2515
        %v2614 = vpack.c.bf16 %v2518, %v2517
        %2615 = vmatprep.subr.bf16.mxu0 0
        %2616 = vmatpush1.bf16.msra.mxu0 %v969
        %2617 = vmatprep.subr.bf16.mxu0 0
        %2618 = vmatpush1.bf16.msra.mxu0 %v972
        %2619 = vmatprep.subr.bf16.mxu0 0
        %2620 = vmatpush1.bf16.msra.mxu0 %v975
        %2621 = vmatprep.subr.bf16.mxu0 0
        %2622 = vmatpush1.bf16.msra.mxu0 %v978
        %2623 = vmatprep.subr.bf16.mxu0 0
        %2624 = vmatpush1.bf16.msra.mxu0 %v981
        %2625 = vmatprep.subr.bf16.mxu0 0
        %2626 = vmatpush1.bf16.msra.mxu0 %v984
        %2627 = vmatprep.subr.bf16.mxu0 0
        %2628 = vmatpush1.bf16.msra.mxu0 %v987
        %2629 = vmatprep.subr.bf16.mxu0 0
        %2630 = vmatpush1.bf16.msra.mxu0 %v990
        %2631 = vmatprep.subr.bf16.mxu0 0
        %2632 = vmatpush1.bf16.msra.mxu0 0
        %2633 = vmatprep.subr.bf16.mxu0 0
        %2634 = vmatpush1.bf16.msra.mxu0 0
        %2635 = vmatprep.subr.bf16.mxu0 0
        %2636 = vmatpush1.bf16.msra.mxu0 0
        %2637 = vmatprep.subr.bf16.mxu0 0
        %2638 = vmatpush1.bf16.msra.mxu0 0
        %2639 = vmatprep.subr.bf16.mxu0 0
        %2640 = vmatpush1.bf16.msra.mxu0 0
        %2641 = vmatprep.subr.bf16.mxu0 0
        %2642 = vmatpush1.bf16.msra.mxu0 0
        %2643 = vmatprep.subr.bf16.mxu0 0
        %2644 = vmatpush1.bf16.msra.mxu0 0
        %2645 = vmatprep.subr.bf16.mxu0 0
        %2646 = vmatpush1.bf16.msra.mxu0 0
        %2647 = vmatprep.mubr.bf16.mxu0 0
        %2648 = vmatmul.mubr.bf16.gmra.mrb[0].mxu0 %v2583
        %v2649 = vpop.f32.mrb[0].mxu0
        %v2650 = vadd.f32 0.0, %v2649
        %v2651 = vpop.f32.mrb[0].mxu0
        %v2652 = vpop.f32.mrb[0].mxu0
        %v2653 = vadd.f32 0.0, %v2652
        %v2654 = vpop.f32.mrb[0].mxu0
        %2655 = vmatprep.mubr.bf16.mxu0 0
        %2656 = vmatmul.mubr.bf16.gmra.mrb[0].mxu0 %v2584
        %v2657 = vpop.f32.mrb[0].mxu0
        %v2658 = vadd.f32 0.0, %v2657
        %v2659 = vpop.f32.mrb[0].mxu0
        %v2660 = vpop.f32.mrb[0].mxu0
        %v2661 = vadd.f32 0.0, %v2660
        %v2662 = vpop.f32.mrb[0].mxu0
        %2663 = vmatprep.mubr.bf16.mxu0 0
        %2664 = vmatmul.mubr.bf16.gmra.mrb[0].mxu0 %v2585
        %v2665 = vpop.f32.mrb[0].mxu0
        %v2666 = vadd.f32 0.0, %v2665
        %v2667 = vpop.f32.mrb[0].mxu0
        %v2668 = vpop.f32.mrb[0].mxu0
        %v2669 = vadd.f32 0.0, %v2668
        %v2670 = vpop.f32.mrb[0].mxu0
        %2671 = vmatprep.mubr.bf16.mxu0 0
        %2672 = vmatmul.mubr.bf16.gmra.mrb[0].mxu0 %v2586
        %v2673 = vpop.f32.mrb[0].mxu0
        %v2674 = vadd.f32 0.0, %v2673
        %v2675 = vpop.f32.mrb[0].mxu0
        %v2676 = vpop.f32.mrb[0].mxu0
        %v2677 = vadd.f32 0.0, %v2676
        %v2678 = vpop.f32.mrb[0].mxu0
        %2679 = vmatprep.mubr.bf16.mxu0 0
        %2680 = vmatmul.mubr.bf16.gmra.mrb[0].mxu0 %v2587
        %v2681 = vpop.f32.mrb[0].mxu0
        %v2682 = vadd.f32 0.0, %v2681
        %v2683 = vpop.f32.mrb[0].mxu0
        %v2684 = vpop.f32.mrb[0].mxu0
        %v2685 = vadd.f32 0.0, %v2684
        %v2686 = vpop.f32.mrb[0].mxu0
        %2687 = vmatprep.mubr.bf16.mxu0 0
        %2688 = vmatmul.mubr.bf16.gmra.mrb[0].mxu0 %v2588
        %v2689 = vpop.f32.mrb[0].mxu0
        %v2690 = vadd.f32 0.0, %v2689
        %v2691 = vpop.f32.mrb[0].mxu0
        %v2692 = vpop.f32.mrb[0].mxu0
        %v2693 = vadd.f32 0.0, %v2692
        %v2694 = vpop.f32.mrb[0].mxu0
        %2695 = vmatprep.mubr.bf16.mxu0 0
        %2696 = vmatmul.mubr.bf16.gmra.mrb[0].mxu0 %v2589
        %v2697 = vpop.f32.mrb[0].mxu0
        %v2698 = vadd.f32 0.0, %v2697
        %v2699 = vpop.f32.mrb[0].mxu0
        %v2700 = vpop.f32.mrb[0].mxu0
        %v2701 = vadd.f32 0.0, %v2700
        %v2702 = vpop.f32.mrb[0].mxu0
        %2703 = vmatprep.mubr.bf16.mxu0 0
        %2704 = vmatmul.mubr.bf16.gmra.mrb[0].mxu0 %v2590
        %v2705 = vpop.f32.mrb[0].mxu0
        %v2706 = vadd.f32 0.0, %v2705
        %v2707 = vpop.f32.mrb[0].mxu0
        %v2708 = vpop.f32.mrb[0].mxu0
        %v2709 = vadd.f32 0.0, %v2708
        %v2710 = vpop.f32.mrb[0].mxu0
        %2711 = vdwg.mxu0
        %2712 = vmatprep.subr.bf16.mxu0 0
        %2713 = vmatpush1.bf16.msra.mxu0 %v1112
        %2714 = vmatprep.subr.bf16.mxu0 0
        %2715 = vmatpush1.bf16.msra.mxu0 %v1114
        %2716 = vmatprep.subr.bf16.mxu0 0
        %2717 = vmatpush1.bf16.msra.mxu0 %v1116
        %2718 = vmatprep.subr.bf16.mxu0 0
        %2719 = vmatpush1.bf16.msra.mxu0 %v1118
        %2720 = vmatprep.subr.bf16.mxu0 0
        %2721 = vmatpush1.bf16.msra.mxu0 %v1120
        %2722 = vmatprep.subr.bf16.mxu0 0
        %2723 = vmatpush1.bf16.msra.mxu0 %v1122
        %2724 = vmatprep.subr.bf16.mxu0 0
        %2725 = vmatpush1.bf16.msra.mxu0 %v1124
        %2726 = vmatprep.subr.bf16.mxu0 0
        %2727 = vmatpush1.bf16.msra.mxu0 %v1126
        %2728 = vmatprep.subr.bf16.mxu0 0
        %2729 = vmatpush1.bf16.msra.mxu0 0
        %2730 = vmatprep.subr.bf16.mxu0 0
        %2731 = vmatpush1.bf16.msra.mxu0 0
        %2732 = vmatprep.subr.bf16.mxu0 0
        %2733 = vmatpush1.bf16.msra.mxu0 0
        %2734 = vmatprep.subr.bf16.mxu0 0
        %2735 = vmatpush1.bf16.msra.mxu0 0
        %2736 = vmatprep.subr.bf16.mxu0 0
        %2737 = vmatpush1.bf16.msra.mxu0 0
        %2738 = vmatprep.subr.bf16.mxu0 0
        %2739 = vmatpush1.bf16.msra.mxu0 0
        %2740 = vmatprep.subr.bf16.mxu0 0
        %2741 = vmatpush1.bf16.msra.mxu0 0
        %2742 = vmatprep.subr.bf16.mxu0 0
        %2743 = vmatpush1.bf16.msra.mxu0 0
        %2744 = vmatprep.mubr.bf16.mxu0 0
        %2745 = vmatmul.mubr.bf16.gmra.mrb[0].mxu0 %v2591
        %v2746 = vpop.f32.mrb[0].mxu0
        %v2747 = vadd.f32 0.0, %v2746
        %v2748 = vpop.f32.mrb[0].mxu0
        %v2749 = vpop.f32.mrb[0].mxu0
        %v2750 = vadd.f32 0.0, %v2749
        %v2751 = vpop.f32.mrb[0].mxu0
        %2752 = vmatprep.mubr.bf16.mxu0 0
        %2753 = vmatmul.mubr.bf16.gmra.mrb[0].mxu0 %v2592
        %v2754 = vpop.f32.mrb[0].mxu0
        %v2755 = vadd.f32 0.0, %v2754
        %v2756 = vpop.f32.mrb[0].mxu0
        %v2757 = vpop.f32.mrb[0].mxu0
        %v2758 = vadd.f32 0.0, %v2757
        %v2759 = vpop.f32.mrb[0].mxu0
        %2760 = vmatprep.mubr.bf16.mxu0 0
        %2761 = vmatmul.mubr.bf16.gmra.mrb[0].mxu0 %v2593
        %v2762 = vpop.f32.mrb[0].mxu0
        %v2763 = vadd.f32 0.0, %v2762
        %v2764 = vpop.f32.mrb[0].mxu0
        %v2765 = vpop.f32.mrb[0].mxu0
        %v2766 = vadd.f32 0.0, %v2765
        %v2767 = vpop.f32.mrb[0].mxu0
        %2768 = vmatprep.mubr.bf16.mxu0 0
        %2769 = vmatmul.mubr.bf16.gmra.mrb[0].mxu0 %v2594
        %v2770 = vpop.f32.mrb[0].mxu0
        %v2771 = vadd.f32 0.0, %v2770
        %v2772 = vpop.f32.mrb[0].mxu0
        %v2773 = vpop.f32.mrb[0].mxu0
        %v2774 = vadd.f32 0.0, %v2773
        %v2775 = vpop.f32.mrb[0].mxu0
        %2776 = vmatprep.mubr.bf16.mxu0 0
        %2777 = vmatmul.mubr.bf16.gmra.mrb[0].mxu0 %v2595
        %v2778 = vpop.f32.mrb[0].mxu0
        %v2779 = vadd.f32 0.0, %v2778
        %v2780 = vpop.f32.mrb[0].mxu0
        %v2781 = vpop.f32.mrb[0].mxu0
        %v2782 = vadd.f32 0.0, %v2781
        %v2783 = vpop.f32.mrb[0].mxu0
        %2784 = vmatprep.mubr.bf16.mxu0 0
        %2785 = vmatmul.mubr.bf16.gmra.mrb[0].mxu0 %v2596
        %v2786 = vpop.f32.mrb[0].mxu0
        %v2787 = vadd.f32 0.0, %v2786
        %v2788 = vpop.f32.mrb[0].mxu0
        %v2789 = vpop.f32.mrb[0].mxu0
        %v2790 = vadd.f32 0.0, %v2789
        %v2791 = vpop.f32.mrb[0].mxu0
        %2792 = vmatprep.mubr.bf16.mxu0 0
        %2793 = vmatmul.mubr.bf16.gmra.mrb[0].mxu0 %v2597
        %v2794 = vpop.f32.mrb[0].mxu0
        %v2795 = vadd.f32 0.0, %v2794
        %v2796 = vpop.f32.mrb[0].mxu0
        %v2797 = vpop.f32.mrb[0].mxu0
        %v2798 = vadd.f32 0.0, %v2797
        %v2799 = vpop.f32.mrb[0].mxu0
        %2800 = vmatprep.mubr.bf16.mxu0 0
        %2801 = vmatmul.mubr.bf16.gmra.mrb[0].mxu0 %v2598
        %v2802 = vpop.f32.mrb[0].mxu0
        %v2803 = vadd.f32 0.0, %v2802
        %v2804 = vpop.f32.mrb[0].mxu0
        %v2805 = vpop.f32.mrb[0].mxu0
        %v2806 = vadd.f32 0.0, %v2805
        %v2807 = vpop.f32.mrb[0].mxu0
        %2808 = vdwg.mxu0
        %2809 = vmatprep.subr.bf16.mxu0 0
        %2810 = vmatpush1.bf16.msra.mxu0 %v1136
        %2811 = vmatprep.subr.bf16.mxu0 0
        %2812 = vmatpush1.bf16.msra.mxu0 %v1138
        %2813 = vmatprep.subr.bf16.mxu0 0
        %2814 = vmatpush1.bf16.msra.mxu0 %v1140
        %2815 = vmatprep.subr.bf16.mxu0 0
        %2816 = vmatpush1.bf16.msra.mxu0 %v1142
        %2817 = vmatprep.subr.bf16.mxu0 0
        %2818 = vmatpush1.bf16.msra.mxu0 %v1144
        %2819 = vmatprep.subr.bf16.mxu0 0
        %2820 = vmatpush1.bf16.msra.mxu0 %v1146
        %2821 = vmatprep.subr.bf16.mxu0 0
        %2822 = vmatpush1.bf16.msra.mxu0 %v1148
        %2823 = vmatprep.subr.bf16.mxu0 0
        %2824 = vmatpush1.bf16.msra.mxu0 %v1150
        %2825 = vmatprep.subr.bf16.mxu0 0
        %2826 = vmatpush1.bf16.msra.mxu0 0
        %2827 = vmatprep.subr.bf16.mxu0 0
        %2828 = vmatpush1.bf16.msra.mxu0 0
        %2829 = vmatprep.subr.bf16.mxu0 0
        %2830 = vmatpush1.bf16.msra.mxu0 0
        %2831 = vmatprep.subr.bf16.mxu0 0
        %2832 = vmatpush1.bf16.msra.mxu0 0
        %2833 = vmatprep.subr.bf16.mxu0 0
        %2834 = vmatpush1.bf16.msra.mxu0 0
        %2835 = vmatprep.subr.bf16.mxu0 0
        %2836 = vmatpush1.bf16.msra.mxu0 0
        %2837 = vmatprep.subr.bf16.mxu0 0
        %2838 = vmatpush1.bf16.msra.mxu0 0
        %2839 = vmatprep.subr.bf16.mxu0 0
        %2840 = vmatpush1.bf16.msra.mxu0 0
        %2841 = vmatprep.mubr.bf16.mxu0 0
        %2842 = vmatmul.mubr.bf16.gmra.mrb[0].mxu0 %v2599
        %v2843 = vpop.f32.mrb[0].mxu0
        %v2844 = vadd.f32 0.0, %v2843
        %v2845 = vpop.f32.mrb[0].mxu0
        %v2846 = vpop.f32.mrb[0].mxu0
        %v2847 = vadd.f32 0.0, %v2846
        %v2848 = vpop.f32.mrb[0].mxu0
        %2849 = vmatprep.mubr.bf16.mxu0 0
        %2850 = vmatmul.mubr.bf16.gmra.mrb[0].mxu0 %v2600
        %v2851 = vpop.f32.mrb[0].mxu0
        %v2852 = vadd.f32 0.0, %v2851
        %v2853 = vpop.f32.mrb[0].mxu0
        %v2854 = vpop.f32.mrb[0].mxu0
        %v2855 = vadd.f32 0.0, %v2854
        %v2856 = vpop.f32.mrb[0].mxu0
        %2857 = vmatprep.mubr.bf16.mxu0 0
        %2858 = vmatmul.mubr.bf16.gmra.mrb[0].mxu0 %v2601
        %v2859 = vpop.f32.mrb[0].mxu0
        %v2860 = vadd.f32 0.0, %v2859
        %v2861 = vpop.f32.mrb[0].mxu0
        %v2862 = vpop.f32.mrb[0].mxu0
        %v2863 = vadd.f32 0.0, %v2862
        %v2864 = vpop.f32.mrb[0].mxu0
        %2865 = vmatprep.mubr.bf16.mxu0 0
        %2866 = vmatmul.mubr.bf16.gmra.mrb[0].mxu0 %v2602
        %v2867 = vpop.f32.mrb[0].mxu0
        %v2868 = vadd.f32 0.0, %v2867
        %v2869 = vpop.f32.mrb[0].mxu0
        %v2870 = vpop.f32.mrb[0].mxu0
        %v2871 = vadd.f32 0.0, %v2870
        %v2872 = vpop.f32.mrb[0].mxu0
        %2873 = vmatprep.mubr.bf16.mxu0 0
        %2874 = vmatmul.mubr.bf16.gmra.mrb[0].mxu0 %v2603
        %v2875 = vpop.f32.mrb[0].mxu0
        %v2876 = vadd.f32 0.0, %v2875
        %v2877 = vpop.f32.mrb[0].mxu0
        %v2878 = vpop.f32.mrb[0].mxu0
        %v2879 = vadd.f32 0.0, %v2878
        %v2880 = vpop.f32.mrb[0].mxu0
        %2881 = vmatprep.mubr.bf16.mxu0 0
        %2882 = vmatmul.mubr.bf16.gmra.mrb[0].mxu0 %v2604
        %v2883 = vpop.f32.mrb[0].mxu0
        %v2884 = vadd.f32 0.0, %v2883
        %v2885 = vpop.f32.mrb[0].mxu0
        %v2886 = vpop.f32.mrb[0].mxu0
        %v2887 = vadd.f32 0.0, %v2886
        %v2888 = vpop.f32.mrb[0].mxu0
        %2889 = vmatprep.mubr.bf16.mxu0 0
        %2890 = vmatmul.mubr.bf16.gmra.mrb[0].mxu0 %v2605
        %v2891 = vpop.f32.mrb[0].mxu0
        %v2892 = vadd.f32 0.0, %v2891
        %v2893 = vpop.f32.mrb[0].mxu0
        %v2894 = vpop.f32.mrb[0].mxu0
        %v2895 = vadd.f32 0.0, %v2894
        %v2896 = vpop.f32.mrb[0].mxu0
        %2897 = vmatprep.mubr.bf16.mxu0 0
        %2898 = vmatmul.mubr.bf16.gmra.mrb[0].mxu0 %v2606
        %v2899 = vpop.f32.mrb[0].mxu0
        %v2900 = vadd.f32 0.0, %v2899
        %v2901 = vpop.f32.mrb[0].mxu0
        %v2902 = vpop.f32.mrb[0].mxu0
        %v2903 = vadd.f32 0.0, %v2902
        %v2904 = vpop.f32.mrb[0].mxu0
        %2905 = vdwg.mxu0
        %2906 = vmatprep.subr.bf16.mxu0 0
        %2907 = vmatpush1.bf16.msra.mxu0 %v1160
        %2908 = vmatprep.subr.bf16.mxu0 0
        %2909 = vmatpush1.bf16.msra.mxu0 %v1162
        %2910 = vmatprep.subr.bf16.mxu0 0
        %2911 = vmatpush1.bf16.msra.mxu0 %v1164
        %2912 = vmatprep.subr.bf16.mxu0 0
        %2913 = vmatpush1.bf16.msra.mxu0 %v1166
        %2914 = vmatprep.subr.bf16.mxu0 0
        %2915 = vmatpush1.bf16.msra.mxu0 %v1168
        %2916 = vmatprep.subr.bf16.mxu0 0
        %2917 = vmatpush1.bf16.msra.mxu0 %v1170
        %2918 = vmatprep.subr.bf16.mxu0 0
        %2919 = vmatpush1.bf16.msra.mxu0 %v1172
        %2920 = vmatprep.subr.bf16.mxu0 0
        %2921 = vmatpush1.bf16.msra.mxu0 %v1174
        %2922 = vmatprep.subr.bf16.mxu0 0
        %2923 = vmatpush1.bf16.msra.mxu0 0
        %2924 = vmatprep.subr.bf16.mxu0 0
        %2925 = vmatpush1.bf16.msra.mxu0 0
        %2926 = vmatprep.subr.bf16.mxu0 0
        %2927 = vmatpush1.bf16.msra.mxu0 0
        %2928 = vmatprep.subr.bf16.mxu0 0
        %2929 = vmatpush1.bf16.msra.mxu0 0
        %2930 = vmatprep.subr.bf16.mxu0 0
        %2931 = vmatpush1.bf16.msra.mxu0 0
        %2932 = vmatprep.subr.bf16.mxu0 0
        %2933 = vmatpush1.bf16.msra.mxu0 0
        %2934 = vmatprep.subr.bf16.mxu0 0
        %2935 = vmatpush1.bf16.msra.mxu0 0
        %2936 = vmatprep.subr.bf16.mxu0 0
        %2937 = vmatpush1.bf16.msra.mxu0 0
        %2938 = vmatprep.mubr.bf16.mxu0 0
        %2939 = vmatmul.mubr.bf16.gmra.mrb[0].mxu0 %v2607
        %v2940 = vpop.f32.mrb[0].mxu0
        %v2941 = vadd.f32 0.0, %v2940
        %v2942 = vpop.f32.mrb[0].mxu0
        %v2943 = vpop.f32.mrb[0].mxu0
        %v2944 = vadd.f32 0.0, %v2943
        %v2945 = vpop.f32.mrb[0].mxu0
        %2946 = vmatprep.mubr.bf16.mxu0 0
        %2947 = vmatmul.mubr.bf16.gmra.mrb[0].mxu0 %v2608
        %v2948 = vpop.f32.mrb[0].mxu0
        %v2949 = vadd.f32 0.0, %v2948
        %v2950 = vpop.f32.mrb[0].mxu0
        %v2951 = vpop.f32.mrb[0].mxu0
        %v2952 = vadd.f32 0.0, %v2951
        %v2953 = vpop.f32.mrb[0].mxu0
        %2954 = vmatprep.mubr.bf16.mxu0 0
        %2955 = vmatmul.mubr.bf16.gmra.mrb[0].mxu0 %v2609
        %v2956 = vpop.f32.mrb[0].mxu0
        %v2957 = vadd.f32 0.0, %v2956
        %v2958 = vpop.f32.mrb[0].mxu0
        %v2959 = vpop.f32.mrb[0].mxu0
        %v2960 = vadd.f32 0.0, %v2959
        %v2961 = vpop.f32.mrb[0].mxu0
        %2962 = vmatprep.mubr.bf16.mxu0 0
        %2963 = vmatmul.mubr.bf16.gmra.mrb[0].mxu0 %v2610
        %v2964 = vpop.f32.mrb[0].mxu0
        %v2965 = vadd.f32 0.0, %v2964
        %v2966 = vpop.f32.mrb[0].mxu0
        %v2967 = vpop.f32.mrb[0].mxu0
        %v2968 = vadd.f32 0.0, %v2967
        %v2969 = vpop.f32.mrb[0].mxu0
        %2970 = vmatprep.mubr.bf16.mxu0 0
        %2971 = vmatmul.mubr.bf16.gmra.mrb[0].mxu0 %v2611
        %v2972 = vpop.f32.mrb[0].mxu0
        %v2973 = vadd.f32 0.0, %v2972
        %v2974 = vpop.f32.mrb[0].mxu0
        %v2975 = vpop.f32.mrb[0].mxu0
        %v2976 = vadd.f32 0.0, %v2975
        %v2977 = vpop.f32.mrb[0].mxu0
        %2978 = vmatprep.mubr.bf16.mxu0 0
        %2979 = vmatmul.mubr.bf16.gmra.mrb[0].mxu0 %v2612
        %v2980 = vpop.f32.mrb[0].mxu0
        %v2981 = vadd.f32 0.0, %v2980
        %v2982 = vpop.f32.mrb[0].mxu0
        %v2983 = vpop.f32.mrb[0].mxu0
        %v2984 = vadd.f32 0.0, %v2983
        %v2985 = vpop.f32.mrb[0].mxu0
        %2986 = vmatprep.mubr.bf16.mxu0 0
        %2987 = vmatmul.mubr.bf16.gmra.mrb[0].mxu0 %v2613
        %v2988 = vpop.f32.mrb[0].mxu0
        %v2989 = vadd.f32 0.0, %v2988
        %v2990 = vpop.f32.mrb[0].mxu0
        %v2991 = vpop.f32.mrb[0].mxu0
        %v2992 = vadd.f32 0.0, %v2991
        %v2993 = vpop.f32.mrb[0].mxu0
        %2994 = vmatprep.mubr.bf16.mxu0 0
        %2995 = vmatmul.mubr.bf16.gmra.mrb[0].mxu0 %v2614
        %v2996 = vpop.f32.mrb[0].mxu0
        %v2997 = vadd.f32 0.0, %v2996
        %v2998 = vpop.f32.mrb[0].mxu0
        %v2999 = vpop.f32.mrb[0].mxu0
        %v3000 = vadd.f32 0.0, %v2999
        %v3001 = vpop.f32.mrb[0].mxu0
        %3002 = vdwg.mxu0
        %v3003 = vpack.c.bf16 %v2653, %v2650
        %v3004 = vpack.c.bf16 %v2661, %v2658
        %v3005 = vpack.c.bf16 %v2669, %v2666
        %v3006 = vpack.c.bf16 %v2677, %v2674
        %v3007 = vpack.c.bf16 %v2685, %v2682
        %v3008 = vpack.c.bf16 %v2693, %v2690
        %v3009 = vpack.c.bf16 %v2701, %v2698
        %v3010 = vpack.c.bf16 %v2709, %v2706
        %v3011 = vpack.c.bf16 %v2750, %v2747
        %v3012 = vpack.c.bf16 %v2758, %v2755
        %v3013 = vpack.c.bf16 %v2766, %v2763
        %v3014 = vpack.c.bf16 %v2774, %v2771
        %v3015 = vpack.c.bf16 %v2782, %v2779
        %v3016 = vpack.c.bf16 %v2790, %v2787
        %v3017 = vpack.c.bf16 %v2798, %v2795
        %v3018 = vpack.c.bf16 %v2806, %v2803
        %v3019 = vpack.c.bf16 %v2847, %v2844
        %v3020 = vpack.c.bf16 %v2855, %v2852
        %v3021 = vpack.c.bf16 %v2863, %v2860
        %v3022 = vpack.c.bf16 %v2871, %v2868
        %v3023 = vpack.c.bf16 %v2879, %v2876
        %v3024 = vpack.c.bf16 %v2887, %v2884
        %v3025 = vpack.c.bf16 %v2895, %v2892
        %v3026 = vpack.c.bf16 %v2903, %v2900
        %v3027 = vpack.c.bf16 %v2944, %v2941
        %v3028 = vpack.c.bf16 %v2952, %v2949
        %v3029 = vpack.c.bf16 %v2960, %v2957
        %v3030 = vpack.c.bf16 %v2968, %v2965
        %v3031 = vpack.c.bf16 %v2976, %v2973
        %v3032 = vpack.c.bf16 %v2984, %v2981
        %v3033 = vpack.c.bf16 %v2992, %v2989
        %v3034 = vpack.c.bf16 %v3000, %v2997
        %v3035 = vld [vmem:[#allocation7] sm:$0xf]
        %v3036 = vld [vmem:[#allocation7 + $0x4] sm:$0xf]
        %v3037 = vld [vmem:[#allocation7 + $0x8] sm:$0xf]
        %v3038 = vld [vmem:[#allocation7 + $0xc] sm:$0xf]
        %v3039 = vld [vmem:[#allocation7 + $0x10] sm:$0xf]
        %v3040 = vld [vmem:[#allocation7 + $0x14] sm:$0xf]
        %v3041 = vld [vmem:[#allocation7 + $0x18] sm:$0xf]
        %v3042 = vld [vmem:[#allocation7 + $0x1c] sm:$0xf]
        %v3043 = vld [vmem:[#allocation7 + $0x20] sm:$0xf]
        %v3044 = vld [vmem:[#allocation7 + $0x24] sm:$0xf]
        %v3045 = vld [vmem:[#allocation7 + $0x28] sm:$0xf]
        %v3046 = vld [vmem:[#allocation7 + $0x2c] sm:$0xf]
        %v3047 = vld [vmem:[#allocation7 + $0x30] sm:$0xf]
        %v3048 = vld [vmem:[#allocation7 + $0x34] sm:$0xf]
        %v3049 = vld [vmem:[#allocation7 + $0x38] sm:$0xf]
        %v3050 = vld [vmem:[#allocation7 + $0x3c] sm:$0xf]
        %v3055 = vunpack.c.l.b16 %v3035
        %v3056 = vunpack.c.l.b16 %v3036
        %v3057 = vunpack.c.l.b16 %v3037
        %v3058 = vunpack.c.l.b16 %v3038
        %v3059 = vpack.c.b16 %v3056, %v3055
        %v3060 = vpack.c.b16 %v3058, %v3057
        %v3064 = vsel %vm1234, %v3003, 0
        %v3067 = vsel %vm1234, %v3004, 0
        %v3070 = vsel %vm1234, %v3005, 0
        %v3073 = vsel %vm1234, %v3006, 0
        %v3076 = vsel %vm1234, %v3007, 0
        %v3079 = vsel %vm1234, %v3008, 0
        %v3082 = vsel %vm1234, %v3009, 0
        %v3085 = vsel %vm1234, %v3010, 0
        %3087 = vmatprep.subr.bf16.mxu0 0
        %3088 = vmatpush1.bf16.msra.mxu0 %v3059
        %3089 = vmatprep.subr.bf16.mxu0 0
        %3090 = vmatpush1.bf16.msra.mxu0 %v3060
        %3091 = vmatprep.subr.bf16.mxu0 0
        %3092 = vmatpush1.bf16.msra.mxu0 0
        %3093 = vmatprep.subr.bf16.mxu0 0
        %3094 = vmatpush1.bf16.msra.mxu0 0
        %3095 = vmatprep.subr.bf16.mxu0 0
        %3096 = vmatpush1.bf16.msra.mxu0 0
        %3097 = vmatprep.subr.bf16.mxu0 0
        %3098 = vmatpush1.bf16.msra.mxu0 0
        %3099 = vmatprep.subr.bf16.mxu0 0
        %3100 = vmatpush1.bf16.msra.mxu0 0
        %3101 = vmatprep.subr.bf16.mxu0 0
        %3102 = vmatpush1.bf16.msra.mxu0 0
        %3103 = vmatprep.subr.bf16.mxu0 0
        %3104 = vmatpush1.bf16.msra.mxu0 0
        %3105 = vmatprep.subr.bf16.mxu0 0
        %3106 = vmatpush1.bf16.msra.mxu0 0
        %3107 = vmatprep.subr.bf16.mxu0 0
        %3108 = vmatpush1.bf16.msra.mxu0 0
        %3109 = vmatprep.subr.bf16.mxu0 0
        %3110 = vmatpush1.bf16.msra.mxu0 0
        %3111 = vmatprep.subr.bf16.mxu0 0
        %3112 = vmatpush1.bf16.msra.mxu0 0
        %3113 = vmatprep.subr.bf16.mxu0 0
        %3114 = vmatpush1.bf16.msra.mxu0 0
        %3115 = vmatprep.subr.bf16.mxu0 0
        %3116 = vmatpush1.bf16.msra.mxu0 0
        %3117 = vmatprep.subr.bf16.mxu0 0
        %3118 = vmatpush1.bf16.msra.mxu0 0
        %3119 = vmatprep.mubr.bf16.mxu0 0
        %3120 = vmatmul.mubr.bf16.gmra.mrb[0].mxu0 %v3064
        %v3121 = vpop.f32.mrb[0].mxu0
        %v3122 = vadd.f32 0.0, %v3121
        %v3123 = vpop.f32.mrb[0].mxu0
        %v3124 = vpop.f32.mrb[0].mxu0
        %v3125 = vadd.f32 0.0, %v3124
        %v3126 = vpop.f32.mrb[0].mxu0
        %3127 = vmatprep.mubr.bf16.mxu0 0
        %3128 = vmatmul.mubr.bf16.gmra.mrb[0].mxu0 %v3067
        %v3129 = vpop.f32.mrb[0].mxu0
        %v3130 = vadd.f32 0.0, %v3129
        %v3131 = vpop.f32.mrb[0].mxu0
        %v3132 = vpop.f32.mrb[0].mxu0
        %v3133 = vadd.f32 0.0, %v3132
        %v3134 = vpop.f32.mrb[0].mxu0
        %3135 = vmatprep.mubr.bf16.mxu0 0
        %3136 = vmatmul.mubr.bf16.gmra.mrb[0].mxu0 %v3070
        %v3137 = vpop.f32.mrb[0].mxu0
        %v3138 = vadd.f32 0.0, %v3137
        %v3139 = vpop.f32.mrb[0].mxu0
        %v3140 = vpop.f32.mrb[0].mxu0
        %v3141 = vadd.f32 0.0, %v3140
        %v3142 = vpop.f32.mrb[0].mxu0
        %3143 = vmatprep.mubr.bf16.mxu0 0
        %3144 = vmatmul.mubr.bf16.gmra.mrb[0].mxu0 %v3073
        %v3145 = vpop.f32.mrb[0].mxu0
        %v3146 = vadd.f32 0.0, %v3145
        %v3147 = vpop.f32.mrb[0].mxu0
        %v3148 = vpop.f32.mrb[0].mxu0
        %v3149 = vadd.f32 0.0, %v3148
        %v3150 = vpop.f32.mrb[0].mxu0
        %3151 = vmatprep.mubr.bf16.mxu0 0
        %3152 = vmatmul.mubr.bf16.gmra.mrb[0].mxu0 %v3076
        %v3153 = vpop.f32.mrb[0].mxu0
        %v3154 = vadd.f32 0.0, %v3153
        %v3155 = vpop.f32.mrb[0].mxu0
        %v3156 = vpop.f32.mrb[0].mxu0
        %v3157 = vadd.f32 0.0, %v3156
        %v3158 = vpop.f32.mrb[0].mxu0
        %3159 = vmatprep.mubr.bf16.mxu0 0
        %3160 = vmatmul.mubr.bf16.gmra.mrb[0].mxu0 %v3079
        %v3161 = vpop.f32.mrb[0].mxu0
        %v3162 = vadd.f32 0.0, %v3161
        %v3163 = vpop.f32.mrb[0].mxu0
        %v3164 = vpop.f32.mrb[0].mxu0
        %v3165 = vadd.f32 0.0, %v3164
        %v3166 = vpop.f32.mrb[0].mxu0
        %3167 = vmatprep.mubr.bf16.mxu0 0
        %3168 = vmatmul.mubr.bf16.gmra.mrb[0].mxu0 %v3082
        %v3169 = vpop.f32.mrb[0].mxu0
        %v3170 = vadd.f32 0.0, %v3169
        %v3171 = vpop.f32.mrb[0].mxu0
        %v3172 = vpop.f32.mrb[0].mxu0
        %v3173 = vadd.f32 0.0, %v3172
        %v3174 = vpop.f32.mrb[0].mxu0
        %3175 = vmatprep.mubr.bf16.mxu0 0
        %3176 = vmatmul.mubr.bf16.gmra.mrb[0].mxu0 %v3085
        %v3177 = vpop.f32.mrb[0].mxu0
        %v3178 = vadd.f32 0.0, %v3177
        %v3179 = vpop.f32.mrb[0].mxu0
        %v3180 = vpop.f32.mrb[0].mxu0
        %v3181 = vadd.f32 0.0, %v3180
        %v3182 = vpop.f32.mrb[0].mxu0
        %3183 = vdwg.mxu0
        %v3188 = vunpack.c.l.b16 %v3039
        %v3189 = vunpack.c.l.b16 %v3040
        %v3190 = vunpack.c.l.b16 %v3041
        %v3191 = vunpack.c.l.b16 %v3042
        %v3192 = vpack.c.b16 %v3189, %v3188
        %v3193 = vpack.c.b16 %v3191, %v3190
        %v3197 = vsel %vm1234, %v3011, 0
        %v3200 = vsel %vm1234, %v3012, 0
        %v3203 = vsel %vm1234, %v3013, 0
        %v3206 = vsel %vm1234, %v3014, 0
        %v3209 = vsel %vm1234, %v3015, 0
        %v3212 = vsel %vm1234, %v3016, 0
        %v3215 = vsel %vm1234, %v3017, 0
        %v3218 = vsel %vm1234, %v3018, 0
        %3220 = vmatprep.subr.bf16.mxu0 0
        %3221 = vmatpush1.bf16.msra.mxu0 %v3192
        %3222 = vmatprep.subr.bf16.mxu0 0
        %3223 = vmatpush1.bf16.msra.mxu0 %v3193
        %3224 = vmatprep.subr.bf16.mxu0 0
        %3225 = vmatpush1.bf16.msra.mxu0 0
        %3226 = vmatprep.subr.bf16.mxu0 0
        %3227 = vmatpush1.bf16.msra.mxu0 0
        %3228 = vmatprep.subr.bf16.mxu0 0
        %3229 = vmatpush1.bf16.msra.mxu0 0
        %3230 = vmatprep.subr.bf16.mxu0 0
        %3231 = vmatpush1.bf16.msra.mxu0 0
        %3232 = vmatprep.subr.bf16.mxu0 0
        %3233 = vmatpush1.bf16.msra.mxu0 0
        %3234 = vmatprep.subr.bf16.mxu0 0
        %3235 = vmatpush1.bf16.msra.mxu0 0
        %3236 = vmatprep.subr.bf16.mxu0 0
        %3237 = vmatpush1.bf16.msra.mxu0 0
        %3238 = vmatprep.subr.bf16.mxu0 0
        %3239 = vmatpush1.bf16.msra.mxu0 0
        %3240 = vmatprep.subr.bf16.mxu0 0
        %3241 = vmatpush1.bf16.msra.mxu0 0
        %3242 = vmatprep.subr.bf16.mxu0 0
        %3243 = vmatpush1.bf16.msra.mxu0 0
        %3244 = vmatprep.subr.bf16.mxu0 0
        %3245 = vmatpush1.bf16.msra.mxu0 0
        %3246 = vmatprep.subr.bf16.mxu0 0
        %3247 = vmatpush1.bf16.msra.mxu0 0
        %3248 = vmatprep.subr.bf16.mxu0 0
        %3249 = vmatpush1.bf16.msra.mxu0 0
        %3250 = vmatprep.subr.bf16.mxu0 0
        %3251 = vmatpush1.bf16.msra.mxu0 0
        %3252 = vmatprep.mubr.bf16.mxu0 0
        %3253 = vmatmul.mubr.bf16.gmra.mrb[0].mxu0 %v3197
        %v3254 = vpop.f32.mrb[0].mxu0
        %v3255 = vadd.f32 0.0, %v3254
        %v3256 = vpop.f32.mrb[0].mxu0
        %v3257 = vpop.f32.mrb[0].mxu0
        %v3258 = vadd.f32 0.0, %v3257
        %v3259 = vpop.f32.mrb[0].mxu0
        %3260 = vmatprep.mubr.bf16.mxu0 0
        %3261 = vmatmul.mubr.bf16.gmra.mrb[0].mxu0 %v3200
        %v3262 = vpop.f32.mrb[0].mxu0
        %v3263 = vadd.f32 0.0, %v3262
        %v3264 = vpop.f32.mrb[0].mxu0
        %v3265 = vpop.f32.mrb[0].mxu0
        %v3266 = vadd.f32 0.0, %v3265
        %v3267 = vpop.f32.mrb[0].mxu0
        %3268 = vmatprep.mubr.bf16.mxu0 0
        %3269 = vmatmul.mubr.bf16.gmra.mrb[0].mxu0 %v3203
        %v3270 = vpop.f32.mrb[0].mxu0
        %v3271 = vadd.f32 0.0, %v3270
        %v3272 = vpop.f32.mrb[0].mxu0
        %v3273 = vpop.f32.mrb[0].mxu0
        %v3274 = vadd.f32 0.0, %v3273
        %v3275 = vpop.f32.mrb[0].mxu0
        %3276 = vmatprep.mubr.bf16.mxu0 0
        %3277 = vmatmul.mubr.bf16.gmra.mrb[0].mxu0 %v3206
        %v3278 = vpop.f32.mrb[0].mxu0
        %v3279 = vadd.f32 0.0, %v3278
        %v3280 = vpop.f32.mrb[0].mxu0
        %v3281 = vpop.f32.mrb[0].mxu0
        %v3282 = vadd.f32 0.0, %v3281
        %v3283 = vpop.f32.mrb[0].mxu0
        %3284 = vmatprep.mubr.bf16.mxu0 0
        %3285 = vmatmul.mubr.bf16.gmra.mrb[0].mxu0 %v3209
        %v3286 = vpop.f32.mrb[0].mxu0
        %v3287 = vadd.f32 0.0, %v3286
        %v3288 = vpop.f32.mrb[0].mxu0
        %v3289 = vpop.f32.mrb[0].mxu0
        %v3290 = vadd.f32 0.0, %v3289
        %v3291 = vpop.f32.mrb[0].mxu0
        %3292 = vmatprep.mubr.bf16.mxu0 0
        %3293 = vmatmul.mubr.bf16.gmra.mrb[0].mxu0 %v3212
        %v3294 = vpop.f32.mrb[0].mxu0
        %v3295 = vadd.f32 0.0, %v3294
        %v3296 = vpop.f32.mrb[0].mxu0
        %v3297 = vpop.f32.mrb[0].mxu0
        %v3298 = vadd.f32 0.0, %v3297
        %v3299 = vpop.f32.mrb[0].mxu0
        %3300 = vmatprep.mubr.bf16.mxu0 0
        %3301 = vmatmul.mubr.bf16.gmra.mrb[0].mxu0 %v3215
        %v3302 = vpop.f32.mrb[0].mxu0
        %v3303 = vadd.f32 0.0, %v3302
        %v3304 = vpop.f32.mrb[0].mxu0
        %v3305 = vpop.f32.mrb[0].mxu0
        %v3306 = vadd.f32 0.0, %v3305
        %v3307 = vpop.f32.mrb[0].mxu0
        %3308 = vmatprep.mubr.bf16.mxu0 0
        %3309 = vmatmul.mubr.bf16.gmra.mrb[0].mxu0 %v3218
        %v3310 = vpop.f32.mrb[0].mxu0
        %v3311 = vadd.f32 0.0, %v3310
        %v3312 = vpop.f32.mrb[0].mxu0
        %v3313 = vpop.f32.mrb[0].mxu0
        %v3314 = vadd.f32 0.0, %v3313
        %v3315 = vpop.f32.mrb[0].mxu0
        %3316 = vdwg.mxu0
        %v3321 = vunpack.c.l.b16 %v3043
        %v3322 = vunpack.c.l.b16 %v3044
        %v3323 = vunpack.c.l.b16 %v3045
        %v3324 = vunpack.c.l.b16 %v3046
        %v3325 = vpack.c.b16 %v3322, %v3321
        %v3326 = vpack.c.b16 %v3324, %v3323
        %v3330 = vsel %vm1234, %v3019, 0
        %v3333 = vsel %vm1234, %v3020, 0
        %v3336 = vsel %vm1234, %v3021, 0
        %v3339 = vsel %vm1234, %v3022, 0
        %v3342 = vsel %vm1234, %v3023, 0
        %v3345 = vsel %vm1234, %v3024, 0
        %v3348 = vsel %vm1234, %v3025, 0
        %v3351 = vsel %vm1234, %v3026, 0
        %3353 = vmatprep.subr.bf16.mxu0 0
        %3354 = vmatpush1.bf16.msra.mxu0 %v3325
        %3355 = vmatprep.subr.bf16.mxu0 0
        %3356 = vmatpush1.bf16.msra.mxu0 %v3326
        %3357 = vmatprep.subr.bf16.mxu0 0
        %3358 = vmatpush1.bf16.msra.mxu0 0
        %3359 = vmatprep.subr.bf16.mxu0 0
        %3360 = vmatpush1.bf16.msra.mxu0 0
        %3361 = vmatprep.subr.bf16.mxu0 0
        %3362 = vmatpush1.bf16.msra.mxu0 0
        %3363 = vmatprep.subr.bf16.mxu0 0
        %3364 = vmatpush1.bf16.msra.mxu0 0
        %3365 = vmatprep.subr.bf16.mxu0 0
        %3366 = vmatpush1.bf16.msra.mxu0 0
        %3367 = vmatprep.subr.bf16.mxu0 0
        %3368 = vmatpush1.bf16.msra.mxu0 0
        %3369 = vmatprep.subr.bf16.mxu0 0
        %3370 = vmatpush1.bf16.msra.mxu0 0
        %3371 = vmatprep.subr.bf16.mxu0 0
        %3372 = vmatpush1.bf16.msra.mxu0 0
        %3373 = vmatprep.subr.bf16.mxu0 0
        %3374 = vmatpush1.bf16.msra.mxu0 0
        %3375 = vmatprep.subr.bf16.mxu0 0
        %3376 = vmatpush1.bf16.msra.mxu0 0
        %3377 = vmatprep.subr.bf16.mxu0 0
        %3378 = vmatpush1.bf16.msra.mxu0 0
        %3379 = vmatprep.subr.bf16.mxu0 0
        %3380 = vmatpush1.bf16.msra.mxu0 0
        %3381 = vmatprep.subr.bf16.mxu0 0
        %3382 = vmatpush1.bf16.msra.mxu0 0
        %3383 = vmatprep.subr.bf16.mxu0 0
        %3384 = vmatpush1.bf16.msra.mxu0 0
        %3385 = vmatprep.mubr.bf16.mxu0 0
        %3386 = vmatmul.mubr.bf16.gmra.mrb[0].mxu0 %v3330
        %v3387 = vpop.f32.mrb[0].mxu0
        %v3388 = vadd.f32 0.0, %v3387
        %v3389 = vpop.f32.mrb[0].mxu0
        %v3390 = vpop.f32.mrb[0].mxu0
        %v3391 = vadd.f32 0.0, %v3390
        %v3392 = vpop.f32.mrb[0].mxu0
        %3393 = vmatprep.mubr.bf16.mxu0 0
        %3394 = vmatmul.mubr.bf16.gmra.mrb[0].mxu0 %v3333
        %v3395 = vpop.f32.mrb[0].mxu0
        %v3396 = vadd.f32 0.0, %v3395
        %v3397 = vpop.f32.mrb[0].mxu0
        %v3398 = vpop.f32.mrb[0].mxu0
        %v3399 = vadd.f32 0.0, %v3398
        %v3400 = vpop.f32.mrb[0].mxu0
        %3401 = vmatprep.mubr.bf16.mxu0 0
        %3402 = vmatmul.mubr.bf16.gmra.mrb[0].mxu0 %v3336
        %v3403 = vpop.f32.mrb[0].mxu0
        %v3404 = vadd.f32 0.0, %v3403
        %v3405 = vpop.f32.mrb[0].mxu0
        %v3406 = vpop.f32.mrb[0].mxu0
        %v3407 = vadd.f32 0.0, %v3406
        %v3408 = vpop.f32.mrb[0].mxu0
        %3409 = vmatprep.mubr.bf16.mxu0 0
        %3410 = vmatmul.mubr.bf16.gmra.mrb[0].mxu0 %v3339
        %v3411 = vpop.f32.mrb[0].mxu0
        %v3412 = vadd.f32 0.0, %v3411
        %v3413 = vpop.f32.mrb[0].mxu0
        %v3414 = vpop.f32.mrb[0].mxu0
        %v3415 = vadd.f32 0.0, %v3414
        %v3416 = vpop.f32.mrb[0].mxu0
        %3417 = vmatprep.mubr.bf16.mxu0 0
        %3418 = vmatmul.mubr.bf16.gmra.mrb[0].mxu0 %v3342
        %v3419 = vpop.f32.mrb[0].mxu0
        %v3420 = vadd.f32 0.0, %v3419
        %v3421 = vpop.f32.mrb[0].mxu0
        %v3422 = vpop.f32.mrb[0].mxu0
        %v3423 = vadd.f32 0.0, %v3422
        %v3424 = vpop.f32.mrb[0].mxu0
        %3425 = vmatprep.mubr.bf16.mxu0 0
        %3426 = vmatmul.mubr.bf16.gmra.mrb[0].mxu0 %v3345
        %v3427 = vpop.f32.mrb[0].mxu0
        %v3428 = vadd.f32 0.0, %v3427
        %v3429 = vpop.f32.mrb[0].mxu0
        %v3430 = vpop.f32.mrb[0].mxu0
        %v3431 = vadd.f32 0.0, %v3430
        %v3432 = vpop.f32.mrb[0].mxu0
        %3433 = vmatprep.mubr.bf16.mxu0 0
        %3434 = vmatmul.mubr.bf16.gmra.mrb[0].mxu0 %v3348
        %v3435 = vpop.f32.mrb[0].mxu0
        %v3436 = vadd.f32 0.0, %v3435
        %v3437 = vpop.f32.mrb[0].mxu0
        %v3438 = vpop.f32.mrb[0].mxu0
        %v3439 = vadd.f32 0.0, %v3438
        %v3440 = vpop.f32.mrb[0].mxu0
        %3441 = vmatprep.mubr.bf16.mxu0 0
        %3442 = vmatmul.mubr.bf16.gmra.mrb[0].mxu0 %v3351
        %v3443 = vpop.f32.mrb[0].mxu0
        %v3444 = vadd.f32 0.0, %v3443
        %v3445 = vpop.f32.mrb[0].mxu0
        %v3446 = vpop.f32.mrb[0].mxu0
        %v3447 = vadd.f32 0.0, %v3446
        %v3448 = vpop.f32.mrb[0].mxu0
        %3449 = vdwg.mxu0
        %v3454 = vunpack.c.l.b16 %v3047
        %v3455 = vunpack.c.l.b16 %v3048
        %v3456 = vunpack.c.l.b16 %v3049
        %v3457 = vunpack.c.l.b16 %v3050
        %v3458 = vpack.c.b16 %v3455, %v3454
        %v3459 = vpack.c.b16 %v3457, %v3456
        %v3463 = vsel %vm1234, %v3027, 0
        %v3466 = vsel %vm1234, %v3028, 0
        %v3469 = vsel %vm1234, %v3029, 0
        %v3472 = vsel %vm1234, %v3030, 0
        %v3475 = vsel %vm1234, %v3031, 0
        %v3478 = vsel %vm1234, %v3032, 0
        %v3481 = vsel %vm1234, %v3033, 0
        %v3484 = vsel %vm1234, %v3034, 0
        %3486 = vmatprep.subr.bf16.mxu0 0
        %3487 = vmatpush1.bf16.msra.mxu0 %v3458
        %3488 = vmatprep.subr.bf16.mxu0 0
        %3489 = vmatpush1.bf16.msra.mxu0 %v3459
        %3490 = vmatprep.subr.bf16.mxu0 0
        %3491 = vmatpush1.bf16.msra.mxu0 0
        %3492 = vmatprep.subr.bf16.mxu0 0
        %3493 = vmatpush1.bf16.msra.mxu0 0
        %3494 = vmatprep.subr.bf16.mxu0 0
        %3495 = vmatpush1.bf16.msra.mxu0 0
        %3496 = vmatprep.subr.bf16.mxu0 0
        %3497 = vmatpush1.bf16.msra.mxu0 0
        %3498 = vmatprep.subr.bf16.mxu0 0
        %3499 = vmatpush1.bf16.msra.mxu0 0
        %3500 = vmatprep.subr.bf16.mxu0 0
        %3501 = vmatpush1.bf16.msra.mxu0 0
        %3502 = vmatprep.subr.bf16.mxu0 0
        %3503 = vmatpush1.bf16.msra.mxu0 0
        %3504 = vmatprep.subr.bf16.mxu0 0
        %3505 = vmatpush1.bf16.msra.mxu0 0
        %3506 = vmatprep.subr.bf16.mxu0 0
        %3507 = vmatpush1.bf16.msra.mxu0 0
        %3508 = vmatprep.subr.bf16.mxu0 0
        %3509 = vmatpush1.bf16.msra.mxu0 0
        %3510 = vmatprep.subr.bf16.mxu0 0
        %3511 = vmatpush1.bf16.msra.mxu0 0
        %3512 = vmatprep.subr.bf16.mxu0 0
        %3513 = vmatpush1.bf16.msra.mxu0 0
        %3514 = vmatprep.subr.bf16.mxu0 0
        %3515 = vmatpush1.bf16.msra.mxu0 0
        %3516 = vmatprep.subr.bf16.mxu0 0
        %3517 = vmatpush1.bf16.msra.mxu0 0
        %3518 = vmatprep.mubr.bf16.mxu0 0
        %3519 = vmatmul.mubr.bf16.gmra.mrb[0].mxu0 %v3463
        %v3520 = vpop.f32.mrb[0].mxu0
        %v3521 = vadd.f32 0.0, %v3520
        %v3522 = vpop.f32.mrb[0].mxu0
        %v3523 = vpop.f32.mrb[0].mxu0
        %v3524 = vadd.f32 0.0, %v3523
        %v3525 = vpop.f32.mrb[0].mxu0
        %3526 = vmatprep.mubr.bf16.mxu0 0
        %3527 = vmatmul.mubr.bf16.gmra.mrb[0].mxu0 %v3466
        %v3528 = vpop.f32.mrb[0].mxu0
        %v3529 = vadd.f32 0.0, %v3528
        %v3530 = vpop.f32.mrb[0].mxu0
        %v3531 = vpop.f32.mrb[0].mxu0
        %v3532 = vadd.f32 0.0, %v3531
        %v3533 = vpop.f32.mrb[0].mxu0
        %3534 = vmatprep.mubr.bf16.mxu0 0
        %3535 = vmatmul.mubr.bf16.gmra.mrb[0].mxu0 %v3469
        %v3536 = vpop.f32.mrb[0].mxu0
        %v3537 = vadd.f32 0.0, %v3536
        %v3538 = vpop.f32.mrb[0].mxu0
        %v3539 = vpop.f32.mrb[0].mxu0
        %v3540 = vadd.f32 0.0, %v3539
        %v3541 = vpop.f32.mrb[0].mxu0
        %3542 = vmatprep.mubr.bf16.mxu0 0
        %3543 = vmatmul.mubr.bf16.gmra.mrb[0].mxu0 %v3472
        %v3544 = vpop.f32.mrb[0].mxu0
        %v3545 = vadd.f32 0.0, %v3544
        %v3546 = vpop.f32.mrb[0].mxu0
        %v3547 = vpop.f32.mrb[0].mxu0
        %v3548 = vadd.f32 0.0, %v3547
        %v3549 = vpop.f32.mrb[0].mxu0
        %3550 = vmatprep.mubr.bf16.mxu0 0
        %3551 = vmatmul.mubr.bf16.gmra.mrb[0].mxu0 %v3475
        %v3552 = vpop.f32.mrb[0].mxu0
        %v3553 = vadd.f32 0.0, %v3552
        %v3554 = vpop.f32.mrb[0].mxu0
        %v3555 = vpop.f32.mrb[0].mxu0
        %v3556 = vadd.f32 0.0, %v3555
        %v3557 = vpop.f32.mrb[0].mxu0
        %3558 = vmatprep.mubr.bf16.mxu0 0
        %3559 = vmatmul.mubr.bf16.gmra.mrb[0].mxu0 %v3478
        %v3560 = vpop.f32.mrb[0].mxu0
        %v3561 = vadd.f32 0.0, %v3560
        %v3562 = vpop.f32.mrb[0].mxu0
        %v3563 = vpop.f32.mrb[0].mxu0
        %v3564 = vadd.f32 0.0, %v3563
        %v3565 = vpop.f32.mrb[0].mxu0
        %3566 = vmatprep.mubr.bf16.mxu0 0
        %3567 = vmatmul.mubr.bf16.gmra.mrb[0].mxu0 %v3481
        %v3568 = vpop.f32.mrb[0].mxu0
        %v3569 = vadd.f32 0.0, %v3568
        %v3570 = vpop.f32.mrb[0].mxu0
        %v3571 = vpop.f32.mrb[0].mxu0
        %v3572 = vadd.f32 0.0, %v3571
        %v3573 = vpop.f32.mrb[0].mxu0
        %3574 = vmatprep.mubr.bf16.mxu0 0
        %3575 = vmatmul.mubr.bf16.gmra.mrb[0].mxu0 %v3484
        %v3576 = vpop.f32.mrb[0].mxu0
        %v3577 = vadd.f32 0.0, %v3576
        %v3578 = vpop.f32.mrb[0].mxu0
        %v3579 = vpop.f32.mrb[0].mxu0
        %v3580 = vadd.f32 0.0, %v3579
        %v3581 = vpop.f32.mrb[0].mxu0
        %3582 = vdwg.mxu0
        %v3583 = vadd.f32 %v3122, %v3255
        %v3584 = vadd.f32 %v3583, %v3388
        %v3585 = vadd.f32 %v3584, %v3521
        %v3586 = vadd.f32 %v3125, %v3258
        %v3587 = vadd.f32 %v3586, %v3391
        %v3588 = vadd.f32 %v3587, %v3524
        %v3589 = vadd.f32 %v3130, %v3263
        %v3590 = vadd.f32 %v3589, %v3396
        %v3591 = vadd.f32 %v3590, %v3529
        %v3592 = vadd.f32 %v3133, %v3266
        %v3593 = vadd.f32 %v3592, %v3399
        %v3594 = vadd.f32 %v3593, %v3532
        %v3595 = vadd.f32 %v3138, %v3271
        %v3596 = vadd.f32 %v3595, %v3404
        %v3597 = vadd.f32 %v3596, %v3537
        %v3598 = vadd.f32 %v3141, %v3274
        %v3599 = vadd.f32 %v3598, %v3407
        %v3600 = vadd.f32 %v3599, %v3540
        %v3601 = vadd.f32 %v3146, %v3279
        %v3602 = vadd.f32 %v3601, %v3412
        %v3603 = vadd.f32 %v3602, %v3545
        %v3604 = vadd.f32 %v3149, %v3282
        %v3605 = vadd.f32 %v3604, %v3415
        %v3606 = vadd.f32 %v3605, %v3548
        %v3607 = vadd.f32 %v3154, %v3287
        %v3608 = vadd.f32 %v3607, %v3420
        %v3609 = vadd.f32 %v3608, %v3553
        %v3610 = vadd.f32 %v3157, %v3290
        %v3611 = vadd.f32 %v3610, %v3423
        %v3612 = vadd.f32 %v3611, %v3556
        %v3613 = vadd.f32 %v3162, %v3295
        %v3614 = vadd.f32 %v3613, %v3428
        %v3615 = vadd.f32 %v3614, %v3561
        %v3616 = vadd.f32 %v3165, %v3298
        %v3617 = vadd.f32 %v3616, %v3431
        %v3618 = vadd.f32 %v3617, %v3564
        %v3619 = vadd.f32 %v3170, %v3303
        %v3620 = vadd.f32 %v3619, %v3436
        %v3621 = vadd.f32 %v3620, %v3569
        %v3622 = vadd.f32 %v3173, %v3306
        %v3623 = vadd.f32 %v3622, %v3439
        %v3624 = vadd.f32 %v3623, %v3572
        %v3625 = vadd.f32 %v3178, %v3311
        %v3626 = vadd.f32 %v3625, %v3444
        %v3627 = vadd.f32 %v3626, %v3577
        %v3628 = vadd.f32 %v3181, %v3314
        %v3629 = vadd.f32 %v3628, %v3447
        %v3630 = vadd.f32 %v3629, %v3580
        %v3631 = vld [vmem:[%s4] sm:$0x1]
        %v3633 = vlaneseq
        %v3634 = vshrl.u32 %v3633, 7
        %v3635 = vsub.s32 0, %v3634
        %v3636 = vrot.slane %v3631, %v3635
        %v3638 = vadd.f32 %v3585, %v3636
        %v3639 = vadd.f32 %v3588, %v3636
        %v3640 = vadd.f32 %v3591, %v3636
        %v3641 = vadd.f32 %v3594, %v3636
        %v3642 = vadd.f32 %v3597, %v3636
        %v3643 = vadd.f32 %v3600, %v3636
        %v3644 = vadd.f32 %v3603, %v3636
        %v3645 = vadd.f32 %v3606, %v3636
        %v3646 = vadd.f32 %v3609, %v3636
        %v3647 = vadd.f32 %v3612, %v3636
        %v3648 = vadd.f32 %v3615, %v3636
        %v3649 = vadd.f32 %v3618, %v3636
        %v3650 = vadd.f32 %v3621, %v3636
        %v3651 = vadd.f32 %v3624, %v3636
        %v3652 = vadd.f32 %v3627, %v3636
        %v3653 = vadd.f32 %v3630, %v3636
        %v3654 = vadd.f32 %v556, %v3638
        %v3655 = vadd.f32 %v557, %v3639
        %v3656 = vadd.f32 %v558, %v3640
        %v3657 = vadd.f32 %v559, %v3641
        %v3658 = vadd.f32 %v560, %v3642
        %v3659 = vadd.f32 %v561, %v3643
        %v3660 = vadd.f32 %v562, %v3644
        %v3661 = vadd.f32 %v563, %v3645
        %v3662 = vadd.f32 %v564, %v3646
        %v3663 = vadd.f32 %v565, %v3647
        %v3664 = vadd.f32 %v566, %v3648
        %v3665 = vadd.f32 %v567, %v3649
        %v3666 = vadd.f32 %v568, %v3650
        %v3667 = vadd.f32 %v569, %v3651
        %v3668 = vadd.f32 %v570, %v3652
        %v3669 = vadd.f32 %v571, %v3653
        %3670 = vadd.xlane.f32.xlu0 %v3654
        %v3671 = vpop.xlane.xlu0 %3670
        %3672 = vadd.xlane.f32.xlu0 %v3655
        %v3673 = vpop.xlane.xlu0 %3672
        %3674 = vadd.xlane.f32.xlu0 %v3656
        %v3675 = vpop.xlane.xlu0 %3674
        %3676 = vadd.xlane.f32.xlu0 %v3657
        %v3677 = vpop.xlane.xlu0 %3676
        %3678 = vadd.xlane.f32.xlu0 %v3658
        %v3679 = vpop.xlane.xlu0 %3678
        %3680 = vadd.xlane.f32.xlu0 %v3659
        %v3681 = vpop.xlane.xlu0 %3680
        %3682 = vadd.xlane.f32.xlu0 %v3660
        %v3683 = vpop.xlane.xlu0 %3682
        %3684 = vadd.xlane.f32.xlu0 %v3661
        %v3685 = vpop.xlane.xlu0 %3684
        %3686 = vadd.xlane.f32.xlu0 %v3662
        %v3687 = vpop.xlane.xlu0 %3686
        %3688 = vadd.xlane.f32.xlu0 %v3663
        %v3689 = vpop.xlane.xlu0 %3688
        %3690 = vadd.xlane.f32.xlu0 %v3664
        %v3691 = vpop.xlane.xlu0 %3690
        %3692 = vadd.xlane.f32.xlu0 %v3665
        %v3693 = vpop.xlane.xlu0 %3692
        %3694 = vadd.xlane.f32.xlu0 %v3666
        %v3695 = vpop.xlane.xlu0 %3694
        %3696 = vadd.xlane.f32.xlu0 %v3667
        %v3697 = vpop.xlane.xlu0 %3696
        %3698 = vadd.xlane.f32.xlu0 %v3668
        %v3699 = vpop.xlane.xlu0 %3698
        %3700 = vadd.xlane.f32.xlu0 %v3669
        %v3701 = vpop.xlane.xlu0 %3700
        %v3702 = vrcp.pop 128.0
        %v3703 = vmul.f32 %v3671, %v3702
        %v3704 = vmul.f32 %v3673, %v3702
        %v3705 = vmul.f32 %v3675, %v3702
        %v3706 = vmul.f32 %v3677, %v3702
        %v3707 = vmul.f32 %v3679, %v3702
        %v3708 = vmul.f32 %v3681, %v3702
        %v3709 = vmul.f32 %v3683, %v3702
        %v3710 = vmul.f32 %v3685, %v3702
        %v3711 = vmul.f32 %v3687, %v3702
        %v3712 = vmul.f32 %v3689, %v3702
        %v3713 = vmul.f32 %v3691, %v3702
        %v3714 = vmul.f32 %v3693, %v3702
        %v3715 = vmul.f32 %v3695, %v3702
        %v3716 = vmul.f32 %v3697, %v3702
        %v3717 = vmul.f32 %v3699, %v3702
        %v3718 = vmul.f32 %v3701, %v3702
        %v3719 = vsub.f32 %v3654, %v3703
        %v3720 = vsub.f32 %v3655, %v3704
        %v3721 = vsub.f32 %v3656, %v3705
        %v3722 = vsub.f32 %v3657, %v3706
        %v3723 = vsub.f32 %v3658, %v3707
        %v3724 = vsub.f32 %v3659, %v3708
        %v3725 = vsub.f32 %v3660, %v3709
        %v3726 = vsub.f32 %v3661, %v3710
        %v3727 = vsub.f32 %v3662, %v3711
        %v3728 = vsub.f32 %v3663, %v3712
        %v3729 = vsub.f32 %v3664, %v3713
        %v3730 = vsub.f32 %v3665, %v3714
        %v3731 = vsub.f32 %v3666, %v3715
        %v3732 = vsub.f32 %v3667, %v3716
        %v3733 = vsub.f32 %v3668, %v3717
        %v3734 = vsub.f32 %v3669, %v3718
        %v3735 = vmul.f32 %v3719, %v3719
        %v3736 = vmul.f32 %v3720, %v3720
        %v3737 = vmul.f32 %v3721, %v3721
        %v3738 = vmul.f32 %v3722, %v3722
        %v3739 = vmul.f32 %v3723, %v3723
        %v3740 = vmul.f32 %v3724, %v3724
        %v3741 = vmul.f32 %v3725, %v3725
        %v3742 = vmul.f32 %v3726, %v3726
        %v3743 = vmul.f32 %v3727, %v3727
        %v3744 = vmul.f32 %v3728, %v3728
        %v3745 = vmul.f32 %v3729, %v3729
        %v3746 = vmul.f32 %v3730, %v3730
        %v3747 = vmul.f32 %v3731, %v3731
        %v3748 = vmul.f32 %v3732, %v3732
        %v3749 = vmul.f32 %v3733, %v3733
        %v3750 = vmul.f32 %v3734, %v3734
        %3751 = vadd.xlane.f32.xlu0 %v3735
        %v3752 = vpop.xlane.xlu0 %3751
        %3753 = vadd.xlane.f32.xlu0 %v3736
        %v3754 = vpop.xlane.xlu0 %3753
        %3755 = vadd.xlane.f32.xlu0 %v3737
        %v3756 = vpop.xlane.xlu0 %3755
        %3757 = vadd.xlane.f32.xlu0 %v3738
        %v3758 = vpop.xlane.xlu0 %3757
        %3759 = vadd.xlane.f32.xlu0 %v3739
        %v3760 = vpop.xlane.xlu0 %3759
        %3761 = vadd.xlane.f32.xlu0 %v3740
        %v3762 = vpop.xlane.xlu0 %3761
        %3763 = vadd.xlane.f32.xlu0 %v3741
        %v3764 = vpop.xlane.xlu0 %3763
        %3765 = vadd.xlane.f32.xlu0 %v3742
        %v3766 = vpop.xlane.xlu0 %3765
        %3767 = vadd.xlane.f32.xlu0 %v3743
        %v3768 = vpop.xlane.xlu0 %3767
        %3769 = vadd.xlane.f32.xlu0 %v3744
        %v3770 = vpop.xlane.xlu0 %3769
        %3771 = vadd.xlane.f32.xlu0 %v3745
        %v3772 = vpop.xlane.xlu0 %3771
        %3773 = vadd.xlane.f32.xlu0 %v3746
        %v3774 = vpop.xlane.xlu0 %3773
        %3775 = vadd.xlane.f32.xlu0 %v3747
        %v3776 = vpop.xlane.xlu0 %3775
        %3777 = vadd.xlane.f32.xlu0 %v3748
        %v3778 = vpop.xlane.xlu0 %3777
        %3779 = vadd.xlane.f32.xlu0 %v3749
        %v3780 = vpop.xlane.xlu0 %3779
        %3781 = vadd.xlane.f32.xlu0 %v3750
        %v3782 = vpop.xlane.xlu0 %3781
        %v3783 = vmul.f32 %v3752, %v3702
        %v3784 = vmul.f32 %v3754, %v3702
        %v3785 = vmul.f32 %v3756, %v3702
        %v3786 = vmul.f32 %v3758, %v3702
        %v3787 = vmul.f32 %v3760, %v3702
        %v3788 = vmul.f32 %v3762, %v3702
        %v3789 = vmul.f32 %v3764, %v3702
        %v3790 = vmul.f32 %v3766, %v3702
        %v3791 = vmul.f32 %v3768, %v3702
        %v3792 = vmul.f32 %v3770, %v3702
        %v3793 = vmul.f32 %v3772, %v3702
        %v3794 = vmul.f32 %v3774, %v3702
        %v3795 = vmul.f32 %v3776, %v3702
        %v3796 = vmul.f32 %v3778, %v3702
        %v3797 = vmul.f32 %v3780, %v3702
        %v3798 = vmul.f32 %v3782, %v3702
        %v3799 = vadd.f32 %v3783, 1e-05
        %v3800 = vadd.f32 %v3784, 1e-05
        %v3801 = vadd.f32 %v3785, 1e-05
        %v3802 = vadd.f32 %v3786, 1e-05
        %v3803 = vadd.f32 %v3787, 1e-05
        %v3804 = vadd.f32 %v3788, 1e-05
        %v3805 = vadd.f32 %v3789, 1e-05
        %v3806 = vadd.f32 %v3790, 1e-05
        %v3807 = vadd.f32 %v3791, 1e-05
        %v3808 = vadd.f32 %v3792, 1e-05
        %v3809 = vadd.f32 %v3793, 1e-05
        %v3810 = vadd.f32 %v3794, 1e-05
        %v3811 = vadd.f32 %v3795, 1e-05
        %v3812 = vadd.f32 %v3796, 1e-05
        %v3813 = vadd.f32 %v3797, 1e-05
        %v3814 = vadd.f32 %v3798, 1e-05
        %v3815 = vrsqrt.pop %v3799
        %v3816 = vrsqrt.pop %v3800
        %v3817 = vrsqrt.pop %v3801
        %v3818 = vrsqrt.pop %v3802
        %v3819 = vrsqrt.pop %v3803
        %v3820 = vrsqrt.pop %v3804
        %v3821 = vrsqrt.pop %v3805
        %v3822 = vrsqrt.pop %v3806
        %v3823 = vrsqrt.pop %v3807
        %v3824 = vrsqrt.pop %v3808
        %v3825 = vrsqrt.pop %v3809
        %v3826 = vrsqrt.pop %v3810
        %v3827 = vrsqrt.pop %v3811
        %v3828 = vrsqrt.pop %v3812
        %v3829 = vrsqrt.pop %v3813
        %v3830 = vrsqrt.pop %v3814
        %v3831 = vmul.f32 %v3719, %v3815
        %v3832 = vmul.f32 %v3720, %v3816
        %v3833 = vmul.f32 %v3721, %v3817
        %v3834 = vmul.f32 %v3722, %v3818
        %v3835 = vmul.f32 %v3723, %v3819
        %v3836 = vmul.f32 %v3724, %v3820
        %v3837 = vmul.f32 %v3725, %v3821
        %v3838 = vmul.f32 %v3726, %v3822
        %v3839 = vmul.f32 %v3727, %v3823
        %v3840 = vmul.f32 %v3728, %v3824
        %v3841 = vmul.f32 %v3729, %v3825
        %v3842 = vmul.f32 %v3730, %v3826
        %v3843 = vmul.f32 %v3731, %v3827
        %v3844 = vmul.f32 %v3732, %v3828
        %v3845 = vmul.f32 %v3733, %v3829
        %v3846 = vmul.f32 %v3734, %v3830
        %v3847 = vld [vmem:[%s5] sm:$0x1]
        %v3849 = vlaneseq
        %v3850 = vshrl.u32 %v3849, 7
        %v3851 = vsub.s32 0, %v3850
        %v3852 = vrot.slane %v3847, %v3851
        %v3854 = vmul.f32 %v3831, %v3852
        %v3855 = vmul.f32 %v3832, %v3852
        %v3856 = vmul.f32 %v3833, %v3852
        %v3857 = vmul.f32 %v3834, %v3852
        %v3858 = vmul.f32 %v3835, %v3852
        %v3859 = vmul.f32 %v3836, %v3852
        %v3860 = vmul.f32 %v3837, %v3852
        %v3861 = vmul.f32 %v3838, %v3852
        %v3862 = vmul.f32 %v3839, %v3852
        %v3863 = vmul.f32 %v3840, %v3852
        %v3864 = vmul.f32 %v3841, %v3852
        %v3865 = vmul.f32 %v3842, %v3852
        %v3866 = vmul.f32 %v3843, %v3852
        %v3867 = vmul.f32 %v3844, %v3852
        %v3868 = vmul.f32 %v3845, %v3852
        %v3869 = vmul.f32 %v3846, %v3852
        %v3870 = vld [vmem:[%s6] sm:$0x1]
        %v3872 = vlaneseq
        %v3873 = vshrl.u32 %v3872, 7
        %v3874 = vsub.s32 0, %v3873
        %v3875 = vrot.slane %v3870, %v3874
        %v3877 = vadd.f32 %v3854, %v3875
        %v3878 = vadd.f32 %v3855, %v3875
        %v3879 = vadd.f32 %v3856, %v3875
        %v3880 = vadd.f32 %v3857, %v3875
        %v3881 = vadd.f32 %v3858, %v3875
        %v3882 = vadd.f32 %v3859, %v3875
        %v3883 = vadd.f32 %v3860, %v3875
        %v3884 = vadd.f32 %v3861, %v3875
        %v3885 = vadd.f32 %v3862, %v3875
        %v3886 = vadd.f32 %v3863, %v3875
        %v3887 = vadd.f32 %v3864, %v3875
        %v3888 = vadd.f32 %v3865, %v3875
        %v3889 = vadd.f32 %v3866, %v3875
        %v3890 = vadd.f32 %v3867, %v3875
        %v3891 = vadd.f32 %v3868, %v3875
        %v3892 = vadd.f32 %v3869, %v3875
        %v3893 = vpack.c.bf16 %v3878, %v3877
        %v3894 = vpack.c.bf16 %v3880, %v3879
        %v3895 = vpack.c.bf16 %v3882, %v3881
        %v3896 = vpack.c.bf16 %v3884, %v3883
        %v3897 = vpack.c.bf16 %v3886, %v3885
        %v3898 = vpack.c.bf16 %v3888, %v3887
        %v3899 = vpack.c.bf16 %v3890, %v3889
        %v3900 = vpack.c.bf16 %v3892, %v3891
        %v3901 = vld [vmem:[#allocation8] sm:$0xff]
        %v3902 = vld [vmem:[#allocation8 + $0x8] sm:$0xff]
        %v3903 = vld [vmem:[#allocation8 + $0x10] sm:$0xff]
        %v3904 = vld [vmem:[#allocation8 + $0x18] sm:$0xff]
        %v3905 = vld [vmem:[#allocation8 + $0x20] sm:$0xff]
        %v3906 = vld [vmem:[#allocation8 + $0x28] sm:$0xff]
        %v3907 = vld [vmem:[#allocation8 + $0x30] sm:$0xff]
        %v3908 = vld [vmem:[#allocation8 + $0x38] sm:$0xff]
        %v3909 = vld [vmem:[#allocation8 + $0x40] sm:$0xff]
        %v3910 = vld [vmem:[#allocation8 + $0x48] sm:$0xff]
        %v3911 = vld [vmem:[#allocation8 + $0x50] sm:$0xff]
        %v3912 = vld [vmem:[#allocation8 + $0x58] sm:$0xff]
        %v3913 = vld [vmem:[#allocation8 + $0x60] sm:$0xff]
        %v3914 = vld [vmem:[#allocation8 + $0x68] sm:$0xff]
        %v3915 = vld [vmem:[#allocation8 + $0x70] sm:$0xff]
        %v3916 = vld [vmem:[#allocation8 + $0x78] sm:$0xff]
        %v3917 = vld [vmem:[%s8] sm:$0x3]
        %v3919 = vlaneseq
        %v3920 = vshrl.u32 %v3919, 7
        %v3921 = vsub.s32 0, %v3920
        %v3922 = vrot.slane %v3917, %v3921
        %v3923 = vlaneseq
        %v3924 = vshrl.u32 %v3923, 7
        %v3925 = vsub.s32 1, %v3924
        %v3926 = vrot.slane %v3917, %v3925
        %v3945 = vunpack.c.l.b16 %v3901
        %v3946 = vunpack.c.h.b16 %v3901
        %v3947 = vunpack.c.l.b16 %v3902
        %v3948 = vunpack.c.h.b16 %v3902
        %v3949 = vunpack.c.l.b16 %v3903
        %v3950 = vunpack.c.h.b16 %v3903
        %v3951 = vunpack.c.l.b16 %v3904
        %v3952 = vunpack.c.h.b16 %v3904
        %v3953 = vunpack.c.l.b16 %v3905
        %v3954 = vunpack.c.h.b16 %v3905
        %v3955 = vunpack.c.l.b16 %v3906
        %v3956 = vunpack.c.h.b16 %v3906
        %v3957 = vunpack.c.l.b16 %v3907
        %v3958 = vunpack.c.h.b16 %v3907
        %v3959 = vunpack.c.l.b16 %v3908
        %v3960 = vunpack.c.h.b16 %v3908
        %v3961 = vunpack.c.l.b16 %v3909
        %v3962 = vunpack.c.h.b16 %v3909
        %v3963 = vunpack.c.l.b16 %v3910
        %v3964 = vunpack.c.h.b16 %v3910
        %v3965 = vunpack.c.l.b16 %v3911
        %v3966 = vunpack.c.h.b16 %v3911
        %v3967 = vunpack.c.l.b16 %v3912
        %v3968 = vunpack.c.h.b16 %v3912
        %v3969 = vunpack.c.l.b16 %v3913
        %v3970 = vunpack.c.h.b16 %v3913
        %v3971 = vunpack.c.l.b16 %v3914
        %v3972 = vunpack.c.h.b16 %v3914
        %v3973 = vunpack.c.l.b16 %v3915
        %v3974 = vunpack.c.h.b16 %v3915
        %v3975 = vunpack.c.l.b16 %v3916
        %v3976 = vunpack.c.h.b16 %v3916
        %v3977 = vpack.c.b16 %v3947, %v3945
        %v3978 = vpack.c.b16 %v3948, %v3946
        %v3979 = vpack.c.b16 %v3951, %v3949
        %v3980 = vpack.c.b16 %v3952, %v3950
        %v3981 = vpack.c.b16 %v3955, %v3953
        %v3982 = vpack.c.b16 %v3956, %v3954
        %v3983 = vpack.c.b16 %v3959, %v3957
        %v3984 = vpack.c.b16 %v3960, %v3958
        %v3985 = vpack.c.b16 %v3963, %v3961
        %v3986 = vpack.c.b16 %v3964, %v3962
        %v3987 = vpack.c.b16 %v3967, %v3965
        %v3988 = vpack.c.b16 %v3968, %v3966
        %v3989 = vpack.c.b16 %v3971, %v3969
        %v3990 = vpack.c.b16 %v3972, %v3970
        %v3991 = vpack.c.b16 %v3975, %v3973
        %v3992 = vpack.c.b16 %v3976, %v3974
        %4009 = vmatprep.subr.bf16.mxu0 %v3978
        %4010 = vmatpush1.bf16.msra.mxu0 %v3977
        %4011 = vmatprep.subr.bf16.mxu0 %v3980
        %4012 = vmatpush1.bf16.msra.mxu0 %v3979
        %4013 = vmatprep.subr.bf16.mxu0 %v3982
        %4014 = vmatpush1.bf16.msra.mxu0 %v3981
        %4015 = vmatprep.subr.bf16.mxu0 %v3984
        %4016 = vmatpush1.bf16.msra.mxu0 %v3983
        %4017 = vmatprep.subr.bf16.mxu0 %v3986
        %4018 = vmatpush1.bf16.msra.mxu0 %v3985
        %4019 = vmatprep.subr.bf16.mxu0 %v3988
        %4020 = vmatpush1.bf16.msra.mxu0 %v3987
        %4021 = vmatprep.subr.bf16.mxu0 %v3990
        %4022 = vmatpush1.bf16.msra.mxu0 %v3989
        %4023 = vmatprep.subr.bf16.mxu0 %v3992
        %4024 = vmatpush1.bf16.msra.mxu0 %v3991
        %4025 = vmatprep.subr.bf16.mxu0 0
        %4026 = vmatpush1.bf16.msra.mxu0 0
        %4027 = vmatprep.subr.bf16.mxu0 0
        %4028 = vmatpush1.bf16.msra.mxu0 0
        %4029 = vmatprep.subr.bf16.mxu0 0
        %4030 = vmatpush1.bf16.msra.mxu0 0
        %4031 = vmatprep.subr.bf16.mxu0 0
        %4032 = vmatpush1.bf16.msra.mxu0 0
        %4033 = vmatprep.subr.bf16.mxu0 0
        %4034 = vmatpush1.bf16.msra.mxu0 0
        %4035 = vmatprep.subr.bf16.mxu0 0
        %4036 = vmatpush1.bf16.msra.mxu0 0
        %4037 = vmatprep.subr.bf16.mxu0 0
        %4038 = vmatpush1.bf16.msra.mxu0 0
        %4039 = vmatprep.subr.bf16.mxu0 0
        %4040 = vmatpush1.bf16.msra.mxu0 0
        %4041 = vmatprep.mubr.bf16.mxu0 0
        %4042 = vmatmul.mubr.bf16.gmra.mrb[0].mxu0 %v3893
        %v4043 = vpop.f32.mrb[0].mxu0
        %v4044 = vadd.f32 %v3922, %v4043
        %v4045 = vpop.f32.mrb[0].mxu0
        %v4046 = vadd.f32 %v3926, %v4045
        %v4047 = vpop.f32.mrb[0].mxu0
        %v4048 = vadd.f32 %v3922, %v4047
        %v4049 = vpop.f32.mrb[0].mxu0
        %v4050 = vadd.f32 %v3926, %v4049
        %4051 = vmatprep.mubr.bf16.mxu0 0
        %4052 = vmatmul.mubr.bf16.gmra.mrb[0].mxu0 %v3894
        %v4053 = vpop.f32.mrb[0].mxu0
        %v4054 = vadd.f32 %v3922, %v4053
        %v4055 = vpop.f32.mrb[0].mxu0
        %v4056 = vadd.f32 %v3926, %v4055
        %v4057 = vpop.f32.mrb[0].mxu0
        %v4058 = vadd.f32 %v3922, %v4057
        %v4059 = vpop.f32.mrb[0].mxu0
        %v4060 = vadd.f32 %v3926, %v4059
        %4061 = vmatprep.mubr.bf16.mxu0 0
        %4062 = vmatmul.mubr.bf16.gmra.mrb[0].mxu0 %v3895
        %v4063 = vpop.f32.mrb[0].mxu0
        %v4064 = vadd.f32 %v3922, %v4063
        %v4065 = vpop.f32.mrb[0].mxu0
        %v4066 = vadd.f32 %v3926, %v4065
        %v4067 = vpop.f32.mrb[0].mxu0
        %v4068 = vadd.f32 %v3922, %v4067
        %v4069 = vpop.f32.mrb[0].mxu0
        %v4070 = vadd.f32 %v3926, %v4069
        %4071 = vmatprep.mubr.bf16.mxu0 0
        %4072 = vmatmul.mubr.bf16.gmra.mrb[0].mxu0 %v3896
        %v4073 = vpop.f32.mrb[0].mxu0
        %v4074 = vadd.f32 %v3922, %v4073
        %v4075 = vpop.f32.mrb[0].mxu0
        %v4076 = vadd.f32 %v3926, %v4075
        %v4077 = vpop.f32.mrb[0].mxu0
        %v4078 = vadd.f32 %v3922, %v4077
        %v4079 = vpop.f32.mrb[0].mxu0
        %v4080 = vadd.f32 %v3926, %v4079
        %4081 = vmatprep.mubr.bf16.mxu0 0
        %4082 = vmatmul.mubr.bf16.gmra.mrb[0].mxu0 %v3897
        %v4083 = vpop.f32.mrb[0].mxu0
        %v4084 = vadd.f32 %v3922, %v4083
        %v4085 = vpop.f32.mrb[0].mxu0
        %v4086 = vadd.f32 %v3926, %v4085
        %v4087 = vpop.f32.mrb[0].mxu0
        %v4088 = vadd.f32 %v3922, %v4087
        %v4089 = vpop.f32.mrb[0].mxu0
        %v4090 = vadd.f32 %v3926, %v4089
        %4091 = vmatprep.mubr.bf16.mxu0 0
        %4092 = vmatmul.mubr.bf16.gmra.mrb[0].mxu0 %v3898
        %v4093 = vpop.f32.mrb[0].mxu0
        %v4094 = vadd.f32 %v3922, %v4093
        %v4095 = vpop.f32.mrb[0].mxu0
        %v4096 = vadd.f32 %v3926, %v4095
        %v4097 = vpop.f32.mrb[0].mxu0
        %v4098 = vadd.f32 %v3922, %v4097
        %v4099 = vpop.f32.mrb[0].mxu0
        %v4100 = vadd.f32 %v3926, %v4099
        %4101 = vmatprep.mubr.bf16.mxu0 0
        %4102 = vmatmul.mubr.bf16.gmra.mrb[0].mxu0 %v3899
        %v4103 = vpop.f32.mrb[0].mxu0
        %v4104 = vadd.f32 %v3922, %v4103
        %v4105 = vpop.f32.mrb[0].mxu0
        %v4106 = vadd.f32 %v3926, %v4105
        %v4107 = vpop.f32.mrb[0].mxu0
        %v4108 = vadd.f32 %v3922, %v4107
        %v4109 = vpop.f32.mrb[0].mxu0
        %v4110 = vadd.f32 %v3926, %v4109
        %4111 = vmatprep.mubr.bf16.mxu0 0
        %4112 = vmatmul.mubr.bf16.gmra.mrb[0].mxu0 %v3900
        %v4113 = vpop.f32.mrb[0].mxu0
        %v4114 = vadd.f32 %v3922, %v4113
        %v4115 = vpop.f32.mrb[0].mxu0
        %v4116 = vadd.f32 %v3926, %v4115
        %v4117 = vpop.f32.mrb[0].mxu0
        %v4118 = vadd.f32 %v3922, %v4117
        %v4119 = vpop.f32.mrb[0].mxu0
        %v4120 = vadd.f32 %v3926, %v4119
        %4121 = vdwg.mxu0
        %v4122 = vmax.f32 %v4044, 0.0
        %v4123 = vmax.f32 %v4046, 0.0
        %v4124 = vmax.f32 %v4048, 0.0
        %v4125 = vmax.f32 %v4050, 0.0
        %v4126 = vmax.f32 %v4054, 0.0
        %v4127 = vmax.f32 %v4056, 0.0
        %v4128 = vmax.f32 %v4058, 0.0
        %v4129 = vmax.f32 %v4060, 0.0
        %v4130 = vmax.f32 %v4064, 0.0
        %v4131 = vmax.f32 %v4066, 0.0
        %v4132 = vmax.f32 %v4068, 0.0
        %v4133 = vmax.f32 %v4070, 0.0
        %v4134 = vmax.f32 %v4074, 0.0
        %v4135 = vmax.f32 %v4076, 0.0
        %v4136 = vmax.f32 %v4078, 0.0
        %v4137 = vmax.f32 %v4080, 0.0
        %v4138 = vmax.f32 %v4084, 0.0
        %v4139 = vmax.f32 %v4086, 0.0
        %v4140 = vmax.f32 %v4088, 0.0
        %v4141 = vmax.f32 %v4090, 0.0
        %v4142 = vmax.f32 %v4094, 0.0
        %v4143 = vmax.f32 %v4096, 0.0
        %v4144 = vmax.f32 %v4098, 0.0
        %v4145 = vmax.f32 %v4100, 0.0
        %v4146 = vmax.f32 %v4104, 0.0
        %v4147 = vmax.f32 %v4106, 0.0
        %v4148 = vmax.f32 %v4108, 0.0
        %v4149 = vmax.f32 %v4110, 0.0
        %v4150 = vmax.f32 %v4114, 0.0
        %v4151 = vmax.f32 %v4116, 0.0
        %v4152 = vmax.f32 %v4118, 0.0
        %v4153 = vmax.f32 %v4120, 0.0
        %v4154 = vpack.c.bf16 %v4124, %v4122
        %v4155 = vpack.c.bf16 %v4125, %v4123
        %v4156 = vpack.c.bf16 %v4128, %v4126
        %v4157 = vpack.c.bf16 %v4129, %v4127
        %v4158 = vpack.c.bf16 %v4132, %v4130
        %v4159 = vpack.c.bf16 %v4133, %v4131
        %v4160 = vpack.c.bf16 %v4136, %v4134
        %v4161 = vpack.c.bf16 %v4137, %v4135
        %v4162 = vpack.c.bf16 %v4140, %v4138
        %v4163 = vpack.c.bf16 %v4141, %v4139
        %v4164 = vpack.c.bf16 %v4144, %v4142
        %v4165 = vpack.c.bf16 %v4145, %v4143
        %v4166 = vpack.c.bf16 %v4148, %v4146
        %v4167 = vpack.c.bf16 %v4149, %v4147
        %v4168 = vpack.c.bf16 %v4152, %v4150
        %v4169 = vpack.c.bf16 %v4153, %v4151
        %v4170 = vld [vmem:[#allocation10] sm:$0xf]
        %v4171 = vld [vmem:[#allocation10 + $0x4] sm:$0xf]
        %v4172 = vld [vmem:[#allocation10 + $0x8] sm:$0xf]
        %v4173 = vld [vmem:[#allocation10 + $0xc] sm:$0xf]
        %v4174 = vld [vmem:[#allocation10 + $0x10] sm:$0xf]
        %v4175 = vld [vmem:[#allocation10 + $0x14] sm:$0xf]
        %v4176 = vld [vmem:[#allocation10 + $0x18] sm:$0xf]
        %v4177 = vld [vmem:[#allocation10 + $0x1c] sm:$0xf]
        %v4178 = vld [vmem:[#allocation10 + $0x20] sm:$0xf]
        %v4179 = vld [vmem:[#allocation10 + $0x24] sm:$0xf]
        %v4180 = vld [vmem:[#allocation10 + $0x28] sm:$0xf]
        %v4181 = vld [vmem:[#allocation10 + $0x2c] sm:$0xf]
        %v4182 = vld [vmem:[#allocation10 + $0x30] sm:$0xf]
        %v4183 = vld [vmem:[#allocation10 + $0x34] sm:$0xf]
        %v4184 = vld [vmem:[#allocation10 + $0x38] sm:$0xf]
        %v4185 = vld [vmem:[#allocation10 + $0x3c] sm:$0xf]
        %v4186 = vld [vmem:[#allocation10 + $0x40] sm:$0xf]
        %v4187 = vld [vmem:[#allocation10 + $0x44] sm:$0xf]
        %v4188 = vld [vmem:[#allocation10 + $0x48] sm:$0xf]
        %v4189 = vld [vmem:[#allocation10 + $0x4c] sm:$0xf]
        %v4190 = vld [vmem:[#allocation10 + $0x50] sm:$0xf]
        %v4191 = vld [vmem:[#allocation10 + $0x54] sm:$0xf]
        %v4192 = vld [vmem:[#allocation10 + $0x58] sm:$0xf]
        %v4193 = vld [vmem:[#allocation10 + $0x5c] sm:$0xf]
        %v4194 = vld [vmem:[#allocation10 + $0x60] sm:$0xf]
        %v4195 = vld [vmem:[#allocation10 + $0x64] sm:$0xf]
        %v4196 = vld [vmem:[#allocation10 + $0x68] sm:$0xf]
        %v4197 = vld [vmem:[#allocation10 + $0x6c] sm:$0xf]
        %v4198 = vld [vmem:[#allocation10 + $0x70] sm:$0xf]
        %v4199 = vld [vmem:[#allocation10 + $0x74] sm:$0xf]
        %v4200 = vld [vmem:[#allocation10 + $0x78] sm:$0xf]
        %v4201 = vld [vmem:[#allocation10 + $0x7c] sm:$0xf]
        %v4202 = vld [vmem:[%s10] sm:$0x1]
        %v4204 = vlaneseq
        %v4205 = vshrl.u32 %v4204, 7
        %v4206 = vsub.s32 0, %v4205
        %v4207 = vrot.slane %v4202, %v4206
        %v4241 = vunpack.c.l.b16 %v4170
        %v4242 = vunpack.c.l.b16 %v4171
        %v4243 = vunpack.c.l.b16 %v4172
        %v4244 = vunpack.c.l.b16 %v4173
        %v4245 = vunpack.c.l.b16 %v4174
        %v4246 = vunpack.c.l.b16 %v4175
        %v4247 = vunpack.c.l.b16 %v4176
        %v4248 = vunpack.c.l.b16 %v4177
        %v4249 = vunpack.c.l.b16 %v4178
        %v4250 = vunpack.c.l.b16 %v4179
        %v4251 = vunpack.c.l.b16 %v4180
        %v4252 = vunpack.c.l.b16 %v4181
        %v4253 = vunpack.c.l.b16 %v4182
        %v4254 = vunpack.c.l.b16 %v4183
        %v4255 = vunpack.c.l.b16 %v4184
        %v4256 = vunpack.c.l.b16 %v4185
        %v4257 = vunpack.c.l.b16 %v4186
        %v4258 = vunpack.c.l.b16 %v4187
        %v4259 = vunpack.c.l.b16 %v4188
        %v4260 = vunpack.c.l.b16 %v4189
        %v4261 = vunpack.c.l.b16 %v4190
        %v4262 = vunpack.c.l.b16 %v4191
        %v4263 = vunpack.c.l.b16 %v4192
        %v4264 = vunpack.c.l.b16 %v4193
        %v4265 = vunpack.c.l.b16 %v4194
        %v4266 = vunpack.c.l.b16 %v4195
        %v4267 = vunpack.c.l.b16 %v4196
        %v4268 = vunpack.c.l.b16 %v4197
        %v4269 = vunpack.c.l.b16 %v4198
        %v4270 = vunpack.c.l.b16 %v4199
        %v4271 = vunpack.c.l.b16 %v4200
        %v4272 = vunpack.c.l.b16 %v4201
        %v4273 = vpack.c.b16 %v4242, %v4241
        %v4274 = vpack.c.b16 %v4244, %v4243
        %v4275 = vpack.c.b16 %v4246, %v4245
        %v4276 = vpack.c.b16 %v4248, %v4247
        %v4277 = vpack.c.b16 %v4250, %v4249
        %v4278 = vpack.c.b16 %v4252, %v4251
        %v4279 = vpack.c.b16 %v4254, %v4253
        %v4280 = vpack.c.b16 %v4256, %v4255
        %v4281 = vpack.c.b16 %v4258, %v4257
        %v4282 = vpack.c.b16 %v4260, %v4259
        %v4283 = vpack.c.b16 %v4262, %v4261
        %v4284 = vpack.c.b16 %v4264, %v4263
        %v4285 = vpack.c.b16 %v4266, %v4265
        %v4286 = vpack.c.b16 %v4268, %v4267
        %v4287 = vpack.c.b16 %v4270, %v4269
        %v4288 = vpack.c.b16 %v4272, %v4271
        %4305 = vmatprep.subr.bf16.mxu0 0
        %4306 = vmatpush1.bf16.msra.mxu0 %v4273
        %4307 = vmatprep.subr.bf16.mxu0 0
        %4308 = vmatpush1.bf16.msra.mxu0 %v4274
        %4309 = vmatprep.subr.bf16.mxu0 0
        %4310 = vmatpush1.bf16.msra.mxu0 %v4275
        %4311 = vmatprep.subr.bf16.mxu0 0
        %4312 = vmatpush1.bf16.msra.mxu0 %v4276
        %4313 = vmatprep.subr.bf16.mxu0 0
        %4314 = vmatpush1.bf16.msra.mxu0 %v4277
        %4315 = vmatprep.subr.bf16.mxu0 0
        %4316 = vmatpush1.bf16.msra.mxu0 %v4278
        %4317 = vmatprep.subr.bf16.mxu0 0
        %4318 = vmatpush1.bf16.msra.mxu0 %v4279
        %4319 = vmatprep.subr.bf16.mxu0 0
        %4320 = vmatpush1.bf16.msra.mxu0 %v4280
        %4321 = vmatprep.subr.bf16.mxu0 0
        %4322 = vmatpush1.bf16.msra.mxu0 %v4281
        %4323 = vmatprep.subr.bf16.mxu0 0
        %4324 = vmatpush1.bf16.msra.mxu0 %v4282
        %4325 = vmatprep.subr.bf16.mxu0 0
        %4326 = vmatpush1.bf16.msra.mxu0 %v4283
        %4327 = vmatprep.subr.bf16.mxu0 0
        %4328 = vmatpush1.bf16.msra.mxu0 %v4284
        %4329 = vmatprep.subr.bf16.mxu0 0
        %4330 = vmatpush1.bf16.msra.mxu0 %v4285
        %4331 = vmatprep.subr.bf16.mxu0 0
        %4332 = vmatpush1.bf16.msra.mxu0 %v4286
        %4333 = vmatprep.subr.bf16.mxu0 0
        %4334 = vmatpush1.bf16.msra.mxu0 %v4287
        %4335 = vmatprep.subr.bf16.mxu0 0
        %4336 = vmatpush1.bf16.msra.mxu0 %v4288
        %4337 = vmatprep.mubr.bf16.mxu0 %v4155
        %4338 = vmatmul.mubr.bf16.gmra.mrb[0].mxu0 %v4154
        %v4339 = vpop.f32.mrb[0].mxu0
        %v4340 = vadd.f32 %v4207, %v4339
        %v4341 = vpop.f32.mrb[0].mxu0
        %v4342 = vpop.f32.mrb[0].mxu0
        %v4343 = vadd.f32 %v4207, %v4342
        %v4344 = vpop.f32.mrb[0].mxu0
        %4345 = vmatprep.mubr.bf16.mxu0 %v4157
        %4346 = vmatmul.mubr.bf16.gmra.mrb[0].mxu0 %v4156
        %v4347 = vpop.f32.mrb[0].mxu0
        %v4348 = vadd.f32 %v4207, %v4347
        %v4349 = vpop.f32.mrb[0].mxu0
        %v4350 = vpop.f32.mrb[0].mxu0
        %v4351 = vadd.f32 %v4207, %v4350
        %v4352 = vpop.f32.mrb[0].mxu0
        %4353 = vmatprep.mubr.bf16.mxu0 %v4159
        %4354 = vmatmul.mubr.bf16.gmra.mrb[0].mxu0 %v4158
        %v4355 = vpop.f32.mrb[0].mxu0
        %v4356 = vadd.f32 %v4207, %v4355
        %v4357 = vpop.f32.mrb[0].mxu0
        %v4358 = vpop.f32.mrb[0].mxu0
        %v4359 = vadd.f32 %v4207, %v4358
        %v4360 = vpop.f32.mrb[0].mxu0
        %4361 = vmatprep.mubr.bf16.mxu0 %v4161
        %4362 = vmatmul.mubr.bf16.gmra.mrb[0].mxu0 %v4160
        %v4363 = vpop.f32.mrb[0].mxu0
        %v4364 = vadd.f32 %v4207, %v4363
        %v4365 = vpop.f32.mrb[0].mxu0
        %v4366 = vpop.f32.mrb[0].mxu0
        %v4367 = vadd.f32 %v4207, %v4366
        %v4368 = vpop.f32.mrb[0].mxu0
        %4369 = vmatprep.mubr.bf16.mxu0 %v4163
        %4370 = vmatmul.mubr.bf16.gmra.mrb[0].mxu0 %v4162
        %v4371 = vpop.f32.mrb[0].mxu0
        %v4372 = vadd.f32 %v4207, %v4371
        %v4373 = vpop.f32.mrb[0].mxu0
        %v4374 = vpop.f32.mrb[0].mxu0
        %v4375 = vadd.f32 %v4207, %v4374
        %v4376 = vpop.f32.mrb[0].mxu0
        %4377 = vmatprep.mubr.bf16.mxu0 %v4165
        %4378 = vmatmul.mubr.bf16.gmra.mrb[0].mxu0 %v4164
        %v4379 = vpop.f32.mrb[0].mxu0
        %v4380 = vadd.f32 %v4207, %v4379
        %v4381 = vpop.f32.mrb[0].mxu0
        %v4382 = vpop.f32.mrb[0].mxu0
        %v4383 = vadd.f32 %v4207, %v4382
        %v4384 = vpop.f32.mrb[0].mxu0
        %4385 = vmatprep.mubr.bf16.mxu0 %v4167
        %4386 = vmatmul.mubr.bf16.gmra.mrb[0].mxu0 %v4166
        %v4387 = vpop.f32.mrb[0].mxu0
        %v4388 = vadd.f32 %v4207, %v4387
        %v4389 = vpop.f32.mrb[0].mxu0
        %v4390 = vpop.f32.mrb[0].mxu0
        %v4391 = vadd.f32 %v4207, %v4390
        %v4392 = vpop.f32.mrb[0].mxu0
        %4393 = vmatprep.mubr.bf16.mxu0 %v4169
        %4394 = vmatmul.mubr.bf16.gmra.mrb[0].mxu0 %v4168
        %v4395 = vpop.f32.mrb[0].mxu0
        %v4396 = vadd.f32 %v4207, %v4395
        %v4397 = vpop.f32.mrb[0].mxu0
        %v4398 = vpop.f32.mrb[0].mxu0
        %v4399 = vadd.f32 %v4207, %v4398
        %v4400 = vpop.f32.mrb[0].mxu0
        %4401 = vdwg.mxu0
        %v4402 = vadd.f32 %v3877, %v4340
        %v4403 = vadd.f32 %v3878, %v4343
        %v4404 = vadd.f32 %v3879, %v4348
        %v4405 = vadd.f32 %v3880, %v4351
        %v4406 = vadd.f32 %v3881, %v4356
        %v4407 = vadd.f32 %v3882, %v4359
        %v4408 = vadd.f32 %v3883, %v4364
        %v4409 = vadd.f32 %v3884, %v4367
        %v4410 = vadd.f32 %v3885, %v4372
        %v4411 = vadd.f32 %v3886, %v4375
        %v4412 = vadd.f32 %v3887, %v4380
        %v4413 = vadd.f32 %v3888, %v4383
        %v4414 = vadd.f32 %v3889, %v4388
        %v4415 = vadd.f32 %v3890, %v4391
        %v4416 = vadd.f32 %v3891, %v4396
        %v4417 = vadd.f32 %v3892, %v4399
        %4418 = vadd.xlane.f32.xlu0 %v4402
        %v4419 = vpop.xlane.xlu0 %4418
        %4420 = vadd.xlane.f32.xlu0 %v4403
        %v4421 = vpop.xlane.xlu0 %4420
        %4422 = vadd.xlane.f32.xlu0 %v4404
        %v4423 = vpop.xlane.xlu0 %4422
        %4424 = vadd.xlane.f32.xlu0 %v4405
        %v4425 = vpop.xlane.xlu0 %4424
        %4426 = vadd.xlane.f32.xlu0 %v4406
        %v4427 = vpop.xlane.xlu0 %4426
        %4428 = vadd.xlane.f32.xlu0 %v4407
        %v4429 = vpop.xlane.xlu0 %4428
        %4430 = vadd.xlane.f32.xlu0 %v4408
        %v4431 = vpop.xlane.xlu0 %4430
        %4432 = vadd.xlane.f32.xlu0 %v4409
        %v4433 = vpop.xlane.xlu0 %4432
        %4434 = vadd.xlane.f32.xlu0 %v4410
        %v4435 = vpop.xlane.xlu0 %4434
        %4436 = vadd.xlane.f32.xlu0 %v4411
        %v4437 = vpop.xlane.xlu0 %4436
        %4438 = vadd.xlane.f32.xlu0 %v4412
        %v4439 = vpop.xlane.xlu0 %4438
        %4440 = vadd.xlane.f32.xlu0 %v4413
        %v4441 = vpop.xlane.xlu0 %4440
        %4442 = vadd.xlane.f32.xlu0 %v4414
        %v4443 = vpop.xlane.xlu0 %4442
        %4444 = vadd.xlane.f32.xlu0 %v4415
        %v4445 = vpop.xlane.xlu0 %4444
        %4446 = vadd.xlane.f32.xlu0 %v4416
        %v4447 = vpop.xlane.xlu0 %4446
        %4448 = vadd.xlane.f32.xlu0 %v4417
        %v4449 = vpop.xlane.xlu0 %4448
        %v4450 = vmul.f32 %v4419, %v3702
        %v4451 = vmul.f32 %v4421, %v3702
        %v4452 = vmul.f32 %v4423, %v3702
        %v4453 = vmul.f32 %v4425, %v3702
        %v4454 = vmul.f32 %v4427, %v3702
        %v4455 = vmul.f32 %v4429, %v3702
        %v4456 = vmul.f32 %v4431, %v3702
        %v4457 = vmul.f32 %v4433, %v3702
        %v4458 = vmul.f32 %v4435, %v3702
        %v4459 = vmul.f32 %v4437, %v3702
        %v4460 = vmul.f32 %v4439, %v3702
        %v4461 = vmul.f32 %v4441, %v3702
        %v4462 = vmul.f32 %v4443, %v3702
        %v4463 = vmul.f32 %v4445, %v3702
        %v4464 = vmul.f32 %v4447, %v3702
        %v4465 = vmul.f32 %v4449, %v3702
        %v4466 = vsub.f32 %v4402, %v4450
        %v4467 = vsub.f32 %v4403, %v4451
        %v4468 = vsub.f32 %v4404, %v4452
        %v4469 = vsub.f32 %v4405, %v4453
        %v4470 = vsub.f32 %v4406, %v4454
        %v4471 = vsub.f32 %v4407, %v4455
        %v4472 = vsub.f32 %v4408, %v4456
        %v4473 = vsub.f32 %v4409, %v4457
        %v4474 = vsub.f32 %v4410, %v4458
        %v4475 = vsub.f32 %v4411, %v4459
        %v4476 = vsub.f32 %v4412, %v4460
        %v4477 = vsub.f32 %v4413, %v4461
        %v4478 = vsub.f32 %v4414, %v4462
        %v4479 = vsub.f32 %v4415, %v4463
        %v4480 = vsub.f32 %v4416, %v4464
        %v4481 = vsub.f32 %v4417, %v4465
        %v4482 = vmul.f32 %v4466, %v4466
        %v4483 = vmul.f32 %v4467, %v4467
        %v4484 = vmul.f32 %v4468, %v4468
        %v4485 = vmul.f32 %v4469, %v4469
        %v4486 = vmul.f32 %v4470, %v4470
        %v4487 = vmul.f32 %v4471, %v4471
        %v4488 = vmul.f32 %v4472, %v4472
        %v4489 = vmul.f32 %v4473, %v4473
        %v4490 = vmul.f32 %v4474, %v4474
        %v4491 = vmul.f32 %v4475, %v4475
        %v4492 = vmul.f32 %v4476, %v4476
        %v4493 = vmul.f32 %v4477, %v4477
        %v4494 = vmul.f32 %v4478, %v4478
        %v4495 = vmul.f32 %v4479, %v4479
        %v4496 = vmul.f32 %v4480, %v4480
        %v4497 = vmul.f32 %v4481, %v4481
        %4498 = vadd.xlane.f32.xlu0 %v4482
        %v4499 = vpop.xlane.xlu0 %4498
        %4500 = vadd.xlane.f32.xlu0 %v4483
        %v4501 = vpop.xlane.xlu0 %4500
        %4502 = vadd.xlane.f32.xlu0 %v4484
        %v4503 = vpop.xlane.xlu0 %4502
        %4504 = vadd.xlane.f32.xlu0 %v4485
        %v4505 = vpop.xlane.xlu0 %4504
        %4506 = vadd.xlane.f32.xlu0 %v4486
        %v4507 = vpop.xlane.xlu0 %4506
        %4508 = vadd.xlane.f32.xlu0 %v4487
        %v4509 = vpop.xlane.xlu0 %4508
        %4510 = vadd.xlane.f32.xlu0 %v4488
        %v4511 = vpop.xlane.xlu0 %4510
        %4512 = vadd.xlane.f32.xlu0 %v4489
        %v4513 = vpop.xlane.xlu0 %4512
        %4514 = vadd.xlane.f32.xlu0 %v4490
        %v4515 = vpop.xlane.xlu0 %4514
        %4516 = vadd.xlane.f32.xlu0 %v4491
        %v4517 = vpop.xlane.xlu0 %4516
        %4518 = vadd.xlane.f32.xlu0 %v4492
        %v4519 = vpop.xlane.xlu0 %4518
        %4520 = vadd.xlane.f32.xlu0 %v4493
        %v4521 = vpop.xlane.xlu0 %4520
        %4522 = vadd.xlane.f32.xlu0 %v4494
        %v4523 = vpop.xlane.xlu0 %4522
        %4524 = vadd.xlane.f32.xlu0 %v4495
        %v4525 = vpop.xlane.xlu0 %4524
        %4526 = vadd.xlane.f32.xlu0 %v4496
        %v4527 = vpop.xlane.xlu0 %4526
        %4528 = vadd.xlane.f32.xlu0 %v4497
        %v4529 = vpop.xlane.xlu0 %4528
        %v4530 = vmul.f32 %v4499, %v3702
        %v4531 = vmul.f32 %v4501, %v3702
        %v4532 = vmul.f32 %v4503, %v3702
        %v4533 = vmul.f32 %v4505, %v3702
        %v4534 = vmul.f32 %v4507, %v3702
        %v4535 = vmul.f32 %v4509, %v3702
        %v4536 = vmul.f32 %v4511, %v3702
        %v4537 = vmul.f32 %v4513, %v3702
        %v4538 = vmul.f32 %v4515, %v3702
        %v4539 = vmul.f32 %v4517, %v3702
        %v4540 = vmul.f32 %v4519, %v3702
        %v4541 = vmul.f32 %v4521, %v3702
        %v4542 = vmul.f32 %v4523, %v3702
        %v4543 = vmul.f32 %v4525, %v3702
        %v4544 = vmul.f32 %v4527, %v3702
        %v4545 = vmul.f32 %v4529, %v3702
        %v4546 = vadd.f32 %v4530, 1e-05
        %v4547 = vadd.f32 %v4531, 1e-05
        %v4548 = vadd.f32 %v4532, 1e-05
        %v4549 = vadd.f32 %v4533, 1e-05
        %v4550 = vadd.f32 %v4534, 1e-05
        %v4551 = vadd.f32 %v4535, 1e-05
        %v4552 = vadd.f32 %v4536, 1e-05
        %v4553 = vadd.f32 %v4537, 1e-05
        %v4554 = vadd.f32 %v4538, 1e-05
        %v4555 = vadd.f32 %v4539, 1e-05
        %v4556 = vadd.f32 %v4540, 1e-05
        %v4557 = vadd.f32 %v4541, 1e-05
        %v4558 = vadd.f32 %v4542, 1e-05
        %v4559 = vadd.f32 %v4543, 1e-05
        %v4560 = vadd.f32 %v4544, 1e-05
        %v4561 = vadd.f32 %v4545, 1e-05
        %v4562 = vrsqrt.pop %v4546
        %v4563 = vrsqrt.pop %v4547
        %v4564 = vrsqrt.pop %v4548
        %v4565 = vrsqrt.pop %v4549
        %v4566 = vrsqrt.pop %v4550
        %v4567 = vrsqrt.pop %v4551
        %v4568 = vrsqrt.pop %v4552
        %v4569 = vrsqrt.pop %v4553
        %v4570 = vrsqrt.pop %v4554
        %v4571 = vrsqrt.pop %v4555
        %v4572 = vrsqrt.pop %v4556
        %v4573 = vrsqrt.pop %v4557
        %v4574 = vrsqrt.pop %v4558
        %v4575 = vrsqrt.pop %v4559
        %v4576 = vrsqrt.pop %v4560
        %v4577 = vrsqrt.pop %v4561
        %v4578 = vmul.f32 %v4466, %v4562
        %v4579 = vmul.f32 %v4467, %v4563
        %v4580 = vmul.f32 %v4468, %v4564
        %v4581 = vmul.f32 %v4469, %v4565
        %v4582 = vmul.f32 %v4470, %v4566
        %v4583 = vmul.f32 %v4471, %v4567
        %v4584 = vmul.f32 %v4472, %v4568
        %v4585 = vmul.f32 %v4473, %v4569
        %v4586 = vmul.f32 %v4474, %v4570
        %v4587 = vmul.f32 %v4475, %v4571
        %v4588 = vmul.f32 %v4476, %v4572
        %v4589 = vmul.f32 %v4477, %v4573
        %v4590 = vmul.f32 %v4478, %v4574
        %v4591 = vmul.f32 %v4479, %v4575
        %v4592 = vmul.f32 %v4480, %v4576
        %v4593 = vmul.f32 %v4481, %v4577
        %v4594 = vld [vmem:[%s11] sm:$0x1]
        %v4596 = vlaneseq
        %v4597 = vshrl.u32 %v4596, 7
        %v4598 = vsub.s32 0, %v4597
        %v4599 = vrot.slane %v4594, %v4598
        %v4601 = vmul.f32 %v4578, %v4599
        %v4602 = vmul.f32 %v4579, %v4599
        %v4603 = vmul.f32 %v4580, %v4599
        %v4604 = vmul.f32 %v4581, %v4599
        %v4605 = vmul.f32 %v4582, %v4599
        %v4606 = vmul.f32 %v4583, %v4599
        %v4607 = vmul.f32 %v4584, %v4599
        %v4608 = vmul.f32 %v4585, %v4599
        %v4609 = vmul.f32 %v4586, %v4599
        %v4610 = vmul.f32 %v4587, %v4599
        %v4611 = vmul.f32 %v4588, %v4599
        %v4612 = vmul.f32 %v4589, %v4599
        %v4613 = vmul.f32 %v4590, %v4599
        %v4614 = vmul.f32 %v4591, %v4599
        %v4615 = vmul.f32 %v4592, %v4599
        %v4616 = vmul.f32 %v4593, %v4599
        %v4617 = vld [vmem:[%s12] sm:$0x1]
        %v4619 = vlaneseq
        %v4620 = vshrl.u32 %v4619, 7
        %v4621 = vsub.s32 0, %v4620
        %v4622 = vrot.slane %v4617, %v4621
        %v4624 = vadd.f32 %v4601, %v4622
        %v4625 = vadd.f32 %v4602, %v4622
        %v4626 = vadd.f32 %v4603, %v4622
        %v4627 = vadd.f32 %v4604, %v4622
        %v4628 = vadd.f32 %v4605, %v4622
        %v4629 = vadd.f32 %v4606, %v4622
        %v4630 = vadd.f32 %v4607, %v4622
        %v4631 = vadd.f32 %v4608, %v4622
        %v4632 = vadd.f32 %v4609, %v4622
        %v4633 = vadd.f32 %v4610, %v4622
        %v4634 = vadd.f32 %v4611, %v4622
        %v4635 = vadd.f32 %v4612, %v4622
        %v4636 = vadd.f32 %v4613, %v4622
        %v4637 = vadd.f32 %v4614, %v4622
        %v4638 = vadd.f32 %v4615, %v4622
        %v4639 = vadd.f32 %v4616, %v4622
        %4640 = vst [vmem:[%s547] sm:$0xff] %v4624
        %4641 = vst [vmem:[%s547 + $0x8] sm:$0xff] %v4625
        %4642 = vst [vmem:[%s547 + $0x10] sm:$0xff] %v4626
        %4643 = vst [vmem:[%s547 + $0x18] sm:$0xff] %v4627
        %4644 = vst [vmem:[%s547 + $0x20] sm:$0xff] %v4628
        %4645 = vst [vmem:[%s547 + $0x28] sm:$0xff] %v4629
        %4646 = vst [vmem:[%s547 + $0x30] sm:$0xff] %v4630
        %4647 = vst [vmem:[%s547 + $0x38] sm:$0xff] %v4631
        %4648 = vst [vmem:[%s547 + $0x40] sm:$0xff] %v4632
        %4649 = vst [vmem:[%s547 + $0x48] sm:$0xff] %v4633
        %4650 = vst [vmem:[%s547 + $0x50] sm:$0xff] %v4634
        %4651 = vst [vmem:[%s547 + $0x58] sm:$0xff] %v4635
        %4652 = vst [vmem:[%s547 + $0x60] sm:$0xff] %v4636
        %4653 = vst [vmem:[%s547 + $0x68] sm:$0xff] %v4637
        %4654 = vst [vmem:[%s547 + $0x70] sm:$0xff] %v4638
        %4655 = vst [vmem:[%s547 + $0x78] sm:$0xff] %v4639
        %s4656 = sand.u32 %s323, 1
        %s4657 = scalar_lea.sflag [#allocation4], %s4656
        %s4658 = sand.u32 %s323, 1
        %s4659 = smul.addr %s4658, 128
        %s4660 = scalar_lea.vmem [#allocation11], %s4659
        %s4661 = sand.u32 %s349, 1
        %s4662 = scalar_lea.sflag [#allocation13], %s4661
        %s4663 = sand.u32 %s349, 1
        %s4664 = smul.addr %s4663, 512
        %s4665 = scalar_lea.vmem [#allocation12], %s4664
        // Predicated region
        $region93: #{tpu_custom_call.1} parent=71 // pred_check
          %p4666 = pneg %p333
        $region94: #{tpu_custom_call.1} parent=71 // pred_check_branch
          %4668 = sbr.rel (%p4666) target = $region96
        $region95: #{tpu_custom_call.1} parent=71 // pred_region
          %s4670 = ssub.s32 2048, 2048
          %4671 = vsyncadd %s4657, %s4670
          %s4672 = smul.addr %s37, 16
          %s4673 = smul.addr %s4672, 128
          %s4674 = scalar_lea.hbm %s13, %s4673
          %s4675 = sshll.u32 %s4660, 4
          %s4676 = int_to_ptr.vmem [resolvable:$true] %s4675
          %4681 = dma.vmem_to_hbm [thread:$0]  %s4676, 2048, %s4674, %s4657, 128, 128, 8
        $region96: #{tpu_custom_call.1} parent=71 // pred_fallthru
          _
        // Predicated region
        $region97: #{tpu_custom_call.1} parent=71 // pred_check
          %p4682 = pneg %p359
        $region98: #{tpu_custom_call.1} parent=71 // pred_check_branch
          %4684 = sbr.rel (%p4682) target = $region100
        $region99: #{tpu_custom_call.1} parent=71 // pred_region
          %s4686 = ssub.s32 8192, 8192
          %4687 = vsyncadd %s4662, %s4686
          %s4688 = smul.addr %s37, 64
          %s4689 = smul.addr %s4688, 128
          %s4690 = scalar_lea.hbm %s14, %s4689
          %s4691 = sshll.u32 %s4665, 4
          %s4692 = int_to_ptr.vmem [resolvable:$true] %s4691
          %4697 = dma.vmem_to_hbm [thread:$0]  %s4692, 8192, %s4690, %s4662, 128, 128, 8
        $region100: #{tpu_custom_call.1} parent=71 // pred_fallthru
          _
      $region72: #{tpu_custom_call.1} parent=5 // pred_fallthru
        _
      %p4698 = scmp.le.s32.totalorder 2, %s32
      // Predicated region
      $region101: #{tpu_custom_call.1} parent=5 // pred_check
        %p4699 = pneg %p4698
      $region102: #{tpu_custom_call.1} parent=5 // pred_check_branch
        %4701 = sbr.rel (%p4699) target = $region104
      $region103: #{tpu_custom_call.1} parent=5 // pred_region
        %s4702 = ssub.s32 %s32, 2
        // Predicated region
        $region105: #{tpu_custom_call.1} parent=103 // pred_check
          %p4703 = pneg %p339
        $region106: #{tpu_custom_call.1} parent=103 // pred_check_branch
          %4705 = sbr.rel (%p4703) target = $region108
        $region107: #{tpu_custom_call.1} parent=103 // pred_region
          %s4706 = sand.u32 %s324, 1
          %s4707 = scalar_lea.sflag [#allocation4], %s4706
          %s4708 = sand.u32 %s324, 1
          %s4709 = smul.addr %s4708, 128
          %s4710 = scalar_lea.vmem [#allocation11], %s4709
          %4711 = dma.done %s4707, 2048
        $region108: #{tpu_custom_call.1} parent=103 // pred_fallthru
          _
        // Predicated region
        $region109: #{tpu_custom_call.1} parent=103 // pred_check
          %p4712 = pneg %p365
        $region110: #{tpu_custom_call.1} parent=103 // pred_check_branch
          %4714 = sbr.rel (%p4712) target = $region112
        $region111: #{tpu_custom_call.1} parent=103 // pred_region
          %s4715 = sand.u32 %s350, 1
          %s4716 = scalar_lea.sflag [#allocation13], %s4715
          %s4717 = sand.u32 %s350, 1
          %s4718 = smul.addr %s4717, 512
          %s4719 = scalar_lea.vmem [#allocation12], %s4718
          %4720 = dma.done %s4716, 8192
        $region112: #{tpu_custom_call.1} parent=103 // pred_fallthru
          _
      $region104: #{tpu_custom_call.1} parent=5 // pred_fallthru
        _
    $region6: #{tpu_custom_call.1} parent=1 // loop_footer
      %s36 = sadd.s32 1, %s32
    $region7: #{tpu_custom_call.1} parent=1 // loop_footer_branch
      %31 = sbr.rel target = $region3
    $region8: #{tpu_custom_call.1} parent=1 // loop_exit
      _
    %4721 = vsyncpa [#allocation3], 1
    %s4722 = scalar_lea.sflag [#allocation3], 1
    %4723 = vsyncpa %s4722, 1
    %4724 = vsyncpa [#allocation6], 1
    %4725 = vsyncpa [#allocation9], 1
    %4726 = vsyncpa [#allocation4], 1
    %s4727 = scalar_lea.sflag [#allocation4], 1
    %4728 = vsyncpa %s4727, 1
    %4729 = vsyncpa [#allocation13], 1
    %s4730 = scalar_lea.sflag [#allocation13], 1
    %4731 = vsyncpa %s4730, 1

</llo_original>
